<compile_context>
chip_gen: v7x
topology: tpu7x:2x2x1
jax: 0.10.0
libtpu: 0.0.40
codegen_flags: <defaults>
</compile_context>

<pallas_src>
import functools

import jax
import jax.numpy as jnp
from jax import lax
from jax.experimental import pallas as pl
from jax.experimental.pallas import tpu as pltpu


_LANE = 128          # hidden dim padded to a multiple of this (lane width)
_SUBLANE = 8         # batch padded to a multiple of this (sublane width)
_TARGET_ROWS = 512   # aim for >= this many (Tt*Bp) rows per grid step


# ---------------------------------- helpers -----------------------------------

def _round_up(n, m):
    return ((n + m - 1) // m) * m


def _pad_axis(a, axis, size):
    if a.shape[axis] == size:
        return a
    widths = [(0, 0)] * a.ndim
    widths[axis] = (0, size - a.shape[axis])
    return jnp.pad(a, widths)


@functools.lru_cache(maxsize=None)
def _vmem_limit_bytes():
    """Per-generation scoped-VMEM budget (~80% of physical, 32 MiB floor)."""
    cap = 128 * 1024 * 1024
    try:
        cap = int(getattr(pltpu.get_tpu_info(), "vmem_capacity_bytes", cap))
    except Exception:
        pass
    cap = min(cap, 128 * 1024 * 1024)
    return max(32 * 1024 * 1024, int(cap * 0.8))


def _pick_time_chunk(T, Bp, D, Hp, t_chunk, vmem_limit):
    """Largest divisor Tt of T whose chunk working set fits the VMEM budget.

    Grows until Tt*Bp >= _TARGET_ROWS (amortizes per-grid-step pipeline
    overhead, makes the hoisted input projection MXU-shaped), then stops to
    leave VMEM headroom.  An explicit t_chunk caps Tt (used by the demo to
    exercise the multi-chunk carry path).
    """
    # Resident bytes: double-buffered bf16 weights + bias + carry scratch.
    resident = 2 * 2 * (D * 4 * Hp + Hp * 4 * Hp) + 4 * 4 * Hp + 4 * Bp * Hp * 4

    def chunk_bytes(tt):
        rows = tt * Bp
        return (rows * 4 * Hp * 4      # pre-gate scratch (f32)
                + 2 * rows * D * 2     # double-buffered x chunk (bf16)
                + 2 * rows * Hp * 2)   # double-buffered out chunk (bf16)

    budget = int(vmem_limit * 0.8) - resident
    cap = T if t_chunk is None else max(1, min(T, int(t_chunk)))
    best = 1
    for tt in range(1, cap + 1):
        if T % tt != 0 or chunk_bytes(tt) > budget:
            continue
        best = tt
        if t_chunk is None and tt * Bp >= _TARGET_ROWS:
            break
    return best


# ----------------------------- LSTM layer kernel -------------------------------

def _lstm_layer_kernel(x_ref, wih_ref, whh_ref, b_ref, out_ref,
                       pre_sc, h_sc, c_sc, *, batch, t_steps):
    # x_ref:  (Tt*Bp, D)  bf16 time-major chunk (row = t*Bp + b)
    # wih:    (D, 4H) bf16   whh: (H, 4H) bf16   b: (1, 4H) f32 (b_ih + b_hh)
    # Gate column layout (packed at build time): [ i | f | o | g ], each H wide.
    B = batch
    H = h_sc.shape[-1]

    @pl.when(pl.program_id(0) == 0)
    def _():
        h_sc[...] = jnp.zeros(h_sc.shape, h_sc.dtype)
        c_sc[...] = jnp.zeros(c_sc.shape, c_sc.dtype)

    # Whole-chunk input projection: one big MXU matmul, bias folded in once.
    pre_sc[...] = (jnp.dot(x_ref[...], wih_ref[...],
                           preferred_element_type=jnp.float32)
                   + b_ref[...])

    def step(t, carry):
        h, c = carry                                   # f32, vreg-resident
        r0 = pl.multiple_of(t * B, B)
        gates = (pre_sc[pl.ds(r0, B), :]
                 + jnp.dot(h.astype(jnp.bfloat16), whh_ref[...],
                           preferred_element_type=jnp.float32))    # (B, 4H)
        ifo = jax.nn.sigmoid(gates[:, 0:3 * H])        # lane-aligned (B, 3H)
        g = jnp.tanh(gates[:, 3 * H:4 * H])
        c = ifo[:, H:2 * H] * c + ifo[:, 0:H] * g
        h = ifo[:, 2 * H:3 * H] * jnp.tanh(c)
        out_ref[pl.ds(r0, B), :] = h.astype(out_ref.dtype)
        return h, c

    # h/c carried as loop values; scratch is touched once per chunk.
    h, c = lax.fori_loop(0, t_steps, step, (h_sc[...], c_sc[...]),
                         unroll=t_steps if t_steps <= 8 else 4)
    h_sc[...] = h
    c_sc[...] = c


def lstm_layer_pallas(x_2d, w_ih, w_hh, b, *, batch, t_chunk=None):
    """x_2d: (T*Bp, D) bf16 time-major slab -> (T*Bp, H) bf16 hidden states."""
    TB, D = x_2d.shape
    Bp = batch
    T = TB // Bp
    Hp = w_hh.shape[0]
    vmem_limit = _vmem_limit_bytes()
    Tt = _pick_time_chunk(T, Bp, D, Hp, t_chunk, vmem_limit)
    nt = T // Tt
    kernel = functools.partial(_lstm_layer_kernel, batch=Bp, t_steps=Tt)
    return pl.pallas_call(
        kernel,
        out_shape=jax.ShapeDtypeStruct((TB, Hp), jnp.bfloat16),
        grid=(nt,),
        in_specs=[
            pl.BlockSpec((Tt * Bp, D), lambda ti: (ti, 0)),     # streamed x
            pl.BlockSpec((D, 4 * Hp), lambda ti: (0, 0)),       # resident W_ih
            pl.BlockSpec((Hp, 4 * Hp), lambda ti: (0, 0)),      # resident W_hh
            pl.BlockSpec((1, 4 * Hp), lambda ti: (0, 0)),       # resident bias
        ],
        out_specs=pl.BlockSpec((Tt * Bp, Hp), lambda ti: (ti, 0)),
        scratch_shapes=[
            pltpu.VMEM((Tt * Bp, 4 * Hp), jnp.float32),   # pre-gates for chunk
            pltpu.VMEM((Bp, Hp), jnp.float32),            # h (carried over chunks)
            pltpu.VMEM((Bp, Hp), jnp.float32),            # c (carried over chunks)
        ],
        compiler_params=pltpu.CompilerParams(
            dimension_semantics=("arbitrary",),
            vmem_limit_bytes=vmem_limit),
    )(x_2d, w_ih, w_hh, b)


# ---------------------- last LSTM layer fused with head ------------------------

def _lstm_head_kernel(x_ref, wih_ref, whh_ref, b_ref,
                      wd1_ref, wd2_ref, wd3_ref, bd_ref, wo_ref, bo_ref,
                      out_ref, pre_sc, h_sc, c_sc, max_sc, sum_sc,
                      *, batch, t_steps, seq_len):
    B = batch
    H = h_sc.shape[-1]
    ti = pl.program_id(0)

    @pl.when(ti == 0)
    def _():
        h_sc[...] = jnp.zeros(h_sc.shape, h_sc.dtype)
        c_sc[...] = jnp.zeros(c_sc.shape, c_sc.dtype)
        max_sc[...] = jnp.full(max_sc.shape, -jnp.inf, max_sc.dtype)
        sum_sc[...] = jnp.zeros(sum_sc.shape, sum_sc.dtype)

    pre_sc[...] = (jnp.dot(x_ref[...], wih_ref[...],
                           preferred_element_type=jnp.float32)
                   + b_ref[...])

    def step(t, carry):
        h, c, mx, sm = carry                           # all f32, vreg-resident
        r0 = pl.multiple_of(t * B, B)
        gates = (pre_sc[pl.ds(r0, B), :]
                 + jnp.dot(h.astype(jnp.bfloat16), whh_ref[...],
                           preferred_element_type=jnp.float32))
        ifo = jax.nn.sigmoid(gates[:, 0:3 * H])
        g = jnp.tanh(gates[:, 3 * H:4 * H])
        c = ifo[:, H:2 * H] * c + ifo[:, 0:H] * g
        h = ifo[:, 2 * H:3 * H] * jnp.tanh(c)
        mx = jnp.maximum(mx, h)                        # adaptive_max_pool1d
        sm = sm + h                                    # adaptive_avg_pool1d
        return h, c, mx, sm

    h, c, mx, sm = lax.fori_loop(
        0, t_steps, step,
        (h_sc[...], c_sc[...], max_sc[...], sum_sc[...]),
        unroll=t_steps if t_steps <= 8 else 4)
    h_sc[...] = h
    c_sc[...] = c
    max_sc[...] = mx
    sum_sc[...] = sm

    # Head epilogue on the final time chunk: concat([last, max, avg]) @ Wd is
    # expressed as three partial bf16 matmuls of the split decode weight.
    # NOTE: the constant-index output block is written ONLY here (revisited
    # accumulator); do not change out_specs/grid without revisiting this.
    @pl.when(ti == pl.num_programs(0) - 1)
    def _():
        last = h.astype(jnp.bfloat16)
        maxp = mx.astype(jnp.bfloat16)
        avgp = (sm * (1.0 / float(seq_len))).astype(jnp.bfloat16)
        hid = (jnp.dot(last, wd1_ref[...], preferred_element_type=jnp.float32)
               + jnp.dot(maxp, wd2_ref[...], preferred_element_type=jnp.float32)
               + jnp.dot(avgp, wd3_ref[...], preferred_element_type=jnp.float32)
               + bd_ref[...])
        hid = jnp.maximum(hid, 0.0)                    # ReLU
        out_ref[...] = (jnp.dot(hid.astype(jnp.bfloat16), wo_ref[...],
                                preferred_element_type=jnp.float32)
                        + bo_ref[...]).astype(out_ref.dtype)


def lstm_head_pallas(x_2d, w_ih, w_hh, b, wd1, wd2, wd3, bd, wo, bo,
                     *, batch, t_chunk=None):
    TB, D = x_2d.shape
    Bp = batch
    T = TB // Bp
    Hp = w_hh.shape[0]
    H2 = wd1.shape[1]
    C = wo.shape[1]
    vmem_limit = _vmem_limit_bytes()
    Tt = _pick_time_chunk(T, Bp, D, Hp, t_chunk, vmem_limit)
    nt = T // Tt
    kernel = functools.partial(_lstm_head_kernel, batch=Bp, t_steps=Tt,
                               seq_len=T)
    return pl.pallas_call(
        kernel,
        out_shape=jax.ShapeDtypeStruct((Bp, C), jnp.float32),
        grid=(nt,),
        in_specs=[
            pl.BlockSpec((Tt * Bp, D), lambda ti: (ti, 0)),
            pl.BlockSpec((D, 4 * Hp), lambda ti: (0, 0)),
            pl.BlockSpec((Hp, 4 * Hp), lambda ti: (0, 0)),
            pl.BlockSpec((1, 4 * Hp), lambda ti: (0, 0)),
            pl.BlockSpec((Hp, H2), lambda ti: (0, 0)),
            pl.BlockSpec((Hp, H2), lambda ti: (0, 0)),
            pl.BlockSpec((Hp, H2), lambda ti: (0, 0)),
            pl.BlockSpec((1, H2), lambda ti: (0, 0)),
            pl.BlockSpec((H2, C), lambda ti: (0, 0)),
            pl.BlockSpec((1, C), lambda ti: (0, 0)),
        ],
        # Output block constant across time -> resident, written only in the
        # last-chunk epilogue.
        out_specs=pl.BlockSpec((Bp, C), lambda ti: (0, 0)),
        scratch_shapes=[
            pltpu.VMEM((Tt * Bp, 4 * Hp), jnp.float32),   # pre-gates
            pltpu.VMEM((Bp, Hp), jnp.float32),            # h (== last timestep)
            pltpu.VMEM((Bp, Hp), jnp.float32),            # c
            pltpu.VMEM((Bp, Hp), jnp.float32),            # running max
            pltpu.VMEM((Bp, Hp), jnp.float32),            # running sum
        ],
        compiler_params=pltpu.CompilerParams(
            dimension_semantics=("arbitrary",),
            vmem_limit_bytes=vmem_limit),
    )(x_2d, w_ih, w_hh, b, wd1, wd2, wd3, bd, wo, bo)


# --------------------------- parameter construction ----------------------------

def init_params(key, nf, nh, ncl, n_classes):
    """PyTorch-layout logical params: LSTM weights (4H, Din)/(4H, H), gate order
    [i, f, g, o]; Linear weights (out, in)."""
    bound = 1.0 / (nh ** 0.5)

    def unif(k, shape):
        return jax.random.uniform(k, shape, jnp.float32, -bound, bound)

    n_lstm = ncl + 1
    keys = jax.random.split(key, n_lstm + 2)

    def lstm_p(k, din):
        k1, k2, k3, k4 = jax.random.split(k, 4)
        return (unif(k1, (4 * nh, din)), unif(k2, (4 * nh, nh)),
                unif(k3, (4 * nh,)), unif(k4, (4 * nh,)))

    params = {"encode": lstm_p(keys[0], nf),
              "cores": [lstm_p(keys[1 + l], nh) for l in range(ncl)]}
    nh2 = nh // 2
    kd1, kd2 = jax.random.split(keys[n_lstm])
    ko1, ko2 = jax.random.split(keys[n_lstm + 1])
    params["decode"] = (unif(kd1, (nh2, 3 * nh)), unif(kd2, (nh2,)))
    params["out"] = (unif(ko1, (n_classes, nh2)), unif(ko2, (n_classes,)))
    return params


def _pack_lstm(w_ih, w_hh, b_ih, b_hh, *, Hp, in_dim_p):
    """PyTorch [i,f,g,o] rows -> kernel layout: transposed, gate columns packed
    as [i,f,o,g] with each gate padded to Hp lanes; input dim padded to
    in_dim_p; weights bf16, folded bias f32.  Zero padding is inert: padded
    g pre-activations are 0 => padded c/h stay exactly 0."""
    def regroup_w(w, din_p):
        wi, wf, wg, wo = jnp.split(w, 4, axis=0)               # each (H, Din)
        w4 = jnp.concatenate([_pad_axis(g, 0, Hp) for g in (wi, wf, wo, wg)], 0)
        return _pad_axis(jnp.transpose(w4), 0, din_p).astype(jnp.bfloat16)

    def regroup_b(bv):
        bi, bf, bg, bo = jnp.split(bv, 4)
        return jnp.concatenate([_pad_axis(g, 0, Hp) for g in (bi, bf, bo, bg)])

    wih = regroup_w(w_ih, din_p=in_dim_p)                      # (Dp, 4Hp)
    whh = regroup_w(w_hh, din_p=Hp)                            # (Hp, 4Hp)
    bias = (regroup_b(b_ih) + regroup_b(b_hh)).reshape(1, 4 * Hp)
    return wih, whh, bias.astype(jnp.float32)


def pack_params(params, nf, nh):
    """Logical (PyTorch-layout) params -> padded, gate-reordered kernel params."""
    Hp = _round_up(nh, _LANE)
    packed = {
        "encode": _pack_lstm(*params["encode"], Hp=Hp, in_dim_p=nf),
        "cores": [_pack_lstm(*p, Hp=Hp, in_dim_p=Hp) for p in params["cores"]],
    }
    wd, bd = params["decode"]                                  # (H2, 3H), (H2,)
    wd1, wd2, wd3 = wd[:, 0:nh], wd[:, nh:2 * nh], wd[:, 2 * nh:3 * nh]
    packed["decode"] = tuple(
        _pad_axis(jnp.transpose(w), 0, Hp).astype(jnp.bfloat16)
        for w in (wd1, wd2, wd3)) + (bd.reshape(1, -1).astype(jnp.float32),)
    wo, bo = params["out"]                                     # (C, H2), (C,)
    packed["out"] = (jnp.transpose(wo).astype(jnp.bfloat16),
                     bo.reshape(1, -1).astype(jnp.float32))
    return packed


# ------------------------------- full forward ----------------------------------

@functools.partial(jax.jit, static_argnames=("t_chunk",))
def lstm_cls_forward(x_btd, packed, *, t_chunk=None):
    # x_btd: (B, T, nf), batch_first like PyTorch.
    B, T, nf = x_btd.shape
    Bp = _round_up(B, _SUBLANE)
    # batch_first -> padded time-major 2-D slab (row = t*Bp + b), bf16.
    # TODO(synk): fold this transpose into the first layer's BlockSpec.
    x = jnp.transpose(x_btd, (1, 0, 2)).astype(jnp.float32)    # (T, B, nf)
    x = _pad_axis(x, 1, Bp).reshape(T * Bp, nf).astype(jnp.bfloat16)
    layers = [packed["encode"]] + list(packed["cores"])
    for (w_ih, w_hh, b) in layers[:-1]:
        # rnn_dropout is identity in eval mode.
        x = lstm_layer_pallas(x, w_ih, w_hh, b, batch=Bp, t_chunk=t_chunk)
    w_ih, w_hh, b = layers[-1]
    wd1, wd2, wd3, bd = packed["decode"]
    wo, bo = packed["out"]
    out = lstm_head_pallas(x, w_ih, w_hh, b, wd1, wd2, wd3, bd, wo, bo,
                           batch=Bp, t_chunk=t_chunk)          # (Bp, n_classes)
    return out[:B]                                             # drop batch pad


# ------------------------------ pure-JAX reference ------------------------------

def lstm_layer_ref(x_tbd, w_ih, w_hh, b_ih, b_hh):
    """x_tbd: (T,B,D) f32 -> (T,B,H) f32; mirrors the kernel's bf16 matmuls."""
    T, B, D = x_tbd.shape
    H = w_hh.shape[1]
    wih = jnp.transpose(w_ih).astype(jnp.bfloat16)             # (D, 4H)
    whh = jnp.transpose(w_hh).astype(jnp.bfloat16)             # (H, 4H)
    bias = (b_ih + b_hh).astype(jnp.float32)
    pre = jnp.dot(x_tbd.astype(jnp.bfloat16).reshape(T * B, D), wih,
                  preferred_element_type=jnp.float32).reshape(T, B, 4 * H) + bias
    h = jnp.zeros((B, H), jnp.float32)
    c = jnp.zeros((B, H), jnp.float32)
    outs = []
    for t in range(T):
        gates = pre[t] + jnp.dot(h.astype(jnp.bfloat16), whh,
                                 preferred_element_type=jnp.float32)
        i = jax.nn.sigmoid(gates[:, 0:H])
        f = jax.nn.sigmoid(gates[:, H:2 * H])
        g = jnp.tanh(gates[:, 2 * H:3 * H])
        o = jax.nn.sigmoid(gates[:, 3 * H:4 * H])
        c = f * c + i * g
        h = o * jnp.tanh(c)
        outs.append(h)
    return jnp.stack(outs, axis=0)


def lstm_cls_ref(x_btd, params):
    x = jnp.transpose(x_btd, (1, 0, 2)).astype(jnp.float32)    # (T, B, nf)
    layers = [params["encode"]] + list(params["cores"])
    for p in layers:
        x = lstm_layer_ref(x, *p)
    last = x[-1]                                               # (B, H)
    maxp = jnp.max(x, axis=0)
    avgp = jnp.mean(x, axis=0)
    wd, bd = params["decode"]
    wo, bo = params["out"]
    feats = jnp.concatenate([last, maxp, avgp], axis=1).astype(jnp.bfloat16)
    hid = jnp.dot(feats, jnp.transpose(wd).astype(jnp.bfloat16),
                  preferred_element_type=jnp.float32) + bd
    hid = jnp.maximum(hid, 0.0)
    return jnp.dot(hid.astype(jnp.bfloat16), jnp.transpose(wo).astype(jnp.bfloat16),
                   preferred_element_type=jnp.float32) + bo


# ------------------------------------ main --------------------------------------

if __name__ == "__main__":
    B, T = 2, 8
    nf, nh, ncl, n_classes = 16, 32, 2, 2

    key = jax.random.PRNGKey(0)
    kx, kp = jax.random.split(key)
    x = jax.random.normal(kx, (B, T, nf), jnp.float32)
    params = init_params(kp, nf, nh, ncl, n_classes)
    packed = pack_params(params, nf, nh)

    ref = lstm_cls_ref(x, params)

    # t_chunk=4 -> 2 time chunks per layer: exercises the streamed grid and the
    # cross-chunk carry of h/c (and max/sum) through VMEM scratch.
    out_chunked = jax.block_until_ready(lstm_cls_forward(x, packed, t_chunk=4))
    # Default: VMEM-budget-derived chunk (whole sequence in one chunk here).
    out_auto = jax.block_until_ready(lstm_cls_forward(x, packed))

    for out in (out_chunked, out_auto):
        assert out.shape == (B, n_classes), out.shape
        err = float(jnp.max(jnp.abs(out - ref)))
        assert jnp.allclose(out, ref, atol=5e-3, rtol=5e-3), f"max abs err {err}"

    print("KERNEL_OK")
</pallas_src>

<mosaic_0001>
module attributes {stable_mosaic.version = 11 : i64} {
  func.func @_lstm_layer_kernel(%arg0: i32, %arg1: memref<32x16xbf16, #tpu.memory_space<vmem>>, %arg2: memref<16x512xbf16, #tpu.memory_space<vmem>>, %arg3: memref<128x512xbf16, #tpu.memory_space<vmem>>, %arg4: memref<1x512xf32, #tpu.memory_space<vmem>>, %arg5: memref<32x128xbf16, #tpu.memory_space<vmem>>, %arg6: memref<32x512xf32, #tpu.memory_space<vmem>>, %arg7: memref<8x128xf32, #tpu.memory_space<vmem>>, %arg8: memref<8x128xf32, #tpu.memory_space<vmem>>) attributes {dimension_semantics = [#tpu.dimension_semantics<arbitrary>], iteration_bounds = array<i64: 2>, scalar_prefetch = 0 : i64, scratch_operands = 3 : i64, tpu.core_type = #tpu.core_type<tc>, window_params = [{transform_indices = @transform_0, window_bounds = array<i64: 32, 16>}, {pipeline_mode = #tpu.pipeline_mode<synchronous>, transform_indices = @transform_1, window_bounds = array<i64: 16, 512>}, {pipeline_mode = #tpu.pipeline_mode<synchronous>, transform_indices = @transform_2, window_bounds = array<i64: 128, 512>}, {pipeline_mode = #tpu.pipeline_mode<synchronous>, transform_indices = @transform_3, window_bounds = array<i64: 1, 512>}, {transform_indices = @transform_4, window_bounds = array<i64: 32, 128>}]} {
    %c0_i32 = arith.constant 0 : i32
    %0 = arith.cmpi eq, %arg0, %c0_i32 : i32
    %1 = arith.extui %0 : i1 to i32
    %c0_i32_0 = arith.constant 0 : i32
    %2 = arith.cmpi ne, %1, %c0_i32_0 : i32
    scf.if %2 {
      %cst_44 = arith.constant 0.000000e+00 : f32
      %122 = vector.broadcast %cst_44 : f32 to vector<8x128xf32>
      %c0_45 = arith.constant 0 : index
      %c0_46 = arith.constant 0 : index
      %123 = vector.load %arg7[%c0_45, %c0_46] : memref<8x128xf32, #tpu.memory_space<vmem>>, vector<8x128xf32>
      tpu.vector_store %arg7[%c0_45, %c0_46], %122 {strides = array<i32>} : memref<8x128xf32, #tpu.memory_space<vmem>>, vector<8x128xf32>,
      %cst_47 = arith.constant 0.000000e+00 : f32
      %124 = vector.broadcast %cst_47 : f32 to vector<8x128xf32>
      %c0_48 = arith.constant 0 : index
      %c0_49 = arith.constant 0 : index
      %125 = vector.load %arg8[%c0_48, %c0_49] : memref<8x128xf32, #tpu.memory_space<vmem>>, vector<8x128xf32>
      tpu.vector_store %arg8[%c0_48, %c0_49], %124 {strides = array<i32>} : memref<8x128xf32, #tpu.memory_space<vmem>>, vector<8x128xf32>,
    } else {
    }
    %c0 = arith.constant 0 : index
    %c0_1 = arith.constant 0 : index
    %3 = vector.load %arg1[%c0, %c0_1] : memref<32x16xbf16, #tpu.memory_space<vmem>>, vector<32x16xbf16>
    %c0_2 = arith.constant 0 : index
    %c0_3 = arith.constant 0 : index
    %4 = vector.load %arg2[%c0_2, %c0_3] : memref<16x512xbf16, #tpu.memory_space<vmem>>, vector<16x512xbf16>
    %cst = arith.constant dense<0.000000e+00> : vector<32x512xf32>
    %5 = tpu.matmul %3, %4, %cst {dimension_numbers = #tpu.dot_dimension_numbers<[1], [0], [0], [1], [0, 0, 1, 1], [], []>} : vector<32x16xbf16>, vector<16x512xbf16>, vector<32x512xf32> -> vector<32x512xf32>
    %c0_4 = arith.constant 0 : index
    %c0_5 = arith.constant 0 : index
    %6 = vector.load %arg4[%c0_4, %c0_5] : memref<1x512xf32, #tpu.memory_space<vmem>>, vector<1x512xf32>
    %7 = vector.broadcast %6 : vector<1x512xf32> to vector<32x512xf32>
    %8 = arith.addf %5, %7 : vector<32x512xf32>
    %c0_6 = arith.constant 0 : index
    %c0_7 = arith.constant 0 : index
    %9 = vector.load %arg6[%c0_6, %c0_7] : memref<32x512xf32, #tpu.memory_space<vmem>>, vector<32x512xf32>
    tpu.vector_store %arg6[%c0_6, %c0_7], %8 {strides = array<i32>} : memref<32x512xf32, #tpu.memory_space<vmem>>, vector<32x512xf32>,
    %c0_8 = arith.constant 0 : index
    %c0_9 = arith.constant 0 : index
    %10 = vector.load %arg7[%c0_8, %c0_9] : memref<8x128xf32, #tpu.memory_space<vmem>>, vector<8x128xf32>
    %c0_10 = arith.constant 0 : index
    %c0_11 = arith.constant 0 : index
    %11 = vector.load %arg8[%c0_10, %c0_11] : memref<8x128xf32, #tpu.memory_space<vmem>>, vector<8x128xf32>
    %c0_i32_12 = arith.constant 0 : i32
    %c8_i32 = arith.constant 8 : i32
    %12 = arith.muli %c0_i32_12, %c8_i32 : i32
    %13 = tpu.assume_multiple %12, 8 : i32
    %14 = arith.index_cast %13 : i32 to index
    %c0_13 = arith.constant 0 : index
    %15 = vector.load %arg6[%14, %c0_13] : memref<32x512xf32, #tpu.memory_space<vmem>>, vector<8x512xf32>
    %16 = arith.truncf %10 : vector<8x128xf32> to vector<8x128xbf16>
    %c0_14 = arith.constant 0 : index
    %c0_15 = arith.constant 0 : index
    %17 = vector.load %arg3[%c0_14, %c0_15] : memref<128x512xbf16, #tpu.memory_space<vmem>>, vector<128x512xbf16>
    %cst_16 = arith.constant dense<0.000000e+00> : vector<8x512xf32>
    %18 = tpu.matmul %16, %17, %cst_16 {dimension_numbers = #tpu.dot_dimension_numbers<[1], [0], [0], [1], [0, 0, 1, 1], [], []>} : vector<8x128xbf16>, vector<128x512xbf16>, vector<8x512xf32> -> vector<8x512xf32>
    %19 = arith.addf %15, %18 : vector<8x512xf32>
    %20 = vector.extract_strided_slice %19 {offsets = [0, 0], sizes = [8, 384], strides = [1, 1]} : vector<8x512xf32> to vector<8x384xf32>
    %21 = arith.negf %20 : vector<8x384xf32>
    %22 = math.exp %21 : vector<8x384xf32>
    %cst_17 = arith.constant 1.000000e+00 : f32
    %23 = vector.broadcast %cst_17 : f32 to vector<8x384xf32>
    %24 = arith.addf %23, %22 : vector<8x384xf32>
    %25 = arith.divf %23, %24 : vector<8x384xf32>
    %26 = vector.extract_strided_slice %19 {offsets = [0, 384], sizes = [8, 128], strides = [1, 1]} : vector<8x512xf32> to vector<8x128xf32>
    %27 = math.tanh %26 : vector<8x128xf32>
    %28 = vector.extract_strided_slice %25 {offsets = [0, 128], sizes = [8, 128], strides = [1, 1]} : vector<8x384xf32> to vector<8x128xf32>
    %29 = arith.mulf %28, %11 : vector<8x128xf32>
    %30 = vector.extract_strided_slice %25 {offsets = [0, 0], sizes = [8, 128], strides = [1, 1]} : vector<8x384xf32> to vector<8x128xf32>
    %31 = arith.mulf %30, %27 : vector<8x128xf32>
    %32 = arith.addf %29, %31 : vector<8x128xf32>
    %33 = vector.extract_strided_slice %25 {offsets = [0, 256], sizes = [8, 128], strides = [1, 1]} : vector<8x384xf32> to vector<8x128xf32>
    %34 = math.tanh %32 : vector<8x128xf32>
    %35 = arith.mulf %33, %34 : vector<8x128xf32>
    %36 = arith.truncf %35 : vector<8x128xf32> to vector<8x128xbf16>
    %37 = arith.index_cast %13 : i32 to index
    %c0_18 = arith.constant 0 : index
    %38 = vector.load %arg5[%37, %c0_18] : memref<32x128xbf16, #tpu.memory_space<vmem>>, vector<8x128xbf16>
    tpu.vector_store %arg5[%37, %c0_18], %36 {strides = array<i32>} : memref<32x128xbf16, #tpu.memory_space<vmem>>, vector<8x128xbf16>,
    %c1_i32 = arith.constant 1 : i32
    %c8_i32_19 = arith.constant 8 : i32
    %39 = arith.muli %c1_i32, %c8_i32_19 : i32
    %40 = tpu.assume_multiple %39, 8 : i32
    %41 = arith.index_cast %40 : i32 to index
    %c0_20 = arith.constant 0 : index
    %42 = vector.load %arg6[%41, %c0_20] : memref<32x512xf32, #tpu.memory_space<vmem>>, vector<8x512xf32>
    %43 = arith.truncf %35 : vector<8x128xf32> to vector<8x128xbf16>
    %c0_21 = arith.constant 0 : index
    %c0_22 = arith.constant 0 : index
    %44 = vector.load %arg3[%c0_21, %c0_22] : memref<128x512xbf16, #tpu.memory_space<vmem>>, vector<128x512xbf16>
    %cst_23 = arith.constant dense<0.000000e+00> : vector<8x512xf32>
    %45 = tpu.matmul %43, %44, %cst_23 {dimension_numbers = #tpu.dot_dimension_numbers<[1], [0], [0], [1], [0, 0, 1, 1], [], []>} : vector<8x128xbf16>, vector<128x512xbf16>, vector<8x512xf32> -> vector<8x512xf32>
    %46 = arith.addf %42, %45 : vector<8x512xf32>
    %47 = vector.extract_strided_slice %46 {offsets = [0, 0], sizes = [8, 384], strides = [1, 1]} : vector<8x512xf32> to vector<8x384xf32>
    %48 = arith.negf %47 : vector<8x384xf32>
    %49 = math.exp %48 : vector<8x384xf32>
    %cst_24 = arith.constant 1.000000e+00 : f32
    %50 = vector.broadcast %cst_24 : f32 to vector<8x384xf32>
    %51 = arith.addf %50, %49 : vector<8x384xf32>
    %52 = arith.divf %50, %51 : vector<8x384xf32>
    %53 = vector.extract_strided_slice %46 {offsets = [0, 384], sizes = [8, 128], strides = [1, 1]} : vector<8x512xf32> to vector<8x128xf32>
    %54 = math.tanh %53 : vector<8x128xf32>
    %55 = vector.extract_strided_slice %52 {offsets = [0, 128], sizes = [8, 128], strides = [1, 1]} : vector<8x384xf32> to vector<8x128xf32>
    %56 = arith.mulf %55, %32 : vector<8x128xf32>
    %57 = vector.extract_strided_slice %52 {offsets = [0, 0], sizes = [8, 128], strides = [1, 1]} : vector<8x384xf32> to vector<8x128xf32>
    %58 = arith.mulf %57, %54 : vector<8x128xf32>
    %59 = arith.addf %56, %58 : vector<8x128xf32>
    %60 = vector.extract_strided_slice %52 {offsets = [0, 256], sizes = [8, 128], strides = [1, 1]} : vector<8x384xf32> to vector<8x128xf32>
    %61 = math.tanh %59 : vector<8x128xf32>
    %62 = arith.mulf %60, %61 : vector<8x128xf32>
    %63 = arith.truncf %62 : vector<8x128xf32> to vector<8x128xbf16>
    %64 = arith.index_cast %40 : i32 to index
    %c0_25 = arith.constant 0 : index
    %65 = vector.load %arg5[%64, %c0_25] : memref<32x128xbf16, #tpu.memory_space<vmem>>, vector<8x128xbf16>
    tpu.vector_store %arg5[%64, %c0_25], %63 {strides = array<i32>} : memref<32x128xbf16, #tpu.memory_space<vmem>>, vector<8x128xbf16>,
    %c2_i32 = arith.constant 2 : i32
    %c8_i32_26 = arith.constant 8 : i32
    %66 = arith.muli %c2_i32, %c8_i32_26 : i32
    %67 = tpu.assume_multiple %66, 8 : i32
    %68 = arith.index_cast %67 : i32 to index
    %c0_27 = arith.constant 0 : index
    %69 = vector.load %arg6[%68, %c0_27] : memref<32x512xf32, #tpu.memory_space<vmem>>, vector<8x512xf32>
    %70 = arith.truncf %62 : vector<8x128xf32> to vector<8x128xbf16>
    %c0_28 = arith.constant 0 : index
    %c0_29 = arith.constant 0 : index
    %71 = vector.load %arg3[%c0_28, %c0_29] : memref<128x512xbf16, #tpu.memory_space<vmem>>, vector<128x512xbf16>
    %cst_30 = arith.constant dense<0.000000e+00> : vector<8x512xf32>
    %72 = tpu.matmul %70, %71, %cst_30 {dimension_numbers = #tpu.dot_dimension_numbers<[1], [0], [0], [1], [0, 0, 1, 1], [], []>} : vector<8x128xbf16>, vector<128x512xbf16>, vector<8x512xf32> -> vector<8x512xf32>
    %73 = arith.addf %69, %72 : vector<8x512xf32>
    %74 = vector.extract_strided_slice %73 {offsets = [0, 0], sizes = [8, 384], strides = [1, 1]} : vector<8x512xf32> to vector<8x384xf32>
    %75 = arith.negf %74 : vector<8x384xf32>
    %76 = math.exp %75 : vector<8x384xf32>
    %cst_31 = arith.constant 1.000000e+00 : f32
    %77 = vector.broadcast %cst_31 : f32 to vector<8x384xf32>
    %78 = arith.addf %77, %76 : vector<8x384xf32>
    %79 = arith.divf %77, %78 : vector<8x384xf32>
    %80 = vector.extract_strided_slice %73 {offsets = [0, 384], sizes = [8, 128], strides = [1, 1]} : vector<8x512xf32> to vector<8x128xf32>
    %81 = math.tanh %80 : vector<8x128xf32>
    %82 = vector.extract_strided_slice %79 {offsets = [0, 128], sizes = [8, 128], strides = [1, 1]} : vector<8x384xf32> to vector<8x128xf32>
    %83 = arith.mulf %82, %59 : vector<8x128xf32>
    %84 = vector.extract_strided_slice %79 {offsets = [0, 0], sizes = [8, 128], strides = [1, 1]} : vector<8x384xf32> to vector<8x128xf32>
    %85 = arith.mulf %84, %81 : vector<8x128xf32>
    %86 = arith.addf %83, %85 : vector<8x128xf32>
    %87 = vector.extract_strided_slice %79 {offsets = [0, 256], sizes = [8, 128], strides = [1, 1]} : vector<8x384xf32> to vector<8x128xf32>
    %88 = math.tanh %86 : vector<8x128xf32>
    %89 = arith.mulf %87, %88 : vector<8x128xf32>
    %90 = arith.truncf %89 : vector<8x128xf32> to vector<8x128xbf16>
    %91 = arith.index_cast %67 : i32 to index
    %c0_32 = arith.constant 0 : index
    %92 = vector.load %arg5[%91, %c0_32] : memref<32x128xbf16, #tpu.memory_space<vmem>>, vector<8x128xbf16>
    tpu.vector_store %arg5[%91, %c0_32], %90 {strides = array<i32>} : memref<32x128xbf16, #tpu.memory_space<vmem>>, vector<8x128xbf16>,
    %c3_i32 = arith.constant 3 : i32
    %c8_i32_33 = arith.constant 8 : i32
    %93 = arith.muli %c3_i32, %c8_i32_33 : i32
    %94 = tpu.assume_multiple %93, 8 : i32
    %95 = arith.index_cast %94 : i32 to index
    %c0_34 = arith.constant 0 : index
    %96 = vector.load %arg6[%95, %c0_34] : memref<32x512xf32, #tpu.memory_space<vmem>>, vector<8x512xf32>
    %97 = arith.truncf %89 : vector<8x128xf32> to vector<8x128xbf16>
    %c0_35 = arith.constant 0 : index
    %c0_36 = arith.constant 0 : index
    %98 = vector.load %arg3[%c0_35, %c0_36] : memref<128x512xbf16, #tpu.memory_space<vmem>>, vector<128x512xbf16>
    %cst_37 = arith.constant dense<0.000000e+00> : vector<8x512xf32>
    %99 = tpu.matmul %97, %98, %cst_37 {dimension_numbers = #tpu.dot_dimension_numbers<[1], [0], [0], [1], [0, 0, 1, 1], [], []>} : vector<8x128xbf16>, vector<128x512xbf16>, vector<8x512xf32> -> vector<8x512xf32>
    %100 = arith.addf %96, %99 : vector<8x512xf32>
    %101 = vector.extract_strided_slice %100 {offsets = [0, 0], sizes = [8, 384], strides = [1, 1]} : vector<8x512xf32> to vector<8x384xf32>
    %102 = arith.negf %101 : vector<8x384xf32>
    %103 = math.exp %102 : vector<8x384xf32>
    %cst_38 = arith.constant 1.000000e+00 : f32
    %104 = vector.broadcast %cst_38 : f32 to vector<8x384xf32>
    %105 = arith.addf %104, %103 : vector<8x384xf32>
    %106 = arith.divf %104, %105 : vector<8x384xf32>
    %107 = vector.extract_strided_slice %100 {offsets = [0, 384], sizes = [8, 128], strides = [1, 1]} : vector<8x512xf32> to vector<8x128xf32>
    %108 = math.tanh %107 : vector<8x128xf32>
    %109 = vector.extract_strided_slice %106 {offsets = [0, 128], sizes = [8, 128], strides = [1, 1]} : vector<8x384xf32> to vector<8x128xf32>
    %110 = arith.mulf %109, %86 : vector<8x128xf32>
    %111 = vector.extract_strided_slice %106 {offsets = [0, 0], sizes = [8, 128], strides = [1, 1]} : vector<8x384xf32> to vector<8x128xf32>
    %112 = arith.mulf %111, %108 : vector<8x128xf32>
    %113 = arith.addf %110, %112 : vector<8x128xf32>
    %114 = vector.extract_strided_slice %106 {offsets = [0, 256], sizes = [8, 128], strides = [1, 1]} : vector<8x384xf32> to vector<8x128xf32>
    %115 = math.tanh %113 : vector<8x128xf32>
    %116 = arith.mulf %114, %115 : vector<8x128xf32>
    %117 = arith.truncf %116 : vector<8x128xf32> to vector<8x128xbf16>
    %118 = arith.index_cast %94 : i32 to index
    %c0_39 = arith.constant 0 : index
    %119 = vector.load %arg5[%118, %c0_39] : memref<32x128xbf16, #tpu.memory_space<vmem>>, vector<8x128xbf16>
    tpu.vector_store %arg5[%118, %c0_39], %117 {strides = array<i32>} : memref<32x128xbf16, #tpu.memory_space<vmem>>, vector<8x128xbf16>,
    %c4_i32 = arith.constant 4 : i32
    %c0_40 = arith.constant 0 : index
    %c0_41 = arith.constant 0 : index
    %120 = vector.load %arg7[%c0_40, %c0_41] : memref<8x128xf32, #tpu.memory_space<vmem>>, vector<8x128xf32>
    tpu.vector_store %arg7[%c0_40, %c0_41], %116 {strides = array<i32>} : memref<8x128xf32, #tpu.memory_space<vmem>>, vector<8x128xf32>,
    %c0_42 = arith.constant 0 : index
    %c0_43 = arith.constant 0 : index
    %121 = vector.load %arg8[%c0_42, %c0_43] : memref<8x128xf32, #tpu.memory_space<vmem>>, vector<8x128xf32>
    tpu.vector_store %arg8[%c0_42, %c0_43], %113 {strides = array<i32>} : memref<8x128xf32, #tpu.memory_space<vmem>>, vector<8x128xf32>,
    return
  }
  func.func @transform_0(%arg0: i32) -> (i32, i32) {
    %c0_i32 = arith.constant 0 : i32
    %c0_i32_0 = arith.constant 0 : i32
    return %arg0, %c0_i32 : i32, i32
  }
  func.func @transform_1(%arg0: i32) -> (i32, i32) {
    %c0_i32 = arith.constant 0 : i32
    %c0_i32_0 = arith.constant 0 : i32
    %c0_i32_1 = arith.constant 0 : i32
    return %c0_i32, %c0_i32_0 : i32, i32
  }
  func.func @transform_2(%arg0: i32) -> (i32, i32) {
    %c0_i32 = arith.constant 0 : i32
    %c0_i32_0 = arith.constant 0 : i32
    %c0_i32_1 = arith.constant 0 : i32
    return %c0_i32, %c0_i32_0 : i32, i32
  }
  func.func @transform_3(%arg0: i32) -> (i32, i32) {
    %c0_i32 = arith.constant 0 : i32
    %c0_i32_0 = arith.constant 0 : i32
    %c0_i32_1 = arith.constant 0 : i32
    return %c0_i32, %c0_i32_0 : i32, i32
  }
  func.func @transform_4(%arg0: i32) -> (i32, i32) {
    %c0_i32 = arith.constant 0 : i32
    %c0_i32_0 = arith.constant 0 : i32
    return %arg0, %c0_i32 : i32, i32
  }
}

module attributes {stable_mosaic.version = 11 : i64} {
  func.func @_lstm_head_kernel(%arg0: i32, %arg1: memref<32x128xbf16, #tpu.memory_space<vmem>>, %arg2: memref<128x512xbf16, #tpu.memory_space<vmem>>, %arg3: memref<128x512xbf16, #tpu.memory_space<vmem>>, %arg4: memref<1x512xf32, #tpu.memory_space<vmem>>, %arg5: memref<128x16xbf16, #tpu.memory_space<vmem>>, %arg6: memref<128x16xbf16, #tpu.memory_space<vmem>>, %arg7: memref<128x16xbf16, #tpu.memory_space<vmem>>, %arg8: memref<1x16xf32, #tpu.memory_space<vmem>>, %arg9: memref<16x2xbf16, #tpu.memory_space<vmem>>, %arg10: memref<1x2xf32, #tpu.memory_space<vmem>>, %arg11: memref<8x2xf32, #tpu.memory_space<vmem>>, %arg12: memref<32x512xf32, #tpu.memory_space<vmem>>, %arg13: memref<8x128xf32, #tpu.memory_space<vmem>>, %arg14: memref<8x128xf32, #tpu.memory_space<vmem>>, %arg15: memref<8x128xf32, #tpu.memory_space<vmem>>, %arg16: memref<8x128xf32, #tpu.memory_space<vmem>>) attributes {dimension_semantics = [#tpu.dimension_semantics<arbitrary>], iteration_bounds = array<i64: 2>, scalar_prefetch = 0 : i64, scratch_operands = 5 : i64, tpu.core_type = #tpu.core_type<tc>, window_params = [{transform_indices = @transform_0, window_bounds = array<i64: 32, 128>}, {pipeline_mode = #tpu.pipeline_mode<synchronous>, transform_indices = @transform_1, window_bounds = array<i64: 128, 512>}, {pipeline_mode = #tpu.pipeline_mode<synchronous>, transform_indices = @transform_2, window_bounds = array<i64: 128, 512>}, {pipeline_mode = #tpu.pipeline_mode<synchronous>, transform_indices = @transform_3, window_bounds = array<i64: 1, 512>}, {pipeline_mode = #tpu.pipeline_mode<synchronous>, transform_indices = @transform_4, window_bounds = array<i64: 128, 16>}, {pipeline_mode = #tpu.pipeline_mode<synchronous>, transform_indices = @transform_5, window_bounds = array<i64: 128, 16>}, {pipeline_mode = #tpu.pipeline_mode<synchronous>, transform_indices = @transform_6, window_bounds = array<i64: 128, 16>}, {pipeline_mode = #tpu.pipeline_mode<synchronous>, transform_indices = @transform_7, window_bounds = array<i64: 1, 16>}, {pipeline_mode = #tpu.pipeline_mode<synchronous>, transform_indices = @transform_8, window_bounds = array<i64: 16, 2>}, {pipeline_mode = #tpu.pipeline_mode<synchronous>, transform_indices = @transform_9, window_bounds = array<i64: 1, 2>}, {pipeline_mode = #tpu.pipeline_mode<synchronous>, transform_indices = @transform_10, window_bounds = array<i64: 8, 2>}]} {
    %c0_i32 = arith.constant 0 : i32
    %0 = arith.cmpi eq, %arg0, %c0_i32 : i32
    %1 = arith.extui %0 : i1 to i32
    %c0_i32_0 = arith.constant 0 : i32
    %2 = arith.cmpi ne, %1, %c0_i32_0 : i32
    scf.if %2 {
      %cst_50 = arith.constant 0.000000e+00 : f32
      %125 = vector.broadcast %cst_50 : f32 to vector<8x128xf32>
      %c0_51 = arith.constant 0 : index
      %c0_52 = arith.constant 0 : index
      %126 = vector.load %arg13[%c0_51, %c0_52] : memref<8x128xf32, #tpu.memory_space<vmem>>, vector<8x128xf32>
      tpu.vector_store %arg13[%c0_51, %c0_52], %125 {strides = array<i32>} : memref<8x128xf32, #tpu.memory_space<vmem>>, vector<8x128xf32>,
      %cst_53 = arith.constant 0.000000e+00 : f32
      %127 = vector.broadcast %cst_53 : f32 to vector<8x128xf32>
      %c0_54 = arith.constant 0 : index
      %c0_55 = arith.constant 0 : index
      %128 = vector.load %arg14[%c0_54, %c0_55] : memref<8x128xf32, #tpu.memory_space<vmem>>, vector<8x128xf32>
      tpu.vector_store %arg14[%c0_54, %c0_55], %127 {strides = array<i32>} : memref<8x128xf32, #tpu.memory_space<vmem>>, vector<8x128xf32>,
      %cst_56 = arith.constant 0xFF800000 : f32
      %129 = vector.broadcast %cst_56 : f32 to vector<8x128xf32>
      %c0_57 = arith.constant 0 : index
      %c0_58 = arith.constant 0 : index
      %130 = vector.load %arg15[%c0_57, %c0_58] : memref<8x128xf32, #tpu.memory_space<vmem>>, vector<8x128xf32>
      tpu.vector_store %arg15[%c0_57, %c0_58], %129 {strides = array<i32>} : memref<8x128xf32, #tpu.memory_space<vmem>>, vector<8x128xf32>,
      %cst_59 = arith.constant 0.000000e+00 : f32
      %131 = vector.broadcast %cst_59 : f32 to vector<8x128xf32>
      %c0_60 = arith.constant 0 : index
      %c0_61 = arith.constant 0 : index
      %132 = vector.load %arg16[%c0_60, %c0_61] : memref<8x128xf32, #tpu.memory_space<vmem>>, vector<8x128xf32>
      tpu.vector_store %arg16[%c0_60, %c0_61], %131 {strides = array<i32>} : memref<8x128xf32, #tpu.memory_space<vmem>>, vector<8x128xf32>,
    } else {
    }
    %c0 = arith.constant 0 : index
    %c0_1 = arith.constant 0 : index
    %3 = vector.load %arg1[%c0, %c0_1] : memref<32x128xbf16, #tpu.memory_space<vmem>>, vector<32x128xbf16>
    %c0_2 = arith.constant 0 : index
    %c0_3 = arith.constant 0 : index
    %4 = vector.load %arg2[%c0_2, %c0_3] : memref<128x512xbf16, #tpu.memory_space<vmem>>, vector<128x512xbf16>
    %cst = arith.constant dense<0.000000e+00> : vector<32x512xf32>
    %5 = tpu.matmul %3, %4, %cst {dimension_numbers = #tpu.dot_dimension_numbers<[1], [0], [0], [1], [0, 0, 1, 1], [], []>} : vector<32x128xbf16>, vector<128x512xbf16>, vector<32x512xf32> -> vector<32x512xf32>
    %c0_4 = arith.constant 0 : index
    %c0_5 = arith.constant 0 : index
    %6 = vector.load %arg4[%c0_4, %c0_5] : memref<1x512xf32, #tpu.memory_space<vmem>>, vector<1x512xf32>
    %7 = vector.broadcast %6 : vector<1x512xf32> to vector<32x512xf32>
    %8 = arith.addf %5, %7 : vector<32x512xf32>
    %c0_6 = arith.constant 0 : index
    %c0_7 = arith.constant 0 : index
    %9 = vector.load %arg12[%c0_6, %c0_7] : memref<32x512xf32, #tpu.memory_space<vmem>>, vector<32x512xf32>
    tpu.vector_store %arg12[%c0_6, %c0_7], %8 {strides = array<i32>} : memref<32x512xf32, #tpu.memory_space<vmem>>, vector<32x512xf32>,
    %c0_8 = arith.constant 0 : index
    %c0_9 = arith.constant 0 : index
    %10 = vector.load %arg13[%c0_8, %c0_9] : memref<8x128xf32, #tpu.memory_space<vmem>>, vector<8x128xf32>
    %c0_10 = arith.constant 0 : index
    %c0_11 = arith.constant 0 : index
    %11 = vector.load %arg14[%c0_10, %c0_11] : memref<8x128xf32, #tpu.memory_space<vmem>>, vector<8x128xf32>
    %c0_12 = arith.constant 0 : index
    %c0_13 = arith.constant 0 : index
    %12 = vector.load %arg15[%c0_12, %c0_13] : memref<8x128xf32, #tpu.memory_space<vmem>>, vector<8x128xf32>
    %c0_14 = arith.constant 0 : index
    %c0_15 = arith.constant 0 : index
    %13 = vector.load %arg16[%c0_14, %c0_15] : memref<8x128xf32, #tpu.memory_space<vmem>>, vector<8x128xf32>
    %c0_i32_16 = arith.constant 0 : i32
    %c8_i32 = arith.constant 8 : i32
    %14 = arith.muli %c0_i32_16, %c8_i32 : i32
    %15 = tpu.assume_multiple %14, 8 : i32
    %16 = arith.index_cast %15 : i32 to index
    %c0_17 = arith.constant 0 : index
    %17 = vector.load %arg12[%16, %c0_17] : memref<32x512xf32, #tpu.memory_space<vmem>>, vector<8x512xf32>
    %18 = arith.truncf %10 : vector<8x128xf32> to vector<8x128xbf16>
    %c0_18 = arith.constant 0 : index
    %c0_19 = arith.constant 0 : index
    %19 = vector.load %arg3[%c0_18, %c0_19] : memref<128x512xbf16, #tpu.memory_space<vmem>>, vector<128x512xbf16>
    %cst_20 = arith.constant dense<0.000000e+00> : vector<8x512xf32>
    %20 = tpu.matmul %18, %19, %cst_20 {dimension_numbers = #tpu.dot_dimension_numbers<[1], [0], [0], [1], [0, 0, 1, 1], [], []>} : vector<8x128xbf16>, vector<128x512xbf16>, vector<8x512xf32> -> vector<8x512xf32>
    %21 = arith.addf %17, %20 : vector<8x512xf32>
    %22 = vector.extract_strided_slice %21 {offsets = [0, 0], sizes = [8, 384], strides = [1, 1]} : vector<8x512xf32> to vector<8x384xf32>
    %23 = arith.negf %22 : vector<8x384xf32>
    %24 = math.exp %23 : vector<8x384xf32>
    %cst_21 = arith.constant 1.000000e+00 : f32
    %25 = vector.broadcast %cst_21 : f32 to vector<8x384xf32>
    %26 = arith.addf %25, %24 : vector<8x384xf32>
    %27 = arith.divf %25, %26 : vector<8x384xf32>
    %28 = vector.extract_strided_slice %21 {offsets = [0, 384], sizes = [8, 128], strides = [1, 1]} : vector<8x512xf32> to vector<8x128xf32>
    %29 = math.tanh %28 : vector<8x128xf32>
    %30 = vector.extract_strided_slice %27 {offsets = [0, 128], sizes = [8, 128], strides = [1, 1]} : vector<8x384xf32> to vector<8x128xf32>
    %31 = arith.mulf %30, %11 : vector<8x128xf32>
    %32 = vector.extract_strided_slice %27 {offsets = [0, 0], sizes = [8, 128], strides = [1, 1]} : vector<8x384xf32> to vector<8x128xf32>
    %33 = arith.mulf %32, %29 : vector<8x128xf32>
    %34 = arith.addf %31, %33 : vector<8x128xf32>
    %35 = vector.extract_strided_slice %27 {offsets = [0, 256], sizes = [8, 128], strides = [1, 1]} : vector<8x384xf32> to vector<8x128xf32>
    %36 = math.tanh %34 : vector<8x128xf32>
    %37 = arith.mulf %35, %36 : vector<8x128xf32>
    %38 = arith.maximumf %12, %37 : vector<8x128xf32>
    %39 = arith.addf %13, %37 : vector<8x128xf32>
    %c1_i32 = arith.constant 1 : i32
    %c8_i32_22 = arith.constant 8 : i32
    %40 = arith.muli %c1_i32, %c8_i32_22 : i32
    %41 = tpu.assume_multiple %40, 8 : i32
    %42 = arith.index_cast %41 : i32 to index
    %c0_23 = arith.constant 0 : index
    %43 = vector.load %arg12[%42, %c0_23] : memref<32x512xf32, #tpu.memory_space<vmem>>, vector<8x512xf32>
    %44 = arith.truncf %37 : vector<8x128xf32> to vector<8x128xbf16>
    %c0_24 = arith.constant 0 : index
    %c0_25 = arith.constant 0 : index
    %45 = vector.load %arg3[%c0_24, %c0_25] : memref<128x512xbf16, #tpu.memory_space<vmem>>, vector<128x512xbf16>
    %cst_26 = arith.constant dense<0.000000e+00> : vector<8x512xf32>
    %46 = tpu.matmul %44, %45, %cst_26 {dimension_numbers = #tpu.dot_dimension_numbers<[1], [0], [0], [1], [0, 0, 1, 1], [], []>} : vector<8x128xbf16>, vector<128x512xbf16>, vector<8x512xf32> -> vector<8x512xf32>
    %47 = arith.addf %43, %46 : vector<8x512xf32>
    %48 = vector.extract_strided_slice %47 {offsets = [0, 0], sizes = [8, 384], strides = [1, 1]} : vector<8x512xf32> to vector<8x384xf32>
    %49 = arith.negf %48 : vector<8x384xf32>
    %50 = math.exp %49 : vector<8x384xf32>
    %cst_27 = arith.constant 1.000000e+00 : f32
    %51 = vector.broadcast %cst_27 : f32 to vector<8x384xf32>
    %52 = arith.addf %51, %50 : vector<8x384xf32>
    %53 = arith.divf %51, %52 : vector<8x384xf32>
    %54 = vector.extract_strided_slice %47 {offsets = [0, 384], sizes = [8, 128], strides = [1, 1]} : vector<8x512xf32> to vector<8x128xf32>
    %55 = math.tanh %54 : vector<8x128xf32>
    %56 = vector.extract_strided_slice %53 {offsets = [0, 128], sizes = [8, 128], strides = [1, 1]} : vector<8x384xf32> to vector<8x128xf32>
    %57 = arith.mulf %56, %34 : vector<8x128xf32>
    %58 = vector.extract_strided_slice %53 {offsets = [0, 0], sizes = [8, 128], strides = [1, 1]} : vector<8x384xf32> to vector<8x128xf32>
    %59 = arith.mulf %58, %55 : vector<8x128xf32>
    %60 = arith.addf %57, %59 : vector<8x128xf32>
    %61 = vector.extract_strided_slice %53 {offsets = [0, 256], sizes = [8, 128], strides = [1, 1]} : vector<8x384xf32> to vector<8x128xf32>
    %62 = math.tanh %60 : vector<8x128xf32>
    %63 = arith.mulf %61, %62 : vector<8x128xf32>
    %64 = arith.maximumf %38, %63 : vector<8x128xf32>
    %65 = arith.addf %39, %63 : vector<8x128xf32>
    %c2_i32 = arith.constant 2 : i32
    %c8_i32_28 = arith.constant 8 : i32
    %66 = arith.muli %c2_i32, %c8_i32_28 : i32
    %67 = tpu.assume_multiple %66, 8 : i32
    %68 = arith.index_cast %67 : i32 to index
    %c0_29 = arith.constant 0 : index
    %69 = vector.load %arg12[%68, %c0_29] : memref<32x512xf32, #tpu.memory_space<vmem>>, vector<8x512xf32>
    %70 = arith.truncf %63 : vector<8x128xf32> to vector<8x128xbf16>
    %c0_30 = arith.constant 0 : index
    %c0_31 = arith.constant 0 : index
    %71 = vector.load %arg3[%c0_30, %c0_31] : memref<128x512xbf16, #tpu.memory_space<vmem>>, vector<128x512xbf16>
    %cst_32 = arith.constant dense<0.000000e+00> : vector<8x512xf32>
    %72 = tpu.matmul %70, %71, %cst_32 {dimension_numbers = #tpu.dot_dimension_numbers<[1], [0], [0], [1], [0, 0, 1, 1], [], []>} : vector<8x128xbf16>, vector<128x512xbf16>, vector<8x512xf32> -> vector<8x512xf32>
    %73 = arith.addf %69, %72 : vector<8x512xf32>
    %74 = vector.extract_strided_slice %73 {offsets = [0, 0], sizes = [8, 384], strides = [1, 1]} : vector<8x512xf32> to vector<8x384xf32>
    %75 = arith.negf %74 : vector<8x384xf32>
    %76 = math.exp %75 : vector<8x384xf32>
    %cst_33 = arith.constant 1.000000e+00 : f32
    %77 = vector.broadcast %cst_33 : f32 to vector<8x384xf32>
    %78 = arith.addf %77, %76 : vector<8x384xf32>
    %79 = arith.divf %77, %78 : vector<8x384xf32>
    %80 = vector.extract_strided_slice %73 {offsets = [0, 384], sizes = [8, 128], strides = [1, 1]} : vector<8x512xf32> to vector<8x128xf32>
    %81 = math.tanh %80 : vector<8x128xf32>
    %82 = vector.extract_strided_slice %79 {offsets = [0, 128], sizes = [8, 128], strides = [1, 1]} : vector<8x384xf32> to vector<8x128xf32>
    %83 = arith.mulf %82, %60 : vector<8x128xf32>
    %84 = vector.extract_strided_slice %79 {offsets = [0, 0], sizes = [8, 128], strides = [1, 1]} : vector<8x384xf32> to vector<8x128xf32>
    %85 = arith.mulf %84, %81 : vector<8x128xf32>
    %86 = arith.addf %83, %85 : vector<8x128xf32>
    %87 = vector.extract_strided_slice %79 {offsets = [0, 256], sizes = [8, 128], strides = [1, 1]} : vector<8x384xf32> to vector<8x128xf32>
    %88 = math.tanh %86 : vector<8x128xf32>
    %89 = arith.mulf %87, %88 : vector<8x128xf32>
    %90 = arith.maximumf %64, %89 : vector<8x128xf32>
    %91 = arith.addf %65, %89 : vector<8x128xf32>
    %c3_i32 = arith.constant 3 : i32
    %c8_i32_34 = arith.constant 8 : i32
    %92 = arith.muli %c3_i32, %c8_i32_34 : i32
    %93 = tpu.assume_multiple %92, 8 : i32
    %94 = arith.index_cast %93 : i32 to index
    %c0_35 = arith.constant 0 : index
    %95 = vector.load %arg12[%94, %c0_35] : memref<32x512xf32, #tpu.memory_space<vmem>>, vector<8x512xf32>
    %96 = arith.truncf %89 : vector<8x128xf32> to vector<8x128xbf16>
    %c0_36 = arith.constant 0 : index
    %c0_37 = arith.constant 0 : index
    %97 = vector.load %arg3[%c0_36, %c0_37] : memref<128x512xbf16, #tpu.memory_space<vmem>>, vector<128x512xbf16>
    %cst_38 = arith.constant dense<0.000000e+00> : vector<8x512xf32>
    %98 = tpu.matmul %96, %97, %cst_38 {dimension_numbers = #tpu.dot_dimension_numbers<[1], [0], [0], [1], [0, 0, 1, 1], [], []>} : vector<8x128xbf16>, vector<128x512xbf16>, vector<8x512xf32> -> vector<8x512xf32>
    %99 = arith.addf %95, %98 : vector<8x512xf32>
    %100 = vector.extract_strided_slice %99 {offsets = [0, 0], sizes = [8, 384], strides = [1, 1]} : vector<8x512xf32> to vector<8x384xf32>
    %101 = arith.negf %100 : vector<8x384xf32>
    %102 = math.exp %101 : vector<8x384xf32>
    %cst_39 = arith.constant 1.000000e+00 : f32
    %103 = vector.broadcast %cst_39 : f32 to vector<8x384xf32>
    %104 = arith.addf %103, %102 : vector<8x384xf32>
    %105 = arith.divf %103, %104 : vector<8x384xf32>
    %106 = vector.extract_strided_slice %99 {offsets = [0, 384], sizes = [8, 128], strides = [1, 1]} : vector<8x512xf32> to vector<8x128xf32>
    %107 = math.tanh %106 : vector<8x128xf32>
    %108 = vector.extract_strided_slice %105 {offsets = [0, 128], sizes = [8, 128], strides = [1, 1]} : vector<8x384xf32> to vector<8x128xf32>
    %109 = arith.mulf %108, %86 : vector<8x128xf32>
    %110 = vector.extract_strided_slice %105 {offsets = [0, 0], sizes = [8, 128], strides = [1, 1]} : vector<8x384xf32> to vector<8x128xf32>
    %111 = arith.mulf %110, %107 : vector<8x128xf32>
    %112 = arith.addf %109, %111 : vector<8x128xf32>
    %113 = vector.extract_strided_slice %105 {offsets = [0, 256], sizes = [8, 128], strides = [1, 1]} : vector<8x384xf32> to vector<8x128xf32>
    %114 = math.tanh %112 : vector<8x128xf32>
    %115 = arith.mulf %113, %114 : vector<8x128xf32>
    %116 = arith.maximumf %90, %115 : vector<8x128xf32>
    %117 = arith.addf %91, %115 : vector<8x128xf32>
    %c4_i32 = arith.constant 4 : i32
    %c0_40 = arith.constant 0 : index
    %c0_41 = arith.constant 0 : index
    %118 = vector.load %arg13[%c0_40, %c0_41] : memref<8x128xf32, #tpu.memory_space<vmem>>, vector<8x128xf32>
    tpu.vector_store %arg13[%c0_40, %c0_41], %115 {strides = array<i32>} : memref<8x128xf32, #tpu.memory_space<vmem>>, vector<8x128xf32>,
    %c0_42 = arith.constant 0 : index
    %c0_43 = arith.constant 0 : index
    %119 = vector.load %arg14[%c0_42, %c0_43] : memref<8x128xf32, #tpu.memory_space<vmem>>, vector<8x128xf32>
    tpu.vector_store %arg14[%c0_42, %c0_43], %112 {strides = array<i32>} : memref<8x128xf32, #tpu.memory_space<vmem>>, vector<8x128xf32>,
    %c0_44 = arith.constant 0 : index
    %c0_45 = arith.constant 0 : index
    %120 = vector.load %arg15[%c0_44, %c0_45] : memref<8x128xf32, #tpu.memory_space<vmem>>, vector<8x128xf32>
    tpu.vector_store %arg15[%c0_44, %c0_45], %116 {strides = array<i32>} : memref<8x128xf32, #tpu.memory_space<vmem>>, vector<8x128xf32>,
    %c0_46 = arith.constant 0 : index
    %c0_47 = arith.constant 0 : index
    %121 = vector.load %arg16[%c0_46, %c0_47] : memref<8x128xf32, #tpu.memory_space<vmem>>, vector<8x128xf32>
    tpu.vector_store %arg16[%c0_46, %c0_47], %117 {strides = array<i32>} : memref<8x128xf32, #tpu.memory_space<vmem>>, vector<8x128xf32>,
    %c1_i32_48 = arith.constant 1 : i32
    %122 = arith.cmpi eq, %arg0, %c1_i32_48 : i32
    %123 = arith.extui %122 : i1 to i32
    %c0_i32_49 = arith.constant 0 : i32
    %124 = arith.cmpi ne, %123, %c0_i32_49 : i32
    scf.if %124 {
      %125 = arith.truncf %115 : vector<8x128xf32> to vector<8x128xbf16>
      %126 = arith.truncf %116 : vector<8x128xf32> to vector<8x128xbf16>
      %cst_50 = arith.constant 1.250000e-01 : f32
      %127 = vector.broadcast %cst_50 : f32 to vector<8x128xf32>
      %128 = arith.mulf %117, %127 : vector<8x128xf32>
      %129 = arith.truncf %128 : vector<8x128xf32> to vector<8x128xbf16>
      %c0_51 = arith.constant 0 : index
      %c0_52 = arith.constant 0 : index
      %130 = vector.load %arg5[%c0_51, %c0_52] : memref<128x16xbf16, #tpu.memory_space<vmem>>, vector<128x16xbf16>
      %cst_53 = arith.constant dense<0.000000e+00> : vector<8x16xf32>
      %131 = tpu.matmul %125, %130, %cst_53 {dimension_numbers = #tpu.dot_dimension_numbers<[1], [0], [0], [1], [0, 0, 1, 1], [], []>} : vector<8x128xbf16>, vector<128x16xbf16>, vector<8x16xf32> -> vector<8x16xf32>
      %c0_54 = arith.constant 0 : index
      %c0_55 = arith.constant 0 : index
      %132 = vector.load %arg6[%c0_54, %c0_55] : memref<128x16xbf16, #tpu.memory_space<vmem>>, vector<128x16xbf16>
      %cst_56 = arith.constant dense<0.000000e+00> : vector<8x16xf32>
      %133 = tpu.matmul %126, %132, %cst_56 {dimension_numbers = #tpu.dot_dimension_numbers<[1], [0], [0], [1], [0, 0, 1, 1], [], []>} : vector<8x128xbf16>, vector<128x16xbf16>, vector<8x16xf32> -> vector<8x16xf32>
      %134 = arith.addf %131, %133 : vector<8x16xf32>
      %c0_57 = arith.constant 0 : index
      %c0_58 = arith.constant 0 : index
      %135 = vector.load %arg7[%c0_57, %c0_58] : memref<128x16xbf16, #tpu.memory_space<vmem>>, vector<128x16xbf16>
      %cst_59 = arith.constant dense<0.000000e+00> : vector<8x16xf32>
      %136 = tpu.matmul %129, %135, %cst_59 {dimension_numbers = #tpu.dot_dimension_numbers<[1], [0], [0], [1], [0, 0, 1, 1], [], []>} : vector<8x128xbf16>, vector<128x16xbf16>, vector<8x16xf32> -> vector<8x16xf32>
      %137 = arith.addf %134, %136 : vector<8x16xf32>
      %c0_60 = arith.constant 0 : index
      %c0_61 = arith.constant 0 : index
      %138 = vector.load %arg8[%c0_60, %c0_61] : memref<1x16xf32, #tpu.memory_space<vmem>>, vector<1x16xf32>
      %139 = vector.broadcast %138 : vector<1x16xf32> to vector<8x16xf32>
      %140 = arith.addf %137, %139 : vector<8x16xf32>
      %cst_62 = arith.constant 0.000000e+00 : f32
      %141 = vector.broadcast %cst_62 : f32 to vector<8x16xf32>
      %142 = arith.maximumf %140, %141 : vector<8x16xf32>
      %143 = arith.truncf %142 : vector<8x16xf32> to vector<8x16xbf16>
      %c0_63 = arith.constant 0 : index
      %c0_64 = arith.constant 0 : index
      %144 = vector.load %arg9[%c0_63, %c0_64] : memref<16x2xbf16, #tpu.memory_space<vmem>>, vector<16x2xbf16>
      %cst_65 = arith.constant dense<0.000000e+00> : vector<8x2xf32>
      %145 = tpu.matmul %143, %144, %cst_65 {dimension_numbers = #tpu.dot_dimension_numbers<[1], [0], [0], [1], [0, 0, 1, 1], [], []>} : vector<8x16xbf16>, vector<16x2xbf16>, vector<8x2xf32> -> vector<8x2xf32>
      %c0_66 = arith.constant 0 : index
      %c0_67 = arith.constant 0 : index
      %146 = vector.load %arg10[%c0_66, %c0_67] : memref<1x2xf32, #tpu.memory_space<vmem>>, vector<1x2xf32>
      %147 = vector.broadcast %146 : vector<1x2xf32> to vector<8x2xf32>
      %148 = arith.addf %145, %147 : vector<8x2xf32>
      %c0_68 = arith.constant 0 : index
      %c0_69 = arith.constant 0 : index
      %149 = vector.load %arg11[%c0_68, %c0_69] : memref<8x2xf32, #tpu.memory_space<vmem>>, vector<8x2xf32>
      tpu.vector_store %arg11[%c0_68, %c0_69], %148 {strides = array<i32>} : memref<8x2xf32, #tpu.memory_space<vmem>>, vector<8x2xf32>,
    } else {
    }
    return
  }
  func.func @transform_0(%arg0: i32) -> (i32, i32) {
    %c0_i32 = arith.constant 0 : i32
    %c0_i32_0 = arith.constant 0 : i32
    return %arg0, %c0_i32 : i32, i32
  }
  func.func @transform_1(%arg0: i32) -> (i32, i32) {
    %c0_i32 = arith.constant 0 : i32
    %c0_i32_0 = arith.constant 0 : i32
    %c0_i32_1 = arith.constant 0 : i32
    return %c0_i32, %c0_i32_0 : i32, i32
  }
  func.func @transform_2(%arg0: i32) -> (i32, i32) {
    %c0_i32 = arith.constant 0 : i32
    %c0_i32_0 = arith.constant 0 : i32
    %c0_i32_1 = arith.constant 0 : i32
    return %c0_i32, %c0_i32_0 : i32, i32
  }
  func.func @transform_3(%arg0: i32) -> (i32, i32) {
    %c0_i32 = arith.constant 0 : i32
    %c0_i32_0 = arith.constant 0 : i32
    %c0_i32_1 = arith.constant 0 : i32
    return %c0_i32, %c0_i32_0 : i32, i32
  }
  func.func @transform_4(%arg0: i32) -> (i32, i32) {
    %c0_i32 = arith.constant 0 : i32
    %c0_i32_0 = arith.constant 0 : i32
    %c0_i32_1 = arith.constant 0 : i32
    return %c0_i32, %c0_i32_0 : i32, i32
  }
  func.func @transform_5(%arg0: i32) -> (i32, i32) {
    %c0_i32 = arith.constant 0 : i32
    %c0_i32_0 = arith.constant 0 : i32
    %c0_i32_1 = arith.constant 0 : i32
    return %c0_i32, %c0_i32_0 : i32, i32
  }
  func.func @transform_6(%arg0: i32) -> (i32, i32) {
    %c0_i32 = arith.constant 0 : i32
    %c0_i32_0 = arith.constant 0 : i32
    %c0_i32_1 = arith.constant 0 : i32
    return %c0_i32, %c0_i32_0 : i32, i32
  }
  func.func @transform_7(%arg0: i32) -> (i32, i32) {
    %c0_i32 = arith.constant 0 : i32
    %c0_i32_0 = arith.constant 0 : i32
    %c0_i32_1 = arith.constant 0 : i32
    return %c0_i32, %c0_i32_0 : i32, i32
  }
  func.func @transform_8(%arg0: i32) -> (i32, i32) {
    %c0_i32 = arith.constant 0 : i32
    %c0_i32_0 = arith.constant 0 : i32
    %c0_i32_1 = arith.constant 0 : i32
    return %c0_i32, %c0_i32_0 : i32, i32
  }
  func.func @transform_9(%arg0: i32) -> (i32, i32) {
    %c0_i32 = arith.constant 0 : i32
    %c0_i32_0 = arith.constant 0 : i32
    %c0_i32_1 = arith.constant 0 : i32
    return %c0_i32, %c0_i32_0 : i32, i32
  }
  func.func @transform_10(%arg0: i32) -> (i32, i32) {
    %c0_i32 = arith.constant 0 : i32
    %c0_i32_0 = arith.constant 0 : i32
    %c0_i32_1 = arith.constant 0 : i32
    return %c0_i32, %c0_i32_0 : i32, i32
  }
}

module attributes {stable_mosaic.version = 11 : i64} {
  func.func @_lstm_layer_kernel(%arg0: i32, %arg1: memref<32x128xbf16, #tpu.memory_space<vmem>>, %arg2: memref<128x512xbf16, #tpu.memory_space<vmem>>, %arg3: memref<128x512xbf16, #tpu.memory_space<vmem>>, %arg4: memref<1x512xf32, #tpu.memory_space<vmem>>, %arg5: memref<32x128xbf16, #tpu.memory_space<vmem>>, %arg6: memref<32x512xf32, #tpu.memory_space<vmem>>, %arg7: memref<8x128xf32, #tpu.memory_space<vmem>>, %arg8: memref<8x128xf32, #tpu.memory_space<vmem>>) attributes {dimension_semantics = [#tpu.dimension_semantics<arbitrary>], iteration_bounds = array<i64: 2>, scalar_prefetch = 0 : i64, scratch_operands = 3 : i64, tpu.core_type = #tpu.core_type<tc>, window_params = [{transform_indices = @transform_0, window_bounds = array<i64: 32, 128>}, {pipeline_mode = #tpu.pipeline_mode<synchronous>, transform_indices = @transform_1, window_bounds = array<i64: 128, 512>}, {pipeline_mode = #tpu.pipeline_mode<synchronous>, transform_indices = @transform_2, window_bounds = array<i64: 128, 512>}, {pipeline_mode = #tpu.pipeline_mode<synchronous>, transform_indices = @transform_3, window_bounds = array<i64: 1, 512>}, {transform_indices = @transform_4, window_bounds = array<i64: 32, 128>}]} {
    %c0_i32 = arith.constant 0 : i32
    %0 = arith.cmpi eq, %arg0, %c0_i32 : i32
    %1 = arith.extui %0 : i1 to i32
    %c0_i32_0 = arith.constant 0 : i32
    %2 = arith.cmpi ne, %1, %c0_i32_0 : i32
    scf.if %2 {
      %cst_44 = arith.constant 0.000000e+00 : f32
      %122 = vector.broadcast %cst_44 : f32 to vector<8x128xf32>
      %c0_45 = arith.constant 0 : index
      %c0_46 = arith.constant 0 : index
      %123 = vector.load %arg7[%c0_45, %c0_46] : memref<8x128xf32, #tpu.memory_space<vmem>>, vector<8x128xf32>
      tpu.vector_store %arg7[%c0_45, %c0_46], %122 {strides = array<i32>} : memref<8x128xf32, #tpu.memory_space<vmem>>, vector<8x128xf32>,
      %cst_47 = arith.constant 0.000000e+00 : f32
      %124 = vector.broadcast %cst_47 : f32 to vector<8x128xf32>
      %c0_48 = arith.constant 0 : index
      %c0_49 = arith.constant 0 : index
      %125 = vector.load %arg8[%c0_48, %c0_49] : memref<8x128xf32, #tpu.memory_space<vmem>>, vector<8x128xf32>
      tpu.vector_store %arg8[%c0_48, %c0_49], %124 {strides = array<i32>} : memref<8x128xf32, #tpu.memory_space<vmem>>, vector<8x128xf32>,
    } else {
    }
    %c0 = arith.constant 0 : index
    %c0_1 = arith.constant 0 : index
    %3 = vector.load %arg1[%c0, %c0_1] : memref<32x128xbf16, #tpu.memory_space<vmem>>, vector<32x128xbf16>
    %c0_2 = arith.constant 0 : index
    %c0_3 = arith.constant 0 : index
    %4 = vector.load %arg2[%c0_2, %c0_3] : memref<128x512xbf16, #tpu.memory_space<vmem>>, vector<128x512xbf16>
    %cst = arith.constant dense<0.000000e+00> : vector<32x512xf32>
    %5 = tpu.matmul %3, %4, %cst {dimension_numbers = #tpu.dot_dimension_numbers<[1], [0], [0], [1], [0, 0, 1, 1], [], []>} : vector<32x128xbf16>, vector<128x512xbf16>, vector<32x512xf32> -> vector<32x512xf32>
    %c0_4 = arith.constant 0 : index
    %c0_5 = arith.constant 0 : index
    %6 = vector.load %arg4[%c0_4, %c0_5] : memref<1x512xf32, #tpu.memory_space<vmem>>, vector<1x512xf32>
    %7 = vector.broadcast %6 : vector<1x512xf32> to vector<32x512xf32>
    %8 = arith.addf %5, %7 : vector<32x512xf32>
    %c0_6 = arith.constant 0 : index
    %c0_7 = arith.constant 0 : index
    %9 = vector.load %arg6[%c0_6, %c0_7] : memref<32x512xf32, #tpu.memory_space<vmem>>, vector<32x512xf32>
    tpu.vector_store %arg6[%c0_6, %c0_7], %8 {strides = array<i32>} : memref<32x512xf32, #tpu.memory_space<vmem>>, vector<32x512xf32>,
    %c0_8 = arith.constant 0 : index
    %c0_9 = arith.constant 0 : index
    %10 = vector.load %arg7[%c0_8, %c0_9] : memref<8x128xf32, #tpu.memory_space<vmem>>, vector<8x128xf32>
    %c0_10 = arith.constant 0 : index
    %c0_11 = arith.constant 0 : index
    %11 = vector.load %arg8[%c0_10, %c0_11] : memref<8x128xf32, #tpu.memory_space<vmem>>, vector<8x128xf32>
    %c0_i32_12 = arith.constant 0 : i32
    %c8_i32 = arith.constant 8 : i32
    %12 = arith.muli %c0_i32_12, %c8_i32 : i32
    %13 = tpu.assume_multiple %12, 8 : i32
    %14 = arith.index_cast %13 : i32 to index
    %c0_13 = arith.constant 0 : index
    %15 = vector.load %arg6[%14, %c0_13] : memref<32x512xf32, #tpu.memory_space<vmem>>, vector<8x512xf32>
    %16 = arith.truncf %10 : vector<8x128xf32> to vector<8x128xbf16>
    %c0_14 = arith.constant 0 : index
    %c0_15 = arith.constant 0 : index
    %17 = vector.load %arg3[%c0_14, %c0_15] : memref<128x512xbf16, #tpu.memory_space<vmem>>, vector<128x512xbf16>
    %cst_16 = arith.constant dense<0.000000e+00> : vector<8x512xf32>
    %18 = tpu.matmul %16, %17, %cst_16 {dimension_numbers = #tpu.dot_dimension_numbers<[1], [0], [0], [1], [0, 0, 1, 1], [], []>} : vector<8x128xbf16>, vector<128x512xbf16>, vector<8x512xf32> -> vector<8x512xf32>
    %19 = arith.addf %15, %18 : vector<8x512xf32>
    %20 = vector.extract_strided_slice %19 {offsets = [0, 0], sizes = [8, 384], strides = [1, 1]} : vector<8x512xf32> to vector<8x384xf32>
    %21 = arith.negf %20 : vector<8x384xf32>
    %22 = math.exp %21 : vector<8x384xf32>
    %cst_17 = arith.constant 1.000000e+00 : f32
    %23 = vector.broadcast %cst_17 : f32 to vector<8x384xf32>
    %24 = arith.addf %23, %22 : vector<8x384xf32>
    %25 = arith.divf %23, %24 : vector<8x384xf32>
    %26 = vector.extract_strided_slice %19 {offsets = [0, 384], sizes = [8, 128], strides = [1, 1]} : vector<8x512xf32> to vector<8x128xf32>
    %27 = math.tanh %26 : vector<8x128xf32>
    %28 = vector.extract_strided_slice %25 {offsets = [0, 128], sizes = [8, 128], strides = [1, 1]} : vector<8x384xf32> to vector<8x128xf32>
    %29 = arith.mulf %28, %11 : vector<8x128xf32>
    %30 = vector.extract_strided_slice %25 {offsets = [0, 0], sizes = [8, 128], strides = [1, 1]} : vector<8x384xf32> to vector<8x128xf32>
    %31 = arith.mulf %30, %27 : vector<8x128xf32>
    %32 = arith.addf %29, %31 : vector<8x128xf32>
    %33 = vector.extract_strided_slice %25 {offsets = [0, 256], sizes = [8, 128], strides = [1, 1]} : vector<8x384xf32> to vector<8x128xf32>
    %34 = math.tanh %32 : vector<8x128xf32>
    %35 = arith.mulf %33, %34 : vector<8x128xf32>
    %36 = arith.truncf %35 : vector<8x128xf32> to vector<8x128xbf16>
    %37 = arith.index_cast %13 : i32 to index
    %c0_18 = arith.constant 0 : index
    %38 = vector.load %arg5[%37, %c0_18] : memref<32x128xbf16, #tpu.memory_space<vmem>>, vector<8x128xbf16>
    tpu.vector_store %arg5[%37, %c0_18], %36 {strides = array<i32>} : memref<32x128xbf16, #tpu.memory_space<vmem>>, vector<8x128xbf16>,
    %c1_i32 = arith.constant 1 : i32
    %c8_i32_19 = arith.constant 8 : i32
    %39 = arith.muli %c1_i32, %c8_i32_19 : i32
    %40 = tpu.assume_multiple %39, 8 : i32
    %41 = arith.index_cast %40 : i32 to index
    %c0_20 = arith.constant 0 : index
    %42 = vector.load %arg6[%41, %c0_20] : memref<32x512xf32, #tpu.memory_space<vmem>>, vector<8x512xf32>
    %43 = arith.truncf %35 : vector<8x128xf32> to vector<8x128xbf16>
    %c0_21 = arith.constant 0 : index
    %c0_22 = arith.constant 0 : index
    %44 = vector.load %arg3[%c0_21, %c0_22] : memref<128x512xbf16, #tpu.memory_space<vmem>>, vector<128x512xbf16>
    %cst_23 = arith.constant dense<0.000000e+00> : vector<8x512xf32>
    %45 = tpu.matmul %43, %44, %cst_23 {dimension_numbers = #tpu.dot_dimension_numbers<[1], [0], [0], [1], [0, 0, 1, 1], [], []>} : vector<8x128xbf16>, vector<128x512xbf16>, vector<8x512xf32> -> vector<8x512xf32>
    %46 = arith.addf %42, %45 : vector<8x512xf32>
    %47 = vector.extract_strided_slice %46 {offsets = [0, 0], sizes = [8, 384], strides = [1, 1]} : vector<8x512xf32> to vector<8x384xf32>
    %48 = arith.negf %47 : vector<8x384xf32>
    %49 = math.exp %48 : vector<8x384xf32>
    %cst_24 = arith.constant 1.000000e+00 : f32
    %50 = vector.broadcast %cst_24 : f32 to vector<8x384xf32>
    %51 = arith.addf %50, %49 : vector<8x384xf32>
    %52 = arith.divf %50, %51 : vector<8x384xf32>
    %53 = vector.extract_strided_slice %46 {offsets = [0, 384], sizes = [8, 128], strides = [1, 1]} : vector<8x512xf32> to vector<8x128xf32>
    %54 = math.tanh %53 : vector<8x128xf32>
    %55 = vector.extract_strided_slice %52 {offsets = [0, 128], sizes = [8, 128], strides = [1, 1]} : vector<8x384xf32> to vector<8x128xf32>
    %56 = arith.mulf %55, %32 : vector<8x128xf32>
    %57 = vector.extract_strided_slice %52 {offsets = [0, 0], sizes = [8, 128], strides = [1, 1]} : vector<8x384xf32> to vector<8x128xf32>
    %58 = arith.mulf %57, %54 : vector<8x128xf32>
    %59 = arith.addf %56, %58 : vector<8x128xf32>
    %60 = vector.extract_strided_slice %52 {offsets = [0, 256], sizes = [8, 128], strides = [1, 1]} : vector<8x384xf32> to vector<8x128xf32>
    %61 = math.tanh %59 : vector<8x128xf32>
    %62 = arith.mulf %60, %61 : vector<8x128xf32>
    %63 = arith.truncf %62 : vector<8x128xf32> to vector<8x128xbf16>
    %64 = arith.index_cast %40 : i32 to index
    %c0_25 = arith.constant 0 : index
    %65 = vector.load %arg5[%64, %c0_25] : memref<32x128xbf16, #tpu.memory_space<vmem>>, vector<8x128xbf16>
    tpu.vector_store %arg5[%64, %c0_25], %63 {strides = array<i32>} : memref<32x128xbf16, #tpu.memory_space<vmem>>, vector<8x128xbf16>,
    %c2_i32 = arith.constant 2 : i32
    %c8_i32_26 = arith.constant 8 : i32
    %66 = arith.muli %c2_i32, %c8_i32_26 : i32
    %67 = tpu.assume_multiple %66, 8 : i32
    %68 = arith.index_cast %67 : i32 to index
    %c0_27 = arith.constant 0 : index
    %69 = vector.load %arg6[%68, %c0_27] : memref<32x512xf32, #tpu.memory_space<vmem>>, vector<8x512xf32>
    %70 = arith.truncf %62 : vector<8x128xf32> to vector<8x128xbf16>
    %c0_28 = arith.constant 0 : index
    %c0_29 = arith.constant 0 : index
    %71 = vector.load %arg3[%c0_28, %c0_29] : memref<128x512xbf16, #tpu.memory_space<vmem>>, vector<128x512xbf16>
    %cst_30 = arith.constant dense<0.000000e+00> : vector<8x512xf32>
    %72 = tpu.matmul %70, %71, %cst_30 {dimension_numbers = #tpu.dot_dimension_numbers<[1], [0], [0], [1], [0, 0, 1, 1], [], []>} : vector<8x128xbf16>, vector<128x512xbf16>, vector<8x512xf32> -> vector<8x512xf32>
    %73 = arith.addf %69, %72 : vector<8x512xf32>
    %74 = vector.extract_strided_slice %73 {offsets = [0, 0], sizes = [8, 384], strides = [1, 1]} : vector<8x512xf32> to vector<8x384xf32>
    %75 = arith.negf %74 : vector<8x384xf32>
    %76 = math.exp %75 : vector<8x384xf32>
    %cst_31 = arith.constant 1.000000e+00 : f32
    %77 = vector.broadcast %cst_31 : f32 to vector<8x384xf32>
    %78 = arith.addf %77, %76 : vector<8x384xf32>
    %79 = arith.divf %77, %78 : vector<8x384xf32>
    %80 = vector.extract_strided_slice %73 {offsets = [0, 384], sizes = [8, 128], strides = [1, 1]} : vector<8x512xf32> to vector<8x128xf32>
    %81 = math.tanh %80 : vector<8x128xf32>
    %82 = vector.extract_strided_slice %79 {offsets = [0, 128], sizes = [8, 128], strides = [1, 1]} : vector<8x384xf32> to vector<8x128xf32>
    %83 = arith.mulf %82, %59 : vector<8x128xf32>
    %84 = vector.extract_strided_slice %79 {offsets = [0, 0], sizes = [8, 128], strides = [1, 1]} : vector<8x384xf32> to vector<8x128xf32>
    %85 = arith.mulf %84, %81 : vector<8x128xf32>
    %86 = arith.addf %83, %85 : vector<8x128xf32>
    %87 = vector.extract_strided_slice %79 {offsets = [0, 256], sizes = [8, 128], strides = [1, 1]} : vector<8x384xf32> to vector<8x128xf32>
    %88 = math.tanh %86 : vector<8x128xf32>
    %89 = arith.mulf %87, %88 : vector<8x128xf32>
    %90 = arith.truncf %89 : vector<8x128xf32> to vector<8x128xbf16>
    %91 = arith.index_cast %67 : i32 to index
    %c0_32 = arith.constant 0 : index
    %92 = vector.load %arg5[%91, %c0_32] : memref<32x128xbf16, #tpu.memory_space<vmem>>, vector<8x128xbf16>
    tpu.vector_store %arg5[%91, %c0_32], %90 {strides = array<i32>} : memref<32x128xbf16, #tpu.memory_space<vmem>>, vector<8x128xbf16>,
    %c3_i32 = arith.constant 3 : i32
    %c8_i32_33 = arith.constant 8 : i32
    %93 = arith.muli %c3_i32, %c8_i32_33 : i32
    %94 = tpu.assume_multiple %93, 8 : i32
    %95 = arith.index_cast %94 : i32 to index
    %c0_34 = arith.constant 0 : index
    %96 = vector.load %arg6[%95, %c0_34] : memref<32x512xf32, #tpu.memory_space<vmem>>, vector<8x512xf32>
    %97 = arith.truncf %89 : vector<8x128xf32> to vector<8x128xbf16>
    %c0_35 = arith.constant 0 : index
    %c0_36 = arith.constant 0 : index
    %98 = vector.load %arg3[%c0_35, %c0_36] : memref<128x512xbf16, #tpu.memory_space<vmem>>, vector<128x512xbf16>
    %cst_37 = arith.constant dense<0.000000e+00> : vector<8x512xf32>
    %99 = tpu.matmul %97, %98, %cst_37 {dimension_numbers = #tpu.dot_dimension_numbers<[1], [0], [0], [1], [0, 0, 1, 1], [], []>} : vector<8x128xbf16>, vector<128x512xbf16>, vector<8x512xf32> -> vector<8x512xf32>
    %100 = arith.addf %96, %99 : vector<8x512xf32>
    %101 = vector.extract_strided_slice %100 {offsets = [0, 0], sizes = [8, 384], strides = [1, 1]} : vector<8x512xf32> to vector<8x384xf32>
    %102 = arith.negf %101 : vector<8x384xf32>
    %103 = math.exp %102 : vector<8x384xf32>
    %cst_38 = arith.constant 1.000000e+00 : f32
    %104 = vector.broadcast %cst_38 : f32 to vector<8x384xf32>
    %105 = arith.addf %104, %103 : vector<8x384xf32>
    %106 = arith.divf %104, %105 : vector<8x384xf32>
    %107 = vector.extract_strided_slice %100 {offsets = [0, 384], sizes = [8, 128], strides = [1, 1]} : vector<8x512xf32> to vector<8x128xf32>
    %108 = math.tanh %107 : vector<8x128xf32>
    %109 = vector.extract_strided_slice %106 {offsets = [0, 128], sizes = [8, 128], strides = [1, 1]} : vector<8x384xf32> to vector<8x128xf32>
    %110 = arith.mulf %109, %86 : vector<8x128xf32>
    %111 = vector.extract_strided_slice %106 {offsets = [0, 0], sizes = [8, 128], strides = [1, 1]} : vector<8x384xf32> to vector<8x128xf32>
    %112 = arith.mulf %111, %108 : vector<8x128xf32>
    %113 = arith.addf %110, %112 : vector<8x128xf32>
    %114 = vector.extract_strided_slice %106 {offsets = [0, 256], sizes = [8, 128], strides = [1, 1]} : vector<8x384xf32> to vector<8x128xf32>
    %115 = math.tanh %113 : vector<8x128xf32>
    %116 = arith.mulf %114, %115 : vector<8x128xf32>
    %117 = arith.truncf %116 : vector<8x128xf32> to vector<8x128xbf16>
    %118 = arith.index_cast %94 : i32 to index
    %c0_39 = arith.constant 0 : index
    %119 = vector.load %arg5[%118, %c0_39] : memref<32x128xbf16, #tpu.memory_space<vmem>>, vector<8x128xbf16>
    tpu.vector_store %arg5[%118, %c0_39], %117 {strides = array<i32>} : memref<32x128xbf16, #tpu.memory_space<vmem>>, vector<8x128xbf16>,
    %c4_i32 = arith.constant 4 : i32
    %c0_40 = arith.constant 0 : index
    %c0_41 = arith.constant 0 : index
    %120 = vector.load %arg7[%c0_40, %c0_41] : memref<8x128xf32, #tpu.memory_space<vmem>>, vector<8x128xf32>
    tpu.vector_store %arg7[%c0_40, %c0_41], %116 {strides = array<i32>} : memref<8x128xf32, #tpu.memory_space<vmem>>, vector<8x128xf32>,
    %c0_42 = arith.constant 0 : index
    %c0_43 = arith.constant 0 : index
    %121 = vector.load %arg8[%c0_42, %c0_43] : memref<8x128xf32, #tpu.memory_space<vmem>>, vector<8x128xf32>
    tpu.vector_store %arg8[%c0_42, %c0_43], %113 {strides = array<i32>} : memref<8x128xf32, #tpu.memory_space<vmem>>, vector<8x128xf32>,
    return
  }
  func.func @transform_0(%arg0: i32) -> (i32, i32) {
    %c0_i32 = arith.constant 0 : i32
    %c0_i32_0 = arith.constant 0 : i32
    return %arg0, %c0_i32 : i32, i32
  }
  func.func @transform_1(%arg0: i32) -> (i32, i32) {
    %c0_i32 = arith.constant 0 : i32
    %c0_i32_0 = arith.constant 0 : i32
    %c0_i32_1 = arith.constant 0 : i32
    return %c0_i32, %c0_i32_0 : i32, i32
  }
  func.func @transform_2(%arg0: i32) -> (i32, i32) {
    %c0_i32 = arith.constant 0 : i32
    %c0_i32_0 = arith.constant 0 : i32
    %c0_i32_1 = arith.constant 0 : i32
    return %c0_i32, %c0_i32_0 : i32, i32
  }
  func.func @transform_3(%arg0: i32) -> (i32, i32) {
    %c0_i32 = arith.constant 0 : i32
    %c0_i32_0 = arith.constant 0 : i32
    %c0_i32_1 = arith.constant 0 : i32
    return %c0_i32, %c0_i32_0 : i32, i32
  }
  func.func @transform_4(%arg0: i32) -> (i32, i32) {
    %c0_i32 = arith.constant 0 : i32
    %c0_i32_0 = arith.constant 0 : i32
    return %arg0, %c0_i32 : i32, i32
  }
}

</mosaic_0001>

<llo_original>
// kernel: lstm_cls_forward.3
$region0: #{lstm_cls_forward.3}
  #allocation0 [shape = 'u32[]', space=smem, size = 0x4, offset = 0x4, fixed_abs, tag = 'smem constant byte address 0x4 - core index']
  #allocation1 [shape = 'u32[144,128]{1,0:T(1,128)}', space=vmem, size = 0x12000, scoped, tag = 'internal scratch']
  #allocation2 [shape = 'f32[32,512]{1,0:T(8,128)}', space=vmem, size = 0x10000, scoped, tag = 'scratch operand']
  #allocation3 [shape = 'f32[8,128]{1,0:T(8,128)}', space=vmem, size = 0x1000, scoped, tag = 'scratch operand']
  #allocation4 [shape = 'f32[8,128]{1,0:T(8,128)}', space=vmem, size = 0x1000, scoped, tag = 'scratch operand']
  %s0 = inlined_call_operand.hbm [shape: bf16[64,16], index: 0, kind: input, shape index: {}]
  %s1 = inlined_call_operand.hbm [shape: bf16[16,512], index: 1, kind: input, shape index: {}]
  %s2 = inlined_call_operand.hbm [shape: bf16[128,512], index: 2, kind: input, shape index: {}]
  %s3 = inlined_call_operand.hbm [shape: f32[1,512], index: 3, kind: input, shape index: {}]
  %s4 = inlined_call_operand.hbm [shape: bf16[64,128], index: 4, kind: output, shape index: {}]
  %s5 = sld [smem:[#allocation0]]
  $region69: #{lstm_cls_forward.3} parent=0
    _
  %s7 = ssub.s32 1, %s5
  %s8 = scalar_select 0, %s7, %s5
  $region1: #{lstm_cls_forward.3} parent=0
    #allocation5 [shape = 'u8[16384]{0}', space=vmem, size = 0x4000, scoped, tag = 'input window, operand 0']
    #allocation6 [shape = 's32[2]{0}', space=sflag, size = 0x8, scoped, tag = 'scoped memory for lstm_cls_forward.3']
    #allocation7 [shape = 's32[2]{0}', space=sflag, size = 0x8, scoped, tag = 'scoped memory for lstm_cls_forward.3']
    #allocation8 [shape = 'u8[16384]{0}', space=vmem, size = 0x4000, scoped, tag = 'input window, operand 1, single buffered']
    #allocation9 [shape = 's32[1]{0}', space=sflag, size = 0x4, scoped, tag = 'scoped memory for lstm_cls_forward.3']
    #allocation10 [shape = 'u8[131072]{0}', space=vmem, size = 0x20000, scoped, tag = 'input window, operand 2, single buffered']
    #allocation11 [shape = 'u8[2048]{0}', space=vmem, size = 0x800, scoped, tag = 'input window, operand 3, single buffered']
    #allocation12 [shape = 's32[1]{0}', space=sflag, size = 0x4, scoped, tag = 'scoped memory for lstm_cls_forward.3']
    #allocation13 [shape = 'u8[16384]{0}', space=vmem, size = 0x4000, scoped, tag = 'output window, operand 0']
    %9 = vsyncpa [#allocation6], 0
    %s10 = scalar_lea.sflag [#allocation6], 1
    %11 = vsyncpa %s10, 0
    %12 = vsyncpa [#allocation9], 0
    %13 = vsyncpa [#allocation12], 0
    %14 = vsyncpa [#allocation7], 0
    %s15 = scalar_lea.sflag [#allocation7], 1
    %16 = vsyncpa %s15, 0
    loop: start=0, step=1, limit=4
    $region2: #{lstm_cls_forward.3} parent=1 // loop_pre_header
      _
    $region3: #{lstm_cls_forward.3} parent=1 // loop_header
      %s18 = sphi 0, %s22
      %p19 = scmp.ge.s32.totalorder %s18, 4
      %s28 = sphi 0, %s30
      %s31 = sphi 0, %s28
      %s32 = sphi 0, %s31
      %s48 = sphi 0, %s32
      %s52 = sphi 0, %s52
      %s54 = sphi 0, %s52
      %s55 = sphi 0, %s54
      %s69 = sphi 0, %s55
      %s73 = sphi 0, %s73
      %s75 = sphi 0, %s73
      %s76 = sphi 0, %s75
      %s90 = sphi 0, %s76
      %s94 = sphi 0, %s94
      %s96 = sphi 0, %s94
      %s97 = sphi 0, %s96
      %s111 = sphi 0, %s97
      %s117 = sphi 0, %s119
      %s120 = sphi 0, %s117
      %s121 = sphi 0, %s120
      %s137 = sphi 0, %s121
    $region4: #{lstm_cls_forward.3} parent=1 // loop_header_branch
      %21 = sbr.rel (%p19) target = $region8
    $region5: #{lstm_cls_forward.3} parent=1 // loop_body
      %s23 = ssub.s32 %s18, 1
      %s24 = ssub.s32 %s18, 2
      %s25 = sadd.s32 %s18, 1
      %s26 = ssub.s32 %s18, %s25
      %p27 = scmp.eq.s32.totalorder %s26, 0
      %s29 = sadd.s32 %s28, 1
      %s30 = scalar_select %p27, %s28, %s29
      %p33 = pneg %p27
      %p34 = scmp.eq.s32.totalorder %s18, 1
      %p35 = por %p33, %p34
      %p36 = scmp.ne.s32.totalorder %s28, %s31
      %p37 = scmp.eq.s32.totalorder %s18, 0
      %p38 = por %p36, %p37
      %p39 = scmp.ne.s32.totalorder %s28, %s31
      %p40 = scmp.eq.s32.totalorder %s23, 1
      %p41 = por %p39, %p40
      %p42 = scmp.ne.s32.totalorder %s31, %s32
      %p43 = scmp.eq.s32.totalorder %s23, 0
      %p44 = por %p42, %p43
      %p45 = scmp.ne.s32.totalorder %s31, %s32
      %p46 = scmp.eq.s32.totalorder %s24, 1
      %p47 = por %p45, %p46
      %p49 = scmp.ne.s32.totalorder %s32, %s48
      %p50 = scmp.eq.s32.totalorder %s24, 0
      %p51 = por %p49, %p50
      %s53 = sadd.s32 %s52, 1
      %p56 = scmp.eq.s32.totalorder %s18, 1
      %p57 = scmp.ne.s32.totalorder %s52, %s54
      %p58 = scmp.eq.s32.totalorder %s18, 0
      %p59 = por %p57, %p58
      %p60 = scmp.ne.s32.totalorder %s52, %s54
      %p61 = scmp.eq.s32.totalorder %s23, 1
      %p62 = por %p60, %p61
      %p63 = scmp.ne.s32.totalorder %s54, %s55
      %p64 = scmp.eq.s32.totalorder %s23, 0
      %p65 = por %p63, %p64
      %p66 = scmp.ne.s32.totalorder %s54, %s55
      %p67 = scmp.eq.s32.totalorder %s24, 1
      %p68 = por %p66, %p67
      %p70 = scmp.ne.s32.totalorder %s55, %s69
      %p71 = scmp.eq.s32.totalorder %s24, 0
      %p72 = por %p70, %p71
      %s74 = sadd.s32 %s73, 1
      %p77 = scmp.eq.s32.totalorder %s18, 1
      %p78 = scmp.ne.s32.totalorder %s73, %s75
      %p79 = scmp.eq.s32.totalorder %s18, 0
      %p80 = por %p78, %p79
      %p81 = scmp.ne.s32.totalorder %s73, %s75
      %p82 = scmp.eq.s32.totalorder %s23, 1
      %p83 = por %p81, %p82
      %p84 = scmp.ne.s32.totalorder %s75, %s76
      %p85 = scmp.eq.s32.totalorder %s23, 0
      %p86 = por %p84, %p85
      %p87 = scmp.ne.s32.totalorder %s75, %s76
      %p88 = scmp.eq.s32.totalorder %s24, 1
      %p89 = por %p87, %p88
      %p91 = scmp.ne.s32.totalorder %s76, %s90
      %p92 = scmp.eq.s32.totalorder %s24, 0
      %p93 = por %p91, %p92
      %s95 = sadd.s32 %s94, 1
      %p98 = scmp.eq.s32.totalorder %s18, 1
      %p99 = scmp.ne.s32.totalorder %s94, %s96
      %p100 = scmp.eq.s32.totalorder %s18, 0
      %p101 = por %p99, %p100
      %p102 = scmp.ne.s32.totalorder %s94, %s96
      %p103 = scmp.eq.s32.totalorder %s23, 1
      %p104 = por %p102, %p103
      %p105 = scmp.ne.s32.totalorder %s96, %s97
      %p106 = scmp.eq.s32.totalorder %s23, 0
      %p107 = por %p105, %p106
      %p108 = scmp.ne.s32.totalorder %s96, %s97
      %p109 = scmp.eq.s32.totalorder %s24, 1
      %p110 = por %p108, %p109
      %p112 = scmp.ne.s32.totalorder %s97, %s111
      %p113 = scmp.eq.s32.totalorder %s24, 0
      %p114 = por %p112, %p113
      %s115 = ssub.s32 %s18, %s25
      %p116 = scmp.eq.s32.totalorder %s115, 0
      %s118 = sadd.s32 %s117, 1
      %s119 = scalar_select %p116, %s117, %s118
      %p122 = pneg %p116
      %p123 = scmp.eq.s32.totalorder %s18, 1
      %p124 = por %p122, %p123
      %p125 = scmp.ne.s32.totalorder %s117, %s120
      %p126 = scmp.eq.s32.totalorder %s18, 0
      %p127 = por %p125, %p126
      %p128 = scmp.ne.s32.totalorder %s117, %s120
      %p129 = scmp.eq.s32.totalorder %s23, 1
      %p130 = por %p128, %p129
      %p131 = scmp.ne.s32.totalorder %s120, %s121
      %p132 = scmp.eq.s32.totalorder %s23, 0
      %p133 = por %p131, %p132
      %p134 = scmp.ne.s32.totalorder %s120, %s121
      %p135 = scmp.eq.s32.totalorder %s24, 1
      %p136 = por %p134, %p135
      %p138 = scmp.ne.s32.totalorder %s121, %s137
      %p139 = scmp.eq.s32.totalorder %s24, 0
      %p140 = por %p138, %p139
      %p141 = scmp.le.s32.totalorder 1, %s18
      %p142 = scmp.lt.s32.totalorder %s18, 3
      %p143 = pnand %p141, %p142
      %p144 = pneg %p143
      // Predicated region
      $region9: #{lstm_cls_forward.3} parent=5 // pred_check
        _
      $region10: #{lstm_cls_forward.3} parent=5 // pred_check_branch
        %146 = sbr.rel (%p143) target = $region12
      $region11: #{lstm_cls_forward.3} parent=5 // pred_region
        %s147 = ssub.s32 %s18, 1
        // Predicated region
        $region13: #{lstm_cls_forward.3} parent=11 // pred_check
          %p148 = pneg %p65
        $region14: #{lstm_cls_forward.3} parent=11 // pred_check_branch
          %150 = sbr.rel (%p148) target = $region16
        $region15: #{lstm_cls_forward.3} parent=11 // pred_region
          %s152 = ssub.s32 512, 512
          %153 = vsyncadd [#allocation9], %s152
          %s154 = sshll.u32 [#allocation8], 4
          %s155 = int_to_ptr.vmem [resolvable:$true] %s154
          %160 = dma.hbm_to_vmem [thread:$0]  %s1, 512, %s155, [#allocation9], 256, 256, 16
        $region16: #{lstm_cls_forward.3} parent=11 // pred_fallthru
          _
        // Predicated region
        $region17: #{lstm_cls_forward.3} parent=11 // pred_check
          %p161 = pneg %p86
        $region18: #{lstm_cls_forward.3} parent=11 // pred_check_branch
          %163 = sbr.rel (%p161) target = $region20
        $region19: #{lstm_cls_forward.3} parent=11 // pred_region
          %s165 = ssub.s32 4096, 4096
          %166 = vsyncadd [#allocation9], %s165
          %s167 = sshll.u32 [#allocation10], 4
          %s168 = int_to_ptr.vmem [resolvable:$true] %s167
          %173 = dma.hbm_to_vmem [thread:$0]  %s2, 4096, %s168, [#allocation9], 256, 256, 16
        $region20: #{lstm_cls_forward.3} parent=11 // pred_fallthru
          _
        // Predicated region
        $region21: #{lstm_cls_forward.3} parent=11 // pred_check
          %p174 = pneg %p107
        $region22: #{lstm_cls_forward.3} parent=11 // pred_check_branch
          %176 = sbr.rel (%p174) target = $region24
        $region23: #{lstm_cls_forward.3} parent=11 // pred_region
          %s178 = ssub.s32 64, 64
          %179 = vsyncadd [#allocation12], %s178
          %s181 = sshll.u32 [#allocation11], 4
          %s182 = int_to_ptr.vmem [resolvable:$true] %s181
          %184 = dma.hbm_to_vmem [thread:$0]  %s3, 64, %s182, [#allocation12]
        $region24: #{lstm_cls_forward.3} parent=11 // pred_fallthru
          _
      $region12: #{lstm_cls_forward.3} parent=5 // pred_fallthru
        _
      %p185 = scmp.lt.s32.totalorder %s18, 2
      // Predicated region
      $region25: #{lstm_cls_forward.3} parent=5 // pred_check
        %p186 = pneg %p185
      $region26: #{lstm_cls_forward.3} parent=5 // pred_check_branch
        %188 = sbr.rel (%p186) target = $region28
      $region27: #{lstm_cls_forward.3} parent=5 // pred_region
        // Predicated region
        $region29: #{lstm_cls_forward.3} parent=27 // pred_check
          %p189 = pneg %p38
        $region30: #{lstm_cls_forward.3} parent=27 // pred_check_branch
          %191 = sbr.rel (%p189) target = $region32
        $region31: #{lstm_cls_forward.3} parent=27 // pred_region
          %s192 = sand.u32 %s28, 1
          %s193 = scalar_lea.sflag [#allocation6], %s192
          %s194 = sand.u32 %s28, 1
          %s195 = smul.addr %s194, 16
          %s196 = scalar_lea.vmem [#allocation5], %s195
          %s197 = smul.u32 4, %s18
          %s199 = ssub.s32 256, 256
          %200 = vsyncadd %s193, %s199
          %s201 = smul.addr %s197, 64
          %s202 = scalar_lea.hbm %s0, %s201
          %s203 = sshll.u32 %s196, 4
          %s204 = int_to_ptr.vmem [resolvable:$true] %s203
          %209 = dma.hbm_to_vmem [thread:$0]  %s202, 256, %s204, %s193, 64, 64, 4
        $region32: #{lstm_cls_forward.3} parent=27 // pred_fallthru
          _
      $region28: #{lstm_cls_forward.3} parent=5 // pred_fallthru
        _
      %p210 = scmp.le.s32.totalorder 1, %s18
      %p211 = scmp.lt.s32.totalorder %s18, 3
      %p212 = pnand %p210, %p211
      %p213 = pneg %p212
      // Predicated region
      $region33: #{lstm_cls_forward.3} parent=5 // pred_check
        _
      $region34: #{lstm_cls_forward.3} parent=5 // pred_check_branch
        %215 = sbr.rel (%p212) target = $region36
      $region35: #{lstm_cls_forward.3} parent=5 // pred_region
        %s216 = ssub.s32 %s18, 1
        %s217 = sand.u32 %s31, 1
        %s218 = scalar_lea.sflag [#allocation6], %s217
        %s219 = sand.u32 %s31, 1
        %s220 = smul.addr %s219, 16
        %s221 = scalar_lea.vmem [#allocation5], %s220
        // Predicated region
        $region37: #{lstm_cls_forward.3} parent=35 // pred_check
          %p222 = pneg %p44
        $region38: #{lstm_cls_forward.3} parent=35 // pred_check_branch
          %224 = sbr.rel (%p222) target = $region40
        $region39: #{lstm_cls_forward.3} parent=35 // pred_region
          %225 = dma.done %s218, 256
        $region40: #{lstm_cls_forward.3} parent=35 // pred_fallthru
          _
        // Predicated region
        $region41: #{lstm_cls_forward.3} parent=35 // pred_check
          %p226 = pneg %p65
        $region42: #{lstm_cls_forward.3} parent=35 // pred_check_branch
          %228 = sbr.rel (%p226) target = $region44
        $region43: #{lstm_cls_forward.3} parent=35 // pred_region
          %229 = dma.done [#allocation9], 512
        $region44: #{lstm_cls_forward.3} parent=35 // pred_fallthru
          _
        // Predicated region
        $region45: #{lstm_cls_forward.3} parent=35 // pred_check
          %p230 = pneg %p86
        $region46: #{lstm_cls_forward.3} parent=35 // pred_check_branch
          %232 = sbr.rel (%p230) target = $region48
        $region47: #{lstm_cls_forward.3} parent=35 // pred_region
          %233 = dma.done [#allocation9], 4096
        $region48: #{lstm_cls_forward.3} parent=35 // pred_fallthru
          _
        // Predicated region
        $region49: #{lstm_cls_forward.3} parent=35 // pred_check
          %p234 = pneg %p107
        $region50: #{lstm_cls_forward.3} parent=35 // pred_check_branch
          %236 = sbr.rel (%p234) target = $region52
        $region51: #{lstm_cls_forward.3} parent=35 // pred_region
          %237 = dma.done [#allocation12], 64
        $region52: #{lstm_cls_forward.3} parent=35 // pred_fallthru
          _
        %s238 = sand.u32 %s31, 1
        %s239 = scalar_lea.sflag [#allocation6], %s238
        %s240 = sand.u32 %s31, 1
        %s241 = smul.addr %s240, 16
        %s242 = scalar_lea.vmem [#allocation5], %s241
        %p243 = pneg %p44
        %p244 = pneg %p41
        %p245 = pneg %p65
        %p246 = pneg %p62
        %p247 = pneg %p86
        %p248 = pneg %p83
        %p249 = pneg %p107
        %p250 = pneg %p104
        %p251 = pneg %p133
        %p252 = pneg %p130
        %s253 = sand.u32 %s120, 1
        %s254 = scalar_lea.sflag [#allocation7], %s253
        %s255 = sand.u32 %s120, 1
        %s256 = smul.addr %s255, 16
        %s257 = scalar_lea.vmem [#allocation13], %s256
        %s258 = smul.u32 4, %s23
        %s259 = smul.u32 4, %s23
        %p261 = scmp.eq.s32.totalorder %s23, 0
        // Predicated region
        $region53: #{lstm_cls_forward.3} parent=35 // pred_check
          %p262 = pneg %p261
        $region54: #{lstm_cls_forward.3} parent=35 // pred_check_branch
          %264 = sbr.rel (%p262) target = $region56
        $region55: #{lstm_cls_forward.3} parent=35 // pred_region
          %265 = vst [vmem:[#allocation3] sm:$0xff] 0.0
          %266 = vst [vmem:[#allocation4] sm:$0xff] 0.0
        $region56: #{lstm_cls_forward.3} parent=35 // pred_fallthru
          _
        %v267 = vld [vmem:[%s221] sm:$0xf]
        %v268 = vld [vmem:[%s221 + $0x4] sm:$0xf]
        %v269 = vld [vmem:[%s221 + $0x8] sm:$0xf]
        %v270 = vld [vmem:[%s221 + $0xc] sm:$0xf]
        %v271 = vld [vmem:[#allocation8] sm:$0xff]
        %v272 = vld [vmem:[#allocation8 + $0x8] sm:$0xff]
        %v273 = vld [vmem:[#allocation8 + $0x10] sm:$0xff]
        %v274 = vld [vmem:[#allocation8 + $0x18] sm:$0xff]
        %v275 = vld [vmem:[#allocation11] sm:$0xf]
        %v277 = vlaneseq
        %v278 = vshrl.u32 %v277, 7
        %v279 = vsub.s32 0, %v278
        %v280 = vrot.slane %v275, %v279
        %v281 = vlaneseq
        %v282 = vshrl.u32 %v281, 7
        %v283 = vsub.s32 1, %v282
        %v284 = vrot.slane %v275, %v283
        %v285 = vlaneseq
        %v286 = vshrl.u32 %v285, 7
        %v287 = vsub.s32 2, %v286
        %v288 = vrot.slane %v275, %v287
        %v289 = vlaneseq
        %v290 = vshrl.u32 %v289, 7
        %v291 = vsub.s32 3, %v290
        %v292 = vrot.slane %v275, %v291
        %v301 = vunpack.c.l.b16 %v267
        %v302 = vunpack.c.l.b16 %v268
        %v303 = vunpack.c.l.b16 %v269
        %v304 = vunpack.c.l.b16 %v270
        %v305 = vpack.c.b16 %v302, %v301
        %v306 = vpack.c.b16 %v304, %v303
        %v311 = vunpack.c.l.b16 %v271
        %v312 = vunpack.c.h.b16 %v271
        %v313 = vunpack.c.l.b16 %v272
        %v314 = vunpack.c.h.b16 %v272
        %v315 = vunpack.c.l.b16 %v273
        %v316 = vunpack.c.h.b16 %v273
        %v317 = vunpack.c.l.b16 %v274
        %v318 = vunpack.c.h.b16 %v274
        %v319 = vpack.c.b16 %v315, %v311
        %v320 = vpack.c.b16 %v316, %v312
        %v321 = vpack.c.b16 %v317, %v313
        %v322 = vpack.c.b16 %v318, %v314
        %vm327 = vcmask 130048
        %v329 = vsel %vm327, %v305, 0
        %v332 = vsel %vm327, %v306, 0
        %334 = vmatprep.subr.bf16.mxu0 %v320
        %335 = vmatpush1.bf16.msra.mxu0 %v319
        %336 = vmatprep.subr.bf16.mxu0 0
        %337 = vmatpush1.bf16.msra.mxu0 0
        %338 = vmatprep.subr.bf16.mxu0 0
        %339 = vmatpush1.bf16.msra.mxu0 0
        %340 = vmatprep.subr.bf16.mxu0 0
        %341 = vmatpush1.bf16.msra.mxu0 0
        %342 = vmatprep.subr.bf16.mxu0 0
        %343 = vmatpush1.bf16.msra.mxu0 0
        %344 = vmatprep.subr.bf16.mxu0 0
        %345 = vmatpush1.bf16.msra.mxu0 0
        %346 = vmatprep.subr.bf16.mxu0 0
        %347 = vmatpush1.bf16.msra.mxu0 0
        %348 = vmatprep.subr.bf16.mxu0 0
        %349 = vmatpush1.bf16.msra.mxu0 0
        %350 = vmatprep.subr.bf16.mxu0 0
        %351 = vmatpush1.bf16.msra.mxu0 0
        %352 = vmatprep.subr.bf16.mxu0 0
        %353 = vmatpush1.bf16.msra.mxu0 0
        %354 = vmatprep.subr.bf16.mxu0 0
        %355 = vmatpush1.bf16.msra.mxu0 0
        %356 = vmatprep.subr.bf16.mxu0 0
        %357 = vmatpush1.bf16.msra.mxu0 0
        %358 = vmatprep.subr.bf16.mxu0 0
        %359 = vmatpush1.bf16.msra.mxu0 0
        %360 = vmatprep.subr.bf16.mxu0 0
        %361 = vmatpush1.bf16.msra.mxu0 0
        %362 = vmatprep.subr.bf16.mxu0 0
        %363 = vmatpush1.bf16.msra.mxu0 0
        %364 = vmatprep.subr.bf16.mxu0 0
        %365 = vmatpush1.bf16.msra.mxu0 0
        %366 = vmatprep.mubr.bf16.mxu0 0
        %367 = vmatmul.mubr.bf16.gmra.mrb[0].mxu0 %v329
        %v368 = vpop.f32.mrb[0].mxu0
        %v369 = vadd.f32 %v280, %v368
        %v370 = vpop.f32.mrb[0].mxu0
        %v371 = vadd.f32 %v284, %v370
        %v372 = vpop.f32.mrb[0].mxu0
        %v373 = vadd.f32 %v280, %v372
        %v374 = vpop.f32.mrb[0].mxu0
        %v375 = vadd.f32 %v284, %v374
        %376 = vmatprep.mubr.bf16.mxu0 0
        %377 = vmatmul.mubr.bf16.gmra.mrb[0].mxu0 %v332
        %v378 = vpop.f32.mrb[0].mxu0
        %v379 = vadd.f32 %v280, %v378
        %v380 = vpop.f32.mrb[0].mxu0
        %v381 = vadd.f32 %v284, %v380
        %v382 = vpop.f32.mrb[0].mxu0
        %v383 = vadd.f32 %v280, %v382
        %v384 = vpop.f32.mrb[0].mxu0
        %v385 = vadd.f32 %v284, %v384
        %386 = vdwg.mxu0
        %387 = vmatprep.subr.bf16.mxu0 %v322
        %388 = vmatpush1.bf16.msra.mxu0 %v321
        %389 = vmatprep.subr.bf16.mxu0 0
        %390 = vmatpush1.bf16.msra.mxu0 0
        %391 = vmatprep.subr.bf16.mxu0 0
        %392 = vmatpush1.bf16.msra.mxu0 0
        %393 = vmatprep.subr.bf16.mxu0 0
        %394 = vmatpush1.bf16.msra.mxu0 0
        %395 = vmatprep.subr.bf16.mxu0 0
        %396 = vmatpush1.bf16.msra.mxu0 0
        %397 = vmatprep.subr.bf16.mxu0 0
        %398 = vmatpush1.bf16.msra.mxu0 0
        %399 = vmatprep.subr.bf16.mxu0 0
        %400 = vmatpush1.bf16.msra.mxu0 0
        %401 = vmatprep.subr.bf16.mxu0 0
        %402 = vmatpush1.bf16.msra.mxu0 0
        %403 = vmatprep.subr.bf16.mxu0 0
        %404 = vmatpush1.bf16.msra.mxu0 0
        %405 = vmatprep.subr.bf16.mxu0 0
        %406 = vmatpush1.bf16.msra.mxu0 0
        %407 = vmatprep.subr.bf16.mxu0 0
        %408 = vmatpush1.bf16.msra.mxu0 0
        %409 = vmatprep.subr.bf16.mxu0 0
        %410 = vmatpush1.bf16.msra.mxu0 0
        %411 = vmatprep.subr.bf16.mxu0 0
        %412 = vmatpush1.bf16.msra.mxu0 0
        %413 = vmatprep.subr.bf16.mxu0 0
        %414 = vmatpush1.bf16.msra.mxu0 0
        %415 = vmatprep.subr.bf16.mxu0 0
        %416 = vmatpush1.bf16.msra.mxu0 0
        %417 = vmatprep.subr.bf16.mxu0 0
        %418 = vmatpush1.bf16.msra.mxu0 0
        %419 = vmatprep.mubr.bf16.mxu0 0
        %420 = vmatmul.mubr.bf16.gmra.mrb[0].mxu0 %v329
        %v421 = vpop.f32.mrb[0].mxu0
        %v422 = vadd.f32 %v288, %v421
        %v423 = vpop.f32.mrb[0].mxu0
        %v424 = vadd.f32 %v292, %v423
        %v425 = vpop.f32.mrb[0].mxu0
        %v426 = vadd.f32 %v288, %v425
        %v427 = vpop.f32.mrb[0].mxu0
        %v428 = vadd.f32 %v292, %v427
        %429 = vmatprep.mubr.bf16.mxu0 0
        %430 = vmatmul.mubr.bf16.gmra.mrb[0].mxu0 %v332
        %v431 = vpop.f32.mrb[0].mxu0
        %v432 = vadd.f32 %v288, %v431
        %v433 = vpop.f32.mrb[0].mxu0
        %v434 = vadd.f32 %v292, %v433
        %v435 = vpop.f32.mrb[0].mxu0
        %v436 = vadd.f32 %v288, %v435
        %v437 = vpop.f32.mrb[0].mxu0
        %v438 = vadd.f32 %v292, %v437
        %439 = vdwg.mxu0
        %440 = vst [vmem:[#allocation2] sm:$0xff] %v369
        %441 = vst [vmem:[#allocation2 + $0x8] sm:$0xff] %v371
        %442 = vst [vmem:[#allocation2 + $0x10] sm:$0xff] %v422
        %443 = vst [vmem:[#allocation2 + $0x18] sm:$0xff] %v424
        %444 = vst [vmem:[#allocation2 + $0x20] sm:$0xff] %v373
        %445 = vst [vmem:[#allocation2 + $0x28] sm:$0xff] %v375
        %446 = vst [vmem:[#allocation2 + $0x30] sm:$0xff] %v426
        %447 = vst [vmem:[#allocation2 + $0x38] sm:$0xff] %v428
        %448 = vst [vmem:[#allocation2 + $0x40] sm:$0xff] %v379
        %449 = vst [vmem:[#allocation2 + $0x48] sm:$0xff] %v381
        %450 = vst [vmem:[#allocation2 + $0x50] sm:$0xff] %v432
        %451 = vst [vmem:[#allocation2 + $0x58] sm:$0xff] %v434
        %452 = vst [vmem:[#allocation2 + $0x60] sm:$0xff] %v383
        %453 = vst [vmem:[#allocation2 + $0x68] sm:$0xff] %v385
        %454 = vst [vmem:[#allocation2 + $0x70] sm:$0xff] %v436
        %455 = vst [vmem:[#allocation2 + $0x78] sm:$0xff] %v438
        %v456 = vld [vmem:[#allocation3] sm:$0xff]
        %v457 = vld [vmem:[#allocation4] sm:$0xff]
        %s458 = smul.u32 0, 4
        %s459 = smul.addr %s458, 8
        %s460 = scalar_lea.vmem [#allocation2], %s459
        %v461 = vld [vmem:[%s460] sm:$0xff]
        %v462 = vld [vmem:[%s460 + $0x8] sm:$0xff]
        %v463 = vld [vmem:[%s460 + $0x10] sm:$0xff]
        %v464 = vld [vmem:[%s460 + $0x18] sm:$0xff]
        %v465 = vpack.c.bf16 %v456, %v456
        %v466 = vld [vmem:[#allocation10] sm:$0xff]
        %v467 = vld [vmem:[#allocation10 + $0x8] sm:$0xff]
        %v468 = vld [vmem:[#allocation10 + $0x10] sm:$0xff]
        %v469 = vld [vmem:[#allocation10 + $0x18] sm:$0xff]
        %v470 = vld [vmem:[#allocation10 + $0x20] sm:$0xff]
        %v471 = vld [vmem:[#allocation10 + $0x28] sm:$0xff]
        %v472 = vld [vmem:[#allocation10 + $0x30] sm:$0xff]
        %v473 = vld [vmem:[#allocation10 + $0x38] sm:$0xff]
        %v474 = vld [vmem:[#allocation10 + $0x40] sm:$0xff]
        %v475 = vld [vmem:[#allocation10 + $0x48] sm:$0xff]
        %v476 = vld [vmem:[#allocation10 + $0x50] sm:$0xff]
        %v477 = vld [vmem:[#allocation10 + $0x58] sm:$0xff]
        %v478 = vld [vmem:[#allocation10 + $0x60] sm:$0xff]
        %v479 = vld [vmem:[#allocation10 + $0x68] sm:$0xff]
        %v480 = vld [vmem:[#allocation10 + $0x70] sm:$0xff]
        %v481 = vld [vmem:[#allocation10 + $0x78] sm:$0xff]
        %v482 = vld [vmem:[#allocation10 + $0x80] sm:$0xff]
        %v483 = vld [vmem:[#allocation10 + $0x88] sm:$0xff]
        %v484 = vld [vmem:[#allocation10 + $0x90] sm:$0xff]
        %v485 = vld [vmem:[#allocation10 + $0x98] sm:$0xff]
        %v486 = vld [vmem:[#allocation10 + $0xa0] sm:$0xff]
        %v487 = vld [vmem:[#allocation10 + $0xa8] sm:$0xff]
        %v488 = vld [vmem:[#allocation10 + $0xb0] sm:$0xff]
        %v489 = vld [vmem:[#allocation10 + $0xb8] sm:$0xff]
        %v490 = vld [vmem:[#allocation10 + $0xc0] sm:$0xff]
        %v491 = vld [vmem:[#allocation10 + $0xc8] sm:$0xff]
        %v492 = vld [vmem:[#allocation10 + $0xd0] sm:$0xff]
        %v493 = vld [vmem:[#allocation10 + $0xd8] sm:$0xff]
        %v494 = vld [vmem:[#allocation10 + $0xe0] sm:$0xff]
        %v495 = vld [vmem:[#allocation10 + $0xe8] sm:$0xff]
        %v496 = vld [vmem:[#allocation10 + $0xf0] sm:$0xff]
        %v497 = vld [vmem:[#allocation10 + $0xf8] sm:$0xff]
        %v530 = vunpack.c.l.b16 %v466
        %v531 = vunpack.c.h.b16 %v466
        %v532 = vunpack.c.l.b16 %v467
        %v533 = vunpack.c.h.b16 %v467
        %v534 = vunpack.c.l.b16 %v468
        %v535 = vunpack.c.h.b16 %v468
        %v536 = vunpack.c.l.b16 %v469
        %v537 = vunpack.c.h.b16 %v469
        %v538 = vunpack.c.l.b16 %v470
        %v539 = vunpack.c.h.b16 %v470
        %v540 = vunpack.c.l.b16 %v471
        %v541 = vunpack.c.h.b16 %v471
        %v542 = vunpack.c.l.b16 %v472
        %v543 = vunpack.c.h.b16 %v472
        %v544 = vunpack.c.l.b16 %v473
        %v545 = vunpack.c.h.b16 %v473
        %v546 = vunpack.c.l.b16 %v474
        %v547 = vunpack.c.h.b16 %v474
        %v548 = vunpack.c.l.b16 %v475
        %v549 = vunpack.c.h.b16 %v475
        %v550 = vunpack.c.l.b16 %v476
        %v551 = vunpack.c.h.b16 %v476
        %v552 = vunpack.c.l.b16 %v477
        %v553 = vunpack.c.h.b16 %v477
        %v554 = vunpack.c.l.b16 %v478
        %v555 = vunpack.c.h.b16 %v478
        %v556 = vunpack.c.l.b16 %v479
        %v557 = vunpack.c.h.b16 %v479
        %v558 = vunpack.c.l.b16 %v480
        %v559 = vunpack.c.h.b16 %v480
        %v560 = vunpack.c.l.b16 %v481
        %v561 = vunpack.c.h.b16 %v481
        %v562 = vunpack.c.l.b16 %v482
        %v563 = vunpack.c.h.b16 %v482
        %v564 = vunpack.c.l.b16 %v483
        %v565 = vunpack.c.h.b16 %v483
        %v566 = vunpack.c.l.b16 %v484
        %v567 = vunpack.c.h.b16 %v484
        %v568 = vunpack.c.l.b16 %v485
        %v569 = vunpack.c.h.b16 %v485
        %v570 = vunpack.c.l.b16 %v486
        %v571 = vunpack.c.h.b16 %v486
        %v572 = vunpack.c.l.b16 %v487
        %v573 = vunpack.c.h.b16 %v487
        %v574 = vunpack.c.l.b16 %v488
        %v575 = vunpack.c.h.b16 %v488
        %v576 = vunpack.c.l.b16 %v489
        %v577 = vunpack.c.h.b16 %v489
        %v578 = vunpack.c.l.b16 %v490
        %v579 = vunpack.c.h.b16 %v490
        %v580 = vunpack.c.l.b16 %v491
        %v581 = vunpack.c.h.b16 %v491
        %v582 = vunpack.c.l.b16 %v492
        %v583 = vunpack.c.h.b16 %v492
        %v584 = vunpack.c.l.b16 %v493
        %v585 = vunpack.c.h.b16 %v493
        %v586 = vunpack.c.l.b16 %v494
        %v587 = vunpack.c.h.b16 %v494
        %v588 = vunpack.c.l.b16 %v495
        %v589 = vunpack.c.h.b16 %v495
        %v590 = vunpack.c.l.b16 %v496
        %v591 = vunpack.c.h.b16 %v496
        %v592 = vunpack.c.l.b16 %v497
        %v593 = vunpack.c.h.b16 %v497
        %v594 = vpack.c.b16 %v534, %v530
        %v595 = vpack.c.b16 %v535, %v531
        %v596 = vpack.c.b16 %v536, %v532
        %v597 = vpack.c.b16 %v537, %v533
        %v598 = vpack.c.b16 %v542, %v538
        %v599 = vpack.c.b16 %v543, %v539
        %v600 = vpack.c.b16 %v544, %v540
        %v601 = vpack.c.b16 %v545, %v541
        %v602 = vpack.c.b16 %v550, %v546
        %v603 = vpack.c.b16 %v551, %v547
        %v604 = vpack.c.b16 %v552, %v548
        %v605 = vpack.c.b16 %v553, %v549
        %v606 = vpack.c.b16 %v558, %v554
        %v607 = vpack.c.b16 %v559, %v555
        %v608 = vpack.c.b16 %v560, %v556
        %v609 = vpack.c.b16 %v561, %v557
        %v610 = vpack.c.b16 %v566, %v562
        %v611 = vpack.c.b16 %v567, %v563
        %v612 = vpack.c.b16 %v568, %v564
        %v613 = vpack.c.b16 %v569, %v565
        %v614 = vpack.c.b16 %v574, %v570
        %v615 = vpack.c.b16 %v575, %v571
        %v616 = vpack.c.b16 %v576, %v572
        %v617 = vpack.c.b16 %v577, %v573
        %v618 = vpack.c.b16 %v582, %v578
        %v619 = vpack.c.b16 %v583, %v579
        %v620 = vpack.c.b16 %v584, %v580
        %v621 = vpack.c.b16 %v585, %v581
        %v622 = vpack.c.b16 %v590, %v586
        %v623 = vpack.c.b16 %v591, %v587
        %v624 = vpack.c.b16 %v592, %v588
        %v625 = vpack.c.b16 %v593, %v589
        %658 = vmatprep.subr.bf16.mxu0 %v595
        %659 = vmatpush1.bf16.msra.mxu0 %v594
        %660 = vmatprep.subr.bf16.mxu0 %v599
        %661 = vmatpush1.bf16.msra.mxu0 %v598
        %662 = vmatprep.subr.bf16.mxu0 %v603
        %663 = vmatpush1.bf16.msra.mxu0 %v602
        %664 = vmatprep.subr.bf16.mxu0 %v607
        %665 = vmatpush1.bf16.msra.mxu0 %v606
        %666 = vmatprep.subr.bf16.mxu0 %v611
        %667 = vmatpush1.bf16.msra.mxu0 %v610
        %668 = vmatprep.subr.bf16.mxu0 %v615
        %669 = vmatpush1.bf16.msra.mxu0 %v614
        %670 = vmatprep.subr.bf16.mxu0 %v619
        %671 = vmatpush1.bf16.msra.mxu0 %v618
        %672 = vmatprep.subr.bf16.mxu0 %v623
        %673 = vmatpush1.bf16.msra.mxu0 %v622
        %674 = vmatprep.subr.bf16.mxu0 0
        %675 = vmatpush1.bf16.msra.mxu0 0
        %676 = vmatprep.subr.bf16.mxu0 0
        %677 = vmatpush1.bf16.msra.mxu0 0
        %678 = vmatprep.subr.bf16.mxu0 0
        %679 = vmatpush1.bf16.msra.mxu0 0
        %680 = vmatprep.subr.bf16.mxu0 0
        %681 = vmatpush1.bf16.msra.mxu0 0
        %682 = vmatprep.subr.bf16.mxu0 0
        %683 = vmatpush1.bf16.msra.mxu0 0
        %684 = vmatprep.subr.bf16.mxu0 0
        %685 = vmatpush1.bf16.msra.mxu0 0
        %686 = vmatprep.subr.bf16.mxu0 0
        %687 = vmatpush1.bf16.msra.mxu0 0
        %688 = vmatprep.subr.bf16.mxu0 0
        %689 = vmatpush1.bf16.msra.mxu0 0
        %690 = vmatprep.mubr.bf16.mxu0 0
        %691 = vmatmul.mubr.bf16.gmra.mrb[0].mxu0 %v465
        %v692 = vpop.f32.mrb[0].mxu0
        %v693 = vadd.f32 0.0, %v692
        %v694 = vpop.f32.mrb[0].mxu0
        %v695 = vadd.f32 0.0, %v694
        %v696 = vpop.f32.mrb[0].mxu0
        %v697 = vpop.f32.mrb[0].mxu0
        %698 = vdwg.mxu0
        %699 = vmatprep.subr.bf16.mxu0 %v597
        %700 = vmatpush1.bf16.msra.mxu0 %v596
        %701 = vmatprep.subr.bf16.mxu0 %v601
        %702 = vmatpush1.bf16.msra.mxu0 %v600
        %703 = vmatprep.subr.bf16.mxu0 %v605
        %704 = vmatpush1.bf16.msra.mxu0 %v604
        %705 = vmatprep.subr.bf16.mxu0 %v609
        %706 = vmatpush1.bf16.msra.mxu0 %v608
        %707 = vmatprep.subr.bf16.mxu0 %v613
        %708 = vmatpush1.bf16.msra.mxu0 %v612
        %709 = vmatprep.subr.bf16.mxu0 %v617
        %710 = vmatpush1.bf16.msra.mxu0 %v616
        %711 = vmatprep.subr.bf16.mxu0 %v621
        %712 = vmatpush1.bf16.msra.mxu0 %v620
        %713 = vmatprep.subr.bf16.mxu0 %v625
        %714 = vmatpush1.bf16.msra.mxu0 %v624
        %715 = vmatprep.subr.bf16.mxu0 0
        %716 = vmatpush1.bf16.msra.mxu0 0
        %717 = vmatprep.subr.bf16.mxu0 0
        %718 = vmatpush1.bf16.msra.mxu0 0
        %719 = vmatprep.subr.bf16.mxu0 0
        %720 = vmatpush1.bf16.msra.mxu0 0
        %721 = vmatprep.subr.bf16.mxu0 0
        %722 = vmatpush1.bf16.msra.mxu0 0
        %723 = vmatprep.subr.bf16.mxu0 0
        %724 = vmatpush1.bf16.msra.mxu0 0
        %725 = vmatprep.subr.bf16.mxu0 0
        %726 = vmatpush1.bf16.msra.mxu0 0
        %727 = vmatprep.subr.bf16.mxu0 0
        %728 = vmatpush1.bf16.msra.mxu0 0
        %729 = vmatprep.subr.bf16.mxu0 0
        %730 = vmatpush1.bf16.msra.mxu0 0
        %731 = vmatprep.mubr.bf16.mxu0 0
        %732 = vmatmul.mubr.bf16.gmra.mrb[0].mxu0 %v465
        %v733 = vpop.f32.mrb[0].mxu0
        %v734 = vadd.f32 0.0, %v733
        %v735 = vpop.f32.mrb[0].mxu0
        %v736 = vadd.f32 0.0, %v735
        %v737 = vpop.f32.mrb[0].mxu0
        %v738 = vpop.f32.mrb[0].mxu0
        %739 = vdwg.mxu0
        %v740 = vadd.f32 %v461, %v693
        %v741 = vadd.f32 %v462, %v695
        %v742 = vadd.f32 %v463, %v734
        %v743 = vadd.f32 %v464, %v736
        %v744 = vxor.u32 %v740, 2147483648
        %v745 = vxor.u32 %v741, 2147483648
        %v746 = vxor.u32 %v742, 2147483648
        %v747 = vmul.f32 %v744, 1.442695
        %v748 = vpow.pop %v747
        %v749 = vmul.f32 %v745, 1.442695
        %v750 = vpow.pop %v749
        %v751 = vmul.f32 %v746, 1.442695
        %v752 = vpow.pop %v751
        %v753 = vadd.f32 %v748, 1.0
        %v754 = vadd.f32 %v750, 1.0
        %v755 = vadd.f32 %v752, 1.0
        %v756 = vrcp.pop %v753
        %v757 = vmul.f32 1.0, %v756
        %v758 = vrcp.pop %v754
        %v759 = vmul.f32 1.0, %v758
        %v760 = vrcp.pop %v755
        %v761 = vmul.f32 1.0, %v760
        %v762 = vtanh.pop %v743
        %v763 = vmul.f32 %v759, %v457
        %v764 = vmul.f32 %v757, %v762
        %v765 = vadd.f32 %v763, %v764
        %v766 = vtanh.pop %v765
        %v767 = vmul.f32 %v761, %v766
        %v768 = vpack.c.bf16 %v767, %v767
        %769 = vst [vmem:[%s257] sm:$0xf] %v768
        %s770 = smul.u32 1, 4
        %s771 = smul.addr %s770, 8
        %s772 = scalar_lea.vmem [#allocation2], %s771
        %v773 = vld [vmem:[%s772] sm:$0xff]
        %v774 = vld [vmem:[%s772 + $0x8] sm:$0xff]
        %v775 = vld [vmem:[%s772 + $0x10] sm:$0xff]
        %v776 = vld [vmem:[%s772 + $0x18] sm:$0xff]
        %v777 = vld [vmem:[#allocation10] sm:$0xff]
        %v778 = vld [vmem:[#allocation10 + $0x8] sm:$0xff]
        %v779 = vld [vmem:[#allocation10 + $0x10] sm:$0xff]
        %v780 = vld [vmem:[#allocation10 + $0x18] sm:$0xff]
        %v781 = vld [vmem:[#allocation10 + $0x20] sm:$0xff]
        %v782 = vld [vmem:[#allocation10 + $0x28] sm:$0xff]
        %v783 = vld [vmem:[#allocation10 + $0x30] sm:$0xff]
        %v784 = vld [vmem:[#allocation10 + $0x38] sm:$0xff]
        %v785 = vld [vmem:[#allocation10 + $0x40] sm:$0xff]
        %v786 = vld [vmem:[#allocation10 + $0x48] sm:$0xff]
        %v787 = vld [vmem:[#allocation10 + $0x50] sm:$0xff]
        %v788 = vld [vmem:[#allocation10 + $0x58] sm:$0xff]
        %v789 = vld [vmem:[#allocation10 + $0x60] sm:$0xff]
        %v790 = vld [vmem:[#allocation10 + $0x68] sm:$0xff]
        %v791 = vld [vmem:[#allocation10 + $0x70] sm:$0xff]
        %v792 = vld [vmem:[#allocation10 + $0x78] sm:$0xff]
        %v793 = vld [vmem:[#allocation10 + $0x80] sm:$0xff]
        %v794 = vld [vmem:[#allocation10 + $0x88] sm:$0xff]
        %v795 = vld [vmem:[#allocation10 + $0x90] sm:$0xff]
        %v796 = vld [vmem:[#allocation10 + $0x98] sm:$0xff]
        %v797 = vld [vmem:[#allocation10 + $0xa0] sm:$0xff]
        %v798 = vld [vmem:[#allocation10 + $0xa8] sm:$0xff]
        %v799 = vld [vmem:[#allocation10 + $0xb0] sm:$0xff]
        %v800 = vld [vmem:[#allocation10 + $0xb8] sm:$0xff]
        %v801 = vld [vmem:[#allocation10 + $0xc0] sm:$0xff]
        %v802 = vld [vmem:[#allocation10 + $0xc8] sm:$0xff]
        %v803 = vld [vmem:[#allocation10 + $0xd0] sm:$0xff]
        %v804 = vld [vmem:[#allocation10 + $0xd8] sm:$0xff]
        %v805 = vld [vmem:[#allocation10 + $0xe0] sm:$0xff]
        %v806 = vld [vmem:[#allocation10 + $0xe8] sm:$0xff]
        %v807 = vld [vmem:[#allocation10 + $0xf0] sm:$0xff]
        %v808 = vld [vmem:[#allocation10 + $0xf8] sm:$0xff]
        %v841 = vunpack.c.l.b16 %v777
        %v842 = vunpack.c.h.b16 %v777
        %v843 = vunpack.c.l.b16 %v778
        %v844 = vunpack.c.h.b16 %v778
        %v845 = vunpack.c.l.b16 %v779
        %v846 = vunpack.c.h.b16 %v779
        %v847 = vunpack.c.l.b16 %v780
        %v848 = vunpack.c.h.b16 %v780
        %v849 = vunpack.c.l.b16 %v781
        %v850 = vunpack.c.h.b16 %v781
        %v851 = vunpack.c.l.b16 %v782
        %v852 = vunpack.c.h.b16 %v782
        %v853 = vunpack.c.l.b16 %v783
        %v854 = vunpack.c.h.b16 %v783
        %v855 = vunpack.c.l.b16 %v784
        %v856 = vunpack.c.h.b16 %v784
        %v857 = vunpack.c.l.b16 %v785
        %v858 = vunpack.c.h.b16 %v785
        %v859 = vunpack.c.l.b16 %v786
        %v860 = vunpack.c.h.b16 %v786
        %v861 = vunpack.c.l.b16 %v787
        %v862 = vunpack.c.h.b16 %v787
        %v863 = vunpack.c.l.b16 %v788
        %v864 = vunpack.c.h.b16 %v788
        %v865 = vunpack.c.l.b16 %v789
        %v866 = vunpack.c.h.b16 %v789
        %v867 = vunpack.c.l.b16 %v790
        %v868 = vunpack.c.h.b16 %v790
        %v869 = vunpack.c.l.b16 %v791
        %v870 = vunpack.c.h.b16 %v791
        %v871 = vunpack.c.l.b16 %v792
        %v872 = vunpack.c.h.b16 %v792
        %v873 = vunpack.c.l.b16 %v793
        %v874 = vunpack.c.h.b16 %v793
        %v875 = vunpack.c.l.b16 %v794
        %v876 = vunpack.c.h.b16 %v794
        %v877 = vunpack.c.l.b16 %v795
        %v878 = vunpack.c.h.b16 %v795
        %v879 = vunpack.c.l.b16 %v796
        %v880 = vunpack.c.h.b16 %v796
        %v881 = vunpack.c.l.b16 %v797
        %v882 = vunpack.c.h.b16 %v797
        %v883 = vunpack.c.l.b16 %v798
        %v884 = vunpack.c.h.b16 %v798
        %v885 = vunpack.c.l.b16 %v799
        %v886 = vunpack.c.h.b16 %v799
        %v887 = vunpack.c.l.b16 %v800
        %v888 = vunpack.c.h.b16 %v800
        %v889 = vunpack.c.l.b16 %v801
        %v890 = vunpack.c.h.b16 %v801
        %v891 = vunpack.c.l.b16 %v802
        %v892 = vunpack.c.h.b16 %v802
        %v893 = vunpack.c.l.b16 %v803
        %v894 = vunpack.c.h.b16 %v803
        %v895 = vunpack.c.l.b16 %v804
        %v896 = vunpack.c.h.b16 %v804
        %v897 = vunpack.c.l.b16 %v805
        %v898 = vunpack.c.h.b16 %v805
        %v899 = vunpack.c.l.b16 %v806
        %v900 = vunpack.c.h.b16 %v806
        %v901 = vunpack.c.l.b16 %v807
        %v902 = vunpack.c.h.b16 %v807
        %v903 = vunpack.c.l.b16 %v808
        %v904 = vunpack.c.h.b16 %v808
        %v905 = vpack.c.b16 %v845, %v841
        %v906 = vpack.c.b16 %v846, %v842
        %v907 = vpack.c.b16 %v847, %v843
        %v908 = vpack.c.b16 %v848, %v844
        %v909 = vpack.c.b16 %v853, %v849
        %v910 = vpack.c.b16 %v854, %v850
        %v911 = vpack.c.b16 %v855, %v851
        %v912 = vpack.c.b16 %v856, %v852
        %v913 = vpack.c.b16 %v861, %v857
        %v914 = vpack.c.b16 %v862, %v858
        %v915 = vpack.c.b16 %v863, %v859
        %v916 = vpack.c.b16 %v864, %v860
        %v917 = vpack.c.b16 %v869, %v865
        %v918 = vpack.c.b16 %v870, %v866
        %v919 = vpack.c.b16 %v871, %v867
        %v920 = vpack.c.b16 %v872, %v868
        %v921 = vpack.c.b16 %v877, %v873
        %v922 = vpack.c.b16 %v878, %v874
        %v923 = vpack.c.b16 %v879, %v875
        %v924 = vpack.c.b16 %v880, %v876
        %v925 = vpack.c.b16 %v885, %v881
        %v926 = vpack.c.b16 %v886, %v882
        %v927 = vpack.c.b16 %v887, %v883
        %v928 = vpack.c.b16 %v888, %v884
        %v929 = vpack.c.b16 %v893, %v889
        %v930 = vpack.c.b16 %v894, %v890
        %v931 = vpack.c.b16 %v895, %v891
        %v932 = vpack.c.b16 %v896, %v892
        %v933 = vpack.c.b16 %v901, %v897
        %v934 = vpack.c.b16 %v902, %v898
        %v935 = vpack.c.b16 %v903, %v899
        %v936 = vpack.c.b16 %v904, %v900
        %969 = vmatprep.subr.bf16.mxu0 %v906
        %970 = vmatpush1.bf16.msra.mxu0 %v905
        %971 = vmatprep.subr.bf16.mxu0 %v910
        %972 = vmatpush1.bf16.msra.mxu0 %v909
        %973 = vmatprep.subr.bf16.mxu0 %v914
        %974 = vmatpush1.bf16.msra.mxu0 %v913
        %975 = vmatprep.subr.bf16.mxu0 %v918
        %976 = vmatpush1.bf16.msra.mxu0 %v917
        %977 = vmatprep.subr.bf16.mxu0 %v922
        %978 = vmatpush1.bf16.msra.mxu0 %v921
        %979 = vmatprep.subr.bf16.mxu0 %v926
        %980 = vmatpush1.bf16.msra.mxu0 %v925
        %981 = vmatprep.subr.bf16.mxu0 %v930
        %982 = vmatpush1.bf16.msra.mxu0 %v929
        %983 = vmatprep.subr.bf16.mxu0 %v934
        %984 = vmatpush1.bf16.msra.mxu0 %v933
        %985 = vmatprep.subr.bf16.mxu0 0
        %986 = vmatpush1.bf16.msra.mxu0 0
        %987 = vmatprep.subr.bf16.mxu0 0
        %988 = vmatpush1.bf16.msra.mxu0 0
        %989 = vmatprep.subr.bf16.mxu0 0
        %990 = vmatpush1.bf16.msra.mxu0 0
        %991 = vmatprep.subr.bf16.mxu0 0
        %992 = vmatpush1.bf16.msra.mxu0 0
        %993 = vmatprep.subr.bf16.mxu0 0
        %994 = vmatpush1.bf16.msra.mxu0 0
        %995 = vmatprep.subr.bf16.mxu0 0
        %996 = vmatpush1.bf16.msra.mxu0 0
        %997 = vmatprep.subr.bf16.mxu0 0
        %998 = vmatpush1.bf16.msra.mxu0 0
        %999 = vmatprep.subr.bf16.mxu0 0
        %1000 = vmatpush1.bf16.msra.mxu0 0
        %1001 = vmatprep.mubr.bf16.mxu0 0
        %1002 = vmatmul.mubr.bf16.gmra.mrb[0].mxu0 %v768
        %v1003 = vpop.f32.mrb[0].mxu0
        %v1004 = vadd.f32 0.0, %v1003
        %v1005 = vpop.f32.mrb[0].mxu0
        %v1006 = vadd.f32 0.0, %v1005
        %v1007 = vpop.f32.mrb[0].mxu0
        %v1008 = vpop.f32.mrb[0].mxu0
        %1009 = vdwg.mxu0
        %1010 = vmatprep.subr.bf16.mxu0 %v908
        %1011 = vmatpush1.bf16.msra.mxu0 %v907
        %1012 = vmatprep.subr.bf16.mxu0 %v912
        %1013 = vmatpush1.bf16.msra.mxu0 %v911
        %1014 = vmatprep.subr.bf16.mxu0 %v916
        %1015 = vmatpush1.bf16.msra.mxu0 %v915
        %1016 = vmatprep.subr.bf16.mxu0 %v920
        %1017 = vmatpush1.bf16.msra.mxu0 %v919
        %1018 = vmatprep.subr.bf16.mxu0 %v924
        %1019 = vmatpush1.bf16.msra.mxu0 %v923
        %1020 = vmatprep.subr.bf16.mxu0 %v928
        %1021 = vmatpush1.bf16.msra.mxu0 %v927
        %1022 = vmatprep.subr.bf16.mxu0 %v932
        %1023 = vmatpush1.bf16.msra.mxu0 %v931
        %1024 = vmatprep.subr.bf16.mxu0 %v936
        %1025 = vmatpush1.bf16.msra.mxu0 %v935
        %1026 = vmatprep.subr.bf16.mxu0 0
        %1027 = vmatpush1.bf16.msra.mxu0 0
        %1028 = vmatprep.subr.bf16.mxu0 0
        %1029 = vmatpush1.bf16.msra.mxu0 0
        %1030 = vmatprep.subr.bf16.mxu0 0
        %1031 = vmatpush1.bf16.msra.mxu0 0
        %1032 = vmatprep.subr.bf16.mxu0 0
        %1033 = vmatpush1.bf16.msra.mxu0 0
        %1034 = vmatprep.subr.bf16.mxu0 0
        %1035 = vmatpush1.bf16.msra.mxu0 0
        %1036 = vmatprep.subr.bf16.mxu0 0
        %1037 = vmatpush1.bf16.msra.mxu0 0
        %1038 = vmatprep.subr.bf16.mxu0 0
        %1039 = vmatpush1.bf16.msra.mxu0 0
        %1040 = vmatprep.subr.bf16.mxu0 0
        %1041 = vmatpush1.bf16.msra.mxu0 0
        %1042 = vmatprep.mubr.bf16.mxu0 0
        %1043 = vmatmul.mubr.bf16.gmra.mrb[0].mxu0 %v768
        %v1044 = vpop.f32.mrb[0].mxu0
        %v1045 = vadd.f32 0.0, %v1044
        %v1046 = vpop.f32.mrb[0].mxu0
        %v1047 = vadd.f32 0.0, %v1046
        %v1048 = vpop.f32.mrb[0].mxu0
        %v1049 = vpop.f32.mrb[0].mxu0
        %1050 = vdwg.mxu0
        %v1051 = vadd.f32 %v773, %v1004
        %v1052 = vadd.f32 %v774, %v1006
        %v1053 = vadd.f32 %v775, %v1045
        %v1054 = vadd.f32 %v776, %v1047
        %v1055 = vxor.u32 %v1051, 2147483648
        %v1056 = vxor.u32 %v1052, 2147483648
        %v1057 = vxor.u32 %v1053, 2147483648
        %v1058 = vmul.f32 %v1055, 1.442695
        %v1059 = vpow.pop %v1058
        %v1060 = vmul.f32 %v1056, 1.442695
        %v1061 = vpow.pop %v1060
        %v1062 = vmul.f32 %v1057, 1.442695
        %v1063 = vpow.pop %v1062
        %v1064 = vadd.f32 %v1059, 1.0
        %v1065 = vadd.f32 %v1061, 1.0
        %v1066 = vadd.f32 %v1063, 1.0
        %v1067 = vrcp.pop %v1064
        %v1068 = vmul.f32 1.0, %v1067
        %v1069 = vrcp.pop %v1065
        %v1070 = vmul.f32 1.0, %v1069
        %v1071 = vrcp.pop %v1066
        %v1072 = vmul.f32 1.0, %v1071
        %v1073 = vtanh.pop %v1054
        %v1074 = vmul.f32 %v1070, %v765
        %v1075 = vmul.f32 %v1068, %v1073
        %v1076 = vadd.f32 %v1074, %v1075
        %v1077 = vtanh.pop %v1076
        %v1078 = vmul.f32 %v1072, %v1077
        %v1079 = vpack.c.bf16 %v1078, %v1078
        %s1080 = scalar_lea.vmem %s257, 4 [#allocation13]
        %1081 = vst [vmem:[%s1080] sm:$0xf] %v1079
        %s1082 = smul.u32 2, 4
        %s1083 = smul.addr %s1082, 8
        %s1084 = scalar_lea.vmem [#allocation2], %s1083
        %v1085 = vld [vmem:[%s1084] sm:$0xff]
        %v1086 = vld [vmem:[%s1084 + $0x8] sm:$0xff]
        %v1087 = vld [vmem:[%s1084 + $0x10] sm:$0xff]
        %v1088 = vld [vmem:[%s1084 + $0x18] sm:$0xff]
        %v1089 = vld [vmem:[#allocation10] sm:$0xff]
        %v1090 = vld [vmem:[#allocation10 + $0x8] sm:$0xff]
        %v1091 = vld [vmem:[#allocation10 + $0x10] sm:$0xff]
        %v1092 = vld [vmem:[#allocation10 + $0x18] sm:$0xff]
        %v1093 = vld [vmem:[#allocation10 + $0x20] sm:$0xff]
        %v1094 = vld [vmem:[#allocation10 + $0x28] sm:$0xff]
        %v1095 = vld [vmem:[#allocation10 + $0x30] sm:$0xff]
        %v1096 = vld [vmem:[#allocation10 + $0x38] sm:$0xff]
        %v1097 = vld [vmem:[#allocation10 + $0x40] sm:$0xff]
        %v1098 = vld [vmem:[#allocation10 + $0x48] sm:$0xff]
        %v1099 = vld [vmem:[#allocation10 + $0x50] sm:$0xff]
        %v1100 = vld [vmem:[#allocation10 + $0x58] sm:$0xff]
        %v1101 = vld [vmem:[#allocation10 + $0x60] sm:$0xff]
        %v1102 = vld [vmem:[#allocation10 + $0x68] sm:$0xff]
        %v1103 = vld [vmem:[#allocation10 + $0x70] sm:$0xff]
        %v1104 = vld [vmem:[#allocation10 + $0x78] sm:$0xff]
        %v1105 = vld [vmem:[#allocation10 + $0x80] sm:$0xff]
        %v1106 = vld [vmem:[#allocation10 + $0x88] sm:$0xff]
        %v1107 = vld [vmem:[#allocation10 + $0x90] sm:$0xff]
        %v1108 = vld [vmem:[#allocation10 + $0x98] sm:$0xff]
        %v1109 = vld [vmem:[#allocation10 + $0xa0] sm:$0xff]
        %v1110 = vld [vmem:[#allocation10 + $0xa8] sm:$0xff]
        %v1111 = vld [vmem:[#allocation10 + $0xb0] sm:$0xff]
        %v1112 = vld [vmem:[#allocation10 + $0xb8] sm:$0xff]
        %v1113 = vld [vmem:[#allocation10 + $0xc0] sm:$0xff]
        %v1114 = vld [vmem:[#allocation10 + $0xc8] sm:$0xff]
        %v1115 = vld [vmem:[#allocation10 + $0xd0] sm:$0xff]
        %v1116 = vld [vmem:[#allocation10 + $0xd8] sm:$0xff]
        %v1117 = vld [vmem:[#allocation10 + $0xe0] sm:$0xff]
        %v1118 = vld [vmem:[#allocation10 + $0xe8] sm:$0xff]
        %v1119 = vld [vmem:[#allocation10 + $0xf0] sm:$0xff]
        %v1120 = vld [vmem:[#allocation10 + $0xf8] sm:$0xff]
        %v1153 = vunpack.c.l.b16 %v1089
        %v1154 = vunpack.c.h.b16 %v1089
        %v1155 = vunpack.c.l.b16 %v1090
        %v1156 = vunpack.c.h.b16 %v1090
        %v1157 = vunpack.c.l.b16 %v1091
        %v1158 = vunpack.c.h.b16 %v1091
        %v1159 = vunpack.c.l.b16 %v1092
        %v1160 = vunpack.c.h.b16 %v1092
        %v1161 = vunpack.c.l.b16 %v1093
        %v1162 = vunpack.c.h.b16 %v1093
        %v1163 = vunpack.c.l.b16 %v1094
        %v1164 = vunpack.c.h.b16 %v1094
        %v1165 = vunpack.c.l.b16 %v1095
        %v1166 = vunpack.c.h.b16 %v1095
        %v1167 = vunpack.c.l.b16 %v1096
        %v1168 = vunpack.c.h.b16 %v1096
        %v1169 = vunpack.c.l.b16 %v1097
        %v1170 = vunpack.c.h.b16 %v1097
        %v1171 = vunpack.c.l.b16 %v1098
        %v1172 = vunpack.c.h.b16 %v1098
        %v1173 = vunpack.c.l.b16 %v1099
        %v1174 = vunpack.c.h.b16 %v1099
        %v1175 = vunpack.c.l.b16 %v1100
        %v1176 = vunpack.c.h.b16 %v1100
        %v1177 = vunpack.c.l.b16 %v1101
        %v1178 = vunpack.c.h.b16 %v1101
        %v1179 = vunpack.c.l.b16 %v1102
        %v1180 = vunpack.c.h.b16 %v1102
        %v1181 = vunpack.c.l.b16 %v1103
        %v1182 = vunpack.c.h.b16 %v1103
        %v1183 = vunpack.c.l.b16 %v1104
        %v1184 = vunpack.c.h.b16 %v1104
        %v1185 = vunpack.c.l.b16 %v1105
        %v1186 = vunpack.c.h.b16 %v1105
        %v1187 = vunpack.c.l.b16 %v1106
        %v1188 = vunpack.c.h.b16 %v1106
        %v1189 = vunpack.c.l.b16 %v1107
        %v1190 = vunpack.c.h.b16 %v1107
        %v1191 = vunpack.c.l.b16 %v1108
        %v1192 = vunpack.c.h.b16 %v1108
        %v1193 = vunpack.c.l.b16 %v1109
        %v1194 = vunpack.c.h.b16 %v1109
        %v1195 = vunpack.c.l.b16 %v1110
        %v1196 = vunpack.c.h.b16 %v1110
        %v1197 = vunpack.c.l.b16 %v1111
        %v1198 = vunpack.c.h.b16 %v1111
        %v1199 = vunpack.c.l.b16 %v1112
        %v1200 = vunpack.c.h.b16 %v1112
        %v1201 = vunpack.c.l.b16 %v1113
        %v1202 = vunpack.c.h.b16 %v1113
        %v1203 = vunpack.c.l.b16 %v1114
        %v1204 = vunpack.c.h.b16 %v1114
        %v1205 = vunpack.c.l.b16 %v1115
        %v1206 = vunpack.c.h.b16 %v1115
        %v1207 = vunpack.c.l.b16 %v1116
        %v1208 = vunpack.c.h.b16 %v1116
        %v1209 = vunpack.c.l.b16 %v1117
        %v1210 = vunpack.c.h.b16 %v1117
        %v1211 = vunpack.c.l.b16 %v1118
        %v1212 = vunpack.c.h.b16 %v1118
        %v1213 = vunpack.c.l.b16 %v1119
        %v1214 = vunpack.c.h.b16 %v1119
        %v1215 = vunpack.c.l.b16 %v1120
        %v1216 = vunpack.c.h.b16 %v1120
        %v1217 = vpack.c.b16 %v1157, %v1153
        %v1218 = vpack.c.b16 %v1158, %v1154
        %v1219 = vpack.c.b16 %v1159, %v1155
        %v1220 = vpack.c.b16 %v1160, %v1156
        %v1221 = vpack.c.b16 %v1165, %v1161
        %v1222 = vpack.c.b16 %v1166, %v1162
        %v1223 = vpack.c.b16 %v1167, %v1163
        %v1224 = vpack.c.b16 %v1168, %v1164
        %v1225 = vpack.c.b16 %v1173, %v1169
        %v1226 = vpack.c.b16 %v1174, %v1170
        %v1227 = vpack.c.b16 %v1175, %v1171
        %v1228 = vpack.c.b16 %v1176, %v1172
        %v1229 = vpack.c.b16 %v1181, %v1177
        %v1230 = vpack.c.b16 %v1182, %v1178
        %v1231 = vpack.c.b16 %v1183, %v1179
        %v1232 = vpack.c.b16 %v1184, %v1180
        %v1233 = vpack.c.b16 %v1189, %v1185
        %v1234 = vpack.c.b16 %v1190, %v1186
        %v1235 = vpack.c.b16 %v1191, %v1187
        %v1236 = vpack.c.b16 %v1192, %v1188
        %v1237 = vpack.c.b16 %v1197, %v1193
        %v1238 = vpack.c.b16 %v1198, %v1194
        %v1239 = vpack.c.b16 %v1199, %v1195
        %v1240 = vpack.c.b16 %v1200, %v1196
        %v1241 = vpack.c.b16 %v1205, %v1201
        %v1242 = vpack.c.b16 %v1206, %v1202
        %v1243 = vpack.c.b16 %v1207, %v1203
        %v1244 = vpack.c.b16 %v1208, %v1204
        %v1245 = vpack.c.b16 %v1213, %v1209
        %v1246 = vpack.c.b16 %v1214, %v1210
        %v1247 = vpack.c.b16 %v1215, %v1211
        %v1248 = vpack.c.b16 %v1216, %v1212
        %1281 = vmatprep.subr.bf16.mxu0 %v1218
        %1282 = vmatpush1.bf16.msra.mxu0 %v1217
        %1283 = vmatprep.subr.bf16.mxu0 %v1222
        %1284 = vmatpush1.bf16.msra.mxu0 %v1221
        %1285 = vmatprep.subr.bf16.mxu0 %v1226
        %1286 = vmatpush1.bf16.msra.mxu0 %v1225
        %1287 = vmatprep.subr.bf16.mxu0 %v1230
        %1288 = vmatpush1.bf16.msra.mxu0 %v1229
        %1289 = vmatprep.subr.bf16.mxu0 %v1234
        %1290 = vmatpush1.bf16.msra.mxu0 %v1233
        %1291 = vmatprep.subr.bf16.mxu0 %v1238
        %1292 = vmatpush1.bf16.msra.mxu0 %v1237
        %1293 = vmatprep.subr.bf16.mxu0 %v1242
        %1294 = vmatpush1.bf16.msra.mxu0 %v1241
        %1295 = vmatprep.subr.bf16.mxu0 %v1246
        %1296 = vmatpush1.bf16.msra.mxu0 %v1245
        %1297 = vmatprep.subr.bf16.mxu0 0
        %1298 = vmatpush1.bf16.msra.mxu0 0
        %1299 = vmatprep.subr.bf16.mxu0 0
        %1300 = vmatpush1.bf16.msra.mxu0 0
        %1301 = vmatprep.subr.bf16.mxu0 0
        %1302 = vmatpush1.bf16.msra.mxu0 0
        %1303 = vmatprep.subr.bf16.mxu0 0
        %1304 = vmatpush1.bf16.msra.mxu0 0
        %1305 = vmatprep.subr.bf16.mxu0 0
        %1306 = vmatpush1.bf16.msra.mxu0 0
        %1307 = vmatprep.subr.bf16.mxu0 0
        %1308 = vmatpush1.bf16.msra.mxu0 0
        %1309 = vmatprep.subr.bf16.mxu0 0
        %1310 = vmatpush1.bf16.msra.mxu0 0
        %1311 = vmatprep.subr.bf16.mxu0 0
        %1312 = vmatpush1.bf16.msra.mxu0 0
        %1313 = vmatprep.mubr.bf16.mxu0 0
        %1314 = vmatmul.mubr.bf16.gmra.mrb[0].mxu0 %v1079
        %v1315 = vpop.f32.mrb[0].mxu0
        %v1316 = vadd.f32 0.0, %v1315
        %v1317 = vpop.f32.mrb[0].mxu0
        %v1318 = vadd.f32 0.0, %v1317
        %v1319 = vpop.f32.mrb[0].mxu0
        %v1320 = vpop.f32.mrb[0].mxu0
        %1321 = vdwg.mxu0
        %1322 = vmatprep.subr.bf16.mxu0 %v1220
        %1323 = vmatpush1.bf16.msra.mxu0 %v1219
        %1324 = vmatprep.subr.bf16.mxu0 %v1224
        %1325 = vmatpush1.bf16.msra.mxu0 %v1223
        %1326 = vmatprep.subr.bf16.mxu0 %v1228
        %1327 = vmatpush1.bf16.msra.mxu0 %v1227
        %1328 = vmatprep.subr.bf16.mxu0 %v1232
        %1329 = vmatpush1.bf16.msra.mxu0 %v1231
        %1330 = vmatprep.subr.bf16.mxu0 %v1236
        %1331 = vmatpush1.bf16.msra.mxu0 %v1235
        %1332 = vmatprep.subr.bf16.mxu0 %v1240
        %1333 = vmatpush1.bf16.msra.mxu0 %v1239
        %1334 = vmatprep.subr.bf16.mxu0 %v1244
        %1335 = vmatpush1.bf16.msra.mxu0 %v1243
        %1336 = vmatprep.subr.bf16.mxu0 %v1248
        %1337 = vmatpush1.bf16.msra.mxu0 %v1247
        %1338 = vmatprep.subr.bf16.mxu0 0
        %1339 = vmatpush1.bf16.msra.mxu0 0
        %1340 = vmatprep.subr.bf16.mxu0 0
        %1341 = vmatpush1.bf16.msra.mxu0 0
        %1342 = vmatprep.subr.bf16.mxu0 0
        %1343 = vmatpush1.bf16.msra.mxu0 0
        %1344 = vmatprep.subr.bf16.mxu0 0
        %1345 = vmatpush1.bf16.msra.mxu0 0
        %1346 = vmatprep.subr.bf16.mxu0 0
        %1347 = vmatpush1.bf16.msra.mxu0 0
        %1348 = vmatprep.subr.bf16.mxu0 0
        %1349 = vmatpush1.bf16.msra.mxu0 0
        %1350 = vmatprep.subr.bf16.mxu0 0
        %1351 = vmatpush1.bf16.msra.mxu0 0
        %1352 = vmatprep.subr.bf16.mxu0 0
        %1353 = vmatpush1.bf16.msra.mxu0 0
        %1354 = vmatprep.mubr.bf16.mxu0 0
        %1355 = vmatmul.mubr.bf16.gmra.mrb[0].mxu0 %v1079
        %v1356 = vpop.f32.mrb[0].mxu0
        %v1357 = vadd.f32 0.0, %v1356
        %v1358 = vpop.f32.mrb[0].mxu0
        %v1359 = vadd.f32 0.0, %v1358
        %v1360 = vpop.f32.mrb[0].mxu0
        %v1361 = vpop.f32.mrb[0].mxu0
        %1362 = vdwg.mxu0
        %v1363 = vadd.f32 %v1085, %v1316
        %v1364 = vadd.f32 %v1086, %v1318
        %v1365 = vadd.f32 %v1087, %v1357
        %v1366 = vadd.f32 %v1088, %v1359
        %v1367 = vxor.u32 %v1363, 2147483648
        %v1368 = vxor.u32 %v1364, 2147483648
        %v1369 = vxor.u32 %v1365, 2147483648
        %v1370 = vmul.f32 %v1367, 1.442695
        %v1371 = vpow.pop %v1370
        %v1372 = vmul.f32 %v1368, 1.442695
        %v1373 = vpow.pop %v1372
        %v1374 = vmul.f32 %v1369, 1.442695
        %v1375 = vpow.pop %v1374
        %v1376 = vadd.f32 %v1371, 1.0
        %v1377 = vadd.f32 %v1373, 1.0
        %v1378 = vadd.f32 %v1375, 1.0
        %v1379 = vrcp.pop %v1376
        %v1380 = vmul.f32 1.0, %v1379
        %v1381 = vrcp.pop %v1377
        %v1382 = vmul.f32 1.0, %v1381
        %v1383 = vrcp.pop %v1378
        %v1384 = vmul.f32 1.0, %v1383
        %v1385 = vtanh.pop %v1366
        %v1386 = vmul.f32 %v1382, %v1076
        %v1387 = vmul.f32 %v1380, %v1385
        %v1388 = vadd.f32 %v1386, %v1387
        %v1389 = vtanh.pop %v1388
        %v1390 = vmul.f32 %v1384, %v1389
        %v1391 = vpack.c.bf16 %v1390, %v1390
        %s1392 = scalar_lea.vmem %s257, 8 [#allocation13]
        %1393 = vst [vmem:[%s1392] sm:$0xf] %v1391
        %s1394 = smul.u32 3, 4
        %s1395 = smul.addr %s1394, 8
        %s1396 = scalar_lea.vmem [#allocation2], %s1395
        %v1397 = vld [vmem:[%s1396] sm:$0xff]
        %v1398 = vld [vmem:[%s1396 + $0x8] sm:$0xff]
        %v1399 = vld [vmem:[%s1396 + $0x10] sm:$0xff]
        %v1400 = vld [vmem:[%s1396 + $0x18] sm:$0xff]
        %v1401 = vld [vmem:[#allocation10] sm:$0xff]
        %v1402 = vld [vmem:[#allocation10 + $0x8] sm:$0xff]
        %v1403 = vld [vmem:[#allocation10 + $0x10] sm:$0xff]
        %v1404 = vld [vmem:[#allocation10 + $0x18] sm:$0xff]
        %v1405 = vld [vmem:[#allocation10 + $0x20] sm:$0xff]
        %v1406 = vld [vmem:[#allocation10 + $0x28] sm:$0xff]
        %v1407 = vld [vmem:[#allocation10 + $0x30] sm:$0xff]
        %v1408 = vld [vmem:[#allocation10 + $0x38] sm:$0xff]
        %v1409 = vld [vmem:[#allocation10 + $0x40] sm:$0xff]
        %v1410 = vld [vmem:[#allocation10 + $0x48] sm:$0xff]
        %v1411 = vld [vmem:[#allocation10 + $0x50] sm:$0xff]
        %v1412 = vld [vmem:[#allocation10 + $0x58] sm:$0xff]
        %v1413 = vld [vmem:[#allocation10 + $0x60] sm:$0xff]
        %v1414 = vld [vmem:[#allocation10 + $0x68] sm:$0xff]
        %v1415 = vld [vmem:[#allocation10 + $0x70] sm:$0xff]
        %v1416 = vld [vmem:[#allocation10 + $0x78] sm:$0xff]
        %v1417 = vld [vmem:[#allocation10 + $0x80] sm:$0xff]
        %v1418 = vld [vmem:[#allocation10 + $0x88] sm:$0xff]
        %v1419 = vld [vmem:[#allocation10 + $0x90] sm:$0xff]
        %v1420 = vld [vmem:[#allocation10 + $0x98] sm:$0xff]
        %v1421 = vld [vmem:[#allocation10 + $0xa0] sm:$0xff]
        %v1422 = vld [vmem:[#allocation10 + $0xa8] sm:$0xff]
        %v1423 = vld [vmem:[#allocation10 + $0xb0] sm:$0xff]
        %v1424 = vld [vmem:[#allocation10 + $0xb8] sm:$0xff]
        %v1425 = vld [vmem:[#allocation10 + $0xc0] sm:$0xff]
        %v1426 = vld [vmem:[#allocation10 + $0xc8] sm:$0xff]
        %v1427 = vld [vmem:[#allocation10 + $0xd0] sm:$0xff]
        %v1428 = vld [vmem:[#allocation10 + $0xd8] sm:$0xff]
        %v1429 = vld [vmem:[#allocation10 + $0xe0] sm:$0xff]
        %v1430 = vld [vmem:[#allocation10 + $0xe8] sm:$0xff]
        %v1431 = vld [vmem:[#allocation10 + $0xf0] sm:$0xff]
        %v1432 = vld [vmem:[#allocation10 + $0xf8] sm:$0xff]
        %v1465 = vunpack.c.l.b16 %v1401
        %v1466 = vunpack.c.h.b16 %v1401
        %v1467 = vunpack.c.l.b16 %v1402
        %v1468 = vunpack.c.h.b16 %v1402
        %v1469 = vunpack.c.l.b16 %v1403
        %v1470 = vunpack.c.h.b16 %v1403
        %v1471 = vunpack.c.l.b16 %v1404
        %v1472 = vunpack.c.h.b16 %v1404
        %v1473 = vunpack.c.l.b16 %v1405
        %v1474 = vunpack.c.h.b16 %v1405
        %v1475 = vunpack.c.l.b16 %v1406
        %v1476 = vunpack.c.h.b16 %v1406
        %v1477 = vunpack.c.l.b16 %v1407
        %v1478 = vunpack.c.h.b16 %v1407
        %v1479 = vunpack.c.l.b16 %v1408
        %v1480 = vunpack.c.h.b16 %v1408
        %v1481 = vunpack.c.l.b16 %v1409
        %v1482 = vunpack.c.h.b16 %v1409
        %v1483 = vunpack.c.l.b16 %v1410
        %v1484 = vunpack.c.h.b16 %v1410
        %v1485 = vunpack.c.l.b16 %v1411
        %v1486 = vunpack.c.h.b16 %v1411
        %v1487 = vunpack.c.l.b16 %v1412
        %v1488 = vunpack.c.h.b16 %v1412
        %v1489 = vunpack.c.l.b16 %v1413
        %v1490 = vunpack.c.h.b16 %v1413
        %v1491 = vunpack.c.l.b16 %v1414
        %v1492 = vunpack.c.h.b16 %v1414
        %v1493 = vunpack.c.l.b16 %v1415
        %v1494 = vunpack.c.h.b16 %v1415
        %v1495 = vunpack.c.l.b16 %v1416
        %v1496 = vunpack.c.h.b16 %v1416
        %v1497 = vunpack.c.l.b16 %v1417
        %v1498 = vunpack.c.h.b16 %v1417
        %v1499 = vunpack.c.l.b16 %v1418
        %v1500 = vunpack.c.h.b16 %v1418
        %v1501 = vunpack.c.l.b16 %v1419
        %v1502 = vunpack.c.h.b16 %v1419
        %v1503 = vunpack.c.l.b16 %v1420
        %v1504 = vunpack.c.h.b16 %v1420
        %v1505 = vunpack.c.l.b16 %v1421
        %v1506 = vunpack.c.h.b16 %v1421
        %v1507 = vunpack.c.l.b16 %v1422
        %v1508 = vunpack.c.h.b16 %v1422
        %v1509 = vunpack.c.l.b16 %v1423
        %v1510 = vunpack.c.h.b16 %v1423
        %v1511 = vunpack.c.l.b16 %v1424
        %v1512 = vunpack.c.h.b16 %v1424
        %v1513 = vunpack.c.l.b16 %v1425
        %v1514 = vunpack.c.h.b16 %v1425
        %v1515 = vunpack.c.l.b16 %v1426
        %v1516 = vunpack.c.h.b16 %v1426
        %v1517 = vunpack.c.l.b16 %v1427
        %v1518 = vunpack.c.h.b16 %v1427
        %v1519 = vunpack.c.l.b16 %v1428
        %v1520 = vunpack.c.h.b16 %v1428
        %v1521 = vunpack.c.l.b16 %v1429
        %v1522 = vunpack.c.h.b16 %v1429
        %v1523 = vunpack.c.l.b16 %v1430
        %v1524 = vunpack.c.h.b16 %v1430
        %v1525 = vunpack.c.l.b16 %v1431
        %v1526 = vunpack.c.h.b16 %v1431
        %v1527 = vunpack.c.l.b16 %v1432
        %v1528 = vunpack.c.h.b16 %v1432
        %v1529 = vpack.c.b16 %v1469, %v1465
        %v1530 = vpack.c.b16 %v1470, %v1466
        %v1531 = vpack.c.b16 %v1471, %v1467
        %v1532 = vpack.c.b16 %v1472, %v1468
        %v1533 = vpack.c.b16 %v1477, %v1473
        %v1534 = vpack.c.b16 %v1478, %v1474
        %v1535 = vpack.c.b16 %v1479, %v1475
        %v1536 = vpack.c.b16 %v1480, %v1476
        %v1537 = vpack.c.b16 %v1485, %v1481
        %v1538 = vpack.c.b16 %v1486, %v1482
        %v1539 = vpack.c.b16 %v1487, %v1483
        %v1540 = vpack.c.b16 %v1488, %v1484
        %v1541 = vpack.c.b16 %v1493, %v1489
        %v1542 = vpack.c.b16 %v1494, %v1490
        %v1543 = vpack.c.b16 %v1495, %v1491
        %v1544 = vpack.c.b16 %v1496, %v1492
        %v1545 = vpack.c.b16 %v1501, %v1497
        %v1546 = vpack.c.b16 %v1502, %v1498
        %v1547 = vpack.c.b16 %v1503, %v1499
        %v1548 = vpack.c.b16 %v1504, %v1500
        %v1549 = vpack.c.b16 %v1509, %v1505
        %v1550 = vpack.c.b16 %v1510, %v1506
        %v1551 = vpack.c.b16 %v1511, %v1507
        %v1552 = vpack.c.b16 %v1512, %v1508
        %v1553 = vpack.c.b16 %v1517, %v1513
        %v1554 = vpack.c.b16 %v1518, %v1514
        %v1555 = vpack.c.b16 %v1519, %v1515
        %v1556 = vpack.c.b16 %v1520, %v1516
        %v1557 = vpack.c.b16 %v1525, %v1521
        %v1558 = vpack.c.b16 %v1526, %v1522
        %v1559 = vpack.c.b16 %v1527, %v1523
        %v1560 = vpack.c.b16 %v1528, %v1524
        %1593 = vmatprep.subr.bf16.mxu0 %v1530
        %1594 = vmatpush1.bf16.msra.mxu0 %v1529
        %1595 = vmatprep.subr.bf16.mxu0 %v1534
        %1596 = vmatpush1.bf16.msra.mxu0 %v1533
        %1597 = vmatprep.subr.bf16.mxu0 %v1538
        %1598 = vmatpush1.bf16.msra.mxu0 %v1537
        %1599 = vmatprep.subr.bf16.mxu0 %v1542
        %1600 = vmatpush1.bf16.msra.mxu0 %v1541
        %1601 = vmatprep.subr.bf16.mxu0 %v1546
        %1602 = vmatpush1.bf16.msra.mxu0 %v1545
        %1603 = vmatprep.subr.bf16.mxu0 %v1550
        %1604 = vmatpush1.bf16.msra.mxu0 %v1549
        %1605 = vmatprep.subr.bf16.mxu0 %v1554
        %1606 = vmatpush1.bf16.msra.mxu0 %v1553
        %1607 = vmatprep.subr.bf16.mxu0 %v1558
        %1608 = vmatpush1.bf16.msra.mxu0 %v1557
        %1609 = vmatprep.subr.bf16.mxu0 0
        %1610 = vmatpush1.bf16.msra.mxu0 0
        %1611 = vmatprep.subr.bf16.mxu0 0
        %1612 = vmatpush1.bf16.msra.mxu0 0
        %1613 = vmatprep.subr.bf16.mxu0 0
        %1614 = vmatpush1.bf16.msra.mxu0 0
        %1615 = vmatprep.subr.bf16.mxu0 0
        %1616 = vmatpush1.bf16.msra.mxu0 0
        %1617 = vmatprep.subr.bf16.mxu0 0
        %1618 = vmatpush1.bf16.msra.mxu0 0
        %1619 = vmatprep.subr.bf16.mxu0 0
        %1620 = vmatpush1.bf16.msra.mxu0 0
        %1621 = vmatprep.subr.bf16.mxu0 0
        %1622 = vmatpush1.bf16.msra.mxu0 0
        %1623 = vmatprep.subr.bf16.mxu0 0
        %1624 = vmatpush1.bf16.msra.mxu0 0
        %1625 = vmatprep.mubr.bf16.mxu0 0
        %1626 = vmatmul.mubr.bf16.gmra.mrb[0].mxu0 %v1391
        %v1627 = vpop.f32.mrb[0].mxu0
        %v1628 = vadd.f32 0.0, %v1627
        %v1629 = vpop.f32.mrb[0].mxu0
        %v1630 = vadd.f32 0.0, %v1629
        %v1631 = vpop.f32.mrb[0].mxu0
        %v1632 = vpop.f32.mrb[0].mxu0
        %1633 = vdwg.mxu0
        %1634 = vmatprep.subr.bf16.mxu0 %v1532
        %1635 = vmatpush1.bf16.msra.mxu0 %v1531
        %1636 = vmatprep.subr.bf16.mxu0 %v1536
        %1637 = vmatpush1.bf16.msra.mxu0 %v1535
        %1638 = vmatprep.subr.bf16.mxu0 %v1540
        %1639 = vmatpush1.bf16.msra.mxu0 %v1539
        %1640 = vmatprep.subr.bf16.mxu0 %v1544
        %1641 = vmatpush1.bf16.msra.mxu0 %v1543
        %1642 = vmatprep.subr.bf16.mxu0 %v1548
        %1643 = vmatpush1.bf16.msra.mxu0 %v1547
        %1644 = vmatprep.subr.bf16.mxu0 %v1552
        %1645 = vmatpush1.bf16.msra.mxu0 %v1551
        %1646 = vmatprep.subr.bf16.mxu0 %v1556
        %1647 = vmatpush1.bf16.msra.mxu0 %v1555
        %1648 = vmatprep.subr.bf16.mxu0 %v1560
        %1649 = vmatpush1.bf16.msra.mxu0 %v1559
        %1650 = vmatprep.subr.bf16.mxu0 0
        %1651 = vmatpush1.bf16.msra.mxu0 0
        %1652 = vmatprep.subr.bf16.mxu0 0
        %1653 = vmatpush1.bf16.msra.mxu0 0
        %1654 = vmatprep.subr.bf16.mxu0 0
        %1655 = vmatpush1.bf16.msra.mxu0 0
        %1656 = vmatprep.subr.bf16.mxu0 0
        %1657 = vmatpush1.bf16.msra.mxu0 0
        %1658 = vmatprep.subr.bf16.mxu0 0
        %1659 = vmatpush1.bf16.msra.mxu0 0
        %1660 = vmatprep.subr.bf16.mxu0 0
        %1661 = vmatpush1.bf16.msra.mxu0 0
        %1662 = vmatprep.subr.bf16.mxu0 0
        %1663 = vmatpush1.bf16.msra.mxu0 0
        %1664 = vmatprep.subr.bf16.mxu0 0
        %1665 = vmatpush1.bf16.msra.mxu0 0
        %1666 = vmatprep.mubr.bf16.mxu0 0
        %1667 = vmatmul.mubr.bf16.gmra.mrb[0].mxu0 %v1391
        %v1668 = vpop.f32.mrb[0].mxu0
        %v1669 = vadd.f32 0.0, %v1668
        %v1670 = vpop.f32.mrb[0].mxu0
        %v1671 = vadd.f32 0.0, %v1670
        %v1672 = vpop.f32.mrb[0].mxu0
        %v1673 = vpop.f32.mrb[0].mxu0
        %1674 = vdwg.mxu0
        %v1675 = vadd.f32 %v1397, %v1628
        %v1676 = vadd.f32 %v1398, %v1630
        %v1677 = vadd.f32 %v1399, %v1669
        %v1678 = vadd.f32 %v1400, %v1671
        %v1679 = vxor.u32 %v1675, 2147483648
        %v1680 = vxor.u32 %v1676, 2147483648
        %v1681 = vxor.u32 %v1677, 2147483648
        %v1682 = vmul.f32 %v1679, 1.442695
        %v1683 = vpow.pop %v1682
        %v1684 = vmul.f32 %v1680, 1.442695
        %v1685 = vpow.pop %v1684
        %v1686 = vmul.f32 %v1681, 1.442695
        %v1687 = vpow.pop %v1686
        %v1688 = vadd.f32 %v1683, 1.0
        %v1689 = vadd.f32 %v1685, 1.0
        %v1690 = vadd.f32 %v1687, 1.0
        %v1691 = vrcp.pop %v1688
        %v1692 = vmul.f32 1.0, %v1691
        %v1693 = vrcp.pop %v1689
        %v1694 = vmul.f32 1.0, %v1693
        %v1695 = vrcp.pop %v1690
        %v1696 = vmul.f32 1.0, %v1695
        %v1697 = vtanh.pop %v1678
        %v1698 = vmul.f32 %v1694, %v1388
        %v1699 = vmul.f32 %v1692, %v1697
        %v1700 = vadd.f32 %v1698, %v1699
        %v1701 = vtanh.pop %v1700
        %v1702 = vmul.f32 %v1696, %v1701
        %v1703 = vpack.c.bf16 %v1702, %v1702
        %s1704 = scalar_lea.vmem %s257, 12 [#allocation13]
        %1705 = vst [vmem:[%s1704] sm:$0xf] %v1703
        %1706 = vst [vmem:[#allocation3] sm:$0xff] %v1702
        %1707 = vst [vmem:[#allocation4] sm:$0xff] %v1700
        %s1708 = sand.u32 %s120, 1
        %s1709 = scalar_lea.sflag [#allocation7], %s1708
        %s1710 = sand.u32 %s120, 1
        %s1711 = smul.addr %s1710, 16
        %s1712 = scalar_lea.vmem [#allocation13], %s1711
        // Predicated region
        $region57: #{lstm_cls_forward.3} parent=35 // pred_check
          %p1713 = pneg %p130
        $region58: #{lstm_cls_forward.3} parent=35 // pred_check_branch
          %1715 = sbr.rel (%p1713) target = $region60
        $region59: #{lstm_cls_forward.3} parent=35 // pred_region
          %s1716 = smul.u32 4, %s23
          %s1718 = ssub.s32 256, 256
          %1719 = vsyncadd %s1709, %s1718
          %s1720 = smul.addr %s1716, 64
          %s1721 = scalar_lea.hbm %s4, %s1720
          %s1722 = sshll.u32 %s1712, 4
          %s1723 = int_to_ptr.vmem [resolvable:$true] %s1722
          %1728 = dma.vmem_to_hbm [thread:$0]  %s1723, 256, %s1721, %s1709, 64, 64, 4
        $region60: #{lstm_cls_forward.3} parent=35 // pred_fallthru
          _
      $region36: #{lstm_cls_forward.3} parent=5 // pred_fallthru
        _
      %p1729 = scmp.le.s32.totalorder 2, %s18
      // Predicated region
      $region61: #{lstm_cls_forward.3} parent=5 // pred_check
        %p1730 = pneg %p1729
      $region62: #{lstm_cls_forward.3} parent=5 // pred_check_branch
        %1732 = sbr.rel (%p1730) target = $region64
      $region63: #{lstm_cls_forward.3} parent=5 // pred_region
        %s1733 = ssub.s32 %s18, 2
        // Predicated region
        $region65: #{lstm_cls_forward.3} parent=63 // pred_check
          %p1734 = pneg %p136
        $region66: #{lstm_cls_forward.3} parent=63 // pred_check_branch
          %1736 = sbr.rel (%p1734) target = $region68
        $region67: #{lstm_cls_forward.3} parent=63 // pred_region
          %s1737 = sand.u32 %s121, 1
          %s1738 = scalar_lea.sflag [#allocation7], %s1737
          %s1739 = sand.u32 %s121, 1
          %s1740 = smul.addr %s1739, 16
          %s1741 = scalar_lea.vmem [#allocation13], %s1740
          %1742 = dma.done %s1738, 256
        $region68: #{lstm_cls_forward.3} parent=63 // pred_fallthru
          _
      $region64: #{lstm_cls_forward.3} parent=5 // pred_fallthru
        _
    $region6: #{lstm_cls_forward.3} parent=1 // loop_footer
      %s22 = sadd.s32 1, %s18
    $region7: #{lstm_cls_forward.3} parent=1 // loop_footer_branch
      %17 = sbr.rel target = $region3
    $region8: #{lstm_cls_forward.3} parent=1 // loop_exit
      _
    %1743 = vsyncpa [#allocation6], 1
    %s1744 = scalar_lea.sflag [#allocation6], 1
    %1745 = vsyncpa %s1744, 1
    %1746 = vsyncpa [#allocation9], 1
    %1747 = vsyncpa [#allocation12], 1
    %1748 = vsyncpa [#allocation7], 1
    %s1749 = scalar_lea.sflag [#allocation7], 1
    %1750 = vsyncpa %s1749, 1

// kernel: lstm_cls_forward.5
$region0: #{lstm_cls_forward.5}
  #allocation0 [shape = 'u32[]', space=smem, size = 0x4, offset = 0x4, fixed_abs, tag = 'smem constant byte address 0x4 - core index']
  #allocation1 [shape = 'u32[144,128]{1,0:T(1,128)}', space=vmem, size = 0x12000, scoped, tag = 'internal scratch']
  #allocation2 [shape = 'f32[32,512]{1,0:T(8,128)}', space=vmem, size = 0x10000, scoped, tag = 'scratch operand']
  #allocation3 [shape = 'f32[8,128]{1,0:T(8,128)}', space=vmem, size = 0x1000, scoped, tag = 'scratch operand']
  #allocation4 [shape = 'f32[8,128]{1,0:T(8,128)}', space=vmem, size = 0x1000, scoped, tag = 'scratch operand']
  #allocation5 [shape = 'f32[8,128]{1,0:T(8,128)}', space=vmem, size = 0x1000, scoped, tag = 'scratch operand']
  #allocation6 [shape = 'f32[8,128]{1,0:T(8,128)}', space=vmem, size = 0x1000, scoped, tag = 'scratch operand']
  %s0 = inlined_call_operand.hbm [shape: bf16[64,128], index: 0, kind: input, shape index: {}]
  %s1 = inlined_call_operand.hbm [shape: bf16[128,512], index: 1, kind: input, shape index: {}]
  %s2 = inlined_call_operand.hbm [shape: bf16[128,512], index: 2, kind: input, shape index: {}]
  %s3 = inlined_call_operand.hbm [shape: f32[1,512], index: 3, kind: input, shape index: {}]
  %s4 = inlined_call_operand.hbm [shape: bf16[128,16], index: 4, kind: input, shape index: {}]
  %s5 = inlined_call_operand.hbm [shape: bf16[128,16], index: 5, kind: input, shape index: {}]
  %s6 = inlined_call_operand.hbm [shape: bf16[128,16], index: 6, kind: input, shape index: {}]
  %s7 = inlined_call_operand.hbm [shape: f32[1,16], index: 7, kind: input, shape index: {}]
  %s8 = inlined_call_operand.hbm [shape: bf16[16,2], index: 8, kind: input, shape index: {}]
  %s9 = inlined_call_operand.hbm [shape: f32[1,2], index: 9, kind: input, shape index: {}]
  %s10 = inlined_call_operand.hbm [shape: f32[8,2], index: 10, kind: output, shape index: {}]
  %s11 = sld [smem:[#allocation0]]
  $region121: #{lstm_cls_forward.5} parent=0
    _
  %s13 = ssub.s32 1, %s11
  %s14 = scalar_select 0, %s13, %s11
  $region1: #{lstm_cls_forward.5} parent=0
    #allocation7 [shape = 'u8[16384]{0}', space=vmem, size = 0x4000, scoped, tag = 'input window, operand 0']
    #allocation8 [shape = 's32[2]{0}', space=sflag, size = 0x8, scoped, tag = 'scoped memory for lstm_cls_forward.5']
    #allocation9 [shape = 's32[2]{0}', space=sflag, size = 0x8, scoped, tag = 'scoped memory for lstm_cls_forward.5']
    #allocation10 [shape = 'u8[131072]{0}', space=vmem, size = 0x20000, scoped, tag = 'input window, operand 1, single buffered']
    #allocation11 [shape = 's32[1]{0}', space=sflag, size = 0x4, scoped, tag = 'scoped memory for lstm_cls_forward.5']
    #allocation12 [shape = 'u8[131072]{0}', space=vmem, size = 0x20000, scoped, tag = 'input window, operand 2, single buffered']
    #allocation13 [shape = 'u8[2048]{0}', space=vmem, size = 0x800, scoped, tag = 'input window, operand 3, single buffered']
    #allocation14 [shape = 's32[1]{0}', space=sflag, size = 0x4, scoped, tag = 'scoped memory for lstm_cls_forward.5']
    #allocation15 [shape = 'u8[32768]{0}', space=vmem, size = 0x8000, scoped, tag = 'input window, operand 4, single buffered']
    #allocation16 [shape = 'u8[32768]{0}', space=vmem, size = 0x8000, scoped, tag = 'input window, operand 5, single buffered']
    #allocation17 [shape = 's32[1]{0}', space=sflag, size = 0x4, scoped, tag = 'scoped memory for lstm_cls_forward.5']
    #allocation18 [shape = 'u8[32768]{0}', space=vmem, size = 0x8000, scoped, tag = 'input window, operand 6, single buffered']
    #allocation19 [shape = 'u8[512]{0}', space=vmem, size = 0x400, scoped, tag = 'input window, operand 7, single buffered']
    #allocation20 [shape = 's32[1]{0}', space=sflag, size = 0x4, scoped, tag = 'scoped memory for lstm_cls_forward.5']
    #allocation21 [shape = 'u8[4096]{0}', space=vmem, size = 0x1000, scoped, tag = 'input window, operand 8, single buffered']
    #allocation22 [shape = 'u8[512]{0}', space=vmem, size = 0x400, scoped, tag = 'input window, operand 9, single buffered']
    #allocation23 [shape = 's32[1]{0}', space=sflag, size = 0x4, scoped, tag = 'scoped memory for lstm_cls_forward.5']
    #allocation24 [shape = 'u8[4096]{0}', space=vmem, size = 0x1000, scoped, tag = 'output window, operand 0, single buffered']
    %15 = vsyncpa [#allocation8], 0
    %s16 = scalar_lea.sflag [#allocation8], 1
    %17 = vsyncpa %s16, 0
    %18 = vsyncpa [#allocation11], 0
    %19 = vsyncpa [#allocation14], 0
    %20 = vsyncpa [#allocation17], 0
    %21 = vsyncpa [#allocation20], 0
    %22 = vsyncpa [#allocation23], 0
    %23 = vsyncpa [#allocation9], 0
    loop: start=0, step=1, limit=4
    $region2: #{lstm_cls_forward.5} parent=1 // loop_pre_header
      _
    $region3: #{lstm_cls_forward.5} parent=1 // loop_header
      %s25 = sphi 0, %s29
      %p26 = scmp.ge.s32.totalorder %s25, 4
      %s35 = sphi 0, %s37
      %s38 = sphi 0, %s35
      %s39 = sphi 0, %s38
      %s55 = sphi 0, %s39
      %s59 = sphi 0, %s59
      %s61 = sphi 0, %s59
      %s62 = sphi 0, %s61
      %s76 = sphi 0, %s62
      %s80 = sphi 0, %s80
      %s82 = sphi 0, %s80
      %s83 = sphi 0, %s82
      %s97 = sphi 0, %s83
      %s101 = sphi 0, %s101
      %s103 = sphi 0, %s101
      %s104 = sphi 0, %s103
      %s118 = sphi 0, %s104
      %s122 = sphi 0, %s122
      %s124 = sphi 0, %s122
      %s125 = sphi 0, %s124
      %s139 = sphi 0, %s125
      %s143 = sphi 0, %s143
      %s145 = sphi 0, %s143
      %s146 = sphi 0, %s145
      %s160 = sphi 0, %s146
      %s164 = sphi 0, %s164
      %s166 = sphi 0, %s164
      %s167 = sphi 0, %s166
      %s181 = sphi 0, %s167
      %s185 = sphi 0, %s185
      %s187 = sphi 0, %s185
      %s188 = sphi 0, %s187
      %s202 = sphi 0, %s188
      %s206 = sphi 0, %s206
      %s208 = sphi 0, %s206
      %s209 = sphi 0, %s208
      %s223 = sphi 0, %s209
      %s227 = sphi 0, %s227
      %s229 = sphi 0, %s227
      %s230 = sphi 0, %s229
      %s244 = sphi 0, %s230
      %s248 = sphi 0, %s248
      %s250 = sphi 0, %s248
      %s251 = sphi 0, %s250
      %s265 = sphi 0, %s251
    $region4: #{lstm_cls_forward.5} parent=1 // loop_header_branch
      %28 = sbr.rel (%p26) target = $region8
    $region5: #{lstm_cls_forward.5} parent=1 // loop_body
      %s30 = ssub.s32 %s25, 1
      %s31 = ssub.s32 %s25, 2
      %s32 = sadd.s32 %s25, 1
      %s33 = ssub.s32 %s25, %s32
      %p34 = scmp.eq.s32.totalorder %s33, 0
      %s36 = sadd.s32 %s35, 1
      %s37 = scalar_select %p34, %s35, %s36
      %p40 = pneg %p34
      %p41 = scmp.eq.s32.totalorder %s25, 1
      %p42 = por %p40, %p41
      %p43 = scmp.ne.s32.totalorder %s35, %s38
      %p44 = scmp.eq.s32.totalorder %s25, 0
      %p45 = por %p43, %p44
      %p46 = scmp.ne.s32.totalorder %s35, %s38
      %p47 = scmp.eq.s32.totalorder %s30, 1
      %p48 = por %p46, %p47
      %p49 = scmp.ne.s32.totalorder %s38, %s39
      %p50 = scmp.eq.s32.totalorder %s30, 0
      %p51 = por %p49, %p50
      %p52 = scmp.ne.s32.totalorder %s38, %s39
      %p53 = scmp.eq.s32.totalorder %s31, 1
      %p54 = por %p52, %p53
      %p56 = scmp.ne.s32.totalorder %s39, %s55
      %p57 = scmp.eq.s32.totalorder %s31, 0
      %p58 = por %p56, %p57
      %s60 = sadd.s32 %s59, 1
      %p63 = scmp.eq.s32.totalorder %s25, 1
      %p64 = scmp.ne.s32.totalorder %s59, %s61
      %p65 = scmp.eq.s32.totalorder %s25, 0
      %p66 = por %p64, %p65
      %p67 = scmp.ne.s32.totalorder %s59, %s61
      %p68 = scmp.eq.s32.totalorder %s30, 1
      %p69 = por %p67, %p68
      %p70 = scmp.ne.s32.totalorder %s61, %s62
      %p71 = scmp.eq.s32.totalorder %s30, 0
      %p72 = por %p70, %p71
      %p73 = scmp.ne.s32.totalorder %s61, %s62
      %p74 = scmp.eq.s32.totalorder %s31, 1
      %p75 = por %p73, %p74
      %p77 = scmp.ne.s32.totalorder %s62, %s76
      %p78 = scmp.eq.s32.totalorder %s31, 0
      %p79 = por %p77, %p78
      %s81 = sadd.s32 %s80, 1
      %p84 = scmp.eq.s32.totalorder %s25, 1
      %p85 = scmp.ne.s32.totalorder %s80, %s82
      %p86 = scmp.eq.s32.totalorder %s25, 0
      %p87 = por %p85, %p86
      %p88 = scmp.ne.s32.totalorder %s80, %s82
      %p89 = scmp.eq.s32.totalorder %s30, 1
      %p90 = por %p88, %p89
      %p91 = scmp.ne.s32.totalorder %s82, %s83
      %p92 = scmp.eq.s32.totalorder %s30, 0
      %p93 = por %p91, %p92
      %p94 = scmp.ne.s32.totalorder %s82, %s83
      %p95 = scmp.eq.s32.totalorder %s31, 1
      %p96 = por %p94, %p95
      %p98 = scmp.ne.s32.totalorder %s83, %s97
      %p99 = scmp.eq.s32.totalorder %s31, 0
      %p100 = por %p98, %p99
      %s102 = sadd.s32 %s101, 1
      %p105 = scmp.eq.s32.totalorder %s25, 1
      %p106 = scmp.ne.s32.totalorder %s101, %s103
      %p107 = scmp.eq.s32.totalorder %s25, 0
      %p108 = por %p106, %p107
      %p109 = scmp.ne.s32.totalorder %s101, %s103
      %p110 = scmp.eq.s32.totalorder %s30, 1
      %p111 = por %p109, %p110
      %p112 = scmp.ne.s32.totalorder %s103, %s104
      %p113 = scmp.eq.s32.totalorder %s30, 0
      %p114 = por %p112, %p113
      %p115 = scmp.ne.s32.totalorder %s103, %s104
      %p116 = scmp.eq.s32.totalorder %s31, 1
      %p117 = por %p115, %p116
      %p119 = scmp.ne.s32.totalorder %s104, %s118
      %p120 = scmp.eq.s32.totalorder %s31, 0
      %p121 = por %p119, %p120
      %s123 = sadd.s32 %s122, 1
      %p126 = scmp.eq.s32.totalorder %s25, 1
      %p127 = scmp.ne.s32.totalorder %s122, %s124
      %p128 = scmp.eq.s32.totalorder %s25, 0
      %p129 = por %p127, %p128
      %p130 = scmp.ne.s32.totalorder %s122, %s124
      %p131 = scmp.eq.s32.totalorder %s30, 1
      %p132 = por %p130, %p131
      %p133 = scmp.ne.s32.totalorder %s124, %s125
      %p134 = scmp.eq.s32.totalorder %s30, 0
      %p135 = por %p133, %p134
      %p136 = scmp.ne.s32.totalorder %s124, %s125
      %p137 = scmp.eq.s32.totalorder %s31, 1
      %p138 = por %p136, %p137
      %p140 = scmp.ne.s32.totalorder %s125, %s139
      %p141 = scmp.eq.s32.totalorder %s31, 0
      %p142 = por %p140, %p141
      %s144 = sadd.s32 %s143, 1
      %p147 = scmp.eq.s32.totalorder %s25, 1
      %p148 = scmp.ne.s32.totalorder %s143, %s145
      %p149 = scmp.eq.s32.totalorder %s25, 0
      %p150 = por %p148, %p149
      %p151 = scmp.ne.s32.totalorder %s143, %s145
      %p152 = scmp.eq.s32.totalorder %s30, 1
      %p153 = por %p151, %p152
      %p154 = scmp.ne.s32.totalorder %s145, %s146
      %p155 = scmp.eq.s32.totalorder %s30, 0
      %p156 = por %p154, %p155
      %p157 = scmp.ne.s32.totalorder %s145, %s146
      %p158 = scmp.eq.s32.totalorder %s31, 1
      %p159 = por %p157, %p158
      %p161 = scmp.ne.s32.totalorder %s146, %s160
      %p162 = scmp.eq.s32.totalorder %s31, 0
      %p163 = por %p161, %p162
      %s165 = sadd.s32 %s164, 1
      %p168 = scmp.eq.s32.totalorder %s25, 1
      %p169 = scmp.ne.s32.totalorder %s164, %s166
      %p170 = scmp.eq.s32.totalorder %s25, 0
      %p171 = por %p169, %p170
      %p172 = scmp.ne.s32.totalorder %s164, %s166
      %p173 = scmp.eq.s32.totalorder %s30, 1
      %p174 = por %p172, %p173
      %p175 = scmp.ne.s32.totalorder %s166, %s167
      %p176 = scmp.eq.s32.totalorder %s30, 0
      %p177 = por %p175, %p176
      %p178 = scmp.ne.s32.totalorder %s166, %s167
      %p179 = scmp.eq.s32.totalorder %s31, 1
      %p180 = por %p178, %p179
      %p182 = scmp.ne.s32.totalorder %s167, %s181
      %p183 = scmp.eq.s32.totalorder %s31, 0
      %p184 = por %p182, %p183
      %s186 = sadd.s32 %s185, 1
      %p189 = scmp.eq.s32.totalorder %s25, 1
      %p190 = scmp.ne.s32.totalorder %s185, %s187
      %p191 = scmp.eq.s32.totalorder %s25, 0
      %p192 = por %p190, %p191
      %p193 = scmp.ne.s32.totalorder %s185, %s187
      %p194 = scmp.eq.s32.totalorder %s30, 1
      %p195 = por %p193, %p194
      %p196 = scmp.ne.s32.totalorder %s187, %s188
      %p197 = scmp.eq.s32.totalorder %s30, 0
      %p198 = por %p196, %p197
      %p199 = scmp.ne.s32.totalorder %s187, %s188
      %p200 = scmp.eq.s32.totalorder %s31, 1
      %p201 = por %p199, %p200
      %p203 = scmp.ne.s32.totalorder %s188, %s202
      %p204 = scmp.eq.s32.totalorder %s31, 0
      %p205 = por %p203, %p204
      %s207 = sadd.s32 %s206, 1
      %p210 = scmp.eq.s32.totalorder %s25, 1
      %p211 = scmp.ne.s32.totalorder %s206, %s208
      %p212 = scmp.eq.s32.totalorder %s25, 0
      %p213 = por %p211, %p212
      %p214 = scmp.ne.s32.totalorder %s206, %s208
      %p215 = scmp.eq.s32.totalorder %s30, 1
      %p216 = por %p214, %p215
      %p217 = scmp.ne.s32.totalorder %s208, %s209
      %p218 = scmp.eq.s32.totalorder %s30, 0
      %p219 = por %p217, %p218
      %p220 = scmp.ne.s32.totalorder %s208, %s209
      %p221 = scmp.eq.s32.totalorder %s31, 1
      %p222 = por %p220, %p221
      %p224 = scmp.ne.s32.totalorder %s209, %s223
      %p225 = scmp.eq.s32.totalorder %s31, 0
      %p226 = por %p224, %p225
      %s228 = sadd.s32 %s227, 1
      %p231 = scmp.eq.s32.totalorder %s25, 1
      %p232 = scmp.ne.s32.totalorder %s227, %s229
      %p233 = scmp.eq.s32.totalorder %s25, 0
      %p234 = por %p232, %p233
      %p235 = scmp.ne.s32.totalorder %s227, %s229
      %p236 = scmp.eq.s32.totalorder %s30, 1
      %p237 = por %p235, %p236
      %p238 = scmp.ne.s32.totalorder %s229, %s230
      %p239 = scmp.eq.s32.totalorder %s30, 0
      %p240 = por %p238, %p239
      %p241 = scmp.ne.s32.totalorder %s229, %s230
      %p242 = scmp.eq.s32.totalorder %s31, 1
      %p243 = por %p241, %p242
      %p245 = scmp.ne.s32.totalorder %s230, %s244
      %p246 = scmp.eq.s32.totalorder %s31, 0
      %p247 = por %p245, %p246
      %s249 = sadd.s32 %s248, 1
      %p252 = scmp.eq.s32.totalorder %s25, 1
      %p253 = scmp.ne.s32.totalorder %s248, %s250
      %p254 = scmp.eq.s32.totalorder %s25, 0
      %p255 = por %p253, %p254
      %p256 = scmp.ne.s32.totalorder %s248, %s250
      %p257 = scmp.eq.s32.totalorder %s30, 1
      %p258 = por %p256, %p257
      %p259 = scmp.ne.s32.totalorder %s250, %s251
      %p260 = scmp.eq.s32.totalorder %s30, 0
      %p261 = por %p259, %p260
      %p262 = scmp.ne.s32.totalorder %s250, %s251
      %p263 = scmp.eq.s32.totalorder %s31, 1
      %p264 = por %p262, %p263
      %p266 = scmp.ne.s32.totalorder %s251, %s265
      %p267 = scmp.eq.s32.totalorder %s31, 0
      %p268 = por %p266, %p267
      %p269 = scmp.le.s32.totalorder 1, %s25
      %p270 = scmp.lt.s32.totalorder %s25, 3
      %p271 = pnand %p269, %p270
      %p272 = pneg %p271
      // Predicated region
      $region9: #{lstm_cls_forward.5} parent=5 // pred_check
        _
      $region10: #{lstm_cls_forward.5} parent=5 // pred_check_branch
        %274 = sbr.rel (%p271) target = $region12
      $region11: #{lstm_cls_forward.5} parent=5 // pred_region
        %s275 = ssub.s32 %s25, 1
        // Predicated region
        $region13: #{lstm_cls_forward.5} parent=11 // pred_check
          %p276 = pneg %p72
        $region14: #{lstm_cls_forward.5} parent=11 // pred_check_branch
          %278 = sbr.rel (%p276) target = $region16
        $region15: #{lstm_cls_forward.5} parent=11 // pred_region
          %s280 = ssub.s32 4096, 4096
          %281 = vsyncadd [#allocation11], %s280
          %s282 = sshll.u32 [#allocation10], 4
          %s283 = int_to_ptr.vmem [resolvable:$true] %s282
          %288 = dma.hbm_to_vmem [thread:$0]  %s1, 4096, %s283, [#allocation11], 256, 256, 16
        $region16: #{lstm_cls_forward.5} parent=11 // pred_fallthru
          _
        // Predicated region
        $region17: #{lstm_cls_forward.5} parent=11 // pred_check
          %p289 = pneg %p93
        $region18: #{lstm_cls_forward.5} parent=11 // pred_check_branch
          %291 = sbr.rel (%p289) target = $region20
        $region19: #{lstm_cls_forward.5} parent=11 // pred_region
          %s293 = ssub.s32 4096, 4096
          %294 = vsyncadd [#allocation11], %s293
          %s295 = sshll.u32 [#allocation12], 4
          %s296 = int_to_ptr.vmem [resolvable:$true] %s295
          %301 = dma.hbm_to_vmem [thread:$0]  %s2, 4096, %s296, [#allocation11], 256, 256, 16
        $region20: #{lstm_cls_forward.5} parent=11 // pred_fallthru
          _
        // Predicated region
        $region21: #{lstm_cls_forward.5} parent=11 // pred_check
          %p302 = pneg %p114
        $region22: #{lstm_cls_forward.5} parent=11 // pred_check_branch
          %304 = sbr.rel (%p302) target = $region24
        $region23: #{lstm_cls_forward.5} parent=11 // pred_region
          %s306 = ssub.s32 64, 64
          %307 = vsyncadd [#allocation14], %s306
          %s309 = sshll.u32 [#allocation13], 4
          %s310 = int_to_ptr.vmem [resolvable:$true] %s309
          %312 = dma.hbm_to_vmem [thread:$0]  %s3, 64, %s310, [#allocation14]
        $region24: #{lstm_cls_forward.5} parent=11 // pred_fallthru
          _
        // Predicated region
        $region25: #{lstm_cls_forward.5} parent=11 // pred_check
          %p313 = pneg %p135
        $region26: #{lstm_cls_forward.5} parent=11 // pred_check_branch
          %315 = sbr.rel (%p313) target = $region28
        $region27: #{lstm_cls_forward.5} parent=11 // pred_region
          %s317 = ssub.s32 1024, 1024
          %318 = vsyncadd [#allocation14], %s317
          %s319 = sshll.u32 [#allocation15], 4
          %s320 = int_to_ptr.vmem [resolvable:$true] %s319
          %325 = dma.hbm_to_vmem [thread:$0]  %s4, 1024, %s320, [#allocation14], 64, 64, 4
        $region28: #{lstm_cls_forward.5} parent=11 // pred_fallthru
          _
        // Predicated region
        $region29: #{lstm_cls_forward.5} parent=11 // pred_check
          %p326 = pneg %p156
        $region30: #{lstm_cls_forward.5} parent=11 // pred_check_branch
          %328 = sbr.rel (%p326) target = $region32
        $region31: #{lstm_cls_forward.5} parent=11 // pred_region
          %s330 = ssub.s32 1024, 1024
          %331 = vsyncadd [#allocation17], %s330
          %s332 = sshll.u32 [#allocation16], 4
          %s333 = int_to_ptr.vmem [resolvable:$true] %s332
          %338 = dma.hbm_to_vmem [thread:$0]  %s5, 1024, %s333, [#allocation17], 64, 64, 4
        $region32: #{lstm_cls_forward.5} parent=11 // pred_fallthru
          _
        // Predicated region
        $region33: #{lstm_cls_forward.5} parent=11 // pred_check
          %p339 = pneg %p177
        $region34: #{lstm_cls_forward.5} parent=11 // pred_check_branch
          %341 = sbr.rel (%p339) target = $region36
        $region35: #{lstm_cls_forward.5} parent=11 // pred_region
          %s343 = ssub.s32 1024, 1024
          %344 = vsyncadd [#allocation17], %s343
          %s345 = sshll.u32 [#allocation18], 4
          %s346 = int_to_ptr.vmem [resolvable:$true] %s345
          %351 = dma.hbm_to_vmem [thread:$0]  %s6, 1024, %s346, [#allocation17], 64, 64, 4
        $region36: #{lstm_cls_forward.5} parent=11 // pred_fallthru
          _
        // Predicated region
        $region37: #{lstm_cls_forward.5} parent=11 // pred_check
          %p352 = pneg %p198
        $region38: #{lstm_cls_forward.5} parent=11 // pred_check_branch
          %354 = sbr.rel (%p352) target = $region40
        $region39: #{lstm_cls_forward.5} parent=11 // pred_region
          %s356 = ssub.s32 16, 16
          %357 = vsyncadd [#allocation20], %s356
          %s359 = sshll.u32 [#allocation19], 4
          %s360 = int_to_ptr.vmem [resolvable:$true] %s359
          %362 = dma.hbm_to_vmem [thread:$0]  %s7, 16, %s360, [#allocation20]
        $region40: #{lstm_cls_forward.5} parent=11 // pred_fallthru
          _
        // Predicated region
        $region41: #{lstm_cls_forward.5} parent=11 // pred_check
          %p363 = pneg %p219
        $region42: #{lstm_cls_forward.5} parent=11 // pred_check_branch
          %365 = sbr.rel (%p363) target = $region44
        $region43: #{lstm_cls_forward.5} parent=11 // pred_region
          %s367 = ssub.s32 128, 128
          %368 = vsyncadd [#allocation20], %s367
          %s369 = sshll.u32 [#allocation21], 4
          %s370 = int_to_ptr.vmem [resolvable:$true] %s369
          %375 = dma.hbm_to_vmem [thread:$0]  %s8, 128, %s370, [#allocation20], 64, 64, 4
        $region44: #{lstm_cls_forward.5} parent=11 // pred_fallthru
          _
        // Predicated region
        $region45: #{lstm_cls_forward.5} parent=11 // pred_check
          %p376 = pneg %p240
        $region46: #{lstm_cls_forward.5} parent=11 // pred_check_branch
          %378 = sbr.rel (%p376) target = $region48
        $region47: #{lstm_cls_forward.5} parent=11 // pred_region
          %s380 = ssub.s32 16, 16
          %381 = vsyncadd [#allocation23], %s380
          %s383 = sshll.u32 [#allocation22], 4
          %s384 = int_to_ptr.vmem [resolvable:$true] %s383
          %386 = dma.hbm_to_vmem [thread:$0]  %s9, 16, %s384, [#allocation23]
        $region48: #{lstm_cls_forward.5} parent=11 // pred_fallthru
          _
      $region12: #{lstm_cls_forward.5} parent=5 // pred_fallthru
        _
      %p387 = scmp.lt.s32.totalorder %s25, 2
      // Predicated region
      $region49: #{lstm_cls_forward.5} parent=5 // pred_check
        %p388 = pneg %p387
      $region50: #{lstm_cls_forward.5} parent=5 // pred_check_branch
        %390 = sbr.rel (%p388) target = $region52
      $region51: #{lstm_cls_forward.5} parent=5 // pred_region
        // Predicated region
        $region53: #{lstm_cls_forward.5} parent=51 // pred_check
          %p391 = pneg %p45
        $region54: #{lstm_cls_forward.5} parent=51 // pred_check_branch
          %393 = sbr.rel (%p391) target = $region56
        $region55: #{lstm_cls_forward.5} parent=51 // pred_region
          %s394 = sand.u32 %s35, 1
          %s395 = scalar_lea.sflag [#allocation8], %s394
          %s396 = sand.u32 %s35, 1
          %s397 = smul.addr %s396, 16
          %s398 = scalar_lea.vmem [#allocation7], %s397
          %s399 = smul.u32 4, %s25
          %s401 = ssub.s32 256, 256
          %402 = vsyncadd %s395, %s401
          %s403 = smul.addr %s399, 64
          %s404 = scalar_lea.hbm %s0, %s403
          %s405 = sshll.u32 %s398, 4
          %s406 = int_to_ptr.vmem [resolvable:$true] %s405
          %411 = dma.hbm_to_vmem [thread:$0]  %s404, 256, %s406, %s395, 64, 64, 4
        $region56: #{lstm_cls_forward.5} parent=51 // pred_fallthru
          _
      $region52: #{lstm_cls_forward.5} parent=5 // pred_fallthru
        _
      %p412 = scmp.le.s32.totalorder 1, %s25
      %p413 = scmp.lt.s32.totalorder %s25, 3
      %p414 = pnand %p412, %p413
      %p415 = pneg %p414
      // Predicated region
      $region57: #{lstm_cls_forward.5} parent=5 // pred_check
        _
      $region58: #{lstm_cls_forward.5} parent=5 // pred_check_branch
        %417 = sbr.rel (%p414) target = $region60
      $region59: #{lstm_cls_forward.5} parent=5 // pred_region
        %s418 = ssub.s32 %s25, 1
        %s419 = sand.u32 %s38, 1
        %s420 = scalar_lea.sflag [#allocation8], %s419
        %s421 = sand.u32 %s38, 1
        %s422 = smul.addr %s421, 16
        %s423 = scalar_lea.vmem [#allocation7], %s422
        // Predicated region
        $region61: #{lstm_cls_forward.5} parent=59 // pred_check
          %p424 = pneg %p51
        $region62: #{lstm_cls_forward.5} parent=59 // pred_check_branch
          %426 = sbr.rel (%p424) target = $region64
        $region63: #{lstm_cls_forward.5} parent=59 // pred_region
          %427 = dma.done %s420, 256
        $region64: #{lstm_cls_forward.5} parent=59 // pred_fallthru
          _
        // Predicated region
        $region65: #{lstm_cls_forward.5} parent=59 // pred_check
          %p428 = pneg %p72
        $region66: #{lstm_cls_forward.5} parent=59 // pred_check_branch
          %430 = sbr.rel (%p428) target = $region68
        $region67: #{lstm_cls_forward.5} parent=59 // pred_region
          %431 = dma.done [#allocation11], 4096
        $region68: #{lstm_cls_forward.5} parent=59 // pred_fallthru
          _
        // Predicated region
        $region69: #{lstm_cls_forward.5} parent=59 // pred_check
          %p432 = pneg %p93
        $region70: #{lstm_cls_forward.5} parent=59 // pred_check_branch
          %434 = sbr.rel (%p432) target = $region72
        $region71: #{lstm_cls_forward.5} parent=59 // pred_region
          %435 = dma.done [#allocation11], 4096
        $region72: #{lstm_cls_forward.5} parent=59 // pred_fallthru
          _
        // Predicated region
        $region73: #{lstm_cls_forward.5} parent=59 // pred_check
          %p436 = pneg %p114
        $region74: #{lstm_cls_forward.5} parent=59 // pred_check_branch
          %438 = sbr.rel (%p436) target = $region76
        $region75: #{lstm_cls_forward.5} parent=59 // pred_region
          %439 = dma.done [#allocation14], 64
        $region76: #{lstm_cls_forward.5} parent=59 // pred_fallthru
          _
        // Predicated region
        $region77: #{lstm_cls_forward.5} parent=59 // pred_check
          %p440 = pneg %p135
        $region78: #{lstm_cls_forward.5} parent=59 // pred_check_branch
          %442 = sbr.rel (%p440) target = $region80
        $region79: #{lstm_cls_forward.5} parent=59 // pred_region
          %443 = dma.done [#allocation14], 1024
        $region80: #{lstm_cls_forward.5} parent=59 // pred_fallthru
          _
        // Predicated region
        $region81: #{lstm_cls_forward.5} parent=59 // pred_check
          %p444 = pneg %p156
        $region82: #{lstm_cls_forward.5} parent=59 // pred_check_branch
          %446 = sbr.rel (%p444) target = $region84
        $region83: #{lstm_cls_forward.5} parent=59 // pred_region
          %447 = dma.done [#allocation17], 1024
        $region84: #{lstm_cls_forward.5} parent=59 // pred_fallthru
          _
        // Predicated region
        $region85: #{lstm_cls_forward.5} parent=59 // pred_check
          %p448 = pneg %p177
        $region86: #{lstm_cls_forward.5} parent=59 // pred_check_branch
          %450 = sbr.rel (%p448) target = $region88
        $region87: #{lstm_cls_forward.5} parent=59 // pred_region
          %451 = dma.done [#allocation17], 1024
        $region88: #{lstm_cls_forward.5} parent=59 // pred_fallthru
          _
        // Predicated region
        $region89: #{lstm_cls_forward.5} parent=59 // pred_check
          %p452 = pneg %p198
        $region90: #{lstm_cls_forward.5} parent=59 // pred_check_branch
          %454 = sbr.rel (%p452) target = $region92
        $region91: #{lstm_cls_forward.5} parent=59 // pred_region
          %455 = dma.done [#allocation20], 16
        $region92: #{lstm_cls_forward.5} parent=59 // pred_fallthru
          _
        // Predicated region
        $region93: #{lstm_cls_forward.5} parent=59 // pred_check
          %p456 = pneg %p219
        $region94: #{lstm_cls_forward.5} parent=59 // pred_check_branch
          %458 = sbr.rel (%p456) target = $region96
        $region95: #{lstm_cls_forward.5} parent=59 // pred_region
          %459 = dma.done [#allocation20], 128
        $region96: #{lstm_cls_forward.5} parent=59 // pred_fallthru
          _
        // Predicated region
        $region97: #{lstm_cls_forward.5} parent=59 // pred_check
          %p460 = pneg %p240
        $region98: #{lstm_cls_forward.5} parent=59 // pred_check_branch
          %462 = sbr.rel (%p460) target = $region100
        $region99: #{lstm_cls_forward.5} parent=59 // pred_region
          %463 = dma.done [#allocation23], 16
        $region100: #{lstm_cls_forward.5} parent=59 // pred_fallthru
          _
        %s464 = sand.u32 %s38, 1
        %s465 = scalar_lea.sflag [#allocation8], %s464
        %s466 = sand.u32 %s38, 1
        %s467 = smul.addr %s466, 16
        %s468 = scalar_lea.vmem [#allocation7], %s467
        %p469 = pneg %p51
        %p470 = pneg %p48
        %p471 = pneg %p72
        %p472 = pneg %p69
        %p473 = pneg %p93
        %p474 = pneg %p90
        %p475 = pneg %p114
        %p476 = pneg %p111
        %p477 = pneg %p135
        %p478 = pneg %p132
        %p479 = pneg %p156
        %p480 = pneg %p153
        %p481 = pneg %p177
        %p482 = pneg %p174
        %p483 = pneg %p198
        %p484 = pneg %p195
        %p485 = pneg %p219
        %p486 = pneg %p216
        %p487 = pneg %p240
        %p488 = pneg %p237
        %p489 = pneg %p261
        %p490 = pneg %p258
        %s491 = smul.u32 4, %s30
        %p493 = scmp.eq.s32.totalorder %s30, 0
        // Predicated region
        $region101: #{lstm_cls_forward.5} parent=59 // pred_check
          %p494 = pneg %p493
        $region102: #{lstm_cls_forward.5} parent=59 // pred_check_branch
          %496 = sbr.rel (%p494) target = $region104
        $region103: #{lstm_cls_forward.5} parent=59 // pred_region
          %497 = vst [vmem:[#allocation3] sm:$0xff] 0.0
          %498 = vst [vmem:[#allocation4] sm:$0xff] 0.0
          %499 = vst [vmem:[#allocation5] sm:$0xff] -inf
          %500 = vst [vmem:[#allocation6] sm:$0xff] 0.0
        $region104: #{lstm_cls_forward.5} parent=59 // pred_fallthru
          _
        %v501 = vld [vmem:[%s423] sm:$0xf]
        %v502 = vld [vmem:[%s423 + $0x4] sm:$0xf]
        %v503 = vld [vmem:[%s423 + $0x8] sm:$0xf]
        %v504 = vld [vmem:[%s423 + $0xc] sm:$0xf]
        %v505 = vld [vmem:[#allocation10] sm:$0xff]
        %v506 = vld [vmem:[#allocation10 + $0x8] sm:$0xff]
        %v507 = vld [vmem:[#allocation10 + $0x10] sm:$0xff]
        %v508 = vld [vmem:[#allocation10 + $0x18] sm:$0xff]
        %v509 = vld [vmem:[#allocation10 + $0x20] sm:$0xff]
        %v510 = vld [vmem:[#allocation10 + $0x28] sm:$0xff]
        %v511 = vld [vmem:[#allocation10 + $0x30] sm:$0xff]
        %v512 = vld [vmem:[#allocation10 + $0x38] sm:$0xff]
        %v513 = vld [vmem:[#allocation10 + $0x40] sm:$0xff]
        %v514 = vld [vmem:[#allocation10 + $0x48] sm:$0xff]
        %v515 = vld [vmem:[#allocation10 + $0x50] sm:$0xff]
        %v516 = vld [vmem:[#allocation10 + $0x58] sm:$0xff]
        %v517 = vld [vmem:[#allocation10 + $0x60] sm:$0xff]
        %v518 = vld [vmem:[#allocation10 + $0x68] sm:$0xff]
        %v519 = vld [vmem:[#allocation10 + $0x70] sm:$0xff]
        %v520 = vld [vmem:[#allocation10 + $0x78] sm:$0xff]
        %v521 = vld [vmem:[#allocation10 + $0x80] sm:$0xff]
        %v522 = vld [vmem:[#allocation10 + $0x88] sm:$0xff]
        %v523 = vld [vmem:[#allocation10 + $0x90] sm:$0xff]
        %v524 = vld [vmem:[#allocation10 + $0x98] sm:$0xff]
        %v525 = vld [vmem:[#allocation10 + $0xa0] sm:$0xff]
        %v526 = vld [vmem:[#allocation10 + $0xa8] sm:$0xff]
        %v527 = vld [vmem:[#allocation10 + $0xb0] sm:$0xff]
        %v528 = vld [vmem:[#allocation10 + $0xb8] sm:$0xff]
        %v529 = vld [vmem:[#allocation10 + $0xc0] sm:$0xff]
        %v530 = vld [vmem:[#allocation10 + $0xc8] sm:$0xff]
        %v531 = vld [vmem:[#allocation10 + $0xd0] sm:$0xff]
        %v532 = vld [vmem:[#allocation10 + $0xd8] sm:$0xff]
        %v533 = vld [vmem:[#allocation10 + $0xe0] sm:$0xff]
        %v534 = vld [vmem:[#allocation10 + $0xe8] sm:$0xff]
        %v535 = vld [vmem:[#allocation10 + $0xf0] sm:$0xff]
        %v536 = vld [vmem:[#allocation10 + $0xf8] sm:$0xff]
        %v537 = vld [vmem:[#allocation13] sm:$0xf]
        %v539 = vlaneseq
        %v540 = vshrl.u32 %v539, 7
        %v541 = vsub.s32 0, %v540
        %v542 = vrot.slane %v537, %v541
        %v543 = vlaneseq
        %v544 = vshrl.u32 %v543, 7
        %v545 = vsub.s32 1, %v544
        %v546 = vrot.slane %v537, %v545
        %v547 = vlaneseq
        %v548 = vshrl.u32 %v547, 7
        %v549 = vsub.s32 2, %v548
        %v550 = vrot.slane %v537, %v549
        %v551 = vlaneseq
        %v552 = vshrl.u32 %v551, 7
        %v553 = vsub.s32 3, %v552
        %v554 = vrot.slane %v537, %v553
        %v563 = vunpack.c.l.b16 %v501
        %v564 = vunpack.c.l.b16 %v502
        %v565 = vunpack.c.l.b16 %v503
        %v566 = vunpack.c.l.b16 %v504
        %v567 = vpack.c.b16 %v564, %v563
        %v568 = vpack.c.b16 %v566, %v565
        %v603 = vunpack.c.l.b16 %v505
        %v604 = vunpack.c.h.b16 %v505
        %v605 = vunpack.c.l.b16 %v506
        %v606 = vunpack.c.h.b16 %v506
        %v607 = vunpack.c.l.b16 %v507
        %v608 = vunpack.c.h.b16 %v507
        %v609 = vunpack.c.l.b16 %v508
        %v610 = vunpack.c.h.b16 %v508
        %v611 = vunpack.c.l.b16 %v509
        %v612 = vunpack.c.h.b16 %v509
        %v613 = vunpack.c.l.b16 %v510
        %v614 = vunpack.c.h.b16 %v510
        %v615 = vunpack.c.l.b16 %v511
        %v616 = vunpack.c.h.b16 %v511
        %v617 = vunpack.c.l.b16 %v512
        %v618 = vunpack.c.h.b16 %v512
        %v619 = vunpack.c.l.b16 %v513
        %v620 = vunpack.c.h.b16 %v513
        %v621 = vunpack.c.l.b16 %v514
        %v622 = vunpack.c.h.b16 %v514
        %v623 = vunpack.c.l.b16 %v515
        %v624 = vunpack.c.h.b16 %v515
        %v625 = vunpack.c.l.b16 %v516
        %v626 = vunpack.c.h.b16 %v516
        %v627 = vunpack.c.l.b16 %v517
        %v628 = vunpack.c.h.b16 %v517
        %v629 = vunpack.c.l.b16 %v518
        %v630 = vunpack.c.h.b16 %v518
        %v631 = vunpack.c.l.b16 %v519
        %v632 = vunpack.c.h.b16 %v519
        %v633 = vunpack.c.l.b16 %v520
        %v634 = vunpack.c.h.b16 %v520
        %v635 = vunpack.c.l.b16 %v521
        %v636 = vunpack.c.h.b16 %v521
        %v637 = vunpack.c.l.b16 %v522
        %v638 = vunpack.c.h.b16 %v522
        %v639 = vunpack.c.l.b16 %v523
        %v640 = vunpack.c.h.b16 %v523
        %v641 = vunpack.c.l.b16 %v524
        %v642 = vunpack.c.h.b16 %v524
        %v643 = vunpack.c.l.b16 %v525
        %v644 = vunpack.c.h.b16 %v525
        %v645 = vunpack.c.l.b16 %v526
        %v646 = vunpack.c.h.b16 %v526
        %v647 = vunpack.c.l.b16 %v527
        %v648 = vunpack.c.h.b16 %v527
        %v649 = vunpack.c.l.b16 %v528
        %v650 = vunpack.c.h.b16 %v528
        %v651 = vunpack.c.l.b16 %v529
        %v652 = vunpack.c.h.b16 %v529
        %v653 = vunpack.c.l.b16 %v530
        %v654 = vunpack.c.h.b16 %v530
        %v655 = vunpack.c.l.b16 %v531
        %v656 = vunpack.c.h.b16 %v531
        %v657 = vunpack.c.l.b16 %v532
        %v658 = vunpack.c.h.b16 %v532
        %v659 = vunpack.c.l.b16 %v533
        %v660 = vunpack.c.h.b16 %v533
        %v661 = vunpack.c.l.b16 %v534
        %v662 = vunpack.c.h.b16 %v534
        %v663 = vunpack.c.l.b16 %v535
        %v664 = vunpack.c.h.b16 %v535
        %v665 = vunpack.c.l.b16 %v536
        %v666 = vunpack.c.h.b16 %v536
        %v667 = vpack.c.b16 %v607, %v603
        %v668 = vpack.c.b16 %v608, %v604
        %v669 = vpack.c.b16 %v609, %v605
        %v670 = vpack.c.b16 %v610, %v606
        %v671 = vpack.c.b16 %v615, %v611
        %v672 = vpack.c.b16 %v616, %v612
        %v673 = vpack.c.b16 %v617, %v613
        %v674 = vpack.c.b16 %v618, %v614
        %v675 = vpack.c.b16 %v623, %v619
        %v676 = vpack.c.b16 %v624, %v620
        %v677 = vpack.c.b16 %v625, %v621
        %v678 = vpack.c.b16 %v626, %v622
        %v679 = vpack.c.b16 %v631, %v627
        %v680 = vpack.c.b16 %v632, %v628
        %v681 = vpack.c.b16 %v633, %v629
        %v682 = vpack.c.b16 %v634, %v630
        %v683 = vpack.c.b16 %v639, %v635
        %v684 = vpack.c.b16 %v640, %v636
        %v685 = vpack.c.b16 %v641, %v637
        %v686 = vpack.c.b16 %v642, %v638
        %v687 = vpack.c.b16 %v647, %v643
        %v688 = vpack.c.b16 %v648, %v644
        %v689 = vpack.c.b16 %v649, %v645
        %v690 = vpack.c.b16 %v650, %v646
        %v691 = vpack.c.b16 %v655, %v651
        %v692 = vpack.c.b16 %v656, %v652
        %v693 = vpack.c.b16 %v657, %v653
        %v694 = vpack.c.b16 %v658, %v654
        %v695 = vpack.c.b16 %v663, %v659
        %v696 = vpack.c.b16 %v664, %v660
        %v697 = vpack.c.b16 %v665, %v661
        %v698 = vpack.c.b16 %v666, %v662
        %731 = vmatprep.subr.bf16.mxu0 %v668
        %732 = vmatpush1.bf16.msra.mxu0 %v667
        %733 = vmatprep.subr.bf16.mxu0 %v672
        %734 = vmatpush1.bf16.msra.mxu0 %v671
        %735 = vmatprep.subr.bf16.mxu0 %v676
        %736 = vmatpush1.bf16.msra.mxu0 %v675
        %737 = vmatprep.subr.bf16.mxu0 %v680
        %738 = vmatpush1.bf16.msra.mxu0 %v679
        %739 = vmatprep.subr.bf16.mxu0 %v684
        %740 = vmatpush1.bf16.msra.mxu0 %v683
        %741 = vmatprep.subr.bf16.mxu0 %v688
        %742 = vmatpush1.bf16.msra.mxu0 %v687
        %743 = vmatprep.subr.bf16.mxu0 %v692
        %744 = vmatpush1.bf16.msra.mxu0 %v691
        %745 = vmatprep.subr.bf16.mxu0 %v696
        %746 = vmatpush1.bf16.msra.mxu0 %v695
        %747 = vmatprep.subr.bf16.mxu0 0
        %748 = vmatpush1.bf16.msra.mxu0 0
        %749 = vmatprep.subr.bf16.mxu0 0
        %750 = vmatpush1.bf16.msra.mxu0 0
        %751 = vmatprep.subr.bf16.mxu0 0
        %752 = vmatpush1.bf16.msra.mxu0 0
        %753 = vmatprep.subr.bf16.mxu0 0
        %754 = vmatpush1.bf16.msra.mxu0 0
        %755 = vmatprep.subr.bf16.mxu0 0
        %756 = vmatpush1.bf16.msra.mxu0 0
        %757 = vmatprep.subr.bf16.mxu0 0
        %758 = vmatpush1.bf16.msra.mxu0 0
        %759 = vmatprep.subr.bf16.mxu0 0
        %760 = vmatpush1.bf16.msra.mxu0 0
        %761 = vmatprep.subr.bf16.mxu0 0
        %762 = vmatpush1.bf16.msra.mxu0 0
        %763 = vmatprep.mubr.bf16.mxu0 0
        %764 = vmatmul.mubr.bf16.gmra.mrb[0].mxu0 %v567
        %v765 = vpop.f32.mrb[0].mxu0
        %v766 = vadd.f32 %v542, %v765
        %v767 = vpop.f32.mrb[0].mxu0
        %v768 = vadd.f32 %v546, %v767
        %v769 = vpop.f32.mrb[0].mxu0
        %v770 = vadd.f32 %v542, %v769
        %v771 = vpop.f32.mrb[0].mxu0
        %v772 = vadd.f32 %v546, %v771
        %773 = vmatprep.mubr.bf16.mxu0 0
        %774 = vmatmul.mubr.bf16.gmra.mrb[0].mxu0 %v568
        %v775 = vpop.f32.mrb[0].mxu0
        %v776 = vadd.f32 %v542, %v775
        %v777 = vpop.f32.mrb[0].mxu0
        %v778 = vadd.f32 %v546, %v777
        %v779 = vpop.f32.mrb[0].mxu0
        %v780 = vadd.f32 %v542, %v779
        %v781 = vpop.f32.mrb[0].mxu0
        %v782 = vadd.f32 %v546, %v781
        %783 = vdwg.mxu0
        %784 = vmatprep.subr.bf16.mxu0 %v670
        %785 = vmatpush1.bf16.msra.mxu0 %v669
        %786 = vmatprep.subr.bf16.mxu0 %v674
        %787 = vmatpush1.bf16.msra.mxu0 %v673
        %788 = vmatprep.subr.bf16.mxu0 %v678
        %789 = vmatpush1.bf16.msra.mxu0 %v677
        %790 = vmatprep.subr.bf16.mxu0 %v682
        %791 = vmatpush1.bf16.msra.mxu0 %v681
        %792 = vmatprep.subr.bf16.mxu0 %v686
        %793 = vmatpush1.bf16.msra.mxu0 %v685
        %794 = vmatprep.subr.bf16.mxu0 %v690
        %795 = vmatpush1.bf16.msra.mxu0 %v689
        %796 = vmatprep.subr.bf16.mxu0 %v694
        %797 = vmatpush1.bf16.msra.mxu0 %v693
        %798 = vmatprep.subr.bf16.mxu0 %v698
        %799 = vmatpush1.bf16.msra.mxu0 %v697
        %800 = vmatprep.subr.bf16.mxu0 0
        %801 = vmatpush1.bf16.msra.mxu0 0
        %802 = vmatprep.subr.bf16.mxu0 0
        %803 = vmatpush1.bf16.msra.mxu0 0
        %804 = vmatprep.subr.bf16.mxu0 0
        %805 = vmatpush1.bf16.msra.mxu0 0
        %806 = vmatprep.subr.bf16.mxu0 0
        %807 = vmatpush1.bf16.msra.mxu0 0
        %808 = vmatprep.subr.bf16.mxu0 0
        %809 = vmatpush1.bf16.msra.mxu0 0
        %810 = vmatprep.subr.bf16.mxu0 0
        %811 = vmatpush1.bf16.msra.mxu0 0
        %812 = vmatprep.subr.bf16.mxu0 0
        %813 = vmatpush1.bf16.msra.mxu0 0
        %814 = vmatprep.subr.bf16.mxu0 0
        %815 = vmatpush1.bf16.msra.mxu0 0
        %816 = vmatprep.mubr.bf16.mxu0 0
        %817 = vmatmul.mubr.bf16.gmra.mrb[0].mxu0 %v567
        %v818 = vpop.f32.mrb[0].mxu0
        %v819 = vadd.f32 %v550, %v818
        %v820 = vpop.f32.mrb[0].mxu0
        %v821 = vadd.f32 %v554, %v820
        %v822 = vpop.f32.mrb[0].mxu0
        %v823 = vadd.f32 %v550, %v822
        %v824 = vpop.f32.mrb[0].mxu0
        %v825 = vadd.f32 %v554, %v824
        %826 = vmatprep.mubr.bf16.mxu0 0
        %827 = vmatmul.mubr.bf16.gmra.mrb[0].mxu0 %v568
        %v828 = vpop.f32.mrb[0].mxu0
        %v829 = vadd.f32 %v550, %v828
        %v830 = vpop.f32.mrb[0].mxu0
        %v831 = vadd.f32 %v554, %v830
        %v832 = vpop.f32.mrb[0].mxu0
        %v833 = vadd.f32 %v550, %v832
        %v834 = vpop.f32.mrb[0].mxu0
        %v835 = vadd.f32 %v554, %v834
        %836 = vdwg.mxu0
        %837 = vst [vmem:[#allocation2] sm:$0xff] %v766
        %838 = vst [vmem:[#allocation2 + $0x8] sm:$0xff] %v768
        %839 = vst [vmem:[#allocation2 + $0x10] sm:$0xff] %v819
        %840 = vst [vmem:[#allocation2 + $0x18] sm:$0xff] %v821
        %841 = vst [vmem:[#allocation2 + $0x20] sm:$0xff] %v770
        %842 = vst [vmem:[#allocation2 + $0x28] sm:$0xff] %v772
        %843 = vst [vmem:[#allocation2 + $0x30] sm:$0xff] %v823
        %844 = vst [vmem:[#allocation2 + $0x38] sm:$0xff] %v825
        %845 = vst [vmem:[#allocation2 + $0x40] sm:$0xff] %v776
        %846 = vst [vmem:[#allocation2 + $0x48] sm:$0xff] %v778
        %847 = vst [vmem:[#allocation2 + $0x50] sm:$0xff] %v829
        %848 = vst [vmem:[#allocation2 + $0x58] sm:$0xff] %v831
        %849 = vst [vmem:[#allocation2 + $0x60] sm:$0xff] %v780
        %850 = vst [vmem:[#allocation2 + $0x68] sm:$0xff] %v782
        %851 = vst [vmem:[#allocation2 + $0x70] sm:$0xff] %v833
        %852 = vst [vmem:[#allocation2 + $0x78] sm:$0xff] %v835
        %v853 = vld [vmem:[#allocation3] sm:$0xff]
        %v854 = vld [vmem:[#allocation4] sm:$0xff]
        %v855 = vld [vmem:[#allocation5] sm:$0xff]
        %v856 = vld [vmem:[#allocation6] sm:$0xff]
        %s857 = smul.u32 0, 4
        %s858 = smul.addr %s857, 8
        %s859 = scalar_lea.vmem [#allocation2], %s858
        %v860 = vld [vmem:[%s859] sm:$0xff]
        %v861 = vld [vmem:[%s859 + $0x8] sm:$0xff]
        %v862 = vld [vmem:[%s859 + $0x10] sm:$0xff]
        %v863 = vld [vmem:[%s859 + $0x18] sm:$0xff]
        %v864 = vpack.c.bf16 %v853, %v853
        %v865 = vld [vmem:[#allocation12] sm:$0xff]
        %v866 = vld [vmem:[#allocation12 + $0x8] sm:$0xff]
        %v867 = vld [vmem:[#allocation12 + $0x10] sm:$0xff]
        %v868 = vld [vmem:[#allocation12 + $0x18] sm:$0xff]
        %v869 = vld [vmem:[#allocation12 + $0x20] sm:$0xff]
        %v870 = vld [vmem:[#allocation12 + $0x28] sm:$0xff]
        %v871 = vld [vmem:[#allocation12 + $0x30] sm:$0xff]
        %v872 = vld [vmem:[#allocation12 + $0x38] sm:$0xff]
        %v873 = vld [vmem:[#allocation12 + $0x40] sm:$0xff]
        %v874 = vld [vmem:[#allocation12 + $0x48] sm:$0xff]
        %v875 = vld [vmem:[#allocation12 + $0x50] sm:$0xff]
        %v876 = vld [vmem:[#allocation12 + $0x58] sm:$0xff]
        %v877 = vld [vmem:[#allocation12 + $0x60] sm:$0xff]
        %v878 = vld [vmem:[#allocation12 + $0x68] sm:$0xff]
        %v879 = vld [vmem:[#allocation12 + $0x70] sm:$0xff]
        %v880 = vld [vmem:[#allocation12 + $0x78] sm:$0xff]
        %v881 = vld [vmem:[#allocation12 + $0x80] sm:$0xff]
        %v882 = vld [vmem:[#allocation12 + $0x88] sm:$0xff]
        %v883 = vld [vmem:[#allocation12 + $0x90] sm:$0xff]
        %v884 = vld [vmem:[#allocation12 + $0x98] sm:$0xff]
        %v885 = vld [vmem:[#allocation12 + $0xa0] sm:$0xff]
        %v886 = vld [vmem:[#allocation12 + $0xa8] sm:$0xff]
        %v887 = vld [vmem:[#allocation12 + $0xb0] sm:$0xff]
        %v888 = vld [vmem:[#allocation12 + $0xb8] sm:$0xff]
        %v889 = vld [vmem:[#allocation12 + $0xc0] sm:$0xff]
        %v890 = vld [vmem:[#allocation12 + $0xc8] sm:$0xff]
        %v891 = vld [vmem:[#allocation12 + $0xd0] sm:$0xff]
        %v892 = vld [vmem:[#allocation12 + $0xd8] sm:$0xff]
        %v893 = vld [vmem:[#allocation12 + $0xe0] sm:$0xff]
        %v894 = vld [vmem:[#allocation12 + $0xe8] sm:$0xff]
        %v895 = vld [vmem:[#allocation12 + $0xf0] sm:$0xff]
        %v896 = vld [vmem:[#allocation12 + $0xf8] sm:$0xff]
        %v929 = vunpack.c.l.b16 %v865
        %v930 = vunpack.c.h.b16 %v865
        %v931 = vunpack.c.l.b16 %v866
        %v932 = vunpack.c.h.b16 %v866
        %v933 = vunpack.c.l.b16 %v867
        %v934 = vunpack.c.h.b16 %v867
        %v935 = vunpack.c.l.b16 %v868
        %v936 = vunpack.c.h.b16 %v868
        %v937 = vunpack.c.l.b16 %v869
        %v938 = vunpack.c.h.b16 %v869
        %v939 = vunpack.c.l.b16 %v870
        %v940 = vunpack.c.h.b16 %v870
        %v941 = vunpack.c.l.b16 %v871
        %v942 = vunpack.c.h.b16 %v871
        %v943 = vunpack.c.l.b16 %v872
        %v944 = vunpack.c.h.b16 %v872
        %v945 = vunpack.c.l.b16 %v873
        %v946 = vunpack.c.h.b16 %v873
        %v947 = vunpack.c.l.b16 %v874
        %v948 = vunpack.c.h.b16 %v874
        %v949 = vunpack.c.l.b16 %v875
        %v950 = vunpack.c.h.b16 %v875
        %v951 = vunpack.c.l.b16 %v876
        %v952 = vunpack.c.h.b16 %v876
        %v953 = vunpack.c.l.b16 %v877
        %v954 = vunpack.c.h.b16 %v877
        %v955 = vunpack.c.l.b16 %v878
        %v956 = vunpack.c.h.b16 %v878
        %v957 = vunpack.c.l.b16 %v879
        %v958 = vunpack.c.h.b16 %v879
        %v959 = vunpack.c.l.b16 %v880
        %v960 = vunpack.c.h.b16 %v880
        %v961 = vunpack.c.l.b16 %v881
        %v962 = vunpack.c.h.b16 %v881
        %v963 = vunpack.c.l.b16 %v882
        %v964 = vunpack.c.h.b16 %v882
        %v965 = vunpack.c.l.b16 %v883
        %v966 = vunpack.c.h.b16 %v883
        %v967 = vunpack.c.l.b16 %v884
        %v968 = vunpack.c.h.b16 %v884
        %v969 = vunpack.c.l.b16 %v885
        %v970 = vunpack.c.h.b16 %v885
        %v971 = vunpack.c.l.b16 %v886
        %v972 = vunpack.c.h.b16 %v886
        %v973 = vunpack.c.l.b16 %v887
        %v974 = vunpack.c.h.b16 %v887
        %v975 = vunpack.c.l.b16 %v888
        %v976 = vunpack.c.h.b16 %v888
        %v977 = vunpack.c.l.b16 %v889
        %v978 = vunpack.c.h.b16 %v889
        %v979 = vunpack.c.l.b16 %v890
        %v980 = vunpack.c.h.b16 %v890
        %v981 = vunpack.c.l.b16 %v891
        %v982 = vunpack.c.h.b16 %v891
        %v983 = vunpack.c.l.b16 %v892
        %v984 = vunpack.c.h.b16 %v892
        %v985 = vunpack.c.l.b16 %v893
        %v986 = vunpack.c.h.b16 %v893
        %v987 = vunpack.c.l.b16 %v894
        %v988 = vunpack.c.h.b16 %v894
        %v989 = vunpack.c.l.b16 %v895
        %v990 = vunpack.c.h.b16 %v895
        %v991 = vunpack.c.l.b16 %v896
        %v992 = vunpack.c.h.b16 %v896
        %v993 = vpack.c.b16 %v933, %v929
        %v994 = vpack.c.b16 %v934, %v930
        %v995 = vpack.c.b16 %v935, %v931
        %v996 = vpack.c.b16 %v936, %v932
        %v997 = vpack.c.b16 %v941, %v937
        %v998 = vpack.c.b16 %v942, %v938
        %v999 = vpack.c.b16 %v943, %v939
        %v1000 = vpack.c.b16 %v944, %v940
        %v1001 = vpack.c.b16 %v949, %v945
        %v1002 = vpack.c.b16 %v950, %v946
        %v1003 = vpack.c.b16 %v951, %v947
        %v1004 = vpack.c.b16 %v952, %v948
        %v1005 = vpack.c.b16 %v957, %v953
        %v1006 = vpack.c.b16 %v958, %v954
        %v1007 = vpack.c.b16 %v959, %v955
        %v1008 = vpack.c.b16 %v960, %v956
        %v1009 = vpack.c.b16 %v965, %v961
        %v1010 = vpack.c.b16 %v966, %v962
        %v1011 = vpack.c.b16 %v967, %v963
        %v1012 = vpack.c.b16 %v968, %v964
        %v1013 = vpack.c.b16 %v973, %v969
        %v1014 = vpack.c.b16 %v974, %v970
        %v1015 = vpack.c.b16 %v975, %v971
        %v1016 = vpack.c.b16 %v976, %v972
        %v1017 = vpack.c.b16 %v981, %v977
        %v1018 = vpack.c.b16 %v982, %v978
        %v1019 = vpack.c.b16 %v983, %v979
        %v1020 = vpack.c.b16 %v984, %v980
        %v1021 = vpack.c.b16 %v989, %v985
        %v1022 = vpack.c.b16 %v990, %v986
        %v1023 = vpack.c.b16 %v991, %v987
        %v1024 = vpack.c.b16 %v992, %v988
        %1057 = vmatprep.subr.bf16.mxu0 %v994
        %1058 = vmatpush1.bf16.msra.mxu0 %v993
        %1059 = vmatprep.subr.bf16.mxu0 %v998
        %1060 = vmatpush1.bf16.msra.mxu0 %v997
        %1061 = vmatprep.subr.bf16.mxu0 %v1002
        %1062 = vmatpush1.bf16.msra.mxu0 %v1001
        %1063 = vmatprep.subr.bf16.mxu0 %v1006
        %1064 = vmatpush1.bf16.msra.mxu0 %v1005
        %1065 = vmatprep.subr.bf16.mxu0 %v1010
        %1066 = vmatpush1.bf16.msra.mxu0 %v1009
        %1067 = vmatprep.subr.bf16.mxu0 %v1014
        %1068 = vmatpush1.bf16.msra.mxu0 %v1013
        %1069 = vmatprep.subr.bf16.mxu0 %v1018
        %1070 = vmatpush1.bf16.msra.mxu0 %v1017
        %1071 = vmatprep.subr.bf16.mxu0 %v1022
        %1072 = vmatpush1.bf16.msra.mxu0 %v1021
        %1073 = vmatprep.subr.bf16.mxu0 0
        %1074 = vmatpush1.bf16.msra.mxu0 0
        %1075 = vmatprep.subr.bf16.mxu0 0
        %1076 = vmatpush1.bf16.msra.mxu0 0
        %1077 = vmatprep.subr.bf16.mxu0 0
        %1078 = vmatpush1.bf16.msra.mxu0 0
        %1079 = vmatprep.subr.bf16.mxu0 0
        %1080 = vmatpush1.bf16.msra.mxu0 0
        %1081 = vmatprep.subr.bf16.mxu0 0
        %1082 = vmatpush1.bf16.msra.mxu0 0
        %1083 = vmatprep.subr.bf16.mxu0 0
        %1084 = vmatpush1.bf16.msra.mxu0 0
        %1085 = vmatprep.subr.bf16.mxu0 0
        %1086 = vmatpush1.bf16.msra.mxu0 0
        %1087 = vmatprep.subr.bf16.mxu0 0
        %1088 = vmatpush1.bf16.msra.mxu0 0
        %1089 = vmatprep.mubr.bf16.mxu0 0
        %1090 = vmatmul.mubr.bf16.gmra.mrb[0].mxu0 %v864
        %v1091 = vpop.f32.mrb[0].mxu0
        %v1092 = vadd.f32 0.0, %v1091
        %v1093 = vpop.f32.mrb[0].mxu0
        %v1094 = vadd.f32 0.0, %v1093
        %v1095 = vpop.f32.mrb[0].mxu0
        %v1096 = vpop.f32.mrb[0].mxu0
        %1097 = vdwg.mxu0
        %1098 = vmatprep.subr.bf16.mxu0 %v996
        %1099 = vmatpush1.bf16.msra.mxu0 %v995
        %1100 = vmatprep.subr.bf16.mxu0 %v1000
        %1101 = vmatpush1.bf16.msra.mxu0 %v999
        %1102 = vmatprep.subr.bf16.mxu0 %v1004
        %1103 = vmatpush1.bf16.msra.mxu0 %v1003
        %1104 = vmatprep.subr.bf16.mxu0 %v1008
        %1105 = vmatpush1.bf16.msra.mxu0 %v1007
        %1106 = vmatprep.subr.bf16.mxu0 %v1012
        %1107 = vmatpush1.bf16.msra.mxu0 %v1011
        %1108 = vmatprep.subr.bf16.mxu0 %v1016
        %1109 = vmatpush1.bf16.msra.mxu0 %v1015
        %1110 = vmatprep.subr.bf16.mxu0 %v1020
        %1111 = vmatpush1.bf16.msra.mxu0 %v1019
        %1112 = vmatprep.subr.bf16.mxu0 %v1024
        %1113 = vmatpush1.bf16.msra.mxu0 %v1023
        %1114 = vmatprep.subr.bf16.mxu0 0
        %1115 = vmatpush1.bf16.msra.mxu0 0
        %1116 = vmatprep.subr.bf16.mxu0 0
        %1117 = vmatpush1.bf16.msra.mxu0 0
        %1118 = vmatprep.subr.bf16.mxu0 0
        %1119 = vmatpush1.bf16.msra.mxu0 0
        %1120 = vmatprep.subr.bf16.mxu0 0
        %1121 = vmatpush1.bf16.msra.mxu0 0
        %1122 = vmatprep.subr.bf16.mxu0 0
        %1123 = vmatpush1.bf16.msra.mxu0 0
        %1124 = vmatprep.subr.bf16.mxu0 0
        %1125 = vmatpush1.bf16.msra.mxu0 0
        %1126 = vmatprep.subr.bf16.mxu0 0
        %1127 = vmatpush1.bf16.msra.mxu0 0
        %1128 = vmatprep.subr.bf16.mxu0 0
        %1129 = vmatpush1.bf16.msra.mxu0 0
        %1130 = vmatprep.mubr.bf16.mxu0 0
        %1131 = vmatmul.mubr.bf16.gmra.mrb[0].mxu0 %v864
        %v1132 = vpop.f32.mrb[0].mxu0
        %v1133 = vadd.f32 0.0, %v1132
        %v1134 = vpop.f32.mrb[0].mxu0
        %v1135 = vadd.f32 0.0, %v1134
        %v1136 = vpop.f32.mrb[0].mxu0
        %v1137 = vpop.f32.mrb[0].mxu0
        %1138 = vdwg.mxu0
        %v1139 = vadd.f32 %v860, %v1092
        %v1140 = vadd.f32 %v861, %v1094
        %v1141 = vadd.f32 %v862, %v1133
        %v1142 = vadd.f32 %v863, %v1135
        %v1143 = vxor.u32 %v1139, 2147483648
        %v1144 = vxor.u32 %v1140, 2147483648
        %v1145 = vxor.u32 %v1141, 2147483648
        %v1146 = vmul.f32 %v1143, 1.442695
        %v1147 = vpow.pop %v1146
        %v1148 = vmul.f32 %v1144, 1.442695
        %v1149 = vpow.pop %v1148
        %v1150 = vmul.f32 %v1145, 1.442695
        %v1151 = vpow.pop %v1150
        %v1152 = vadd.f32 %v1147, 1.0
        %v1153 = vadd.f32 %v1149, 1.0
        %v1154 = vadd.f32 %v1151, 1.0
        %v1155 = vrcp.pop %v1152
        %v1156 = vmul.f32 1.0, %v1155
        %v1157 = vrcp.pop %v1153
        %v1158 = vmul.f32 1.0, %v1157
        %v1159 = vrcp.pop %v1154
        %v1160 = vmul.f32 1.0, %v1159
        %v1161 = vtanh.pop %v1142
        %v1162 = vmul.f32 %v1158, %v854
        %v1163 = vmul.f32 %v1156, %v1161
        %v1164 = vadd.f32 %v1162, %v1163
        %v1165 = vtanh.pop %v1164
        %v1166 = vmul.f32 %v1160, %v1165
        %v1167 = vmax.f32 %v855, %v1166
        %v1168 = vadd.f32 %v856, %v1166
        %s1169 = smul.u32 1, 4
        %s1170 = smul.addr %s1169, 8
        %s1171 = scalar_lea.vmem [#allocation2], %s1170
        %v1172 = vld [vmem:[%s1171] sm:$0xff]
        %v1173 = vld [vmem:[%s1171 + $0x8] sm:$0xff]
        %v1174 = vld [vmem:[%s1171 + $0x10] sm:$0xff]
        %v1175 = vld [vmem:[%s1171 + $0x18] sm:$0xff]
        %v1176 = vpack.c.bf16 %v1166, %v1166
        %1177 = vmatprep.subr.bf16.mxu0 %v994
        %1178 = vmatpush1.bf16.msra.mxu0 %v993
        %1179 = vmatprep.subr.bf16.mxu0 %v998
        %1180 = vmatpush1.bf16.msra.mxu0 %v997
        %1181 = vmatprep.subr.bf16.mxu0 %v1002
        %1182 = vmatpush1.bf16.msra.mxu0 %v1001
        %1183 = vmatprep.subr.bf16.mxu0 %v1006
        %1184 = vmatpush1.bf16.msra.mxu0 %v1005
        %1185 = vmatprep.subr.bf16.mxu0 %v1010
        %1186 = vmatpush1.bf16.msra.mxu0 %v1009
        %1187 = vmatprep.subr.bf16.mxu0 %v1014
        %1188 = vmatpush1.bf16.msra.mxu0 %v1013
        %1189 = vmatprep.subr.bf16.mxu0 %v1018
        %1190 = vmatpush1.bf16.msra.mxu0 %v1017
        %1191 = vmatprep.subr.bf16.mxu0 %v1022
        %1192 = vmatpush1.bf16.msra.mxu0 %v1021
        %1193 = vmatprep.subr.bf16.mxu0 0
        %1194 = vmatpush1.bf16.msra.mxu0 0
        %1195 = vmatprep.subr.bf16.mxu0 0
        %1196 = vmatpush1.bf16.msra.mxu0 0
        %1197 = vmatprep.subr.bf16.mxu0 0
        %1198 = vmatpush1.bf16.msra.mxu0 0
        %1199 = vmatprep.subr.bf16.mxu0 0
        %1200 = vmatpush1.bf16.msra.mxu0 0
        %1201 = vmatprep.subr.bf16.mxu0 0
        %1202 = vmatpush1.bf16.msra.mxu0 0
        %1203 = vmatprep.subr.bf16.mxu0 0
        %1204 = vmatpush1.bf16.msra.mxu0 0
        %1205 = vmatprep.subr.bf16.mxu0 0
        %1206 = vmatpush1.bf16.msra.mxu0 0
        %1207 = vmatprep.subr.bf16.mxu0 0
        %1208 = vmatpush1.bf16.msra.mxu0 0
        %1209 = vmatprep.mubr.bf16.mxu0 0
        %1210 = vmatmul.mubr.bf16.gmra.mrb[0].mxu0 %v1176
        %v1211 = vpop.f32.mrb[0].mxu0
        %v1212 = vadd.f32 0.0, %v1211
        %v1213 = vpop.f32.mrb[0].mxu0
        %v1214 = vadd.f32 0.0, %v1213
        %v1215 = vpop.f32.mrb[0].mxu0
        %v1216 = vpop.f32.mrb[0].mxu0
        %1217 = vdwg.mxu0
        %1218 = vmatprep.subr.bf16.mxu0 %v996
        %1219 = vmatpush1.bf16.msra.mxu0 %v995
        %1220 = vmatprep.subr.bf16.mxu0 %v1000
        %1221 = vmatpush1.bf16.msra.mxu0 %v999
        %1222 = vmatprep.subr.bf16.mxu0 %v1004
        %1223 = vmatpush1.bf16.msra.mxu0 %v1003
        %1224 = vmatprep.subr.bf16.mxu0 %v1008
        %1225 = vmatpush1.bf16.msra.mxu0 %v1007
        %1226 = vmatprep.subr.bf16.mxu0 %v1012
        %1227 = vmatpush1.bf16.msra.mxu0 %v1011
        %1228 = vmatprep.subr.bf16.mxu0 %v1016
        %1229 = vmatpush1.bf16.msra.mxu0 %v1015
        %1230 = vmatprep.subr.bf16.mxu0 %v1020
        %1231 = vmatpush1.bf16.msra.mxu0 %v1019
        %1232 = vmatprep.subr.bf16.mxu0 %v1024
        %1233 = vmatpush1.bf16.msra.mxu0 %v1023
        %1234 = vmatprep.subr.bf16.mxu0 0
        %1235 = vmatpush1.bf16.msra.mxu0 0
        %1236 = vmatprep.subr.bf16.mxu0 0
        %1237 = vmatpush1.bf16.msra.mxu0 0
        %1238 = vmatprep.subr.bf16.mxu0 0
        %1239 = vmatpush1.bf16.msra.mxu0 0
        %1240 = vmatprep.subr.bf16.mxu0 0
        %1241 = vmatpush1.bf16.msra.mxu0 0
        %1242 = vmatprep.subr.bf16.mxu0 0
        %1243 = vmatpush1.bf16.msra.mxu0 0
        %1244 = vmatprep.subr.bf16.mxu0 0
        %1245 = vmatpush1.bf16.msra.mxu0 0
        %1246 = vmatprep.subr.bf16.mxu0 0
        %1247 = vmatpush1.bf16.msra.mxu0 0
        %1248 = vmatprep.subr.bf16.mxu0 0
        %1249 = vmatpush1.bf16.msra.mxu0 0
        %1250 = vmatprep.mubr.bf16.mxu0 0
        %1251 = vmatmul.mubr.bf16.gmra.mrb[0].mxu0 %v1176
        %v1252 = vpop.f32.mrb[0].mxu0
        %v1253 = vadd.f32 0.0, %v1252
        %v1254 = vpop.f32.mrb[0].mxu0
        %v1255 = vadd.f32 0.0, %v1254
        %v1256 = vpop.f32.mrb[0].mxu0
        %v1257 = vpop.f32.mrb[0].mxu0
        %1258 = vdwg.mxu0
        %v1259 = vadd.f32 %v1172, %v1212
        %v1260 = vadd.f32 %v1173, %v1214
        %v1261 = vadd.f32 %v1174, %v1253
        %v1262 = vadd.f32 %v1175, %v1255
        %v1263 = vxor.u32 %v1259, 2147483648
        %v1264 = vxor.u32 %v1260, 2147483648
        %v1265 = vxor.u32 %v1261, 2147483648
        %v1266 = vmul.f32 %v1263, 1.442695
        %v1267 = vpow.pop %v1266
        %v1268 = vmul.f32 %v1264, 1.442695
        %v1269 = vpow.pop %v1268
        %v1270 = vmul.f32 %v1265, 1.442695
        %v1271 = vpow.pop %v1270
        %v1272 = vadd.f32 %v1267, 1.0
        %v1273 = vadd.f32 %v1269, 1.0
        %v1274 = vadd.f32 %v1271, 1.0
        %v1275 = vrcp.pop %v1272
        %v1276 = vmul.f32 1.0, %v1275
        %v1277 = vrcp.pop %v1273
        %v1278 = vmul.f32 1.0, %v1277
        %v1279 = vrcp.pop %v1274
        %v1280 = vmul.f32 1.0, %v1279
        %v1281 = vtanh.pop %v1262
        %v1282 = vmul.f32 %v1278, %v1164
        %v1283 = vmul.f32 %v1276, %v1281
        %v1284 = vadd.f32 %v1282, %v1283
        %v1285 = vtanh.pop %v1284
        %v1286 = vmul.f32 %v1280, %v1285
        %v1287 = vmax.f32 %v1167, %v1286
        %v1288 = vadd.f32 %v1168, %v1286
        %s1289 = smul.u32 2, 4
        %s1290 = smul.addr %s1289, 8
        %s1291 = scalar_lea.vmem [#allocation2], %s1290
        %v1292 = vld [vmem:[%s1291] sm:$0xff]
        %v1293 = vld [vmem:[%s1291 + $0x8] sm:$0xff]
        %v1294 = vld [vmem:[%s1291 + $0x10] sm:$0xff]
        %v1295 = vld [vmem:[%s1291 + $0x18] sm:$0xff]
        %v1296 = vpack.c.bf16 %v1286, %v1286
        %1297 = vmatprep.subr.bf16.mxu0 %v994
        %1298 = vmatpush1.bf16.msra.mxu0 %v993
        %1299 = vmatprep.subr.bf16.mxu0 %v998
        %1300 = vmatpush1.bf16.msra.mxu0 %v997
        %1301 = vmatprep.subr.bf16.mxu0 %v1002
        %1302 = vmatpush1.bf16.msra.mxu0 %v1001
        %1303 = vmatprep.subr.bf16.mxu0 %v1006
        %1304 = vmatpush1.bf16.msra.mxu0 %v1005
        %1305 = vmatprep.subr.bf16.mxu0 %v1010
        %1306 = vmatpush1.bf16.msra.mxu0 %v1009
        %1307 = vmatprep.subr.bf16.mxu0 %v1014
        %1308 = vmatpush1.bf16.msra.mxu0 %v1013
        %1309 = vmatprep.subr.bf16.mxu0 %v1018
        %1310 = vmatpush1.bf16.msra.mxu0 %v1017
        %1311 = vmatprep.subr.bf16.mxu0 %v1022
        %1312 = vmatpush1.bf16.msra.mxu0 %v1021
        %1313 = vmatprep.subr.bf16.mxu0 0
        %1314 = vmatpush1.bf16.msra.mxu0 0
        %1315 = vmatprep.subr.bf16.mxu0 0
        %1316 = vmatpush1.bf16.msra.mxu0 0
        %1317 = vmatprep.subr.bf16.mxu0 0
        %1318 = vmatpush1.bf16.msra.mxu0 0
        %1319 = vmatprep.subr.bf16.mxu0 0
        %1320 = vmatpush1.bf16.msra.mxu0 0
        %1321 = vmatprep.subr.bf16.mxu0 0
        %1322 = vmatpush1.bf16.msra.mxu0 0
        %1323 = vmatprep.subr.bf16.mxu0 0
        %1324 = vmatpush1.bf16.msra.mxu0 0
        %1325 = vmatprep.subr.bf16.mxu0 0
        %1326 = vmatpush1.bf16.msra.mxu0 0
        %1327 = vmatprep.subr.bf16.mxu0 0
        %1328 = vmatpush1.bf16.msra.mxu0 0
        %1329 = vmatprep.mubr.bf16.mxu0 0
        %1330 = vmatmul.mubr.bf16.gmra.mrb[0].mxu0 %v1296
        %v1331 = vpop.f32.mrb[0].mxu0
        %v1332 = vadd.f32 0.0, %v1331
        %v1333 = vpop.f32.mrb[0].mxu0
        %v1334 = vadd.f32 0.0, %v1333
        %v1335 = vpop.f32.mrb[0].mxu0
        %v1336 = vpop.f32.mrb[0].mxu0
        %1337 = vdwg.mxu0
        %1338 = vmatprep.subr.bf16.mxu0 %v996
        %1339 = vmatpush1.bf16.msra.mxu0 %v995
        %1340 = vmatprep.subr.bf16.mxu0 %v1000
        %1341 = vmatpush1.bf16.msra.mxu0 %v999
        %1342 = vmatprep.subr.bf16.mxu0 %v1004
        %1343 = vmatpush1.bf16.msra.mxu0 %v1003
        %1344 = vmatprep.subr.bf16.mxu0 %v1008
        %1345 = vmatpush1.bf16.msra.mxu0 %v1007
        %1346 = vmatprep.subr.bf16.mxu0 %v1012
        %1347 = vmatpush1.bf16.msra.mxu0 %v1011
        %1348 = vmatprep.subr.bf16.mxu0 %v1016
        %1349 = vmatpush1.bf16.msra.mxu0 %v1015
        %1350 = vmatprep.subr.bf16.mxu0 %v1020
        %1351 = vmatpush1.bf16.msra.mxu0 %v1019
        %1352 = vmatprep.subr.bf16.mxu0 %v1024
        %1353 = vmatpush1.bf16.msra.mxu0 %v1023
        %1354 = vmatprep.subr.bf16.mxu0 0
        %1355 = vmatpush1.bf16.msra.mxu0 0
        %1356 = vmatprep.subr.bf16.mxu0 0
        %1357 = vmatpush1.bf16.msra.mxu0 0
        %1358 = vmatprep.subr.bf16.mxu0 0
        %1359 = vmatpush1.bf16.msra.mxu0 0
        %1360 = vmatprep.subr.bf16.mxu0 0
        %1361 = vmatpush1.bf16.msra.mxu0 0
        %1362 = vmatprep.subr.bf16.mxu0 0
        %1363 = vmatpush1.bf16.msra.mxu0 0
        %1364 = vmatprep.subr.bf16.mxu0 0
        %1365 = vmatpush1.bf16.msra.mxu0 0
        %1366 = vmatprep.subr.bf16.mxu0 0
        %1367 = vmatpush1.bf16.msra.mxu0 0
        %1368 = vmatprep.subr.bf16.mxu0 0
        %1369 = vmatpush1.bf16.msra.mxu0 0
        %1370 = vmatprep.mubr.bf16.mxu0 0
        %1371 = vmatmul.mubr.bf16.gmra.mrb[0].mxu0 %v1296
        %v1372 = vpop.f32.mrb[0].mxu0
        %v1373 = vadd.f32 0.0, %v1372
        %v1374 = vpop.f32.mrb[0].mxu0
        %v1375 = vadd.f32 0.0, %v1374
        %v1376 = vpop.f32.mrb[0].mxu0
        %v1377 = vpop.f32.mrb[0].mxu0
        %1378 = vdwg.mxu0
        %v1379 = vadd.f32 %v1292, %v1332
        %v1380 = vadd.f32 %v1293, %v1334
        %v1381 = vadd.f32 %v1294, %v1373
        %v1382 = vadd.f32 %v1295, %v1375
        %v1383 = vxor.u32 %v1379, 2147483648
        %v1384 = vxor.u32 %v1380, 2147483648
        %v1385 = vxor.u32 %v1381, 2147483648
        %v1386 = vmul.f32 %v1383, 1.442695
        %v1387 = vpow.pop %v1386
        %v1388 = vmul.f32 %v1384, 1.442695
        %v1389 = vpow.pop %v1388
        %v1390 = vmul.f32 %v1385, 1.442695
        %v1391 = vpow.pop %v1390
        %v1392 = vadd.f32 %v1387, 1.0
        %v1393 = vadd.f32 %v1389, 1.0
        %v1394 = vadd.f32 %v1391, 1.0
        %v1395 = vrcp.pop %v1392
        %v1396 = vmul.f32 1.0, %v1395
        %v1397 = vrcp.pop %v1393
        %v1398 = vmul.f32 1.0, %v1397
        %v1399 = vrcp.pop %v1394
        %v1400 = vmul.f32 1.0, %v1399
        %v1401 = vtanh.pop %v1382
        %v1402 = vmul.f32 %v1398, %v1284
        %v1403 = vmul.f32 %v1396, %v1401
        %v1404 = vadd.f32 %v1402, %v1403
        %v1405 = vtanh.pop %v1404
        %v1406 = vmul.f32 %v1400, %v1405
        %v1407 = vmax.f32 %v1287, %v1406
        %v1408 = vadd.f32 %v1288, %v1406
        %s1409 = smul.u32 3, 4
        %s1410 = smul.addr %s1409, 8
        %s1411 = scalar_lea.vmem [#allocation2], %s1410
        %v1412 = vld [vmem:[%s1411] sm:$0xff]
        %v1413 = vld [vmem:[%s1411 + $0x8] sm:$0xff]
        %v1414 = vld [vmem:[%s1411 + $0x10] sm:$0xff]
        %v1415 = vld [vmem:[%s1411 + $0x18] sm:$0xff]
        %v1416 = vpack.c.bf16 %v1406, %v1406
        %1417 = vmatprep.subr.bf16.mxu0 %v994
        %1418 = vmatpush1.bf16.msra.mxu0 %v993
        %1419 = vmatprep.subr.bf16.mxu0 %v998
        %1420 = vmatpush1.bf16.msra.mxu0 %v997
        %1421 = vmatprep.subr.bf16.mxu0 %v1002
        %1422 = vmatpush1.bf16.msra.mxu0 %v1001
        %1423 = vmatprep.subr.bf16.mxu0 %v1006
        %1424 = vmatpush1.bf16.msra.mxu0 %v1005
        %1425 = vmatprep.subr.bf16.mxu0 %v1010
        %1426 = vmatpush1.bf16.msra.mxu0 %v1009
        %1427 = vmatprep.subr.bf16.mxu0 %v1014
        %1428 = vmatpush1.bf16.msra.mxu0 %v1013
        %1429 = vmatprep.subr.bf16.mxu0 %v1018
        %1430 = vmatpush1.bf16.msra.mxu0 %v1017
        %1431 = vmatprep.subr.bf16.mxu0 %v1022
        %1432 = vmatpush1.bf16.msra.mxu0 %v1021
        %1433 = vmatprep.subr.bf16.mxu0 0
        %1434 = vmatpush1.bf16.msra.mxu0 0
        %1435 = vmatprep.subr.bf16.mxu0 0
        %1436 = vmatpush1.bf16.msra.mxu0 0
        %1437 = vmatprep.subr.bf16.mxu0 0
        %1438 = vmatpush1.bf16.msra.mxu0 0
        %1439 = vmatprep.subr.bf16.mxu0 0
        %1440 = vmatpush1.bf16.msra.mxu0 0
        %1441 = vmatprep.subr.bf16.mxu0 0
        %1442 = vmatpush1.bf16.msra.mxu0 0
        %1443 = vmatprep.subr.bf16.mxu0 0
        %1444 = vmatpush1.bf16.msra.mxu0 0
        %1445 = vmatprep.subr.bf16.mxu0 0
        %1446 = vmatpush1.bf16.msra.mxu0 0
        %1447 = vmatprep.subr.bf16.mxu0 0
        %1448 = vmatpush1.bf16.msra.mxu0 0
        %1449 = vmatprep.mubr.bf16.mxu0 0
        %1450 = vmatmul.mubr.bf16.gmra.mrb[0].mxu0 %v1416
        %v1451 = vpop.f32.mrb[0].mxu0
        %v1452 = vadd.f32 0.0, %v1451
        %v1453 = vpop.f32.mrb[0].mxu0
        %v1454 = vadd.f32 0.0, %v1453
        %v1455 = vpop.f32.mrb[0].mxu0
        %v1456 = vpop.f32.mrb[0].mxu0
        %1457 = vdwg.mxu0
        %1458 = vmatprep.subr.bf16.mxu0 %v996
        %1459 = vmatpush1.bf16.msra.mxu0 %v995
        %1460 = vmatprep.subr.bf16.mxu0 %v1000
        %1461 = vmatpush1.bf16.msra.mxu0 %v999
        %1462 = vmatprep.subr.bf16.mxu0 %v1004
        %1463 = vmatpush1.bf16.msra.mxu0 %v1003
        %1464 = vmatprep.subr.bf16.mxu0 %v1008
        %1465 = vmatpush1.bf16.msra.mxu0 %v1007
        %1466 = vmatprep.subr.bf16.mxu0 %v1012
        %1467 = vmatpush1.bf16.msra.mxu0 %v1011
        %1468 = vmatprep.subr.bf16.mxu0 %v1016
        %1469 = vmatpush1.bf16.msra.mxu0 %v1015
        %1470 = vmatprep.subr.bf16.mxu0 %v1020
        %1471 = vmatpush1.bf16.msra.mxu0 %v1019
        %1472 = vmatprep.subr.bf16.mxu0 %v1024
        %1473 = vmatpush1.bf16.msra.mxu0 %v1023
        %1474 = vmatprep.subr.bf16.mxu0 0
        %1475 = vmatpush1.bf16.msra.mxu0 0
        %1476 = vmatprep.subr.bf16.mxu0 0
        %1477 = vmatpush1.bf16.msra.mxu0 0
        %1478 = vmatprep.subr.bf16.mxu0 0
        %1479 = vmatpush1.bf16.msra.mxu0 0
        %1480 = vmatprep.subr.bf16.mxu0 0
        %1481 = vmatpush1.bf16.msra.mxu0 0
        %1482 = vmatprep.subr.bf16.mxu0 0
        %1483 = vmatpush1.bf16.msra.mxu0 0
        %1484 = vmatprep.subr.bf16.mxu0 0
        %1485 = vmatpush1.bf16.msra.mxu0 0
        %1486 = vmatprep.subr.bf16.mxu0 0
        %1487 = vmatpush1.bf16.msra.mxu0 0
        %1488 = vmatprep.subr.bf16.mxu0 0
        %1489 = vmatpush1.bf16.msra.mxu0 0
        %1490 = vmatprep.mubr.bf16.mxu0 0
        %1491 = vmatmul.mubr.bf16.gmra.mrb[0].mxu0 %v1416
        %v1492 = vpop.f32.mrb[0].mxu0
        %v1493 = vadd.f32 0.0, %v1492
        %v1494 = vpop.f32.mrb[0].mxu0
        %v1495 = vadd.f32 0.0, %v1494
        %v1496 = vpop.f32.mrb[0].mxu0
        %v1497 = vpop.f32.mrb[0].mxu0
        %1498 = vdwg.mxu0
        %v1499 = vadd.f32 %v1412, %v1452
        %v1500 = vadd.f32 %v1413, %v1454
        %v1501 = vadd.f32 %v1414, %v1493
        %v1502 = vadd.f32 %v1415, %v1495
        %v1503 = vxor.u32 %v1499, 2147483648
        %v1504 = vxor.u32 %v1500, 2147483648
        %v1505 = vxor.u32 %v1501, 2147483648
        %v1506 = vmul.f32 %v1503, 1.442695
        %v1507 = vpow.pop %v1506
        %v1508 = vmul.f32 %v1504, 1.442695
        %v1509 = vpow.pop %v1508
        %v1510 = vmul.f32 %v1505, 1.442695
        %v1511 = vpow.pop %v1510
        %v1512 = vadd.f32 %v1507, 1.0
        %v1513 = vadd.f32 %v1509, 1.0
        %v1514 = vadd.f32 %v1511, 1.0
        %v1515 = vrcp.pop %v1512
        %v1516 = vmul.f32 1.0, %v1515
        %v1517 = vrcp.pop %v1513
        %v1518 = vmul.f32 1.0, %v1517
        %v1519 = vrcp.pop %v1514
        %v1520 = vmul.f32 1.0, %v1519
        %v1521 = vtanh.pop %v1502
        %v1522 = vmul.f32 %v1518, %v1404
        %v1523 = vmul.f32 %v1516, %v1521
        %v1524 = vadd.f32 %v1522, %v1523
        %v1525 = vtanh.pop %v1524
        %v1526 = vmul.f32 %v1520, %v1525
        %v1527 = vmax.f32 %v1407, %v1526
        %v1528 = vadd.f32 %v1408, %v1526
        %1529 = vst [vmem:[#allocation3] sm:$0xff] %v1526
        %1530 = vst [vmem:[#allocation4] sm:$0xff] %v1524
        %1531 = vst [vmem:[#allocation5] sm:$0xff] %v1527
        %1532 = vst [vmem:[#allocation6] sm:$0xff] %v1528
        %p1533 = scmp.eq.s32.totalorder %s30, 1
        // Predicated region
        $region105: #{lstm_cls_forward.5} parent=59 // pred_check
          %p1534 = pneg %p1533
        $region106: #{lstm_cls_forward.5} parent=59 // pred_check_branch
          %1536 = sbr.rel (%p1534) target = $region108
        $region107: #{lstm_cls_forward.5} parent=59 // pred_region
          %v1537 = vpack.c.bf16 %v1526, %v1526
          %v1538 = vpack.c.bf16 %v1527, %v1527
          %v1539 = vmul.f32 %v1528, 0.125
          %v1540 = vpack.c.bf16 %v1539, %v1539
          %v1541 = vld [vmem:[#allocation15] sm:$0xf]
          %v1542 = vld [vmem:[#allocation15 + $0x4] sm:$0xf]
          %v1543 = vld [vmem:[#allocation15 + $0x8] sm:$0xf]
          %v1544 = vld [vmem:[#allocation15 + $0xc] sm:$0xf]
          %v1545 = vld [vmem:[#allocation15 + $0x10] sm:$0xf]
          %v1546 = vld [vmem:[#allocation15 + $0x14] sm:$0xf]
          %v1547 = vld [vmem:[#allocation15 + $0x18] sm:$0xf]
          %v1548 = vld [vmem:[#allocation15 + $0x1c] sm:$0xf]
          %v1549 = vld [vmem:[#allocation15 + $0x20] sm:$0xf]
          %v1550 = vld [vmem:[#allocation15 + $0x24] sm:$0xf]
          %v1551 = vld [vmem:[#allocation15 + $0x28] sm:$0xf]
          %v1552 = vld [vmem:[#allocation15 + $0x2c] sm:$0xf]
          %v1553 = vld [vmem:[#allocation15 + $0x30] sm:$0xf]
          %v1554 = vld [vmem:[#allocation15 + $0x34] sm:$0xf]
          %v1555 = vld [vmem:[#allocation15 + $0x38] sm:$0xf]
          %v1556 = vld [vmem:[#allocation15 + $0x3c] sm:$0xf]
          %v1557 = vld [vmem:[#allocation16] sm:$0xf]
          %v1558 = vld [vmem:[#allocation16 + $0x4] sm:$0xf]
          %v1559 = vld [vmem:[#allocation16 + $0x8] sm:$0xf]
          %v1560 = vld [vmem:[#allocation16 + $0xc] sm:$0xf]
          %v1561 = vld [vmem:[#allocation16 + $0x10] sm:$0xf]
          %v1562 = vld [vmem:[#allocation16 + $0x14] sm:$0xf]
          %v1563 = vld [vmem:[#allocation16 + $0x18] sm:$0xf]
          %v1564 = vld [vmem:[#allocation16 + $0x1c] sm:$0xf]
          %v1565 = vld [vmem:[#allocation16 + $0x20] sm:$0xf]
          %v1566 = vld [vmem:[#allocation16 + $0x24] sm:$0xf]
          %v1567 = vld [vmem:[#allocation16 + $0x28] sm:$0xf]
          %v1568 = vld [vmem:[#allocation16 + $0x2c] sm:$0xf]
          %v1569 = vld [vmem:[#allocation16 + $0x30] sm:$0xf]
          %v1570 = vld [vmem:[#allocation16 + $0x34] sm:$0xf]
          %v1571 = vld [vmem:[#allocation16 + $0x38] sm:$0xf]
          %v1572 = vld [vmem:[#allocation16 + $0x3c] sm:$0xf]
          %v1589 = vunpack.c.l.b16 %v1557
          %v1590 = vunpack.c.l.b16 %v1558
          %v1591 = vunpack.c.l.b16 %v1559
          %v1592 = vunpack.c.l.b16 %v1560
          %v1593 = vunpack.c.l.b16 %v1561
          %v1594 = vunpack.c.l.b16 %v1562
          %v1595 = vunpack.c.l.b16 %v1563
          %v1596 = vunpack.c.l.b16 %v1564
          %v1597 = vunpack.c.l.b16 %v1565
          %v1598 = vunpack.c.l.b16 %v1566
          %v1599 = vunpack.c.l.b16 %v1567
          %v1600 = vunpack.c.l.b16 %v1568
          %v1601 = vunpack.c.l.b16 %v1569
          %v1602 = vunpack.c.l.b16 %v1570
          %v1603 = vunpack.c.l.b16 %v1571
          %v1604 = vunpack.c.l.b16 %v1572
          %v1605 = vpack.c.b16 %v1590, %v1589
          %v1606 = vpack.c.b16 %v1592, %v1591
          %v1607 = vpack.c.b16 %v1594, %v1593
          %v1608 = vpack.c.b16 %v1596, %v1595
          %v1609 = vpack.c.b16 %v1598, %v1597
          %v1610 = vpack.c.b16 %v1600, %v1599
          %v1611 = vpack.c.b16 %v1602, %v1601
          %v1612 = vpack.c.b16 %v1604, %v1603
          %1621 = vmatprep.subr.bf16.mxu0 0
          %1622 = vmatpush1.bf16.msra.mxu0 %v1605
          %1623 = vmatprep.subr.bf16.mxu0 0
          %1624 = vmatpush1.bf16.msra.mxu0 %v1606
          %1625 = vmatprep.subr.bf16.mxu0 0
          %1626 = vmatpush1.bf16.msra.mxu0 %v1607
          %1627 = vmatprep.subr.bf16.mxu0 0
          %1628 = vmatpush1.bf16.msra.mxu0 %v1608
          %1629 = vmatprep.subr.bf16.mxu0 0
          %1630 = vmatpush1.bf16.msra.mxu0 %v1609
          %1631 = vmatprep.subr.bf16.mxu0 0
          %1632 = vmatpush1.bf16.msra.mxu0 %v1610
          %1633 = vmatprep.subr.bf16.mxu0 0
          %1634 = vmatpush1.bf16.msra.mxu0 %v1611
          %1635 = vmatprep.subr.bf16.mxu0 0
          %1636 = vmatpush1.bf16.msra.mxu0 %v1612
          %1637 = vmatprep.subr.bf16.mxu0 0
          %1638 = vmatpush1.bf16.msra.mxu0 0
          %1639 = vmatprep.subr.bf16.mxu0 0
          %1640 = vmatpush1.bf16.msra.mxu0 0
          %1641 = vmatprep.subr.bf16.mxu0 0
          %1642 = vmatpush1.bf16.msra.mxu0 0
          %1643 = vmatprep.subr.bf16.mxu0 0
          %1644 = vmatpush1.bf16.msra.mxu0 0
          %1645 = vmatprep.subr.bf16.mxu0 0
          %1646 = vmatpush1.bf16.msra.mxu0 0
          %1647 = vmatprep.subr.bf16.mxu0 0
          %1648 = vmatpush1.bf16.msra.mxu0 0
          %1649 = vmatprep.subr.bf16.mxu0 0
          %1650 = vmatpush1.bf16.msra.mxu0 0
          %1651 = vmatprep.subr.bf16.mxu0 0
          %1652 = vmatpush1.bf16.msra.mxu0 0
          %1653 = vmatprep.mubr.bf16.mxu0 0
          %1654 = vmatmul.mubr.bf16.gmra.mrb[0].mxu0 %v1538
          %v1655 = vpop.f32.mrb[0].mxu0
          %v1656 = vadd.f32 0.0, %v1655
          %v1657 = vpop.f32.mrb[0].mxu0
          %v1658 = vpop.f32.mrb[0].mxu0
          %v1659 = vpop.f32.mrb[0].mxu0
          %1660 = vdwg.mxu0
          %v1677 = vunpack.c.l.b16 %v1541
          %v1678 = vunpack.c.l.b16 %v1542
          %v1679 = vunpack.c.l.b16 %v1543
          %v1680 = vunpack.c.l.b16 %v1544
          %v1681 = vunpack.c.l.b16 %v1545
          %v1682 = vunpack.c.l.b16 %v1546
          %v1683 = vunpack.c.l.b16 %v1547
          %v1684 = vunpack.c.l.b16 %v1548
          %v1685 = vunpack.c.l.b16 %v1549
          %v1686 = vunpack.c.l.b16 %v1550
          %v1687 = vunpack.c.l.b16 %v1551
          %v1688 = vunpack.c.l.b16 %v1552
          %v1689 = vunpack.c.l.b16 %v1553
          %v1690 = vunpack.c.l.b16 %v1554
          %v1691 = vunpack.c.l.b16 %v1555
          %v1692 = vunpack.c.l.b16 %v1556
          %v1693 = vpack.c.b16 %v1678, %v1677
          %v1694 = vpack.c.b16 %v1680, %v1679
          %v1695 = vpack.c.b16 %v1682, %v1681
          %v1696 = vpack.c.b16 %v1684, %v1683
          %v1697 = vpack.c.b16 %v1686, %v1685
          %v1698 = vpack.c.b16 %v1688, %v1687
          %v1699 = vpack.c.b16 %v1690, %v1689
          %v1700 = vpack.c.b16 %v1692, %v1691
          %1709 = vmatprep.subr.bf16.mxu0 0
          %1710 = vmatpush1.bf16.msra.mxu0 %v1693
          %1711 = vmatprep.subr.bf16.mxu0 0
          %1712 = vmatpush1.bf16.msra.mxu0 %v1694
          %1713 = vmatprep.subr.bf16.mxu0 0
          %1714 = vmatpush1.bf16.msra.mxu0 %v1695
          %1715 = vmatprep.subr.bf16.mxu0 0
          %1716 = vmatpush1.bf16.msra.mxu0 %v1696
          %1717 = vmatprep.subr.bf16.mxu0 0
          %1718 = vmatpush1.bf16.msra.mxu0 %v1697
          %1719 = vmatprep.subr.bf16.mxu0 0
          %1720 = vmatpush1.bf16.msra.mxu0 %v1698
          %1721 = vmatprep.subr.bf16.mxu0 0
          %1722 = vmatpush1.bf16.msra.mxu0 %v1699
          %1723 = vmatprep.subr.bf16.mxu0 0
          %1724 = vmatpush1.bf16.msra.mxu0 %v1700
          %1725 = vmatprep.subr.bf16.mxu0 0
          %1726 = vmatpush1.bf16.msra.mxu0 0
          %1727 = vmatprep.subr.bf16.mxu0 0
          %1728 = vmatpush1.bf16.msra.mxu0 0
          %1729 = vmatprep.subr.bf16.mxu0 0
          %1730 = vmatpush1.bf16.msra.mxu0 0
          %1731 = vmatprep.subr.bf16.mxu0 0
          %1732 = vmatpush1.bf16.msra.mxu0 0
          %1733 = vmatprep.subr.bf16.mxu0 0
          %1734 = vmatpush1.bf16.msra.mxu0 0
          %1735 = vmatprep.subr.bf16.mxu0 0
          %1736 = vmatpush1.bf16.msra.mxu0 0
          %1737 = vmatprep.subr.bf16.mxu0 0
          %1738 = vmatpush1.bf16.msra.mxu0 0
          %1739 = vmatprep.subr.bf16.mxu0 0
          %1740 = vmatpush1.bf16.msra.mxu0 0
          %1741 = vmatprep.mubr.bf16.mxu0 0
          %1742 = vmatmul.mubr.bf16.gmra.mrb[0].mxu0 %v1537
          %v1743 = vpop.f32.mrb[0].mxu0
          %v1744 = vadd.f32 %v1656, %v1743
          %v1745 = vpop.f32.mrb[0].mxu0
          %v1746 = vpop.f32.mrb[0].mxu0
          %v1747 = vpop.f32.mrb[0].mxu0
          %1748 = vdwg.mxu0
          %v1749 = vld [vmem:[#allocation18] sm:$0xf]
          %v1750 = vld [vmem:[#allocation18 + $0x4] sm:$0xf]
          %v1751 = vld [vmem:[#allocation18 + $0x8] sm:$0xf]
          %v1752 = vld [vmem:[#allocation18 + $0xc] sm:$0xf]
          %v1753 = vld [vmem:[#allocation18 + $0x10] sm:$0xf]
          %v1754 = vld [vmem:[#allocation18 + $0x14] sm:$0xf]
          %v1755 = vld [vmem:[#allocation18 + $0x18] sm:$0xf]
          %v1756 = vld [vmem:[#allocation18 + $0x1c] sm:$0xf]
          %v1757 = vld [vmem:[#allocation18 + $0x20] sm:$0xf]
          %v1758 = vld [vmem:[#allocation18 + $0x24] sm:$0xf]
          %v1759 = vld [vmem:[#allocation18 + $0x28] sm:$0xf]
          %v1760 = vld [vmem:[#allocation18 + $0x2c] sm:$0xf]
          %v1761 = vld [vmem:[#allocation18 + $0x30] sm:$0xf]
          %v1762 = vld [vmem:[#allocation18 + $0x34] sm:$0xf]
          %v1763 = vld [vmem:[#allocation18 + $0x38] sm:$0xf]
          %v1764 = vld [vmem:[#allocation18 + $0x3c] sm:$0xf]
          %v1781 = vunpack.c.l.b16 %v1749
          %v1782 = vunpack.c.l.b16 %v1750
          %v1783 = vunpack.c.l.b16 %v1751
          %v1784 = vunpack.c.l.b16 %v1752
          %v1785 = vunpack.c.l.b16 %v1753
          %v1786 = vunpack.c.l.b16 %v1754
          %v1787 = vunpack.c.l.b16 %v1755
          %v1788 = vunpack.c.l.b16 %v1756
          %v1789 = vunpack.c.l.b16 %v1757
          %v1790 = vunpack.c.l.b16 %v1758
          %v1791 = vunpack.c.l.b16 %v1759
          %v1792 = vunpack.c.l.b16 %v1760
          %v1793 = vunpack.c.l.b16 %v1761
          %v1794 = vunpack.c.l.b16 %v1762
          %v1795 = vunpack.c.l.b16 %v1763
          %v1796 = vunpack.c.l.b16 %v1764
          %v1797 = vpack.c.b16 %v1782, %v1781
          %v1798 = vpack.c.b16 %v1784, %v1783
          %v1799 = vpack.c.b16 %v1786, %v1785
          %v1800 = vpack.c.b16 %v1788, %v1787
          %v1801 = vpack.c.b16 %v1790, %v1789
          %v1802 = vpack.c.b16 %v1792, %v1791
          %v1803 = vpack.c.b16 %v1794, %v1793
          %v1804 = vpack.c.b16 %v1796, %v1795
          %1813 = vmatprep.subr.bf16.mxu0 0
          %1814 = vmatpush1.bf16.msra.mxu0 %v1797
          %1815 = vmatprep.subr.bf16.mxu0 0
          %1816 = vmatpush1.bf16.msra.mxu0 %v1798
          %1817 = vmatprep.subr.bf16.mxu0 0
          %1818 = vmatpush1.bf16.msra.mxu0 %v1799
          %1819 = vmatprep.subr.bf16.mxu0 0
          %1820 = vmatpush1.bf16.msra.mxu0 %v1800
          %1821 = vmatprep.subr.bf16.mxu0 0
          %1822 = vmatpush1.bf16.msra.mxu0 %v1801
          %1823 = vmatprep.subr.bf16.mxu0 0
          %1824 = vmatpush1.bf16.msra.mxu0 %v1802
          %1825 = vmatprep.subr.bf16.mxu0 0
          %1826 = vmatpush1.bf16.msra.mxu0 %v1803
          %1827 = vmatprep.subr.bf16.mxu0 0
          %1828 = vmatpush1.bf16.msra.mxu0 %v1804
          %1829 = vmatprep.subr.bf16.mxu0 0
          %1830 = vmatpush1.bf16.msra.mxu0 0
          %1831 = vmatprep.subr.bf16.mxu0 0
          %1832 = vmatpush1.bf16.msra.mxu0 0
          %1833 = vmatprep.subr.bf16.mxu0 0
          %1834 = vmatpush1.bf16.msra.mxu0 0
          %1835 = vmatprep.subr.bf16.mxu0 0
          %1836 = vmatpush1.bf16.msra.mxu0 0
          %1837 = vmatprep.subr.bf16.mxu0 0
          %1838 = vmatpush1.bf16.msra.mxu0 0
          %1839 = vmatprep.subr.bf16.mxu0 0
          %1840 = vmatpush1.bf16.msra.mxu0 0
          %1841 = vmatprep.subr.bf16.mxu0 0
          %1842 = vmatpush1.bf16.msra.mxu0 0
          %1843 = vmatprep.subr.bf16.mxu0 0
          %1844 = vmatpush1.bf16.msra.mxu0 0
          %1845 = vmatprep.mubr.bf16.mxu0 0
          %1846 = vmatmul.mubr.bf16.gmra.mrb[0].mxu0 %v1540
          %v1847 = vpop.f32.mrb[0].mxu0
          %v1848 = vadd.f32 0.0, %v1847
          %v1849 = vpop.f32.mrb[0].mxu0
          %v1850 = vpop.f32.mrb[0].mxu0
          %v1851 = vpop.f32.mrb[0].mxu0
          %1852 = vdwg.mxu0
          %v1853 = vadd.f32 %v1744, %v1848
          %v1854 = vld [vmem:[#allocation19] sm:$0x1]
          %v1856 = vlaneseq
          %v1857 = vshrl.u32 %v1856, 7
          %v1858 = vsub.s32 0, %v1857
          %v1859 = vrot.slane %v1854, %v1858
          %v1861 = vadd.f32 %v1853, %v1859
          %v1862 = vmax.f32 %v1861, 0.0
          %v1863 = vpack.c.bf16 %v1862, %v1862
          %v1864 = vld [vmem:[#allocation21] sm:$0xf]
          %v1865 = vld [vmem:[#allocation21 + $0x4] sm:$0xf]
          %v1866 = vld [vmem:[#allocation22] sm:$0x1]
          %v1868 = vlaneseq
          %v1869 = vshrl.u32 %v1868, 7
          %v1870 = vsub.s32 0, %v1869
          %v1871 = vrot.slane %v1866, %v1870
          %v1875 = vunpack.c.l.b16 %v1864
          %v1876 = vunpack.c.l.b16 %v1865
          %v1877 = vpack.c.b16 %v1876, %v1875
          %vm1879 = vcmask 130048
          %v1881 = vsel %vm1879, %v1863, 0
          %1883 = vmatprep.subr.bf16.mxu0 0
          %1884 = vmatpush1.bf16.msra.mxu0 %v1877
          %1885 = vmatprep.subr.bf16.mxu0 0
          %1886 = vmatpush1.bf16.msra.mxu0 0
          %1887 = vmatprep.subr.bf16.mxu0 0
          %1888 = vmatpush1.bf16.msra.mxu0 0
          %1889 = vmatprep.subr.bf16.mxu0 0
          %1890 = vmatpush1.bf16.msra.mxu0 0
          %1891 = vmatprep.subr.bf16.mxu0 0
          %1892 = vmatpush1.bf16.msra.mxu0 0
          %1893 = vmatprep.subr.bf16.mxu0 0
          %1894 = vmatpush1.bf16.msra.mxu0 0
          %1895 = vmatprep.subr.bf16.mxu0 0
          %1896 = vmatpush1.bf16.msra.mxu0 0
          %1897 = vmatprep.subr.bf16.mxu0 0
          %1898 = vmatpush1.bf16.msra.mxu0 0
          %1899 = vmatprep.subr.bf16.mxu0 0
          %1900 = vmatpush1.bf16.msra.mxu0 0
          %1901 = vmatprep.subr.bf16.mxu0 0
          %1902 = vmatpush1.bf16.msra.mxu0 0
          %1903 = vmatprep.subr.bf16.mxu0 0
          %1904 = vmatpush1.bf16.msra.mxu0 0
          %1905 = vmatprep.subr.bf16.mxu0 0
          %1906 = vmatpush1.bf16.msra.mxu0 0
          %1907 = vmatprep.subr.bf16.mxu0 0
          %1908 = vmatpush1.bf16.msra.mxu0 0
          %1909 = vmatprep.subr.bf16.mxu0 0
          %1910 = vmatpush1.bf16.msra.mxu0 0
          %1911 = vmatprep.subr.bf16.mxu0 0
          %1912 = vmatpush1.bf16.msra.mxu0 0
          %1913 = vmatprep.subr.bf16.mxu0 0
          %1914 = vmatpush1.bf16.msra.mxu0 0
          %1915 = vmatprep.mubr.bf16.mxu0 0
          %1916 = vmatmul.mubr.bf16.gmra.mrb[0].mxu0 %v1881
          %v1917 = vpop.f32.mrb[0].mxu0
          %v1918 = vadd.f32 %v1871, %v1917
          %v1919 = vpop.f32.mrb[0].mxu0
          %v1920 = vpop.f32.mrb[0].mxu0
          %v1921 = vpop.f32.mrb[0].mxu0
          %1922 = vdwg.mxu0
          %vm1923 = vcmask 15360
          %1924 = vst.msk [vmem:[#allocation24] sm:$0xff] %vm1923, %v1918
        $region108: #{lstm_cls_forward.5} parent=59 // pred_fallthru
          _
        // Predicated region
        $region109: #{lstm_cls_forward.5} parent=59 // pred_check
          %p1925 = pneg %p258
        $region110: #{lstm_cls_forward.5} parent=59 // pred_check_branch
          %1927 = sbr.rel (%p1925) target = $region112
        $region111: #{lstm_cls_forward.5} parent=59 // pred_region
          %s1929 = ssub.s32 128, 128
          %1930 = vsyncadd [#allocation9], %s1929
          %s1932 = sshll.u32 [#allocation24], 4
          %s1933 = int_to_ptr.vmem [resolvable:$true] %s1932
          %1935 = dma.vmem_to_hbm [thread:$0]  %s1933, 128, %s10, [#allocation9]
        $region112: #{lstm_cls_forward.5} parent=59 // pred_fallthru
          _
        // Predicated region
        $region113: #{lstm_cls_forward.5} parent=59 // pred_check
          %p1936 = pneg %p258
        $region114: #{lstm_cls_forward.5} parent=59 // pred_check_branch
          %1938 = sbr.rel (%p1936) target = $region116
        $region115: #{lstm_cls_forward.5} parent=59 // pred_region
          %1939 = dma.done [#allocation9], 128
        $region116: #{lstm_cls_forward.5} parent=59 // pred_fallthru
          _
      $region60: #{lstm_cls_forward.5} parent=5 // pred_fallthru
        _
      %p1940 = scmp.le.s32.totalorder 2, %s25
      // Predicated region
      $region117: #{lstm_cls_forward.5} parent=5 // pred_check
        %p1941 = pneg %p1940
      $region118: #{lstm_cls_forward.5} parent=5 // pred_check_branch
        %1943 = sbr.rel (%p1941) target = $region120
      $region119: #{lstm_cls_forward.5} parent=5 // pred_region
        %s1944 = ssub.s32 %s25, 2
      $region120: #{lstm_cls_forward.5} parent=5 // pred_fallthru
        _
    $region6: #{lstm_cls_forward.5} parent=1 // loop_footer
      %s29 = sadd.s32 1, %s25
    $region7: #{lstm_cls_forward.5} parent=1 // loop_footer_branch
      %24 = sbr.rel target = $region3
    $region8: #{lstm_cls_forward.5} parent=1 // loop_exit
      _
    %1945 = vsyncpa [#allocation8], 1
    %s1946 = scalar_lea.sflag [#allocation8], 1
    %1947 = vsyncpa %s1946, 1
    %1948 = vsyncpa [#allocation11], 1
    %1949 = vsyncpa [#allocation14], 1
    %1950 = vsyncpa [#allocation17], 1
    %1951 = vsyncpa [#allocation20], 1
    %1952 = vsyncpa [#allocation23], 1
    %1953 = vsyncpa [#allocation9], 1
    %s1954 = scalar_lea.sflag [#allocation9], 1
    %1955 = vsyncpa %s1954, 1

// kernel: lstm_cls_forward.4
$region0: #{lstm_cls_forward.4}
  #allocation0 [shape = 'u32[]', space=smem, size = 0x4, offset = 0x4, fixed_abs, tag = 'smem constant byte address 0x4 - core index']
  #allocation1 [shape = 'u32[144,128]{1,0:T(1,128)}', space=vmem, size = 0x12000, scoped, tag = 'internal scratch']
  #allocation2 [shape = 'f32[32,512]{1,0:T(8,128)}', space=vmem, size = 0x10000, scoped, tag = 'scratch operand']
  #allocation3 [shape = 'f32[8,128]{1,0:T(8,128)}', space=vmem, size = 0x1000, scoped, tag = 'scratch operand']
  #allocation4 [shape = 'f32[8,128]{1,0:T(8,128)}', space=vmem, size = 0x1000, scoped, tag = 'scratch operand']
  %s0 = inlined_call_operand.hbm [shape: bf16[64,128], index: 0, kind: input, shape index: {}]
  %s1 = inlined_call_operand.hbm [shape: bf16[128,512], index: 1, kind: input, shape index: {}]
  %s2 = inlined_call_operand.hbm [shape: bf16[128,512], index: 2, kind: input, shape index: {}]
  %s3 = inlined_call_operand.hbm [shape: f32[1,512], index: 3, kind: input, shape index: {}]
  %s4 = inlined_call_operand.hbm [shape: bf16[64,128], index: 4, kind: output, shape index: {}]
  %s5 = sld [smem:[#allocation0]]
  $region69: #{lstm_cls_forward.4} parent=0
    _
  %s7 = ssub.s32 1, %s5
  %s8 = scalar_select 0, %s7, %s5
  $region1: #{lstm_cls_forward.4} parent=0
    #allocation5 [shape = 'u8[16384]{0}', space=vmem, size = 0x4000, scoped, tag = 'input window, operand 0']
    #allocation6 [shape = 's32[2]{0}', space=sflag, size = 0x8, scoped, tag = 'scoped memory for lstm_cls_forward.4']
    #allocation7 [shape = 's32[2]{0}', space=sflag, size = 0x8, scoped, tag = 'scoped memory for lstm_cls_forward.4']
    #allocation8 [shape = 'u8[131072]{0}', space=vmem, size = 0x20000, scoped, tag = 'input window, operand 1, single buffered']
    #allocation9 [shape = 's32[1]{0}', space=sflag, size = 0x4, scoped, tag = 'scoped memory for lstm_cls_forward.4']
    #allocation10 [shape = 'u8[131072]{0}', space=vmem, size = 0x20000, scoped, tag = 'input window, operand 2, single buffered']
    #allocation11 [shape = 'u8[2048]{0}', space=vmem, size = 0x800, scoped, tag = 'input window, operand 3, single buffered']
    #allocation12 [shape = 's32[1]{0}', space=sflag, size = 0x4, scoped, tag = 'scoped memory for lstm_cls_forward.4']
    #allocation13 [shape = 'u8[16384]{0}', space=vmem, size = 0x4000, scoped, tag = 'output window, operand 0']
    %9 = vsyncpa [#allocation6], 0
    %s10 = scalar_lea.sflag [#allocation6], 1
    %11 = vsyncpa %s10, 0
    %12 = vsyncpa [#allocation9], 0
    %13 = vsyncpa [#allocation12], 0
    %14 = vsyncpa [#allocation7], 0
    %s15 = scalar_lea.sflag [#allocation7], 1
    %16 = vsyncpa %s15, 0
    loop: start=0, step=1, limit=4
    $region2: #{lstm_cls_forward.4} parent=1 // loop_pre_header
      _
    $region3: #{lstm_cls_forward.4} parent=1 // loop_header
      %s18 = sphi 0, %s22
      %p19 = scmp.ge.s32.totalorder %s18, 4
      %s28 = sphi 0, %s30
      %s31 = sphi 0, %s28
      %s32 = sphi 0, %s31
      %s48 = sphi 0, %s32
      %s52 = sphi 0, %s52
      %s54 = sphi 0, %s52
      %s55 = sphi 0, %s54
      %s69 = sphi 0, %s55
      %s73 = sphi 0, %s73
      %s75 = sphi 0, %s73
      %s76 = sphi 0, %s75
      %s90 = sphi 0, %s76
      %s94 = sphi 0, %s94
      %s96 = sphi 0, %s94
      %s97 = sphi 0, %s96
      %s111 = sphi 0, %s97
      %s117 = sphi 0, %s119
      %s120 = sphi 0, %s117
      %s121 = sphi 0, %s120
      %s137 = sphi 0, %s121
    $region4: #{lstm_cls_forward.4} parent=1 // loop_header_branch
      %21 = sbr.rel (%p19) target = $region8
    $region5: #{lstm_cls_forward.4} parent=1 // loop_body
      %s23 = ssub.s32 %s18, 1
      %s24 = ssub.s32 %s18, 2
      %s25 = sadd.s32 %s18, 1
      %s26 = ssub.s32 %s18, %s25
      %p27 = scmp.eq.s32.totalorder %s26, 0
      %s29 = sadd.s32 %s28, 1
      %s30 = scalar_select %p27, %s28, %s29
      %p33 = pneg %p27
      %p34 = scmp.eq.s32.totalorder %s18, 1
      %p35 = por %p33, %p34
      %p36 = scmp.ne.s32.totalorder %s28, %s31
      %p37 = scmp.eq.s32.totalorder %s18, 0
      %p38 = por %p36, %p37
      %p39 = scmp.ne.s32.totalorder %s28, %s31
      %p40 = scmp.eq.s32.totalorder %s23, 1
      %p41 = por %p39, %p40
      %p42 = scmp.ne.s32.totalorder %s31, %s32
      %p43 = scmp.eq.s32.totalorder %s23, 0
      %p44 = por %p42, %p43
      %p45 = scmp.ne.s32.totalorder %s31, %s32
      %p46 = scmp.eq.s32.totalorder %s24, 1
      %p47 = por %p45, %p46
      %p49 = scmp.ne.s32.totalorder %s32, %s48
      %p50 = scmp.eq.s32.totalorder %s24, 0
      %p51 = por %p49, %p50
      %s53 = sadd.s32 %s52, 1
      %p56 = scmp.eq.s32.totalorder %s18, 1
      %p57 = scmp.ne.s32.totalorder %s52, %s54
      %p58 = scmp.eq.s32.totalorder %s18, 0
      %p59 = por %p57, %p58
      %p60 = scmp.ne.s32.totalorder %s52, %s54
      %p61 = scmp.eq.s32.totalorder %s23, 1
      %p62 = por %p60, %p61
      %p63 = scmp.ne.s32.totalorder %s54, %s55
      %p64 = scmp.eq.s32.totalorder %s23, 0
      %p65 = por %p63, %p64
      %p66 = scmp.ne.s32.totalorder %s54, %s55
      %p67 = scmp.eq.s32.totalorder %s24, 1
      %p68 = por %p66, %p67
      %p70 = scmp.ne.s32.totalorder %s55, %s69
      %p71 = scmp.eq.s32.totalorder %s24, 0
      %p72 = por %p70, %p71
      %s74 = sadd.s32 %s73, 1
      %p77 = scmp.eq.s32.totalorder %s18, 1
      %p78 = scmp.ne.s32.totalorder %s73, %s75
      %p79 = scmp.eq.s32.totalorder %s18, 0
      %p80 = por %p78, %p79
      %p81 = scmp.ne.s32.totalorder %s73, %s75
      %p82 = scmp.eq.s32.totalorder %s23, 1
      %p83 = por %p81, %p82
      %p84 = scmp.ne.s32.totalorder %s75, %s76
      %p85 = scmp.eq.s32.totalorder %s23, 0
      %p86 = por %p84, %p85
      %p87 = scmp.ne.s32.totalorder %s75, %s76
      %p88 = scmp.eq.s32.totalorder %s24, 1
      %p89 = por %p87, %p88
      %p91 = scmp.ne.s32.totalorder %s76, %s90
      %p92 = scmp.eq.s32.totalorder %s24, 0
      %p93 = por %p91, %p92
      %s95 = sadd.s32 %s94, 1
      %p98 = scmp.eq.s32.totalorder %s18, 1
      %p99 = scmp.ne.s32.totalorder %s94, %s96
      %p100 = scmp.eq.s32.totalorder %s18, 0
      %p101 = por %p99, %p100
      %p102 = scmp.ne.s32.totalorder %s94, %s96
      %p103 = scmp.eq.s32.totalorder %s23, 1
      %p104 = por %p102, %p103
      %p105 = scmp.ne.s32.totalorder %s96, %s97
      %p106 = scmp.eq.s32.totalorder %s23, 0
      %p107 = por %p105, %p106
      %p108 = scmp.ne.s32.totalorder %s96, %s97
      %p109 = scmp.eq.s32.totalorder %s24, 1
      %p110 = por %p108, %p109
      %p112 = scmp.ne.s32.totalorder %s97, %s111
      %p113 = scmp.eq.s32.totalorder %s24, 0
      %p114 = por %p112, %p113
      %s115 = ssub.s32 %s18, %s25
      %p116 = scmp.eq.s32.totalorder %s115, 0
      %s118 = sadd.s32 %s117, 1
      %s119 = scalar_select %p116, %s117, %s118
      %p122 = pneg %p116
      %p123 = scmp.eq.s32.totalorder %s18, 1
      %p124 = por %p122, %p123
      %p125 = scmp.ne.s32.totalorder %s117, %s120
      %p126 = scmp.eq.s32.totalorder %s18, 0
      %p127 = por %p125, %p126
      %p128 = scmp.ne.s32.totalorder %s117, %s120
      %p129 = scmp.eq.s32.totalorder %s23, 1
      %p130 = por %p128, %p129
      %p131 = scmp.ne.s32.totalorder %s120, %s121
      %p132 = scmp.eq.s32.totalorder %s23, 0
      %p133 = por %p131, %p132
      %p134 = scmp.ne.s32.totalorder %s120, %s121
      %p135 = scmp.eq.s32.totalorder %s24, 1
      %p136 = por %p134, %p135
      %p138 = scmp.ne.s32.totalorder %s121, %s137
      %p139 = scmp.eq.s32.totalorder %s24, 0
      %p140 = por %p138, %p139
      %p141 = scmp.le.s32.totalorder 1, %s18
      %p142 = scmp.lt.s32.totalorder %s18, 3
      %p143 = pnand %p141, %p142
      %p144 = pneg %p143
      // Predicated region
      $region9: #{lstm_cls_forward.4} parent=5 // pred_check
        _
      $region10: #{lstm_cls_forward.4} parent=5 // pred_check_branch
        %146 = sbr.rel (%p143) target = $region12
      $region11: #{lstm_cls_forward.4} parent=5 // pred_region
        %s147 = ssub.s32 %s18, 1
        // Predicated region
        $region13: #{lstm_cls_forward.4} parent=11 // pred_check
          %p148 = pneg %p65
        $region14: #{lstm_cls_forward.4} parent=11 // pred_check_branch
          %150 = sbr.rel (%p148) target = $region16
        $region15: #{lstm_cls_forward.4} parent=11 // pred_region
          %s152 = ssub.s32 4096, 4096
          %153 = vsyncadd [#allocation9], %s152
          %s154 = sshll.u32 [#allocation8], 4
          %s155 = int_to_ptr.vmem [resolvable:$true] %s154
          %160 = dma.hbm_to_vmem [thread:$0]  %s1, 4096, %s155, [#allocation9], 256, 256, 16
        $region16: #{lstm_cls_forward.4} parent=11 // pred_fallthru
          _
        // Predicated region
        $region17: #{lstm_cls_forward.4} parent=11 // pred_check
          %p161 = pneg %p86
        $region18: #{lstm_cls_forward.4} parent=11 // pred_check_branch
          %163 = sbr.rel (%p161) target = $region20
        $region19: #{lstm_cls_forward.4} parent=11 // pred_region
          %s165 = ssub.s32 4096, 4096
          %166 = vsyncadd [#allocation9], %s165
          %s167 = sshll.u32 [#allocation10], 4
          %s168 = int_to_ptr.vmem [resolvable:$true] %s167
          %173 = dma.hbm_to_vmem [thread:$0]  %s2, 4096, %s168, [#allocation9], 256, 256, 16
        $region20: #{lstm_cls_forward.4} parent=11 // pred_fallthru
          _
        // Predicated region
        $region21: #{lstm_cls_forward.4} parent=11 // pred_check
          %p174 = pneg %p107
        $region22: #{lstm_cls_forward.4} parent=11 // pred_check_branch
          %176 = sbr.rel (%p174) target = $region24
        $region23: #{lstm_cls_forward.4} parent=11 // pred_region
          %s178 = ssub.s32 64, 64
          %179 = vsyncadd [#allocation12], %s178
          %s181 = sshll.u32 [#allocation11], 4
          %s182 = int_to_ptr.vmem [resolvable:$true] %s181
          %184 = dma.hbm_to_vmem [thread:$0]  %s3, 64, %s182, [#allocation12]
        $region24: #{lstm_cls_forward.4} parent=11 // pred_fallthru
          _
      $region12: #{lstm_cls_forward.4} parent=5 // pred_fallthru
        _
      %p185 = scmp.lt.s32.totalorder %s18, 2
      // Predicated region
      $region25: #{lstm_cls_forward.4} parent=5 // pred_check
        %p186 = pneg %p185
      $region26: #{lstm_cls_forward.4} parent=5 // pred_check_branch
        %188 = sbr.rel (%p186) target = $region28
      $region27: #{lstm_cls_forward.4} parent=5 // pred_region
        // Predicated region
        $region29: #{lstm_cls_forward.4} parent=27 // pred_check
          %p189 = pneg %p38
        $region30: #{lstm_cls_forward.4} parent=27 // pred_check_branch
          %191 = sbr.rel (%p189) target = $region32
        $region31: #{lstm_cls_forward.4} parent=27 // pred_region
          %s192 = sand.u32 %s28, 1
          %s193 = scalar_lea.sflag [#allocation6], %s192
          %s194 = sand.u32 %s28, 1
          %s195 = smul.addr %s194, 16
          %s196 = scalar_lea.vmem [#allocation5], %s195
          %s197 = smul.u32 4, %s18
          %s199 = ssub.s32 256, 256
          %200 = vsyncadd %s193, %s199
          %s201 = smul.addr %s197, 64
          %s202 = scalar_lea.hbm %s0, %s201
          %s203 = sshll.u32 %s196, 4
          %s204 = int_to_ptr.vmem [resolvable:$true] %s203
          %209 = dma.hbm_to_vmem [thread:$0]  %s202, 256, %s204, %s193, 64, 64, 4
        $region32: #{lstm_cls_forward.4} parent=27 // pred_fallthru
          _
      $region28: #{lstm_cls_forward.4} parent=5 // pred_fallthru
        _
      %p210 = scmp.le.s32.totalorder 1, %s18
      %p211 = scmp.lt.s32.totalorder %s18, 3
      %p212 = pnand %p210, %p211
      %p213 = pneg %p212
      // Predicated region
      $region33: #{lstm_cls_forward.4} parent=5 // pred_check
        _
      $region34: #{lstm_cls_forward.4} parent=5 // pred_check_branch
        %215 = sbr.rel (%p212) target = $region36
      $region35: #{lstm_cls_forward.4} parent=5 // pred_region
        %s216 = ssub.s32 %s18, 1
        %s217 = sand.u32 %s31, 1
        %s218 = scalar_lea.sflag [#allocation6], %s217
        %s219 = sand.u32 %s31, 1
        %s220 = smul.addr %s219, 16
        %s221 = scalar_lea.vmem [#allocation5], %s220
        // Predicated region
        $region37: #{lstm_cls_forward.4} parent=35 // pred_check
          %p222 = pneg %p44
        $region38: #{lstm_cls_forward.4} parent=35 // pred_check_branch
          %224 = sbr.rel (%p222) target = $region40
        $region39: #{lstm_cls_forward.4} parent=35 // pred_region
          %225 = dma.done %s218, 256
        $region40: #{lstm_cls_forward.4} parent=35 // pred_fallthru
          _
        // Predicated region
        $region41: #{lstm_cls_forward.4} parent=35 // pred_check
          %p226 = pneg %p65
        $region42: #{lstm_cls_forward.4} parent=35 // pred_check_branch
          %228 = sbr.rel (%p226) target = $region44
        $region43: #{lstm_cls_forward.4} parent=35 // pred_region
          %229 = dma.done [#allocation9], 4096
        $region44: #{lstm_cls_forward.4} parent=35 // pred_fallthru
          _
        // Predicated region
        $region45: #{lstm_cls_forward.4} parent=35 // pred_check
          %p230 = pneg %p86
        $region46: #{lstm_cls_forward.4} parent=35 // pred_check_branch
          %232 = sbr.rel (%p230) target = $region48
        $region47: #{lstm_cls_forward.4} parent=35 // pred_region
          %233 = dma.done [#allocation9], 4096
        $region48: #{lstm_cls_forward.4} parent=35 // pred_fallthru
          _
        // Predicated region
        $region49: #{lstm_cls_forward.4} parent=35 // pred_check
          %p234 = pneg %p107
        $region50: #{lstm_cls_forward.4} parent=35 // pred_check_branch
          %236 = sbr.rel (%p234) target = $region52
        $region51: #{lstm_cls_forward.4} parent=35 // pred_region
          %237 = dma.done [#allocation12], 64
        $region52: #{lstm_cls_forward.4} parent=35 // pred_fallthru
          _
        %s238 = sand.u32 %s31, 1
        %s239 = scalar_lea.sflag [#allocation6], %s238
        %s240 = sand.u32 %s31, 1
        %s241 = smul.addr %s240, 16
        %s242 = scalar_lea.vmem [#allocation5], %s241
        %p243 = pneg %p44
        %p244 = pneg %p41
        %p245 = pneg %p65
        %p246 = pneg %p62
        %p247 = pneg %p86
        %p248 = pneg %p83
        %p249 = pneg %p107
        %p250 = pneg %p104
        %p251 = pneg %p133
        %p252 = pneg %p130
        %s253 = sand.u32 %s120, 1
        %s254 = scalar_lea.sflag [#allocation7], %s253
        %s255 = sand.u32 %s120, 1
        %s256 = smul.addr %s255, 16
        %s257 = scalar_lea.vmem [#allocation13], %s256
        %s258 = smul.u32 4, %s23
        %s259 = smul.u32 4, %s23
        %p261 = scmp.eq.s32.totalorder %s23, 0
        // Predicated region
        $region53: #{lstm_cls_forward.4} parent=35 // pred_check
          %p262 = pneg %p261
        $region54: #{lstm_cls_forward.4} parent=35 // pred_check_branch
          %264 = sbr.rel (%p262) target = $region56
        $region55: #{lstm_cls_forward.4} parent=35 // pred_region
          %265 = vst [vmem:[#allocation3] sm:$0xff] 0.0
          %266 = vst [vmem:[#allocation4] sm:$0xff] 0.0
        $region56: #{lstm_cls_forward.4} parent=35 // pred_fallthru
          _
        %v267 = vld [vmem:[%s221] sm:$0xf]
        %v268 = vld [vmem:[%s221 + $0x4] sm:$0xf]
        %v269 = vld [vmem:[%s221 + $0x8] sm:$0xf]
        %v270 = vld [vmem:[%s221 + $0xc] sm:$0xf]
        %v271 = vld [vmem:[#allocation8] sm:$0xff]
        %v272 = vld [vmem:[#allocation8 + $0x8] sm:$0xff]
        %v273 = vld [vmem:[#allocation8 + $0x10] sm:$0xff]
        %v274 = vld [vmem:[#allocation8 + $0x18] sm:$0xff]
        %v275 = vld [vmem:[#allocation8 + $0x20] sm:$0xff]
        %v276 = vld [vmem:[#allocation8 + $0x28] sm:$0xff]
        %v277 = vld [vmem:[#allocation8 + $0x30] sm:$0xff]
        %v278 = vld [vmem:[#allocation8 + $0x38] sm:$0xff]
        %v279 = vld [vmem:[#allocation8 + $0x40] sm:$0xff]
        %v280 = vld [vmem:[#allocation8 + $0x48] sm:$0xff]
        %v281 = vld [vmem:[#allocation8 + $0x50] sm:$0xff]
        %v282 = vld [vmem:[#allocation8 + $0x58] sm:$0xff]
        %v283 = vld [vmem:[#allocation8 + $0x60] sm:$0xff]
        %v284 = vld [vmem:[#allocation8 + $0x68] sm:$0xff]
        %v285 = vld [vmem:[#allocation8 + $0x70] sm:$0xff]
        %v286 = vld [vmem:[#allocation8 + $0x78] sm:$0xff]
        %v287 = vld [vmem:[#allocation8 + $0x80] sm:$0xff]
        %v288 = vld [vmem:[#allocation8 + $0x88] sm:$0xff]
        %v289 = vld [vmem:[#allocation8 + $0x90] sm:$0xff]
        %v290 = vld [vmem:[#allocation8 + $0x98] sm:$0xff]
        %v291 = vld [vmem:[#allocation8 + $0xa0] sm:$0xff]
        %v292 = vld [vmem:[#allocation8 + $0xa8] sm:$0xff]
        %v293 = vld [vmem:[#allocation8 + $0xb0] sm:$0xff]
        %v294 = vld [vmem:[#allocation8 + $0xb8] sm:$0xff]
        %v295 = vld [vmem:[#allocation8 + $0xc0] sm:$0xff]
        %v296 = vld [vmem:[#allocation8 + $0xc8] sm:$0xff]
        %v297 = vld [vmem:[#allocation8 + $0xd0] sm:$0xff]
        %v298 = vld [vmem:[#allocation8 + $0xd8] sm:$0xff]
        %v299 = vld [vmem:[#allocation8 + $0xe0] sm:$0xff]
        %v300 = vld [vmem:[#allocation8 + $0xe8] sm:$0xff]
        %v301 = vld [vmem:[#allocation8 + $0xf0] sm:$0xff]
        %v302 = vld [vmem:[#allocation8 + $0xf8] sm:$0xff]
        %v303 = vld [vmem:[#allocation11] sm:$0xf]
        %v305 = vlaneseq
        %v306 = vshrl.u32 %v305, 7
        %v307 = vsub.s32 0, %v306
        %v308 = vrot.slane %v303, %v307
        %v309 = vlaneseq
        %v310 = vshrl.u32 %v309, 7
        %v311 = vsub.s32 1, %v310
        %v312 = vrot.slane %v303, %v311
        %v313 = vlaneseq
        %v314 = vshrl.u32 %v313, 7
        %v315 = vsub.s32 2, %v314
        %v316 = vrot.slane %v303, %v315
        %v317 = vlaneseq
        %v318 = vshrl.u32 %v317, 7
        %v319 = vsub.s32 3, %v318
        %v320 = vrot.slane %v303, %v319
        %v329 = vunpack.c.l.b16 %v267
        %v330 = vunpack.c.l.b16 %v268
        %v331 = vunpack.c.l.b16 %v269
        %v332 = vunpack.c.l.b16 %v270
        %v333 = vpack.c.b16 %v330, %v329
        %v334 = vpack.c.b16 %v332, %v331
        %v369 = vunpack.c.l.b16 %v271
        %v370 = vunpack.c.h.b16 %v271
        %v371 = vunpack.c.l.b16 %v272
        %v372 = vunpack.c.h.b16 %v272
        %v373 = vunpack.c.l.b16 %v273
        %v374 = vunpack.c.h.b16 %v273
        %v375 = vunpack.c.l.b16 %v274
        %v376 = vunpack.c.h.b16 %v274
        %v377 = vunpack.c.l.b16 %v275
        %v378 = vunpack.c.h.b16 %v275
        %v379 = vunpack.c.l.b16 %v276
        %v380 = vunpack.c.h.b16 %v276
        %v381 = vunpack.c.l.b16 %v277
        %v382 = vunpack.c.h.b16 %v277
        %v383 = vunpack.c.l.b16 %v278
        %v384 = vunpack.c.h.b16 %v278
        %v385 = vunpack.c.l.b16 %v279
        %v386 = vunpack.c.h.b16 %v279
        %v387 = vunpack.c.l.b16 %v280
        %v388 = vunpack.c.h.b16 %v280
        %v389 = vunpack.c.l.b16 %v281
        %v390 = vunpack.c.h.b16 %v281
        %v391 = vunpack.c.l.b16 %v282
        %v392 = vunpack.c.h.b16 %v282
        %v393 = vunpack.c.l.b16 %v283
        %v394 = vunpack.c.h.b16 %v283
        %v395 = vunpack.c.l.b16 %v284
        %v396 = vunpack.c.h.b16 %v284
        %v397 = vunpack.c.l.b16 %v285
        %v398 = vunpack.c.h.b16 %v285
        %v399 = vunpack.c.l.b16 %v286
        %v400 = vunpack.c.h.b16 %v286
        %v401 = vunpack.c.l.b16 %v287
        %v402 = vunpack.c.h.b16 %v287
        %v403 = vunpack.c.l.b16 %v288
        %v404 = vunpack.c.h.b16 %v288
        %v405 = vunpack.c.l.b16 %v289
        %v406 = vunpack.c.h.b16 %v289
        %v407 = vunpack.c.l.b16 %v290
        %v408 = vunpack.c.h.b16 %v290
        %v409 = vunpack.c.l.b16 %v291
        %v410 = vunpack.c.h.b16 %v291
        %v411 = vunpack.c.l.b16 %v292
        %v412 = vunpack.c.h.b16 %v292
        %v413 = vunpack.c.l.b16 %v293
        %v414 = vunpack.c.h.b16 %v293
        %v415 = vunpack.c.l.b16 %v294
        %v416 = vunpack.c.h.b16 %v294
        %v417 = vunpack.c.l.b16 %v295
        %v418 = vunpack.c.h.b16 %v295
        %v419 = vunpack.c.l.b16 %v296
        %v420 = vunpack.c.h.b16 %v296
        %v421 = vunpack.c.l.b16 %v297
        %v422 = vunpack.c.h.b16 %v297
        %v423 = vunpack.c.l.b16 %v298
        %v424 = vunpack.c.h.b16 %v298
        %v425 = vunpack.c.l.b16 %v299
        %v426 = vunpack.c.h.b16 %v299
        %v427 = vunpack.c.l.b16 %v300
        %v428 = vunpack.c.h.b16 %v300
        %v429 = vunpack.c.l.b16 %v301
        %v430 = vunpack.c.h.b16 %v301
        %v431 = vunpack.c.l.b16 %v302
        %v432 = vunpack.c.h.b16 %v302
        %v433 = vpack.c.b16 %v373, %v369
        %v434 = vpack.c.b16 %v374, %v370
        %v435 = vpack.c.b16 %v375, %v371
        %v436 = vpack.c.b16 %v376, %v372
        %v437 = vpack.c.b16 %v381, %v377
        %v438 = vpack.c.b16 %v382, %v378
        %v439 = vpack.c.b16 %v383, %v379
        %v440 = vpack.c.b16 %v384, %v380
        %v441 = vpack.c.b16 %v389, %v385
        %v442 = vpack.c.b16 %v390, %v386
        %v443 = vpack.c.b16 %v391, %v387
        %v444 = vpack.c.b16 %v392, %v388
        %v445 = vpack.c.b16 %v397, %v393
        %v446 = vpack.c.b16 %v398, %v394
        %v447 = vpack.c.b16 %v399, %v395
        %v448 = vpack.c.b16 %v400, %v396
        %v449 = vpack.c.b16 %v405, %v401
        %v450 = vpack.c.b16 %v406, %v402
        %v451 = vpack.c.b16 %v407, %v403
        %v452 = vpack.c.b16 %v408, %v404
        %v453 = vpack.c.b16 %v413, %v409
        %v454 = vpack.c.b16 %v414, %v410
        %v455 = vpack.c.b16 %v415, %v411
        %v456 = vpack.c.b16 %v416, %v412
        %v457 = vpack.c.b16 %v421, %v417
        %v458 = vpack.c.b16 %v422, %v418
        %v459 = vpack.c.b16 %v423, %v419
        %v460 = vpack.c.b16 %v424, %v420
        %v461 = vpack.c.b16 %v429, %v425
        %v462 = vpack.c.b16 %v430, %v426
        %v463 = vpack.c.b16 %v431, %v427
        %v464 = vpack.c.b16 %v432, %v428
        %497 = vmatprep.subr.bf16.mxu0 %v434
        %498 = vmatpush1.bf16.msra.mxu0 %v433
        %499 = vmatprep.subr.bf16.mxu0 %v438
        %500 = vmatpush1.bf16.msra.mxu0 %v437
        %501 = vmatprep.subr.bf16.mxu0 %v442
        %502 = vmatpush1.bf16.msra.mxu0 %v441
        %503 = vmatprep.subr.bf16.mxu0 %v446
        %504 = vmatpush1.bf16.msra.mxu0 %v445
        %505 = vmatprep.subr.bf16.mxu0 %v450
        %506 = vmatpush1.bf16.msra.mxu0 %v449
        %507 = vmatprep.subr.bf16.mxu0 %v454
        %508 = vmatpush1.bf16.msra.mxu0 %v453
        %509 = vmatprep.subr.bf16.mxu0 %v458
        %510 = vmatpush1.bf16.msra.mxu0 %v457
        %511 = vmatprep.subr.bf16.mxu0 %v462
        %512 = vmatpush1.bf16.msra.mxu0 %v461
        %513 = vmatprep.subr.bf16.mxu0 0
        %514 = vmatpush1.bf16.msra.mxu0 0
        %515 = vmatprep.subr.bf16.mxu0 0
        %516 = vmatpush1.bf16.msra.mxu0 0
        %517 = vmatprep.subr.bf16.mxu0 0
        %518 = vmatpush1.bf16.msra.mxu0 0
        %519 = vmatprep.subr.bf16.mxu0 0
        %520 = vmatpush1.bf16.msra.mxu0 0
        %521 = vmatprep.subr.bf16.mxu0 0
        %522 = vmatpush1.bf16.msra.mxu0 0
        %523 = vmatprep.subr.bf16.mxu0 0
        %524 = vmatpush1.bf16.msra.mxu0 0
        %525 = vmatprep.subr.bf16.mxu0 0
        %526 = vmatpush1.bf16.msra.mxu0 0
        %527 = vmatprep.subr.bf16.mxu0 0
        %528 = vmatpush1.bf16.msra.mxu0 0
        %529 = vmatprep.mubr.bf16.mxu0 0
        %530 = vmatmul.mubr.bf16.gmra.mrb[0].mxu0 %v333
        %v531 = vpop.f32.mrb[0].mxu0
        %v532 = vadd.f32 %v308, %v531
        %v533 = vpop.f32.mrb[0].mxu0
        %v534 = vadd.f32 %v312, %v533
        %v535 = vpop.f32.mrb[0].mxu0
        %v536 = vadd.f32 %v308, %v535
        %v537 = vpop.f32.mrb[0].mxu0
        %v538 = vadd.f32 %v312, %v537
        %539 = vmatprep.mubr.bf16.mxu0 0
        %540 = vmatmul.mubr.bf16.gmra.mrb[0].mxu0 %v334
        %v541 = vpop.f32.mrb[0].mxu0
        %v542 = vadd.f32 %v308, %v541
        %v543 = vpop.f32.mrb[0].mxu0
        %v544 = vadd.f32 %v312, %v543
        %v545 = vpop.f32.mrb[0].mxu0
        %v546 = vadd.f32 %v308, %v545
        %v547 = vpop.f32.mrb[0].mxu0
        %v548 = vadd.f32 %v312, %v547
        %549 = vdwg.mxu0
        %550 = vmatprep.subr.bf16.mxu0 %v436
        %551 = vmatpush1.bf16.msra.mxu0 %v435
        %552 = vmatprep.subr.bf16.mxu0 %v440
        %553 = vmatpush1.bf16.msra.mxu0 %v439
        %554 = vmatprep.subr.bf16.mxu0 %v444
        %555 = vmatpush1.bf16.msra.mxu0 %v443
        %556 = vmatprep.subr.bf16.mxu0 %v448
        %557 = vmatpush1.bf16.msra.mxu0 %v447
        %558 = vmatprep.subr.bf16.mxu0 %v452
        %559 = vmatpush1.bf16.msra.mxu0 %v451
        %560 = vmatprep.subr.bf16.mxu0 %v456
        %561 = vmatpush1.bf16.msra.mxu0 %v455
        %562 = vmatprep.subr.bf16.mxu0 %v460
        %563 = vmatpush1.bf16.msra.mxu0 %v459
        %564 = vmatprep.subr.bf16.mxu0 %v464
        %565 = vmatpush1.bf16.msra.mxu0 %v463
        %566 = vmatprep.subr.bf16.mxu0 0
        %567 = vmatpush1.bf16.msra.mxu0 0
        %568 = vmatprep.subr.bf16.mxu0 0
        %569 = vmatpush1.bf16.msra.mxu0 0
        %570 = vmatprep.subr.bf16.mxu0 0
        %571 = vmatpush1.bf16.msra.mxu0 0
        %572 = vmatprep.subr.bf16.mxu0 0
        %573 = vmatpush1.bf16.msra.mxu0 0
        %574 = vmatprep.subr.bf16.mxu0 0
        %575 = vmatpush1.bf16.msra.mxu0 0
        %576 = vmatprep.subr.bf16.mxu0 0
        %577 = vmatpush1.bf16.msra.mxu0 0
        %578 = vmatprep.subr.bf16.mxu0 0
        %579 = vmatpush1.bf16.msra.mxu0 0
        %580 = vmatprep.subr.bf16.mxu0 0
        %581 = vmatpush1.bf16.msra.mxu0 0
        %582 = vmatprep.mubr.bf16.mxu0 0
        %583 = vmatmul.mubr.bf16.gmra.mrb[0].mxu0 %v333
        %v584 = vpop.f32.mrb[0].mxu0
        %v585 = vadd.f32 %v316, %v584
        %v586 = vpop.f32.mrb[0].mxu0
        %v587 = vadd.f32 %v320, %v586
        %v588 = vpop.f32.mrb[0].mxu0
        %v589 = vadd.f32 %v316, %v588
        %v590 = vpop.f32.mrb[0].mxu0
        %v591 = vadd.f32 %v320, %v590
        %592 = vmatprep.mubr.bf16.mxu0 0
        %593 = vmatmul.mubr.bf16.gmra.mrb[0].mxu0 %v334
        %v594 = vpop.f32.mrb[0].mxu0
        %v595 = vadd.f32 %v316, %v594
        %v596 = vpop.f32.mrb[0].mxu0
        %v597 = vadd.f32 %v320, %v596
        %v598 = vpop.f32.mrb[0].mxu0
        %v599 = vadd.f32 %v316, %v598
        %v600 = vpop.f32.mrb[0].mxu0
        %v601 = vadd.f32 %v320, %v600
        %602 = vdwg.mxu0
        %603 = vst [vmem:[#allocation2] sm:$0xff] %v532
        %604 = vst [vmem:[#allocation2 + $0x8] sm:$0xff] %v534
        %605 = vst [vmem:[#allocation2 + $0x10] sm:$0xff] %v585
        %606 = vst [vmem:[#allocation2 + $0x18] sm:$0xff] %v587
        %607 = vst [vmem:[#allocation2 + $0x20] sm:$0xff] %v536
        %608 = vst [vmem:[#allocation2 + $0x28] sm:$0xff] %v538
        %609 = vst [vmem:[#allocation2 + $0x30] sm:$0xff] %v589
        %610 = vst [vmem:[#allocation2 + $0x38] sm:$0xff] %v591
        %611 = vst [vmem:[#allocation2 + $0x40] sm:$0xff] %v542
        %612 = vst [vmem:[#allocation2 + $0x48] sm:$0xff] %v544
        %613 = vst [vmem:[#allocation2 + $0x50] sm:$0xff] %v595
        %614 = vst [vmem:[#allocation2 + $0x58] sm:$0xff] %v597
        %615 = vst [vmem:[#allocation2 + $0x60] sm:$0xff] %v546
        %616 = vst [vmem:[#allocation2 + $0x68] sm:$0xff] %v548
        %617 = vst [vmem:[#allocation2 + $0x70] sm:$0xff] %v599
        %618 = vst [vmem:[#allocation2 + $0x78] sm:$0xff] %v601
        %v619 = vld [vmem:[#allocation3] sm:$0xff]
        %v620 = vld [vmem:[#allocation4] sm:$0xff]
        %s621 = smul.u32 0, 4
        %s622 = smul.addr %s621, 8
        %s623 = scalar_lea.vmem [#allocation2], %s622
        %v624 = vld [vmem:[%s623] sm:$0xff]
        %v625 = vld [vmem:[%s623 + $0x8] sm:$0xff]
        %v626 = vld [vmem:[%s623 + $0x10] sm:$0xff]
        %v627 = vld [vmem:[%s623 + $0x18] sm:$0xff]
        %v628 = vpack.c.bf16 %v619, %v619
        %v629 = vld [vmem:[#allocation10] sm:$0xff]
        %v630 = vld [vmem:[#allocation10 + $0x8] sm:$0xff]
        %v631 = vld [vmem:[#allocation10 + $0x10] sm:$0xff]
        %v632 = vld [vmem:[#allocation10 + $0x18] sm:$0xff]
        %v633 = vld [vmem:[#allocation10 + $0x20] sm:$0xff]
        %v634 = vld [vmem:[#allocation10 + $0x28] sm:$0xff]
        %v635 = vld [vmem:[#allocation10 + $0x30] sm:$0xff]
        %v636 = vld [vmem:[#allocation10 + $0x38] sm:$0xff]
        %v637 = vld [vmem:[#allocation10 + $0x40] sm:$0xff]
        %v638 = vld [vmem:[#allocation10 + $0x48] sm:$0xff]
        %v639 = vld [vmem:[#allocation10 + $0x50] sm:$0xff]
        %v640 = vld [vmem:[#allocation10 + $0x58] sm:$0xff]
        %v641 = vld [vmem:[#allocation10 + $0x60] sm:$0xff]
        %v642 = vld [vmem:[#allocation10 + $0x68] sm:$0xff]
        %v643 = vld [vmem:[#allocation10 + $0x70] sm:$0xff]
        %v644 = vld [vmem:[#allocation10 + $0x78] sm:$0xff]
        %v645 = vld [vmem:[#allocation10 + $0x80] sm:$0xff]
        %v646 = vld [vmem:[#allocation10 + $0x88] sm:$0xff]
        %v647 = vld [vmem:[#allocation10 + $0x90] sm:$0xff]
        %v648 = vld [vmem:[#allocation10 + $0x98] sm:$0xff]
        %v649 = vld [vmem:[#allocation10 + $0xa0] sm:$0xff]
        %v650 = vld [vmem:[#allocation10 + $0xa8] sm:$0xff]
        %v651 = vld [vmem:[#allocation10 + $0xb0] sm:$0xff]
        %v652 = vld [vmem:[#allocation10 + $0xb8] sm:$0xff]
        %v653 = vld [vmem:[#allocation10 + $0xc0] sm:$0xff]
        %v654 = vld [vmem:[#allocation10 + $0xc8] sm:$0xff]
        %v655 = vld [vmem:[#allocation10 + $0xd0] sm:$0xff]
        %v656 = vld [vmem:[#allocation10 + $0xd8] sm:$0xff]
        %v657 = vld [vmem:[#allocation10 + $0xe0] sm:$0xff]
        %v658 = vld [vmem:[#allocation10 + $0xe8] sm:$0xff]
        %v659 = vld [vmem:[#allocation10 + $0xf0] sm:$0xff]
        %v660 = vld [vmem:[#allocation10 + $0xf8] sm:$0xff]
        %v693 = vunpack.c.l.b16 %v629
        %v694 = vunpack.c.h.b16 %v629
        %v695 = vunpack.c.l.b16 %v630
        %v696 = vunpack.c.h.b16 %v630
        %v697 = vunpack.c.l.b16 %v631
        %v698 = vunpack.c.h.b16 %v631
        %v699 = vunpack.c.l.b16 %v632
        %v700 = vunpack.c.h.b16 %v632
        %v701 = vunpack.c.l.b16 %v633
        %v702 = vunpack.c.h.b16 %v633
        %v703 = vunpack.c.l.b16 %v634
        %v704 = vunpack.c.h.b16 %v634
        %v705 = vunpack.c.l.b16 %v635
        %v706 = vunpack.c.h.b16 %v635
        %v707 = vunpack.c.l.b16 %v636
        %v708 = vunpack.c.h.b16 %v636
        %v709 = vunpack.c.l.b16 %v637
        %v710 = vunpack.c.h.b16 %v637
        %v711 = vunpack.c.l.b16 %v638
        %v712 = vunpack.c.h.b16 %v638
        %v713 = vunpack.c.l.b16 %v639
        %v714 = vunpack.c.h.b16 %v639
        %v715 = vunpack.c.l.b16 %v640
        %v716 = vunpack.c.h.b16 %v640
        %v717 = vunpack.c.l.b16 %v641
        %v718 = vunpack.c.h.b16 %v641
        %v719 = vunpack.c.l.b16 %v642
        %v720 = vunpack.c.h.b16 %v642
        %v721 = vunpack.c.l.b16 %v643
        %v722 = vunpack.c.h.b16 %v643
        %v723 = vunpack.c.l.b16 %v644
        %v724 = vunpack.c.h.b16 %v644
        %v725 = vunpack.c.l.b16 %v645
        %v726 = vunpack.c.h.b16 %v645
        %v727 = vunpack.c.l.b16 %v646
        %v728 = vunpack.c.h.b16 %v646
        %v729 = vunpack.c.l.b16 %v647
        %v730 = vunpack.c.h.b16 %v647
        %v731 = vunpack.c.l.b16 %v648
        %v732 = vunpack.c.h.b16 %v648
        %v733 = vunpack.c.l.b16 %v649
        %v734 = vunpack.c.h.b16 %v649
        %v735 = vunpack.c.l.b16 %v650
        %v736 = vunpack.c.h.b16 %v650
        %v737 = vunpack.c.l.b16 %v651
        %v738 = vunpack.c.h.b16 %v651
        %v739 = vunpack.c.l.b16 %v652
        %v740 = vunpack.c.h.b16 %v652
        %v741 = vunpack.c.l.b16 %v653
        %v742 = vunpack.c.h.b16 %v653
        %v743 = vunpack.c.l.b16 %v654
        %v744 = vunpack.c.h.b16 %v654
        %v745 = vunpack.c.l.b16 %v655
        %v746 = vunpack.c.h.b16 %v655
        %v747 = vunpack.c.l.b16 %v656
        %v748 = vunpack.c.h.b16 %v656
        %v749 = vunpack.c.l.b16 %v657
        %v750 = vunpack.c.h.b16 %v657
        %v751 = vunpack.c.l.b16 %v658
        %v752 = vunpack.c.h.b16 %v658
        %v753 = vunpack.c.l.b16 %v659
        %v754 = vunpack.c.h.b16 %v659
        %v755 = vunpack.c.l.b16 %v660
        %v756 = vunpack.c.h.b16 %v660
        %v757 = vpack.c.b16 %v697, %v693
        %v758 = vpack.c.b16 %v698, %v694
        %v759 = vpack.c.b16 %v699, %v695
        %v760 = vpack.c.b16 %v700, %v696
        %v761 = vpack.c.b16 %v705, %v701
        %v762 = vpack.c.b16 %v706, %v702
        %v763 = vpack.c.b16 %v707, %v703
        %v764 = vpack.c.b16 %v708, %v704
        %v765 = vpack.c.b16 %v713, %v709
        %v766 = vpack.c.b16 %v714, %v710
        %v767 = vpack.c.b16 %v715, %v711
        %v768 = vpack.c.b16 %v716, %v712
        %v769 = vpack.c.b16 %v721, %v717
        %v770 = vpack.c.b16 %v722, %v718
        %v771 = vpack.c.b16 %v723, %v719
        %v772 = vpack.c.b16 %v724, %v720
        %v773 = vpack.c.b16 %v729, %v725
        %v774 = vpack.c.b16 %v730, %v726
        %v775 = vpack.c.b16 %v731, %v727
        %v776 = vpack.c.b16 %v732, %v728
        %v777 = vpack.c.b16 %v737, %v733
        %v778 = vpack.c.b16 %v738, %v734
        %v779 = vpack.c.b16 %v739, %v735
        %v780 = vpack.c.b16 %v740, %v736
        %v781 = vpack.c.b16 %v745, %v741
        %v782 = vpack.c.b16 %v746, %v742
        %v783 = vpack.c.b16 %v747, %v743
        %v784 = vpack.c.b16 %v748, %v744
        %v785 = vpack.c.b16 %v753, %v749
        %v786 = vpack.c.b16 %v754, %v750
        %v787 = vpack.c.b16 %v755, %v751
        %v788 = vpack.c.b16 %v756, %v752
        %821 = vmatprep.subr.bf16.mxu0 %v758
        %822 = vmatpush1.bf16.msra.mxu0 %v757
        %823 = vmatprep.subr.bf16.mxu0 %v762
        %824 = vmatpush1.bf16.msra.mxu0 %v761
        %825 = vmatprep.subr.bf16.mxu0 %v766
        %826 = vmatpush1.bf16.msra.mxu0 %v765
        %827 = vmatprep.subr.bf16.mxu0 %v770
        %828 = vmatpush1.bf16.msra.mxu0 %v769
        %829 = vmatprep.subr.bf16.mxu0 %v774
        %830 = vmatpush1.bf16.msra.mxu0 %v773
        %831 = vmatprep.subr.bf16.mxu0 %v778
        %832 = vmatpush1.bf16.msra.mxu0 %v777
        %833 = vmatprep.subr.bf16.mxu0 %v782
        %834 = vmatpush1.bf16.msra.mxu0 %v781
        %835 = vmatprep.subr.bf16.mxu0 %v786
        %836 = vmatpush1.bf16.msra.mxu0 %v785
        %837 = vmatprep.subr.bf16.mxu0 0
        %838 = vmatpush1.bf16.msra.mxu0 0
        %839 = vmatprep.subr.bf16.mxu0 0
        %840 = vmatpush1.bf16.msra.mxu0 0
        %841 = vmatprep.subr.bf16.mxu0 0
        %842 = vmatpush1.bf16.msra.mxu0 0
        %843 = vmatprep.subr.bf16.mxu0 0
        %844 = vmatpush1.bf16.msra.mxu0 0
        %845 = vmatprep.subr.bf16.mxu0 0
        %846 = vmatpush1.bf16.msra.mxu0 0
        %847 = vmatprep.subr.bf16.mxu0 0
        %848 = vmatpush1.bf16.msra.mxu0 0
        %849 = vmatprep.subr.bf16.mxu0 0
        %850 = vmatpush1.bf16.msra.mxu0 0
        %851 = vmatprep.subr.bf16.mxu0 0
        %852 = vmatpush1.bf16.msra.mxu0 0
        %853 = vmatprep.mubr.bf16.mxu0 0
        %854 = vmatmul.mubr.bf16.gmra.mrb[0].mxu0 %v628
        %v855 = vpop.f32.mrb[0].mxu0
        %v856 = vadd.f32 0.0, %v855
        %v857 = vpop.f32.mrb[0].mxu0
        %v858 = vadd.f32 0.0, %v857
        %v859 = vpop.f32.mrb[0].mxu0
        %v860 = vpop.f32.mrb[0].mxu0
        %861 = vdwg.mxu0
        %862 = vmatprep.subr.bf16.mxu0 %v760
        %863 = vmatpush1.bf16.msra.mxu0 %v759
        %864 = vmatprep.subr.bf16.mxu0 %v764
        %865 = vmatpush1.bf16.msra.mxu0 %v763
        %866 = vmatprep.subr.bf16.mxu0 %v768
        %867 = vmatpush1.bf16.msra.mxu0 %v767
        %868 = vmatprep.subr.bf16.mxu0 %v772
        %869 = vmatpush1.bf16.msra.mxu0 %v771
        %870 = vmatprep.subr.bf16.mxu0 %v776
        %871 = vmatpush1.bf16.msra.mxu0 %v775
        %872 = vmatprep.subr.bf16.mxu0 %v780
        %873 = vmatpush1.bf16.msra.mxu0 %v779
        %874 = vmatprep.subr.bf16.mxu0 %v784
        %875 = vmatpush1.bf16.msra.mxu0 %v783
        %876 = vmatprep.subr.bf16.mxu0 %v788
        %877 = vmatpush1.bf16.msra.mxu0 %v787
        %878 = vmatprep.subr.bf16.mxu0 0
        %879 = vmatpush1.bf16.msra.mxu0 0
        %880 = vmatprep.subr.bf16.mxu0 0
        %881 = vmatpush1.bf16.msra.mxu0 0
        %882 = vmatprep.subr.bf16.mxu0 0
        %883 = vmatpush1.bf16.msra.mxu0 0
        %884 = vmatprep.subr.bf16.mxu0 0
        %885 = vmatpush1.bf16.msra.mxu0 0
        %886 = vmatprep.subr.bf16.mxu0 0
        %887 = vmatpush1.bf16.msra.mxu0 0
        %888 = vmatprep.subr.bf16.mxu0 0
        %889 = vmatpush1.bf16.msra.mxu0 0
        %890 = vmatprep.subr.bf16.mxu0 0
        %891 = vmatpush1.bf16.msra.mxu0 0
        %892 = vmatprep.subr.bf16.mxu0 0
        %893 = vmatpush1.bf16.msra.mxu0 0
        %894 = vmatprep.mubr.bf16.mxu0 0
        %895 = vmatmul.mubr.bf16.gmra.mrb[0].mxu0 %v628
        %v896 = vpop.f32.mrb[0].mxu0
        %v897 = vadd.f32 0.0, %v896
        %v898 = vpop.f32.mrb[0].mxu0
        %v899 = vadd.f32 0.0, %v898
        %v900 = vpop.f32.mrb[0].mxu0
        %v901 = vpop.f32.mrb[0].mxu0
        %902 = vdwg.mxu0
        %v903 = vadd.f32 %v624, %v856
        %v904 = vadd.f32 %v625, %v858
        %v905 = vadd.f32 %v626, %v897
        %v906 = vadd.f32 %v627, %v899
        %v907 = vxor.u32 %v903, 2147483648
        %v908 = vxor.u32 %v904, 2147483648
        %v909 = vxor.u32 %v905, 2147483648
        %v910 = vmul.f32 %v907, 1.442695
        %v911 = vpow.pop %v910
        %v912 = vmul.f32 %v908, 1.442695
        %v913 = vpow.pop %v912
        %v914 = vmul.f32 %v909, 1.442695
        %v915 = vpow.pop %v914
        %v916 = vadd.f32 %v911, 1.0
        %v917 = vadd.f32 %v913, 1.0
        %v918 = vadd.f32 %v915, 1.0
        %v919 = vrcp.pop %v916
        %v920 = vmul.f32 1.0, %v919
        %v921 = vrcp.pop %v917
        %v922 = vmul.f32 1.0, %v921
        %v923 = vrcp.pop %v918
        %v924 = vmul.f32 1.0, %v923
        %v925 = vtanh.pop %v906
        %v926 = vmul.f32 %v922, %v620
        %v927 = vmul.f32 %v920, %v925
        %v928 = vadd.f32 %v926, %v927
        %v929 = vtanh.pop %v928
        %v930 = vmul.f32 %v924, %v929
        %v931 = vpack.c.bf16 %v930, %v930
        %932 = vst [vmem:[%s257] sm:$0xf] %v931
        %s933 = smul.u32 1, 4
        %s934 = smul.addr %s933, 8
        %s935 = scalar_lea.vmem [#allocation2], %s934
        %v936 = vld [vmem:[%s935] sm:$0xff]
        %v937 = vld [vmem:[%s935 + $0x8] sm:$0xff]
        %v938 = vld [vmem:[%s935 + $0x10] sm:$0xff]
        %v939 = vld [vmem:[%s935 + $0x18] sm:$0xff]
        %v940 = vld [vmem:[#allocation10] sm:$0xff]
        %v941 = vld [vmem:[#allocation10 + $0x8] sm:$0xff]
        %v942 = vld [vmem:[#allocation10 + $0x10] sm:$0xff]
        %v943 = vld [vmem:[#allocation10 + $0x18] sm:$0xff]
        %v944 = vld [vmem:[#allocation10 + $0x20] sm:$0xff]
        %v945 = vld [vmem:[#allocation10 + $0x28] sm:$0xff]
        %v946 = vld [vmem:[#allocation10 + $0x30] sm:$0xff]
        %v947 = vld [vmem:[#allocation10 + $0x38] sm:$0xff]
        %v948 = vld [vmem:[#allocation10 + $0x40] sm:$0xff]
        %v949 = vld [vmem:[#allocation10 + $0x48] sm:$0xff]
        %v950 = vld [vmem:[#allocation10 + $0x50] sm:$0xff]
        %v951 = vld [vmem:[#allocation10 + $0x58] sm:$0xff]
        %v952 = vld [vmem:[#allocation10 + $0x60] sm:$0xff]
        %v953 = vld [vmem:[#allocation10 + $0x68] sm:$0xff]
        %v954 = vld [vmem:[#allocation10 + $0x70] sm:$0xff]
        %v955 = vld [vmem:[#allocation10 + $0x78] sm:$0xff]
        %v956 = vld [vmem:[#allocation10 + $0x80] sm:$0xff]
        %v957 = vld [vmem:[#allocation10 + $0x88] sm:$0xff]
        %v958 = vld [vmem:[#allocation10 + $0x90] sm:$0xff]
        %v959 = vld [vmem:[#allocation10 + $0x98] sm:$0xff]
        %v960 = vld [vmem:[#allocation10 + $0xa0] sm:$0xff]
        %v961 = vld [vmem:[#allocation10 + $0xa8] sm:$0xff]
        %v962 = vld [vmem:[#allocation10 + $0xb0] sm:$0xff]
        %v963 = vld [vmem:[#allocation10 + $0xb8] sm:$0xff]
        %v964 = vld [vmem:[#allocation10 + $0xc0] sm:$0xff]
        %v965 = vld [vmem:[#allocation10 + $0xc8] sm:$0xff]
        %v966 = vld [vmem:[#allocation10 + $0xd0] sm:$0xff]
        %v967 = vld [vmem:[#allocation10 + $0xd8] sm:$0xff]
        %v968 = vld [vmem:[#allocation10 + $0xe0] sm:$0xff]
        %v969 = vld [vmem:[#allocation10 + $0xe8] sm:$0xff]
        %v970 = vld [vmem:[#allocation10 + $0xf0] sm:$0xff]
        %v971 = vld [vmem:[#allocation10 + $0xf8] sm:$0xff]
        %v1004 = vunpack.c.l.b16 %v940
        %v1005 = vunpack.c.h.b16 %v940
        %v1006 = vunpack.c.l.b16 %v941
        %v1007 = vunpack.c.h.b16 %v941
        %v1008 = vunpack.c.l.b16 %v942
        %v1009 = vunpack.c.h.b16 %v942
        %v1010 = vunpack.c.l.b16 %v943
        %v1011 = vunpack.c.h.b16 %v943
        %v1012 = vunpack.c.l.b16 %v944
        %v1013 = vunpack.c.h.b16 %v944
        %v1014 = vunpack.c.l.b16 %v945
        %v1015 = vunpack.c.h.b16 %v945
        %v1016 = vunpack.c.l.b16 %v946
        %v1017 = vunpack.c.h.b16 %v946
        %v1018 = vunpack.c.l.b16 %v947
        %v1019 = vunpack.c.h.b16 %v947
        %v1020 = vunpack.c.l.b16 %v948
        %v1021 = vunpack.c.h.b16 %v948
        %v1022 = vunpack.c.l.b16 %v949
        %v1023 = vunpack.c.h.b16 %v949
        %v1024 = vunpack.c.l.b16 %v950
        %v1025 = vunpack.c.h.b16 %v950
        %v1026 = vunpack.c.l.b16 %v951
        %v1027 = vunpack.c.h.b16 %v951
        %v1028 = vunpack.c.l.b16 %v952
        %v1029 = vunpack.c.h.b16 %v952
        %v1030 = vunpack.c.l.b16 %v953
        %v1031 = vunpack.c.h.b16 %v953
        %v1032 = vunpack.c.l.b16 %v954
        %v1033 = vunpack.c.h.b16 %v954
        %v1034 = vunpack.c.l.b16 %v955
        %v1035 = vunpack.c.h.b16 %v955
        %v1036 = vunpack.c.l.b16 %v956
        %v1037 = vunpack.c.h.b16 %v956
        %v1038 = vunpack.c.l.b16 %v957
        %v1039 = vunpack.c.h.b16 %v957
        %v1040 = vunpack.c.l.b16 %v958
        %v1041 = vunpack.c.h.b16 %v958
        %v1042 = vunpack.c.l.b16 %v959
        %v1043 = vunpack.c.h.b16 %v959
        %v1044 = vunpack.c.l.b16 %v960
        %v1045 = vunpack.c.h.b16 %v960
        %v1046 = vunpack.c.l.b16 %v961
        %v1047 = vunpack.c.h.b16 %v961
        %v1048 = vunpack.c.l.b16 %v962
        %v1049 = vunpack.c.h.b16 %v962
        %v1050 = vunpack.c.l.b16 %v963
        %v1051 = vunpack.c.h.b16 %v963
        %v1052 = vunpack.c.l.b16 %v964
        %v1053 = vunpack.c.h.b16 %v964
        %v1054 = vunpack.c.l.b16 %v965
        %v1055 = vunpack.c.h.b16 %v965
        %v1056 = vunpack.c.l.b16 %v966
        %v1057 = vunpack.c.h.b16 %v966
        %v1058 = vunpack.c.l.b16 %v967
        %v1059 = vunpack.c.h.b16 %v967
        %v1060 = vunpack.c.l.b16 %v968
        %v1061 = vunpack.c.h.b16 %v968
        %v1062 = vunpack.c.l.b16 %v969
        %v1063 = vunpack.c.h.b16 %v969
        %v1064 = vunpack.c.l.b16 %v970
        %v1065 = vunpack.c.h.b16 %v970
        %v1066 = vunpack.c.l.b16 %v971
        %v1067 = vunpack.c.h.b16 %v971
        %v1068 = vpack.c.b16 %v1008, %v1004
        %v1069 = vpack.c.b16 %v1009, %v1005
        %v1070 = vpack.c.b16 %v1010, %v1006
        %v1071 = vpack.c.b16 %v1011, %v1007
        %v1072 = vpack.c.b16 %v1016, %v1012
        %v1073 = vpack.c.b16 %v1017, %v1013
        %v1074 = vpack.c.b16 %v1018, %v1014
        %v1075 = vpack.c.b16 %v1019, %v1015
        %v1076 = vpack.c.b16 %v1024, %v1020
        %v1077 = vpack.c.b16 %v1025, %v1021
        %v1078 = vpack.c.b16 %v1026, %v1022
        %v1079 = vpack.c.b16 %v1027, %v1023
        %v1080 = vpack.c.b16 %v1032, %v1028
        %v1081 = vpack.c.b16 %v1033, %v1029
        %v1082 = vpack.c.b16 %v1034, %v1030
        %v1083 = vpack.c.b16 %v1035, %v1031
        %v1084 = vpack.c.b16 %v1040, %v1036
        %v1085 = vpack.c.b16 %v1041, %v1037
        %v1086 = vpack.c.b16 %v1042, %v1038
        %v1087 = vpack.c.b16 %v1043, %v1039
        %v1088 = vpack.c.b16 %v1048, %v1044
        %v1089 = vpack.c.b16 %v1049, %v1045
        %v1090 = vpack.c.b16 %v1050, %v1046
        %v1091 = vpack.c.b16 %v1051, %v1047
        %v1092 = vpack.c.b16 %v1056, %v1052
        %v1093 = vpack.c.b16 %v1057, %v1053
        %v1094 = vpack.c.b16 %v1058, %v1054
        %v1095 = vpack.c.b16 %v1059, %v1055
        %v1096 = vpack.c.b16 %v1064, %v1060
        %v1097 = vpack.c.b16 %v1065, %v1061
        %v1098 = vpack.c.b16 %v1066, %v1062
        %v1099 = vpack.c.b16 %v1067, %v1063
        %1132 = vmatprep.subr.bf16.mxu0 %v1069
        %1133 = vmatpush1.bf16.msra.mxu0 %v1068
        %1134 = vmatprep.subr.bf16.mxu0 %v1073
        %1135 = vmatpush1.bf16.msra.mxu0 %v1072
        %1136 = vmatprep.subr.bf16.mxu0 %v1077
        %1137 = vmatpush1.bf16.msra.mxu0 %v1076
        %1138 = vmatprep.subr.bf16.mxu0 %v1081
        %1139 = vmatpush1.bf16.msra.mxu0 %v1080
        %1140 = vmatprep.subr.bf16.mxu0 %v1085
        %1141 = vmatpush1.bf16.msra.mxu0 %v1084
        %1142 = vmatprep.subr.bf16.mxu0 %v1089
        %1143 = vmatpush1.bf16.msra.mxu0 %v1088
        %1144 = vmatprep.subr.bf16.mxu0 %v1093
        %1145 = vmatpush1.bf16.msra.mxu0 %v1092
        %1146 = vmatprep.subr.bf16.mxu0 %v1097
        %1147 = vmatpush1.bf16.msra.mxu0 %v1096
        %1148 = vmatprep.subr.bf16.mxu0 0
        %1149 = vmatpush1.bf16.msra.mxu0 0
        %1150 = vmatprep.subr.bf16.mxu0 0
        %1151 = vmatpush1.bf16.msra.mxu0 0
        %1152 = vmatprep.subr.bf16.mxu0 0
        %1153 = vmatpush1.bf16.msra.mxu0 0
        %1154 = vmatprep.subr.bf16.mxu0 0
        %1155 = vmatpush1.bf16.msra.mxu0 0
        %1156 = vmatprep.subr.bf16.mxu0 0
        %1157 = vmatpush1.bf16.msra.mxu0 0
        %1158 = vmatprep.subr.bf16.mxu0 0
        %1159 = vmatpush1.bf16.msra.mxu0 0
        %1160 = vmatprep.subr.bf16.mxu0 0
        %1161 = vmatpush1.bf16.msra.mxu0 0
        %1162 = vmatprep.subr.bf16.mxu0 0
        %1163 = vmatpush1.bf16.msra.mxu0 0
        %1164 = vmatprep.mubr.bf16.mxu0 0
        %1165 = vmatmul.mubr.bf16.gmra.mrb[0].mxu0 %v931
        %v1166 = vpop.f32.mrb[0].mxu0
        %v1167 = vadd.f32 0.0, %v1166
        %v1168 = vpop.f32.mrb[0].mxu0
        %v1169 = vadd.f32 0.0, %v1168
        %v1170 = vpop.f32.mrb[0].mxu0
        %v1171 = vpop.f32.mrb[0].mxu0
        %1172 = vdwg.mxu0
        %1173 = vmatprep.subr.bf16.mxu0 %v1071
        %1174 = vmatpush1.bf16.msra.mxu0 %v1070
        %1175 = vmatprep.subr.bf16.mxu0 %v1075
        %1176 = vmatpush1.bf16.msra.mxu0 %v1074
        %1177 = vmatprep.subr.bf16.mxu0 %v1079
        %1178 = vmatpush1.bf16.msra.mxu0 %v1078
        %1179 = vmatprep.subr.bf16.mxu0 %v1083
        %1180 = vmatpush1.bf16.msra.mxu0 %v1082
        %1181 = vmatprep.subr.bf16.mxu0 %v1087
        %1182 = vmatpush1.bf16.msra.mxu0 %v1086
        %1183 = vmatprep.subr.bf16.mxu0 %v1091
        %1184 = vmatpush1.bf16.msra.mxu0 %v1090
        %1185 = vmatprep.subr.bf16.mxu0 %v1095
        %1186 = vmatpush1.bf16.msra.mxu0 %v1094
        %1187 = vmatprep.subr.bf16.mxu0 %v1099
        %1188 = vmatpush1.bf16.msra.mxu0 %v1098
        %1189 = vmatprep.subr.bf16.mxu0 0
        %1190 = vmatpush1.bf16.msra.mxu0 0
        %1191 = vmatprep.subr.bf16.mxu0 0
        %1192 = vmatpush1.bf16.msra.mxu0 0
        %1193 = vmatprep.subr.bf16.mxu0 0
        %1194 = vmatpush1.bf16.msra.mxu0 0
        %1195 = vmatprep.subr.bf16.mxu0 0
        %1196 = vmatpush1.bf16.msra.mxu0 0
        %1197 = vmatprep.subr.bf16.mxu0 0
        %1198 = vmatpush1.bf16.msra.mxu0 0
        %1199 = vmatprep.subr.bf16.mxu0 0
        %1200 = vmatpush1.bf16.msra.mxu0 0
        %1201 = vmatprep.subr.bf16.mxu0 0
        %1202 = vmatpush1.bf16.msra.mxu0 0
        %1203 = vmatprep.subr.bf16.mxu0 0
        %1204 = vmatpush1.bf16.msra.mxu0 0
        %1205 = vmatprep.mubr.bf16.mxu0 0
        %1206 = vmatmul.mubr.bf16.gmra.mrb[0].mxu0 %v931
        %v1207 = vpop.f32.mrb[0].mxu0
        %v1208 = vadd.f32 0.0, %v1207
        %v1209 = vpop.f32.mrb[0].mxu0
        %v1210 = vadd.f32 0.0, %v1209
        %v1211 = vpop.f32.mrb[0].mxu0
        %v1212 = vpop.f32.mrb[0].mxu0
        %1213 = vdwg.mxu0
        %v1214 = vadd.f32 %v936, %v1167
        %v1215 = vadd.f32 %v937, %v1169
        %v1216 = vadd.f32 %v938, %v1208
        %v1217 = vadd.f32 %v939, %v1210
        %v1218 = vxor.u32 %v1214, 2147483648
        %v1219 = vxor.u32 %v1215, 2147483648
        %v1220 = vxor.u32 %v1216, 2147483648
        %v1221 = vmul.f32 %v1218, 1.442695
        %v1222 = vpow.pop %v1221
        %v1223 = vmul.f32 %v1219, 1.442695
        %v1224 = vpow.pop %v1223
        %v1225 = vmul.f32 %v1220, 1.442695
        %v1226 = vpow.pop %v1225
        %v1227 = vadd.f32 %v1222, 1.0
        %v1228 = vadd.f32 %v1224, 1.0
        %v1229 = vadd.f32 %v1226, 1.0
        %v1230 = vrcp.pop %v1227
        %v1231 = vmul.f32 1.0, %v1230
        %v1232 = vrcp.pop %v1228
        %v1233 = vmul.f32 1.0, %v1232
        %v1234 = vrcp.pop %v1229
        %v1235 = vmul.f32 1.0, %v1234
        %v1236 = vtanh.pop %v1217
        %v1237 = vmul.f32 %v1233, %v928
        %v1238 = vmul.f32 %v1231, %v1236
        %v1239 = vadd.f32 %v1237, %v1238
        %v1240 = vtanh.pop %v1239
        %v1241 = vmul.f32 %v1235, %v1240
        %v1242 = vpack.c.bf16 %v1241, %v1241
        %s1243 = scalar_lea.vmem %s257, 4 [#allocation13]
        %1244 = vst [vmem:[%s1243] sm:$0xf] %v1242
        %s1245 = smul.u32 2, 4
        %s1246 = smul.addr %s1245, 8
        %s1247 = scalar_lea.vmem [#allocation2], %s1246
        %v1248 = vld [vmem:[%s1247] sm:$0xff]
        %v1249 = vld [vmem:[%s1247 + $0x8] sm:$0xff]
        %v1250 = vld [vmem:[%s1247 + $0x10] sm:$0xff]
        %v1251 = vld [vmem:[%s1247 + $0x18] sm:$0xff]
        %v1252 = vld [vmem:[#allocation10] sm:$0xff]
        %v1253 = vld [vmem:[#allocation10 + $0x8] sm:$0xff]
        %v1254 = vld [vmem:[#allocation10 + $0x10] sm:$0xff]
        %v1255 = vld [vmem:[#allocation10 + $0x18] sm:$0xff]
        %v1256 = vld [vmem:[#allocation10 + $0x20] sm:$0xff]
        %v1257 = vld [vmem:[#allocation10 + $0x28] sm:$0xff]
        %v1258 = vld [vmem:[#allocation10 + $0x30] sm:$0xff]
        %v1259 = vld [vmem:[#allocation10 + $0x38] sm:$0xff]
        %v1260 = vld [vmem:[#allocation10 + $0x40] sm:$0xff]
        %v1261 = vld [vmem:[#allocation10 + $0x48] sm:$0xff]
        %v1262 = vld [vmem:[#allocation10 + $0x50] sm:$0xff]
        %v1263 = vld [vmem:[#allocation10 + $0x58] sm:$0xff]
        %v1264 = vld [vmem:[#allocation10 + $0x60] sm:$0xff]
        %v1265 = vld [vmem:[#allocation10 + $0x68] sm:$0xff]
        %v1266 = vld [vmem:[#allocation10 + $0x70] sm:$0xff]
        %v1267 = vld [vmem:[#allocation10 + $0x78] sm:$0xff]
        %v1268 = vld [vmem:[#allocation10 + $0x80] sm:$0xff]
        %v1269 = vld [vmem:[#allocation10 + $0x88] sm:$0xff]
        %v1270 = vld [vmem:[#allocation10 + $0x90] sm:$0xff]
        %v1271 = vld [vmem:[#allocation10 + $0x98] sm:$0xff]
        %v1272 = vld [vmem:[#allocation10 + $0xa0] sm:$0xff]
        %v1273 = vld [vmem:[#allocation10 + $0xa8] sm:$0xff]
        %v1274 = vld [vmem:[#allocation10 + $0xb0] sm:$0xff]
        %v1275 = vld [vmem:[#allocation10 + $0xb8] sm:$0xff]
        %v1276 = vld [vmem:[#allocation10 + $0xc0] sm:$0xff]
        %v1277 = vld [vmem:[#allocation10 + $0xc8] sm:$0xff]
        %v1278 = vld [vmem:[#allocation10 + $0xd0] sm:$0xff]
        %v1279 = vld [vmem:[#allocation10 + $0xd8] sm:$0xff]
        %v1280 = vld [vmem:[#allocation10 + $0xe0] sm:$0xff]
        %v1281 = vld [vmem:[#allocation10 + $0xe8] sm:$0xff]
        %v1282 = vld [vmem:[#allocation10 + $0xf0] sm:$0xff]
        %v1283 = vld [vmem:[#allocation10 + $0xf8] sm:$0xff]
        %v1316 = vunpack.c.l.b16 %v1252
        %v1317 = vunpack.c.h.b16 %v1252
        %v1318 = vunpack.c.l.b16 %v1253
        %v1319 = vunpack.c.h.b16 %v1253
        %v1320 = vunpack.c.l.b16 %v1254
        %v1321 = vunpack.c.h.b16 %v1254
        %v1322 = vunpack.c.l.b16 %v1255
        %v1323 = vunpack.c.h.b16 %v1255
        %v1324 = vunpack.c.l.b16 %v1256
        %v1325 = vunpack.c.h.b16 %v1256
        %v1326 = vunpack.c.l.b16 %v1257
        %v1327 = vunpack.c.h.b16 %v1257
        %v1328 = vunpack.c.l.b16 %v1258
        %v1329 = vunpack.c.h.b16 %v1258
        %v1330 = vunpack.c.l.b16 %v1259
        %v1331 = vunpack.c.h.b16 %v1259
        %v1332 = vunpack.c.l.b16 %v1260
        %v1333 = vunpack.c.h.b16 %v1260
        %v1334 = vunpack.c.l.b16 %v1261
        %v1335 = vunpack.c.h.b16 %v1261
        %v1336 = vunpack.c.l.b16 %v1262
        %v1337 = vunpack.c.h.b16 %v1262
        %v1338 = vunpack.c.l.b16 %v1263
        %v1339 = vunpack.c.h.b16 %v1263
        %v1340 = vunpack.c.l.b16 %v1264
        %v1341 = vunpack.c.h.b16 %v1264
        %v1342 = vunpack.c.l.b16 %v1265
        %v1343 = vunpack.c.h.b16 %v1265
        %v1344 = vunpack.c.l.b16 %v1266
        %v1345 = vunpack.c.h.b16 %v1266
        %v1346 = vunpack.c.l.b16 %v1267
        %v1347 = vunpack.c.h.b16 %v1267
        %v1348 = vunpack.c.l.b16 %v1268
        %v1349 = vunpack.c.h.b16 %v1268
        %v1350 = vunpack.c.l.b16 %v1269
        %v1351 = vunpack.c.h.b16 %v1269
        %v1352 = vunpack.c.l.b16 %v1270
        %v1353 = vunpack.c.h.b16 %v1270
        %v1354 = vunpack.c.l.b16 %v1271
        %v1355 = vunpack.c.h.b16 %v1271
        %v1356 = vunpack.c.l.b16 %v1272
        %v1357 = vunpack.c.h.b16 %v1272
        %v1358 = vunpack.c.l.b16 %v1273
        %v1359 = vunpack.c.h.b16 %v1273
        %v1360 = vunpack.c.l.b16 %v1274
        %v1361 = vunpack.c.h.b16 %v1274
        %v1362 = vunpack.c.l.b16 %v1275
        %v1363 = vunpack.c.h.b16 %v1275
        %v1364 = vunpack.c.l.b16 %v1276
        %v1365 = vunpack.c.h.b16 %v1276
        %v1366 = vunpack.c.l.b16 %v1277
        %v1367 = vunpack.c.h.b16 %v1277
        %v1368 = vunpack.c.l.b16 %v1278
        %v1369 = vunpack.c.h.b16 %v1278
        %v1370 = vunpack.c.l.b16 %v1279
        %v1371 = vunpack.c.h.b16 %v1279
        %v1372 = vunpack.c.l.b16 %v1280
        %v1373 = vunpack.c.h.b16 %v1280
        %v1374 = vunpack.c.l.b16 %v1281
        %v1375 = vunpack.c.h.b16 %v1281
        %v1376 = vunpack.c.l.b16 %v1282
        %v1377 = vunpack.c.h.b16 %v1282
        %v1378 = vunpack.c.l.b16 %v1283
        %v1379 = vunpack.c.h.b16 %v1283
        %v1380 = vpack.c.b16 %v1320, %v1316
        %v1381 = vpack.c.b16 %v1321, %v1317
        %v1382 = vpack.c.b16 %v1322, %v1318
        %v1383 = vpack.c.b16 %v1323, %v1319
        %v1384 = vpack.c.b16 %v1328, %v1324
        %v1385 = vpack.c.b16 %v1329, %v1325
        %v1386 = vpack.c.b16 %v1330, %v1326
        %v1387 = vpack.c.b16 %v1331, %v1327
        %v1388 = vpack.c.b16 %v1336, %v1332
        %v1389 = vpack.c.b16 %v1337, %v1333
        %v1390 = vpack.c.b16 %v1338, %v1334
        %v1391 = vpack.c.b16 %v1339, %v1335
        %v1392 = vpack.c.b16 %v1344, %v1340
        %v1393 = vpack.c.b16 %v1345, %v1341
        %v1394 = vpack.c.b16 %v1346, %v1342
        %v1395 = vpack.c.b16 %v1347, %v1343
        %v1396 = vpack.c.b16 %v1352, %v1348
        %v1397 = vpack.c.b16 %v1353, %v1349
        %v1398 = vpack.c.b16 %v1354, %v1350
        %v1399 = vpack.c.b16 %v1355, %v1351
        %v1400 = vpack.c.b16 %v1360, %v1356
        %v1401 = vpack.c.b16 %v1361, %v1357
        %v1402 = vpack.c.b16 %v1362, %v1358
        %v1403 = vpack.c.b16 %v1363, %v1359
        %v1404 = vpack.c.b16 %v1368, %v1364
        %v1405 = vpack.c.b16 %v1369, %v1365
        %v1406 = vpack.c.b16 %v1370, %v1366
        %v1407 = vpack.c.b16 %v1371, %v1367
        %v1408 = vpack.c.b16 %v1376, %v1372
        %v1409 = vpack.c.b16 %v1377, %v1373
        %v1410 = vpack.c.b16 %v1378, %v1374
        %v1411 = vpack.c.b16 %v1379, %v1375
        %1444 = vmatprep.subr.bf16.mxu0 %v1381
        %1445 = vmatpush1.bf16.msra.mxu0 %v1380
        %1446 = vmatprep.subr.bf16.mxu0 %v1385
        %1447 = vmatpush1.bf16.msra.mxu0 %v1384
        %1448 = vmatprep.subr.bf16.mxu0 %v1389
        %1449 = vmatpush1.bf16.msra.mxu0 %v1388
        %1450 = vmatprep.subr.bf16.mxu0 %v1393
        %1451 = vmatpush1.bf16.msra.mxu0 %v1392
        %1452 = vmatprep.subr.bf16.mxu0 %v1397
        %1453 = vmatpush1.bf16.msra.mxu0 %v1396
        %1454 = vmatprep.subr.bf16.mxu0 %v1401
        %1455 = vmatpush1.bf16.msra.mxu0 %v1400
        %1456 = vmatprep.subr.bf16.mxu0 %v1405
        %1457 = vmatpush1.bf16.msra.mxu0 %v1404
        %1458 = vmatprep.subr.bf16.mxu0 %v1409
        %1459 = vmatpush1.bf16.msra.mxu0 %v1408
        %1460 = vmatprep.subr.bf16.mxu0 0
        %1461 = vmatpush1.bf16.msra.mxu0 0
        %1462 = vmatprep.subr.bf16.mxu0 0
        %1463 = vmatpush1.bf16.msra.mxu0 0
        %1464 = vmatprep.subr.bf16.mxu0 0
        %1465 = vmatpush1.bf16.msra.mxu0 0
        %1466 = vmatprep.subr.bf16.mxu0 0
        %1467 = vmatpush1.bf16.msra.mxu0 0
        %1468 = vmatprep.subr.bf16.mxu0 0
        %1469 = vmatpush1.bf16.msra.mxu0 0
        %1470 = vmatprep.subr.bf16.mxu0 0
        %1471 = vmatpush1.bf16.msra.mxu0 0
        %1472 = vmatprep.subr.bf16.mxu0 0
        %1473 = vmatpush1.bf16.msra.mxu0 0
        %1474 = vmatprep.subr.bf16.mxu0 0
        %1475 = vmatpush1.bf16.msra.mxu0 0
        %1476 = vmatprep.mubr.bf16.mxu0 0
        %1477 = vmatmul.mubr.bf16.gmra.mrb[0].mxu0 %v1242
        %v1478 = vpop.f32.mrb[0].mxu0
        %v1479 = vadd.f32 0.0, %v1478
        %v1480 = vpop.f32.mrb[0].mxu0
        %v1481 = vadd.f32 0.0, %v1480
        %v1482 = vpop.f32.mrb[0].mxu0
        %v1483 = vpop.f32.mrb[0].mxu0
        %1484 = vdwg.mxu0
        %1485 = vmatprep.subr.bf16.mxu0 %v1383
        %1486 = vmatpush1.bf16.msra.mxu0 %v1382
        %1487 = vmatprep.subr.bf16.mxu0 %v1387
        %1488 = vmatpush1.bf16.msra.mxu0 %v1386
        %1489 = vmatprep.subr.bf16.mxu0 %v1391
        %1490 = vmatpush1.bf16.msra.mxu0 %v1390
        %1491 = vmatprep.subr.bf16.mxu0 %v1395
        %1492 = vmatpush1.bf16.msra.mxu0 %v1394
        %1493 = vmatprep.subr.bf16.mxu0 %v1399
        %1494 = vmatpush1.bf16.msra.mxu0 %v1398
        %1495 = vmatprep.subr.bf16.mxu0 %v1403
        %1496 = vmatpush1.bf16.msra.mxu0 %v1402
        %1497 = vmatprep.subr.bf16.mxu0 %v1407
        %1498 = vmatpush1.bf16.msra.mxu0 %v1406
        %1499 = vmatprep.subr.bf16.mxu0 %v1411
        %1500 = vmatpush1.bf16.msra.mxu0 %v1410
        %1501 = vmatprep.subr.bf16.mxu0 0
        %1502 = vmatpush1.bf16.msra.mxu0 0
        %1503 = vmatprep.subr.bf16.mxu0 0
        %1504 = vmatpush1.bf16.msra.mxu0 0
        %1505 = vmatprep.subr.bf16.mxu0 0
        %1506 = vmatpush1.bf16.msra.mxu0 0
        %1507 = vmatprep.subr.bf16.mxu0 0
        %1508 = vmatpush1.bf16.msra.mxu0 0
        %1509 = vmatprep.subr.bf16.mxu0 0
        %1510 = vmatpush1.bf16.msra.mxu0 0
        %1511 = vmatprep.subr.bf16.mxu0 0
        %1512 = vmatpush1.bf16.msra.mxu0 0
        %1513 = vmatprep.subr.bf16.mxu0 0
        %1514 = vmatpush1.bf16.msra.mxu0 0
        %1515 = vmatprep.subr.bf16.mxu0 0
        %1516 = vmatpush1.bf16.msra.mxu0 0
        %1517 = vmatprep.mubr.bf16.mxu0 0
        %1518 = vmatmul.mubr.bf16.gmra.mrb[0].mxu0 %v1242
        %v1519 = vpop.f32.mrb[0].mxu0
        %v1520 = vadd.f32 0.0, %v1519
        %v1521 = vpop.f32.mrb[0].mxu0
        %v1522 = vadd.f32 0.0, %v1521
        %v1523 = vpop.f32.mrb[0].mxu0
        %v1524 = vpop.f32.mrb[0].mxu0
        %1525 = vdwg.mxu0
        %v1526 = vadd.f32 %v1248, %v1479
        %v1527 = vadd.f32 %v1249, %v1481
        %v1528 = vadd.f32 %v1250, %v1520
        %v1529 = vadd.f32 %v1251, %v1522
        %v1530 = vxor.u32 %v1526, 2147483648
        %v1531 = vxor.u32 %v1527, 2147483648
        %v1532 = vxor.u32 %v1528, 2147483648
        %v1533 = vmul.f32 %v1530, 1.442695
        %v1534 = vpow.pop %v1533
        %v1535 = vmul.f32 %v1531, 1.442695
        %v1536 = vpow.pop %v1535
        %v1537 = vmul.f32 %v1532, 1.442695
        %v1538 = vpow.pop %v1537
        %v1539 = vadd.f32 %v1534, 1.0
        %v1540 = vadd.f32 %v1536, 1.0
        %v1541 = vadd.f32 %v1538, 1.0
        %v1542 = vrcp.pop %v1539
        %v1543 = vmul.f32 1.0, %v1542
        %v1544 = vrcp.pop %v1540
        %v1545 = vmul.f32 1.0, %v1544
        %v1546 = vrcp.pop %v1541
        %v1547 = vmul.f32 1.0, %v1546
        %v1548 = vtanh.pop %v1529
        %v1549 = vmul.f32 %v1545, %v1239
        %v1550 = vmul.f32 %v1543, %v1548
        %v1551 = vadd.f32 %v1549, %v1550
        %v1552 = vtanh.pop %v1551
        %v1553 = vmul.f32 %v1547, %v1552
        %v1554 = vpack.c.bf16 %v1553, %v1553
        %s1555 = scalar_lea.vmem %s257, 8 [#allocation13]
        %1556 = vst [vmem:[%s1555] sm:$0xf] %v1554
        %s1557 = smul.u32 3, 4
        %s1558 = smul.addr %s1557, 8
        %s1559 = scalar_lea.vmem [#allocation2], %s1558
        %v1560 = vld [vmem:[%s1559] sm:$0xff]
        %v1561 = vld [vmem:[%s1559 + $0x8] sm:$0xff]
        %v1562 = vld [vmem:[%s1559 + $0x10] sm:$0xff]
        %v1563 = vld [vmem:[%s1559 + $0x18] sm:$0xff]
        %v1564 = vld [vmem:[#allocation10] sm:$0xff]
        %v1565 = vld [vmem:[#allocation10 + $0x8] sm:$0xff]
        %v1566 = vld [vmem:[#allocation10 + $0x10] sm:$0xff]
        %v1567 = vld [vmem:[#allocation10 + $0x18] sm:$0xff]
        %v1568 = vld [vmem:[#allocation10 + $0x20] sm:$0xff]
        %v1569 = vld [vmem:[#allocation10 + $0x28] sm:$0xff]
        %v1570 = vld [vmem:[#allocation10 + $0x30] sm:$0xff]
        %v1571 = vld [vmem:[#allocation10 + $0x38] sm:$0xff]
        %v1572 = vld [vmem:[#allocation10 + $0x40] sm:$0xff]
        %v1573 = vld [vmem:[#allocation10 + $0x48] sm:$0xff]
        %v1574 = vld [vmem:[#allocation10 + $0x50] sm:$0xff]
        %v1575 = vld [vmem:[#allocation10 + $0x58] sm:$0xff]
        %v1576 = vld [vmem:[#allocation10 + $0x60] sm:$0xff]
        %v1577 = vld [vmem:[#allocation10 + $0x68] sm:$0xff]
        %v1578 = vld [vmem:[#allocation10 + $0x70] sm:$0xff]
        %v1579 = vld [vmem:[#allocation10 + $0x78] sm:$0xff]
        %v1580 = vld [vmem:[#allocation10 + $0x80] sm:$0xff]
        %v1581 = vld [vmem:[#allocation10 + $0x88] sm:$0xff]
        %v1582 = vld [vmem:[#allocation10 + $0x90] sm:$0xff]
        %v1583 = vld [vmem:[#allocation10 + $0x98] sm:$0xff]
        %v1584 = vld [vmem:[#allocation10 + $0xa0] sm:$0xff]
        %v1585 = vld [vmem:[#allocation10 + $0xa8] sm:$0xff]
        %v1586 = vld [vmem:[#allocation10 + $0xb0] sm:$0xff]
        %v1587 = vld [vmem:[#allocation10 + $0xb8] sm:$0xff]
        %v1588 = vld [vmem:[#allocation10 + $0xc0] sm:$0xff]
        %v1589 = vld [vmem:[#allocation10 + $0xc8] sm:$0xff]
        %v1590 = vld [vmem:[#allocation10 + $0xd0] sm:$0xff]
        %v1591 = vld [vmem:[#allocation10 + $0xd8] sm:$0xff]
        %v1592 = vld [vmem:[#allocation10 + $0xe0] sm:$0xff]
        %v1593 = vld [vmem:[#allocation10 + $0xe8] sm:$0xff]
        %v1594 = vld [vmem:[#allocation10 + $0xf0] sm:$0xff]
        %v1595 = vld [vmem:[#allocation10 + $0xf8] sm:$0xff]
        %v1628 = vunpack.c.l.b16 %v1564
        %v1629 = vunpack.c.h.b16 %v1564
        %v1630 = vunpack.c.l.b16 %v1565
        %v1631 = vunpack.c.h.b16 %v1565
        %v1632 = vunpack.c.l.b16 %v1566
        %v1633 = vunpack.c.h.b16 %v1566
        %v1634 = vunpack.c.l.b16 %v1567
        %v1635 = vunpack.c.h.b16 %v1567
        %v1636 = vunpack.c.l.b16 %v1568
        %v1637 = vunpack.c.h.b16 %v1568
        %v1638 = vunpack.c.l.b16 %v1569
        %v1639 = vunpack.c.h.b16 %v1569
        %v1640 = vunpack.c.l.b16 %v1570
        %v1641 = vunpack.c.h.b16 %v1570
        %v1642 = vunpack.c.l.b16 %v1571
        %v1643 = vunpack.c.h.b16 %v1571
        %v1644 = vunpack.c.l.b16 %v1572
        %v1645 = vunpack.c.h.b16 %v1572
        %v1646 = vunpack.c.l.b16 %v1573
        %v1647 = vunpack.c.h.b16 %v1573
        %v1648 = vunpack.c.l.b16 %v1574
        %v1649 = vunpack.c.h.b16 %v1574
        %v1650 = vunpack.c.l.b16 %v1575
        %v1651 = vunpack.c.h.b16 %v1575
        %v1652 = vunpack.c.l.b16 %v1576
        %v1653 = vunpack.c.h.b16 %v1576
        %v1654 = vunpack.c.l.b16 %v1577
        %v1655 = vunpack.c.h.b16 %v1577
        %v1656 = vunpack.c.l.b16 %v1578
        %v1657 = vunpack.c.h.b16 %v1578
        %v1658 = vunpack.c.l.b16 %v1579
        %v1659 = vunpack.c.h.b16 %v1579
        %v1660 = vunpack.c.l.b16 %v1580
        %v1661 = vunpack.c.h.b16 %v1580
        %v1662 = vunpack.c.l.b16 %v1581
        %v1663 = vunpack.c.h.b16 %v1581
        %v1664 = vunpack.c.l.b16 %v1582
        %v1665 = vunpack.c.h.b16 %v1582
        %v1666 = vunpack.c.l.b16 %v1583
        %v1667 = vunpack.c.h.b16 %v1583
        %v1668 = vunpack.c.l.b16 %v1584
        %v1669 = vunpack.c.h.b16 %v1584
        %v1670 = vunpack.c.l.b16 %v1585
        %v1671 = vunpack.c.h.b16 %v1585
        %v1672 = vunpack.c.l.b16 %v1586
        %v1673 = vunpack.c.h.b16 %v1586
        %v1674 = vunpack.c.l.b16 %v1587
        %v1675 = vunpack.c.h.b16 %v1587
        %v1676 = vunpack.c.l.b16 %v1588
        %v1677 = vunpack.c.h.b16 %v1588
        %v1678 = vunpack.c.l.b16 %v1589
        %v1679 = vunpack.c.h.b16 %v1589
        %v1680 = vunpack.c.l.b16 %v1590
        %v1681 = vunpack.c.h.b16 %v1590
        %v1682 = vunpack.c.l.b16 %v1591
        %v1683 = vunpack.c.h.b16 %v1591
        %v1684 = vunpack.c.l.b16 %v1592
        %v1685 = vunpack.c.h.b16 %v1592
        %v1686 = vunpack.c.l.b16 %v1593
        %v1687 = vunpack.c.h.b16 %v1593
        %v1688 = vunpack.c.l.b16 %v1594
        %v1689 = vunpack.c.h.b16 %v1594
        %v1690 = vunpack.c.l.b16 %v1595
        %v1691 = vunpack.c.h.b16 %v1595
        %v1692 = vpack.c.b16 %v1632, %v1628
        %v1693 = vpack.c.b16 %v1633, %v1629
        %v1694 = vpack.c.b16 %v1634, %v1630
        %v1695 = vpack.c.b16 %v1635, %v1631
        %v1696 = vpack.c.b16 %v1640, %v1636
        %v1697 = vpack.c.b16 %v1641, %v1637
        %v1698 = vpack.c.b16 %v1642, %v1638
        %v1699 = vpack.c.b16 %v1643, %v1639
        %v1700 = vpack.c.b16 %v1648, %v1644
        %v1701 = vpack.c.b16 %v1649, %v1645
        %v1702 = vpack.c.b16 %v1650, %v1646
        %v1703 = vpack.c.b16 %v1651, %v1647
        %v1704 = vpack.c.b16 %v1656, %v1652
        %v1705 = vpack.c.b16 %v1657, %v1653
        %v1706 = vpack.c.b16 %v1658, %v1654
        %v1707 = vpack.c.b16 %v1659, %v1655
        %v1708 = vpack.c.b16 %v1664, %v1660
        %v1709 = vpack.c.b16 %v1665, %v1661
        %v1710 = vpack.c.b16 %v1666, %v1662
        %v1711 = vpack.c.b16 %v1667, %v1663
        %v1712 = vpack.c.b16 %v1672, %v1668
        %v1713 = vpack.c.b16 %v1673, %v1669
        %v1714 = vpack.c.b16 %v1674, %v1670
        %v1715 = vpack.c.b16 %v1675, %v1671
        %v1716 = vpack.c.b16 %v1680, %v1676
        %v1717 = vpack.c.b16 %v1681, %v1677
        %v1718 = vpack.c.b16 %v1682, %v1678
        %v1719 = vpack.c.b16 %v1683, %v1679
        %v1720 = vpack.c.b16 %v1688, %v1684
        %v1721 = vpack.c.b16 %v1689, %v1685
        %v1722 = vpack.c.b16 %v1690, %v1686
        %v1723 = vpack.c.b16 %v1691, %v1687
        %1756 = vmatprep.subr.bf16.mxu0 %v1693
        %1757 = vmatpush1.bf16.msra.mxu0 %v1692
        %1758 = vmatprep.subr.bf16.mxu0 %v1697
        %1759 = vmatpush1.bf16.msra.mxu0 %v1696
        %1760 = vmatprep.subr.bf16.mxu0 %v1701
        %1761 = vmatpush1.bf16.msra.mxu0 %v1700
        %1762 = vmatprep.subr.bf16.mxu0 %v1705
        %1763 = vmatpush1.bf16.msra.mxu0 %v1704
        %1764 = vmatprep.subr.bf16.mxu0 %v1709
        %1765 = vmatpush1.bf16.msra.mxu0 %v1708
        %1766 = vmatprep.subr.bf16.mxu0 %v1713
        %1767 = vmatpush1.bf16.msra.mxu0 %v1712
        %1768 = vmatprep.subr.bf16.mxu0 %v1717
        %1769 = vmatpush1.bf16.msra.mxu0 %v1716
        %1770 = vmatprep.subr.bf16.mxu0 %v1721
        %1771 = vmatpush1.bf16.msra.mxu0 %v1720
        %1772 = vmatprep.subr.bf16.mxu0 0
        %1773 = vmatpush1.bf16.msra.mxu0 0
        %1774 = vmatprep.subr.bf16.mxu0 0
        %1775 = vmatpush1.bf16.msra.mxu0 0
        %1776 = vmatprep.subr.bf16.mxu0 0
        %1777 = vmatpush1.bf16.msra.mxu0 0
        %1778 = vmatprep.subr.bf16.mxu0 0
        %1779 = vmatpush1.bf16.msra.mxu0 0
        %1780 = vmatprep.subr.bf16.mxu0 0
        %1781 = vmatpush1.bf16.msra.mxu0 0
        %1782 = vmatprep.subr.bf16.mxu0 0
        %1783 = vmatpush1.bf16.msra.mxu0 0
        %1784 = vmatprep.subr.bf16.mxu0 0
        %1785 = vmatpush1.bf16.msra.mxu0 0
        %1786 = vmatprep.subr.bf16.mxu0 0
        %1787 = vmatpush1.bf16.msra.mxu0 0
        %1788 = vmatprep.mubr.bf16.mxu0 0
        %1789 = vmatmul.mubr.bf16.gmra.mrb[0].mxu0 %v1554
        %v1790 = vpop.f32.mrb[0].mxu0
        %v1791 = vadd.f32 0.0, %v1790
        %v1792 = vpop.f32.mrb[0].mxu0
        %v1793 = vadd.f32 0.0, %v1792
        %v1794 = vpop.f32.mrb[0].mxu0
        %v1795 = vpop.f32.mrb[0].mxu0
        %1796 = vdwg.mxu0
        %1797 = vmatprep.subr.bf16.mxu0 %v1695
        %1798 = vmatpush1.bf16.msra.mxu0 %v1694
        %1799 = vmatprep.subr.bf16.mxu0 %v1699
        %1800 = vmatpush1.bf16.msra.mxu0 %v1698
        %1801 = vmatprep.subr.bf16.mxu0 %v1703
        %1802 = vmatpush1.bf16.msra.mxu0 %v1702
        %1803 = vmatprep.subr.bf16.mxu0 %v1707
        %1804 = vmatpush1.bf16.msra.mxu0 %v1706
        %1805 = vmatprep.subr.bf16.mxu0 %v1711
        %1806 = vmatpush1.bf16.msra.mxu0 %v1710
        %1807 = vmatprep.subr.bf16.mxu0 %v1715
        %1808 = vmatpush1.bf16.msra.mxu0 %v1714
        %1809 = vmatprep.subr.bf16.mxu0 %v1719
        %1810 = vmatpush1.bf16.msra.mxu0 %v1718
        %1811 = vmatprep.subr.bf16.mxu0 %v1723
        %1812 = vmatpush1.bf16.msra.mxu0 %v1722
        %1813 = vmatprep.subr.bf16.mxu0 0
        %1814 = vmatpush1.bf16.msra.mxu0 0
        %1815 = vmatprep.subr.bf16.mxu0 0
        %1816 = vmatpush1.bf16.msra.mxu0 0
        %1817 = vmatprep.subr.bf16.mxu0 0
        %1818 = vmatpush1.bf16.msra.mxu0 0
        %1819 = vmatprep.subr.bf16.mxu0 0
        %1820 = vmatpush1.bf16.msra.mxu0 0
        %1821 = vmatprep.subr.bf16.mxu0 0
        %1822 = vmatpush1.bf16.msra.mxu0 0
        %1823 = vmatprep.subr.bf16.mxu0 0
        %1824 = vmatpush1.bf16.msra.mxu0 0
        %1825 = vmatprep.subr.bf16.mxu0 0
        %1826 = vmatpush1.bf16.msra.mxu0 0
        %1827 = vmatprep.subr.bf16.mxu0 0
        %1828 = vmatpush1.bf16.msra.mxu0 0
        %1829 = vmatprep.mubr.bf16.mxu0 0
        %1830 = vmatmul.mubr.bf16.gmra.mrb[0].mxu0 %v1554
        %v1831 = vpop.f32.mrb[0].mxu0
        %v1832 = vadd.f32 0.0, %v1831
        %v1833 = vpop.f32.mrb[0].mxu0
        %v1834 = vadd.f32 0.0, %v1833
        %v1835 = vpop.f32.mrb[0].mxu0
        %v1836 = vpop.f32.mrb[0].mxu0
        %1837 = vdwg.mxu0
        %v1838 = vadd.f32 %v1560, %v1791
        %v1839 = vadd.f32 %v1561, %v1793
        %v1840 = vadd.f32 %v1562, %v1832
        %v1841 = vadd.f32 %v1563, %v1834
        %v1842 = vxor.u32 %v1838, 2147483648
        %v1843 = vxor.u32 %v1839, 2147483648
        %v1844 = vxor.u32 %v1840, 2147483648
        %v1845 = vmul.f32 %v1842, 1.442695
        %v1846 = vpow.pop %v1845
        %v1847 = vmul.f32 %v1843, 1.442695
        %v1848 = vpow.pop %v1847
        %v1849 = vmul.f32 %v1844, 1.442695
        %v1850 = vpow.pop %v1849
        %v1851 = vadd.f32 %v1846, 1.0
        %v1852 = vadd.f32 %v1848, 1.0
        %v1853 = vadd.f32 %v1850, 1.0
        %v1854 = vrcp.pop %v1851
        %v1855 = vmul.f32 1.0, %v1854
        %v1856 = vrcp.pop %v1852
        %v1857 = vmul.f32 1.0, %v1856
        %v1858 = vrcp.pop %v1853
        %v1859 = vmul.f32 1.0, %v1858
        %v1860 = vtanh.pop %v1841
        %v1861 = vmul.f32 %v1857, %v1551
        %v1862 = vmul.f32 %v1855, %v1860
        %v1863 = vadd.f32 %v1861, %v1862
        %v1864 = vtanh.pop %v1863
        %v1865 = vmul.f32 %v1859, %v1864
        %v1866 = vpack.c.bf16 %v1865, %v1865
        %s1867 = scalar_lea.vmem %s257, 12 [#allocation13]
        %1868 = vst [vmem:[%s1867] sm:$0xf] %v1866
        %1869 = vst [vmem:[#allocation3] sm:$0xff] %v1865
        %1870 = vst [vmem:[#allocation4] sm:$0xff] %v1863
        %s1871 = sand.u32 %s120, 1
        %s1872 = scalar_lea.sflag [#allocation7], %s1871
        %s1873 = sand.u32 %s120, 1
        %s1874 = smul.addr %s1873, 16
        %s1875 = scalar_lea.vmem [#allocation13], %s1874
        // Predicated region
        $region57: #{lstm_cls_forward.4} parent=35 // pred_check
          %p1876 = pneg %p130
        $region58: #{lstm_cls_forward.4} parent=35 // pred_check_branch
          %1878 = sbr.rel (%p1876) target = $region60
        $region59: #{lstm_cls_forward.4} parent=35 // pred_region
          %s1879 = smul.u32 4, %s23
          %s1881 = ssub.s32 256, 256
          %1882 = vsyncadd %s1872, %s1881
          %s1883 = smul.addr %s1879, 64
          %s1884 = scalar_lea.hbm %s4, %s1883
          %s1885 = sshll.u32 %s1875, 4
          %s1886 = int_to_ptr.vmem [resolvable:$true] %s1885
          %1891 = dma.vmem_to_hbm [thread:$0]  %s1886, 256, %s1884, %s1872, 64, 64, 4
        $region60: #{lstm_cls_forward.4} parent=35 // pred_fallthru
          _
      $region36: #{lstm_cls_forward.4} parent=5 // pred_fallthru
        _
      %p1892 = scmp.le.s32.totalorder 2, %s18
      // Predicated region
      $region61: #{lstm_cls_forward.4} parent=5 // pred_check
        %p1893 = pneg %p1892
      $region62: #{lstm_cls_forward.4} parent=5 // pred_check_branch
        %1895 = sbr.rel (%p1893) target = $region64
      $region63: #{lstm_cls_forward.4} parent=5 // pred_region
        %s1896 = ssub.s32 %s18, 2
        // Predicated region
        $region65: #{lstm_cls_forward.4} parent=63 // pred_check
          %p1897 = pneg %p136
        $region66: #{lstm_cls_forward.4} parent=63 // pred_check_branch
          %1899 = sbr.rel (%p1897) target = $region68
        $region67: #{lstm_cls_forward.4} parent=63 // pred_region
          %s1900 = sand.u32 %s121, 1
          %s1901 = scalar_lea.sflag [#allocation7], %s1900
          %s1902 = sand.u32 %s121, 1
          %s1903 = smul.addr %s1902, 16
          %s1904 = scalar_lea.vmem [#allocation13], %s1903
          %1905 = dma.done %s1901, 256
        $region68: #{lstm_cls_forward.4} parent=63 // pred_fallthru
          _
      $region64: #{lstm_cls_forward.4} parent=5 // pred_fallthru
        _
    $region6: #{lstm_cls_forward.4} parent=1 // loop_footer
      %s22 = sadd.s32 1, %s18
    $region7: #{lstm_cls_forward.4} parent=1 // loop_footer_branch
      %17 = sbr.rel target = $region3
    $region8: #{lstm_cls_forward.4} parent=1 // loop_exit
      _
    %1906 = vsyncpa [#allocation6], 1
    %s1907 = scalar_lea.sflag [#allocation6], 1
    %1908 = vsyncpa %s1907, 1
    %1909 = vsyncpa [#allocation9], 1
    %1910 = vsyncpa [#allocation12], 1
    %1911 = vsyncpa [#allocation7], 1
    %s1912 = scalar_lea.sflag [#allocation7], 1
    %1913 = vsyncpa %s1912, 1

</llo_original>
